<compile_context>
chip_gen: v7x
topology: tpu7x:2x2x1
jax: 0.10.0
libtpu: 0.0.40
codegen_flags: <defaults>
</compile_context>

<pallas_src>
import functools
import math

import jax
import jax.numpy as jnp
from jax.experimental import pallas as pl
from jax.experimental.pallas import tpu as pltpu


# --------------------------------------------------------------------------
# shared helpers (pure layout / math, usable both in-kernel and in reference)
# --------------------------------------------------------------------------
def _layernorm(x, gamma, beta, eps=1e-5):
    mu = jnp.mean(x, axis=-1, keepdims=True)
    var = jnp.mean((x - mu) ** 2, axis=-1, keepdims=True)
    return (x - mu) * jax.lax.rsqrt(var + eps) * gamma + beta


def im2col_nhwc(x, k=7, stride=2, pad=3):
    """NHWC (B,H,W,C) -> patches (B*Ho*Wo, k*k*C); feature order (kh, kw, c).
    Wrapper-side layout only (XLA)."""
    B, Hh, Ww, C = x.shape
    Ho = (Hh + 2 * pad - k) // stride + 1
    Wo = (Ww + 2 * pad - k) // stride + 1
    xp = jnp.pad(x, ((0, 0), (pad, pad), (pad, pad), (0, 0)))
    cols = []
    for kh in range(k):
        for kw in range(k):
            cols.append(xp[:, kh:kh + stride * Ho:stride, kw:kw + stride * Wo:stride, :])
    patches = jnp.stack(cols, axis=3)                 # (B, Ho, Wo, k*k, C)
    return patches.reshape(B * Ho * Wo, k * k * C), Ho, Wo


def conv_weight_to_gemm(W):
    """PyTorch (Cout, Cin, kh, kw) -> (kh*kw*Cin, Cout), matching im2col_nhwc."""
    Cout = W.shape[0]
    return W.transpose(2, 3, 1, 0).reshape(-1, Cout)


def positional_encoding_table(S, E):
    pos = jnp.arange(S, dtype=jnp.float32)[:, None]
    div = jnp.exp(jnp.arange(0, E, 2, dtype=jnp.float32) * (-math.log(10000.0) / E))
    pe = jnp.zeros((S, E), jnp.float32)
    pe = pe.at[:, 0::2].set(jnp.sin(pos * div))
    pe = pe.at[:, 1::2].set(jnp.cos(pos * div))
    return pe


# --------------------------------------------------------------------------
# Pallas kernels
# --------------------------------------------------------------------------
def gemm_relu_kernel(x_ref, w_ref, b_ref, o_ref):
    # x_ref: (TP, K) bf16    w_ref: (K, Cout) bf16    b_ref: (1, Cout) f32
    y = jnp.dot(x_ref[...], w_ref[...], preferred_element_type=jnp.float32) + b_ref[...]
    o_ref[...] = jnp.maximum(y, 0.0).astype(o_ref.dtype)


def encoder_layer_kernel(*refs, num_heads, add_pe):
    """One batch element per grid step.  Fused full-width Q/K/V projections,
    per-head QK^T / PV, register-resident output-projection accumulator,
    LayerNorm + FFN, optional fused positional-encoding add."""
    if add_pe:
        (x_ref, pe_ref, wq_ref, bq_ref, wk_ref, bk_ref, wv_ref, bv_ref,
         wo_ref, bo_ref, w1_ref, b1_ref, w2_ref, b2_ref,
         g1_ref, be1_ref, g2_ref, be2_ref, o_ref) = refs
    else:
        (x_ref, wq_ref, bq_ref, wk_ref, bk_ref, wv_ref, bv_ref,
         wo_ref, bo_ref, w1_ref, b1_ref, w2_ref, b2_ref,
         g1_ref, be1_ref, g2_ref, be2_ref, o_ref) = refs
        pe_ref = None

    bf16 = jnp.bfloat16
    x = x_ref[0]                                    # (S, E) f32
    if add_pe:
        x = x + pe_ref[...]
    S, E = x.shape
    Dh = E // num_heads
    xb = x.astype(bf16)

    # --- fused (E,E) projections: lane-dense MXU contractions ------------
    # 1/sqrt(Dh) already folded into wq / bq in the wrapper.
    q = (jnp.dot(xb, wq_ref[...], preferred_element_type=jnp.float32)
         + bq_ref[...]).astype(bf16)                # (S, E)
    k = (jnp.dot(xb, wk_ref[...], preferred_element_type=jnp.float32)
         + bk_ref[...]).astype(bf16)
    v = (jnp.dot(xb, wv_ref[...], preferred_element_type=jnp.float32)
         + bv_ref[...]).astype(bf16)

    # --- per-head attention; register-resident accumulator ---------------
    # sum_h head_h @ Wo_h == concat(heads) @ Wo, so no in-kernel concat and
    # no VMEM scratch; per-head temporaries die at the end of each iteration.
    acc = jnp.zeros((S, E), jnp.float32)
    for h in range(num_heads):
        sl = slice(h * Dh, (h + 1) * Dh)            # static lane slice
        q_h, k_h, v_h = q[:, sl], k[:, sl], v[:, sl]
        # scores = q @ k^T: contract minor dims of both operands (no transpose)
        scores = jax.lax.dot_general(q_h, k_h,
                                     dimension_numbers=(((1,), (1,)), ((), ())),
                                     preferred_element_type=jnp.float32)  # (S, S)
        scores = scores - jnp.max(scores, axis=-1, keepdims=True)
        p = jnp.exp(scores)
        p = p * pl.reciprocal(jnp.sum(p, axis=-1, keepdims=True), approx=True)
        head = jnp.dot(p.astype(bf16), v_h,
                       preferred_element_type=jnp.float32)                # (S, Dh)
        acc = acc + jnp.dot(head.astype(bf16), wo_ref[h],
                            preferred_element_type=jnp.float32)           # (S, E)

    attn = acc + bo_ref[...]
    x1 = _layernorm(x + attn, g1_ref[...], be1_ref[...])     # dropout = identity (eval)

    # --- feed forward ------------------------------------------------------
    h1 = jnp.maximum(
        jnp.dot(x1.astype(bf16), w1_ref[...], preferred_element_type=jnp.float32)
        + b1_ref[...], 0.0)
    ff = jnp.dot(h1.astype(bf16), w2_ref[...], preferred_element_type=jnp.float32) \
        + b2_ref[...]

    o_ref[0] = _layernorm(x1 + ff, g2_ref[...], be2_ref[...]).astype(o_ref.dtype)


# --------------------------------------------------------------------------
# Pallas wrappers
# --------------------------------------------------------------------------
def conv_gemm_relu(patches_bf16, w_mat_bf16, bias_f32, *, out_dtype, row_tile=256):
    """GEMM + bias + ReLU with batch folded into the row dimension."""
    R, K = patches_bf16.shape
    Cout = w_mat_bf16.shape[1]
    TP = row_tile if (row_tile < R and R % row_tile == 0) else R
    return pl.pallas_call(
        gemm_relu_kernel,
        out_shape=jax.ShapeDtypeStruct((R, Cout), out_dtype),
        grid=(R // TP,),
        in_specs=[pl.BlockSpec((TP, K), lambda r: (r, 0)),
                  pl.BlockSpec((K, Cout), lambda r: (0, 0)),
                  pl.BlockSpec((1, Cout), lambda r: (0, 0))],
        out_specs=pl.BlockSpec((TP, Cout), lambda r: (r, 0)),
        compiler_params=pltpu.CompilerParams(
            dimension_semantics=("parallel",)),
    )(patches_bf16, w_mat_bf16, bias_f32)


def prepare_layer_weights(p, num_heads):
    """PyTorch-layout params -> kernel layout: fused (E,E) Q/K/V/O weights
    (scale folded into Q, matmul weights bf16), per-head (H,Dh,E) out-proj
    slabs, biases / LN params f32."""
    E = p["out_w"].shape[0]
    assert E % num_heads == 0, "dim_size must be divisible by num_heads"
    Dh = E // num_heads
    scale = 1.0 / math.sqrt(Dh)
    bf16 = jnp.bfloat16
    W_in, b_in = p["in_proj_w"], p["in_proj_b"]          # (3E, E), (3E,)

    wq = (scale * W_in[:E]).T.astype(bf16)               # (E, E)
    bq = (scale * b_in[:E]).reshape(1, E)
    wk = W_in[E:2 * E].T.astype(bf16)
    bk = b_in[E:2 * E].reshape(1, E)
    wv = W_in[2 * E:].T.astype(bf16)
    bv = b_in[2 * E:].reshape(1, E)
    wo = p["out_w"].T.reshape(num_heads, Dh, E).astype(bf16)   # (H, Dh, E)

    return (wq, bq, wk, bk, wv, bv,
            wo, p["out_b"].reshape(1, E),
            p["w1"].T.astype(bf16), p["b1"].reshape(1, 4 * E),
            p["w2"].T.astype(bf16), p["b2"].reshape(1, E),
            p["g1"].reshape(1, E), p["be1"].reshape(1, E),
            p["g2"].reshape(1, E), p["be2"].reshape(1, E))


def encoder_layer(x, weights, *, num_heads, pe=None):
    B, S, E = x.shape
    args = [x]
    in_specs = [pl.BlockSpec((1, S, E), lambda b: (b, 0, 0))]
    if pe is not None:
        args.append(pe)
        in_specs.append(pl.BlockSpec((S, E), lambda b: (0, 0)))
    for w in weights:
        args.append(w)
        nd = w.ndim
        in_specs.append(pl.BlockSpec(w.shape, lambda b, _nd=nd: (0,) * _nd))

    # VMEM budget from actual buffer bytes (blocks are double-buffered), with
    # generous headroom, clamped to 48 MiB so v7x keeps slack below its 64 MiB.
    need = 4 * S * E * 2                                   # x block + out block (f32)
    if pe is not None:
        need += 4 * S * E
    need += sum(int(w.size) * w.dtype.itemsize for w in weights)
    vmem_limit = int(min(48 * 1024 * 1024, max(8 * need, 16 * 1024 * 1024)))

    kernel = functools.partial(encoder_layer_kernel,
                               num_heads=num_heads, add_pe=pe is not None)
    return pl.pallas_call(
        kernel,
        out_shape=jax.ShapeDtypeStruct((B, S, E), jnp.float32),
        grid=(B,),
        in_specs=in_specs,
        out_specs=pl.BlockSpec((1, S, E), lambda b: (b, 0, 0)),
        compiler_params=pltpu.CompilerParams(
            dimension_semantics=("parallel",),        # megacore-shardable on v7x
            vmem_limit_bytes=vmem_limit),
    )(*args)


def encoder_forward(x_img, params, *, num_heads):
    # NCHW -> NHWC once; activations stay NHWC bf16 between convs so no
    # inter-conv transposes and half the HBM traffic on the im2col path.
    feat = jnp.transpose(x_img, (0, 2, 3, 1)).astype(jnp.bfloat16)
    B = feat.shape[0]
    n_conv = len(params["conv"])
    for ci, (W, b) in enumerate(params["conv"]):
        patches, Ho, Wo = im2col_nhwc(feat)               # wrapper-side layout only
        Cout = W.shape[0]
        w_mat = conv_weight_to_gemm(W).astype(jnp.bfloat16)
        out_dtype = jnp.float32 if ci == n_conv - 1 else jnp.bfloat16
        y = conv_gemm_relu(patches, w_mat, b.reshape(1, Cout), out_dtype=out_dtype)
        feat = y.reshape(B, Ho, Wo, Cout)

    S = feat.shape[1] * feat.shape[2]
    E = feat.shape[3]
    x = feat.reshape(B, S, E)          # NHWC reshape == PyTorch view + transpose(1, 2)
    pe = positional_encoding_table(S, E)
    for li, lp in enumerate(params["layers"]):
        x = encoder_layer(x, prepare_layer_weights(lp, num_heads),
                          num_heads=num_heads,
                          pe=pe if li == 0 else None)      # PE fused into layer 0
    return x


# --------------------------------------------------------------------------
# parameters (PyTorch layout) and pure-JAX reference
# --------------------------------------------------------------------------
def init_params(key, dim_size, num_heads, num_layers):
    E = dim_size
    keys = jax.random.split(key, 3 + num_layers)
    sc = 0.05
    conv = []
    for i, (cin, cout) in enumerate([(3, 32), (32, 64), (64, E)]):
        kw, kb = jax.random.split(keys[i])
        conv.append((sc * jax.random.normal(kw, (cout, cin, 7, 7), jnp.float32),
                     sc * jax.random.normal(kb, (cout,), jnp.float32)))
    layers = []
    for li in range(num_layers):
        ks = jax.random.split(keys[3 + li], 8)
        layers.append({
            "in_proj_w": sc * jax.random.normal(ks[0], (3 * E, E), jnp.float32),
            "in_proj_b": sc * jax.random.normal(ks[1], (3 * E,), jnp.float32),
            "out_w": sc * jax.random.normal(ks[2], (E, E), jnp.float32),
            "out_b": sc * jax.random.normal(ks[3], (E,), jnp.float32),
            "w1": sc * jax.random.normal(ks[4], (4 * E, E), jnp.float32),
            "b1": sc * jax.random.normal(ks[5], (4 * E,), jnp.float32),
            "w2": sc * jax.random.normal(ks[6], (E, 4 * E), jnp.float32),
            "b2": sc * jax.random.normal(ks[7], (E,), jnp.float32),
            "g1": jnp.ones((E,), jnp.float32), "be1": jnp.zeros((E,), jnp.float32),
            "g2": jnp.ones((E,), jnp.float32), "be2": jnp.zeros((E,), jnp.float32),
        })
    return {"conv": conv, "layers": layers}


def reference_encoder_layer(x, lp, num_heads):
    B, S, E = x.shape
    Dh = E // num_heads
    bf = jnp.bfloat16
    qkv = jnp.dot(x.astype(bf), lp["in_proj_w"].T.astype(bf),
                  preferred_element_type=jnp.float32) + lp["in_proj_b"]
    q, k, v = qkv[..., :E], qkv[..., E:2 * E], qkv[..., 2 * E:]

    def heads(t):
        return t.reshape(B, S, num_heads, Dh).transpose(0, 2, 1, 3)

    qh, kh, vh = heads(q), heads(k), heads(v)
    s = jnp.einsum("bhqd,bhkd->bhqk", qh.astype(bf), kh.astype(bf),
                   preferred_element_type=jnp.float32) / math.sqrt(Dh)
    p_attn = jax.nn.softmax(s, axis=-1)
    attn = jnp.einsum("bhqk,bhkd->bhqd", p_attn.astype(bf), vh.astype(bf),
                      preferred_element_type=jnp.float32)
    attn = attn.transpose(0, 2, 1, 3).reshape(B, S, E)
    attn = jnp.dot(attn.astype(bf), lp["out_w"].T.astype(bf),
                   preferred_element_type=jnp.float32) + lp["out_b"]
    x1 = _layernorm(x + attn, lp["g1"], lp["be1"])
    hdn = jnp.maximum(jnp.dot(x1.astype(bf), lp["w1"].T.astype(bf),
                              preferred_element_type=jnp.float32) + lp["b1"], 0.0)
    ff = jnp.dot(hdn.astype(bf), lp["w2"].T.astype(bf),
                 preferred_element_type=jnp.float32) + lp["b2"]
    return _layernorm(x1 + ff, lp["g2"], lp["be2"])


def reference_forward(x_img, params, num_heads):
    """Pure-JAX reference of the PyTorch Encoder forward (mirrors the kernel's
    bf16-matmul / f32-accumulate numerics so the comparison stays tight)."""
    bf = jnp.bfloat16
    feat = jnp.transpose(x_img, (0, 2, 3, 1)).astype(bf)
    B = feat.shape[0]
    n_conv = len(params["conv"])
    for ci, (W, b) in enumerate(params["conv"]):
        patches, Ho, Wo = im2col_nhwc(feat)
        Cout = W.shape[0]
        w_mat = conv_weight_to_gemm(W)
        y = jnp.dot(patches.astype(bf), w_mat.astype(bf),
                    preferred_element_type=jnp.float32) + b
        y = jnp.maximum(y, 0.0)
        out_dtype = jnp.float32 if ci == n_conv - 1 else bf
        feat = y.astype(out_dtype).reshape(B, Ho, Wo, Cout)
    S = feat.shape[1] * feat.shape[2]
    E = feat.shape[3]
    x = feat.reshape(B, S, E).astype(jnp.float32)
    x = x + positional_encoding_table(S, E)
    for lp in params["layers"]:
        x = reference_encoder_layer(x, lp, num_heads)
    return x


# --------------------------------------------------------------------------
if __name__ == "__main__":
    B, Cin, Himg, Wimg = 2, 3, 32, 32          # conv stack: 32 -> 16 -> 8 -> 4  => S = 16
    E, NH, L = 32, 4, 3                        # dim_size, num_heads, num_layers

    key = jax.random.PRNGKey(0)
    k_x, k_p = jax.random.split(key)
    x_img = jax.random.normal(k_x, (B, Cin, Himg, Wimg), jnp.float32)
    params = init_params(k_p, E, NH, L)

    fwd = jax.jit(functools.partial(encoder_forward, num_heads=NH))
    out = jax.block_until_ready(fwd(x_img, params))

    ref = reference_forward(x_img, params, NH)
    assert out.shape == ref.shape == (B, 16, E)
    assert jnp.allclose(out, ref, atol=3e-2, rtol=3e-2), (
        f"Pallas output mismatch vs reference: max abs err "
        f"{float(jnp.max(jnp.abs(out - ref)))}")

    print("KERNEL_OK")
</pallas_src>

<mosaic_0001>
module attributes {stable_mosaic.version = 11 : i64} {
  func.func @gemm_relu_kernel(%arg0: i32, %arg1: memref<256x147xbf16, #tpu.memory_space<vmem>>, %arg2: memref<147x32xbf16, #tpu.memory_space<vmem>>, %arg3: memref<1x32xf32, #tpu.memory_space<vmem>>, %arg4: memref<256x32xbf16, #tpu.memory_space<vmem>>) attributes {dimension_semantics = [#tpu.dimension_semantics<parallel>], iteration_bounds = array<i64: 2>, scalar_prefetch = 0 : i64, scratch_operands = 0 : i64, tpu.core_type = #tpu.core_type<tc>, window_params = [{transform_indices = @transform_0, window_bounds = array<i64: 256, 147>}, {pipeline_mode = #tpu.pipeline_mode<synchronous>, transform_indices = @transform_1, window_bounds = array<i64: 147, 32>}, {pipeline_mode = #tpu.pipeline_mode<synchronous>, transform_indices = @transform_2, window_bounds = array<i64: 1, 32>}, {transform_indices = @transform_3, window_bounds = array<i64: 256, 32>}]} {
    %c0 = arith.constant 0 : index
    %c0_0 = arith.constant 0 : index
    %0 = vector.load %arg1[%c0, %c0_0] : memref<256x147xbf16, #tpu.memory_space<vmem>>, vector<256x147xbf16>
    %c0_1 = arith.constant 0 : index
    %c0_2 = arith.constant 0 : index
    %1 = vector.load %arg2[%c0_1, %c0_2] : memref<147x32xbf16, #tpu.memory_space<vmem>>, vector<147x32xbf16>
    %cst = arith.constant dense<0.000000e+00> : vector<256x32xf32>
    %2 = tpu.matmul %0, %1, %cst {dimension_numbers = #tpu.dot_dimension_numbers<[1], [0], [0], [1], [0, 0, 1, 1], [], []>} : vector<256x147xbf16>, vector<147x32xbf16>, vector<256x32xf32> -> vector<256x32xf32>
    %c0_3 = arith.constant 0 : index
    %c0_4 = arith.constant 0 : index
    %3 = vector.load %arg3[%c0_3, %c0_4] : memref<1x32xf32, #tpu.memory_space<vmem>>, vector<1x32xf32>
    %4 = vector.broadcast %3 : vector<1x32xf32> to vector<256x32xf32>
    %5 = arith.addf %2, %4 : vector<256x32xf32>
    %cst_5 = arith.constant 0.000000e+00 : f32
    %6 = vector.broadcast %cst_5 : f32 to vector<256x32xf32>
    %7 = arith.maximumf %5, %6 : vector<256x32xf32>
    %8 = arith.truncf %7 : vector<256x32xf32> to vector<256x32xbf16>
    %c0_6 = arith.constant 0 : index
    %c0_7 = arith.constant 0 : index
    %9 = vector.load %arg4[%c0_6, %c0_7] : memref<256x32xbf16, #tpu.memory_space<vmem>>, vector<256x32xbf16>
    tpu.vector_store %arg4[%c0_6, %c0_7], %8 {strides = array<i32>} : memref<256x32xbf16, #tpu.memory_space<vmem>>, vector<256x32xbf16>,
    return
  }
  func.func @transform_0(%arg0: i32) -> (i32, i32) {
    %c0_i32 = arith.constant 0 : i32
    %c0_i32_0 = arith.constant 0 : i32
    return %arg0, %c0_i32 : i32, i32
  }
  func.func @transform_1(%arg0: i32) -> (i32, i32) {
    %c0_i32 = arith.constant 0 : i32
    %c0_i32_0 = arith.constant 0 : i32
    %c0_i32_1 = arith.constant 0 : i32
    return %c0_i32, %c0_i32_0 : i32, i32
  }
  func.func @transform_2(%arg0: i32) -> (i32, i32) {
    %c0_i32 = arith.constant 0 : i32
    %c0_i32_0 = arith.constant 0 : i32
    %c0_i32_1 = arith.constant 0 : i32
    return %c0_i32, %c0_i32_0 : i32, i32
  }
  func.func @transform_3(%arg0: i32) -> (i32, i32) {
    %c0_i32 = arith.constant 0 : i32
    %c0_i32_0 = arith.constant 0 : i32
    return %arg0, %c0_i32 : i32, i32
  }
}

module attributes {stable_mosaic.version = 11 : i64} {
  func.func @gemm_relu_kernel(%arg0: i32, %arg1: memref<128x1568xbf16, #tpu.memory_space<vmem>>, %arg2: memref<1568x64xbf16, #tpu.memory_space<vmem>>, %arg3: memref<1x64xf32, #tpu.memory_space<vmem>>, %arg4: memref<128x64xbf16, #tpu.memory_space<vmem>>) attributes {dimension_semantics = [#tpu.dimension_semantics<parallel>], iteration_bounds = array<i64: 1>, scalar_prefetch = 0 : i64, scratch_operands = 0 : i64, tpu.core_type = #tpu.core_type<tc>, window_params = [{transform_indices = @transform_0, window_bounds = array<i64: 128, 1568>}, {pipeline_mode = #tpu.pipeline_mode<synchronous>, transform_indices = @transform_1, window_bounds = array<i64: 1568, 64>}, {pipeline_mode = #tpu.pipeline_mode<synchronous>, transform_indices = @transform_2, window_bounds = array<i64: 1, 64>}, {transform_indices = @transform_3, window_bounds = array<i64: 128, 64>}]} {
    %c0 = arith.constant 0 : index
    %c0_0 = arith.constant 0 : index
    %0 = vector.load %arg1[%c0, %c0_0] : memref<128x1568xbf16, #tpu.memory_space<vmem>>, vector<128x1568xbf16>
    %c0_1 = arith.constant 0 : index
    %c0_2 = arith.constant 0 : index
    %1 = vector.load %arg2[%c0_1, %c0_2] : memref<1568x64xbf16, #tpu.memory_space<vmem>>, vector<1568x64xbf16>
    %cst = arith.constant dense<0.000000e+00> : vector<128x64xf32>
    %2 = tpu.matmul %0, %1, %cst {dimension_numbers = #tpu.dot_dimension_numbers<[1], [0], [0], [1], [0, 0, 1, 1], [], []>} : vector<128x1568xbf16>, vector<1568x64xbf16>, vector<128x64xf32> -> vector<128x64xf32>
    %c0_3 = arith.constant 0 : index
    %c0_4 = arith.constant 0 : index
    %3 = vector.load %arg3[%c0_3, %c0_4] : memref<1x64xf32, #tpu.memory_space<vmem>>, vector<1x64xf32>
    %4 = vector.broadcast %3 : vector<1x64xf32> to vector<128x64xf32>
    %5 = arith.addf %2, %4 : vector<128x64xf32>
    %cst_5 = arith.constant 0.000000e+00 : f32
    %6 = vector.broadcast %cst_5 : f32 to vector<128x64xf32>
    %7 = arith.maximumf %5, %6 : vector<128x64xf32>
    %8 = arith.truncf %7 : vector<128x64xf32> to vector<128x64xbf16>
    %c0_6 = arith.constant 0 : index
    %c0_7 = arith.constant 0 : index
    %9 = vector.load %arg4[%c0_6, %c0_7] : memref<128x64xbf16, #tpu.memory_space<vmem>>, vector<128x64xbf16>
    tpu.vector_store %arg4[%c0_6, %c0_7], %8 {strides = array<i32>} : memref<128x64xbf16, #tpu.memory_space<vmem>>, vector<128x64xbf16>,
    return
  }
  func.func @transform_0(%arg0: i32) -> (i32, i32) {
    %c0_i32 = arith.constant 0 : i32
    %c0_i32_0 = arith.constant 0 : i32
    return %arg0, %c0_i32 : i32, i32
  }
  func.func @transform_1(%arg0: i32) -> (i32, i32) {
    %c0_i32 = arith.constant 0 : i32
    %c0_i32_0 = arith.constant 0 : i32
    %c0_i32_1 = arith.constant 0 : i32
    return %c0_i32, %c0_i32_0 : i32, i32
  }
  func.func @transform_2(%arg0: i32) -> (i32, i32) {
    %c0_i32 = arith.constant 0 : i32
    %c0_i32_0 = arith.constant 0 : i32
    %c0_i32_1 = arith.constant 0 : i32
    return %c0_i32, %c0_i32_0 : i32, i32
  }
  func.func @transform_3(%arg0: i32) -> (i32, i32) {
    %c0_i32 = arith.constant 0 : i32
    %c0_i32_0 = arith.constant 0 : i32
    return %arg0, %c0_i32 : i32, i32
  }
}

module attributes {stable_mosaic.version = 11 : i64} {
  func.func @gemm_relu_kernel(%arg0: i32, %arg1: memref<32x3136xbf16, #tpu.memory_space<vmem>>, %arg2: memref<3136x32xbf16, #tpu.memory_space<vmem>>, %arg3: memref<1x32xf32, #tpu.memory_space<vmem>>, %arg4: memref<32x32xf32, #tpu.memory_space<vmem>>) attributes {dimension_semantics = [#tpu.dimension_semantics<parallel>], iteration_bounds = array<i64: 1>, scalar_prefetch = 0 : i64, scratch_operands = 0 : i64, tpu.core_type = #tpu.core_type<tc>, window_params = [{transform_indices = @transform_0, window_bounds = array<i64: 32, 3136>}, {pipeline_mode = #tpu.pipeline_mode<synchronous>, transform_indices = @transform_1, window_bounds = array<i64: 3136, 32>}, {pipeline_mode = #tpu.pipeline_mode<synchronous>, transform_indices = @transform_2, window_bounds = array<i64: 1, 32>}, {transform_indices = @transform_3, window_bounds = array<i64: 32, 32>}]} {
    %c0 = arith.constant 0 : index
    %c0_0 = arith.constant 0 : index
    %0 = vector.load %arg1[%c0, %c0_0] : memref<32x3136xbf16, #tpu.memory_space<vmem>>, vector<32x3136xbf16>
    %c0_1 = arith.constant 0 : index
    %c0_2 = arith.constant 0 : index
    %1 = vector.load %arg2[%c0_1, %c0_2] : memref<3136x32xbf16, #tpu.memory_space<vmem>>, vector<3136x32xbf16>
    %cst = arith.constant dense<0.000000e+00> : vector<32x32xf32>
    %2 = tpu.matmul %0, %1, %cst {dimension_numbers = #tpu.dot_dimension_numbers<[1], [0], [0], [1], [0, 0, 1, 1], [], []>} : vector<32x3136xbf16>, vector<3136x32xbf16>, vector<32x32xf32> -> vector<32x32xf32>
    %c0_3 = arith.constant 0 : index
    %c0_4 = arith.constant 0 : index
    %3 = vector.load %arg3[%c0_3, %c0_4] : memref<1x32xf32, #tpu.memory_space<vmem>>, vector<1x32xf32>
    %4 = vector.broadcast %3 : vector<1x32xf32> to vector<32x32xf32>
    %5 = arith.addf %2, %4 : vector<32x32xf32>
    %cst_5 = arith.constant 0.000000e+00 : f32
    %6 = vector.broadcast %cst_5 : f32 to vector<32x32xf32>
    %7 = arith.maximumf %5, %6 : vector<32x32xf32>
    %c0_6 = arith.constant 0 : index
    %c0_7 = arith.constant 0 : index
    %8 = vector.load %arg4[%c0_6, %c0_7] : memref<32x32xf32, #tpu.memory_space<vmem>>, vector<32x32xf32>
    tpu.vector_store %arg4[%c0_6, %c0_7], %7 {strides = array<i32>} : memref<32x32xf32, #tpu.memory_space<vmem>>, vector<32x32xf32>,
    return
  }
  func.func @transform_0(%arg0: i32) -> (i32, i32) {
    %c0_i32 = arith.constant 0 : i32
    %c0_i32_0 = arith.constant 0 : i32
    return %arg0, %c0_i32 : i32, i32
  }
  func.func @transform_1(%arg0: i32) -> (i32, i32) {
    %c0_i32 = arith.constant 0 : i32
    %c0_i32_0 = arith.constant 0 : i32
    %c0_i32_1 = arith.constant 0 : i32
    return %c0_i32, %c0_i32_0 : i32, i32
  }
  func.func @transform_2(%arg0: i32) -> (i32, i32) {
    %c0_i32 = arith.constant 0 : i32
    %c0_i32_0 = arith.constant 0 : i32
    %c0_i32_1 = arith.constant 0 : i32
    return %c0_i32, %c0_i32_0 : i32, i32
  }
  func.func @transform_3(%arg0: i32) -> (i32, i32) {
    %c0_i32 = arith.constant 0 : i32
    %c0_i32_0 = arith.constant 0 : i32
    return %arg0, %c0_i32 : i32, i32
  }
}

module attributes {stable_mosaic.version = 11 : i64} {
  func.func @encoder_layer_kernel(%arg0: i32, %arg1: memref<1x16x32xf32, #tpu.memory_space<vmem>>, %arg2: memref<32x32xbf16, #tpu.memory_space<vmem>>, %arg3: memref<1x32xf32, #tpu.memory_space<vmem>>, %arg4: memref<32x32xbf16, #tpu.memory_space<vmem>>, %arg5: memref<1x32xf32, #tpu.memory_space<vmem>>, %arg6: memref<32x32xbf16, #tpu.memory_space<vmem>>, %arg7: memref<1x32xf32, #tpu.memory_space<vmem>>, %arg8: memref<4x8x32xbf16, #tpu.memory_space<vmem>>, %arg9: memref<1x32xf32, #tpu.memory_space<vmem>>, %arg10: memref<32x128xbf16, #tpu.memory_space<vmem>>, %arg11: memref<1x128xf32, #tpu.memory_space<vmem>>, %arg12: memref<128x32xbf16, #tpu.memory_space<vmem>>, %arg13: memref<1x32xf32, #tpu.memory_space<vmem>>, %arg14: memref<1x32xf32, #tpu.memory_space<vmem>>, %arg15: memref<1x32xf32, #tpu.memory_space<vmem>>, %arg16: memref<1x32xf32, #tpu.memory_space<vmem>>, %arg17: memref<1x32xf32, #tpu.memory_space<vmem>>, %arg18: memref<1x16x32xf32, #tpu.memory_space<vmem>>) attributes {dimension_semantics = [#tpu.dimension_semantics<parallel>], iteration_bounds = array<i64: 2>, scalar_prefetch = 0 : i64, scratch_operands = 0 : i64, tpu.core_type = #tpu.core_type<tc>, window_params = [{transform_indices = @transform_0, window_bounds = array<i64: 1, 16, 32>}, {pipeline_mode = #tpu.pipeline_mode<synchronous>, transform_indices = @transform_1, window_bounds = array<i64: 32, 32>}, {pipeline_mode = #tpu.pipeline_mode<synchronous>, transform_indices = @transform_2, window_bounds = array<i64: 1, 32>}, {pipeline_mode = #tpu.pipeline_mode<synchronous>, transform_indices = @transform_3, window_bounds = array<i64: 32, 32>}, {pipeline_mode = #tpu.pipeline_mode<synchronous>, transform_indices = @transform_4, window_bounds = array<i64: 1, 32>}, {pipeline_mode = #tpu.pipeline_mode<synchronous>, transform_indices = @transform_5, window_bounds = array<i64: 32, 32>}, {pipeline_mode = #tpu.pipeline_mode<synchronous>, transform_indices = @transform_6, window_bounds = array<i64: 1, 32>}, {pipeline_mode = #tpu.pipeline_mode<synchronous>, transform_indices = @transform_7, window_bounds = array<i64: 4, 8, 32>}, {pipeline_mode = #tpu.pipeline_mode<synchronous>, transform_indices = @transform_8, window_bounds = array<i64: 1, 32>}, {pipeline_mode = #tpu.pipeline_mode<synchronous>, transform_indices = @transform_9, window_bounds = array<i64: 32, 128>}, {pipeline_mode = #tpu.pipeline_mode<synchronous>, transform_indices = @transform_10, window_bounds = array<i64: 1, 128>}, {pipeline_mode = #tpu.pipeline_mode<synchronous>, transform_indices = @transform_11, window_bounds = array<i64: 128, 32>}, {pipeline_mode = #tpu.pipeline_mode<synchronous>, transform_indices = @transform_12, window_bounds = array<i64: 1, 32>}, {pipeline_mode = #tpu.pipeline_mode<synchronous>, transform_indices = @transform_13, window_bounds = array<i64: 1, 32>}, {pipeline_mode = #tpu.pipeline_mode<synchronous>, transform_indices = @transform_14, window_bounds = array<i64: 1, 32>}, {pipeline_mode = #tpu.pipeline_mode<synchronous>, transform_indices = @transform_15, window_bounds = array<i64: 1, 32>}, {pipeline_mode = #tpu.pipeline_mode<synchronous>, transform_indices = @transform_16, window_bounds = array<i64: 1, 32>}, {transform_indices = @transform_17, window_bounds = array<i64: 1, 16, 32>}]} {
    %c0 = arith.constant 0 : index
    %c0_0 = arith.constant 0 : index
    %c0_1 = arith.constant 0 : index
    %0 = vector.load %arg1[%c0, %c0_0, %c0_1] : memref<1x16x32xf32, #tpu.memory_space<vmem>>, vector<1x16x32xf32>
    %1 = vector.shape_cast %0 : vector<1x16x32xf32> to vector<16x32xf32>
    %2 = arith.truncf %1 : vector<16x32xf32> to vector<16x32xbf16>
    %c0_2 = arith.constant 0 : index
    %c0_3 = arith.constant 0 : index
    %3 = vector.load %arg2[%c0_2, %c0_3] : memref<32x32xbf16, #tpu.memory_space<vmem>>, vector<32x32xbf16>
    %cst = arith.constant dense<0.000000e+00> : vector<16x32xf32>
    %4 = tpu.matmul %2, %3, %cst {dimension_numbers = #tpu.dot_dimension_numbers<[1], [0], [0], [1], [0, 0, 1, 1], [], []>} : vector<16x32xbf16>, vector<32x32xbf16>, vector<16x32xf32> -> vector<16x32xf32>
    %c0_4 = arith.constant 0 : index
    %c0_5 = arith.constant 0 : index
    %5 = vector.load %arg3[%c0_4, %c0_5] : memref<1x32xf32, #tpu.memory_space<vmem>>, vector<1x32xf32>
    %6 = vector.broadcast %5 : vector<1x32xf32> to vector<16x32xf32>
    %7 = arith.addf %4, %6 : vector<16x32xf32>
    %8 = arith.truncf %7 : vector<16x32xf32> to vector<16x32xbf16>
    %c0_6 = arith.constant 0 : index
    %c0_7 = arith.constant 0 : index
    %9 = vector.load %arg4[%c0_6, %c0_7] : memref<32x32xbf16, #tpu.memory_space<vmem>>, vector<32x32xbf16>
    %cst_8 = arith.constant dense<0.000000e+00> : vector<16x32xf32>
    %10 = tpu.matmul %2, %9, %cst_8 {dimension_numbers = #tpu.dot_dimension_numbers<[1], [0], [0], [1], [0, 0, 1, 1], [], []>} : vector<16x32xbf16>, vector<32x32xbf16>, vector<16x32xf32> -> vector<16x32xf32>
    %c0_9 = arith.constant 0 : index
    %c0_10 = arith.constant 0 : index
    %11 = vector.load %arg5[%c0_9, %c0_10] : memref<1x32xf32, #tpu.memory_space<vmem>>, vector<1x32xf32>
    %12 = vector.broadcast %11 : vector<1x32xf32> to vector<16x32xf32>
    %13 = arith.addf %10, %12 : vector<16x32xf32>
    %14 = arith.truncf %13 : vector<16x32xf32> to vector<16x32xbf16>
    %c0_11 = arith.constant 0 : index
    %c0_12 = arith.constant 0 : index
    %15 = vector.load %arg6[%c0_11, %c0_12] : memref<32x32xbf16, #tpu.memory_space<vmem>>, vector<32x32xbf16>
    %cst_13 = arith.constant dense<0.000000e+00> : vector<16x32xf32>
    %16 = tpu.matmul %2, %15, %cst_13 {dimension_numbers = #tpu.dot_dimension_numbers<[1], [0], [0], [1], [0, 0, 1, 1], [], []>} : vector<16x32xbf16>, vector<32x32xbf16>, vector<16x32xf32> -> vector<16x32xf32>
    %c0_14 = arith.constant 0 : index
    %c0_15 = arith.constant 0 : index
    %17 = vector.load %arg7[%c0_14, %c0_15] : memref<1x32xf32, #tpu.memory_space<vmem>>, vector<1x32xf32>
    %18 = vector.broadcast %17 : vector<1x32xf32> to vector<16x32xf32>
    %19 = arith.addf %16, %18 : vector<16x32xf32>
    %20 = arith.truncf %19 : vector<16x32xf32> to vector<16x32xbf16>
    %cst_16 = arith.constant 0.000000e+00 : f32
    %21 = vector.broadcast %cst_16 : f32 to vector<16x32xf32>
    %22 = vector.extract_strided_slice %8 {offsets = [0, 0], sizes = [16, 8], strides = [1, 1]} : vector<16x32xbf16> to vector<16x8xbf16>
    %23 = vector.extract_strided_slice %14 {offsets = [0, 0], sizes = [16, 8], strides = [1, 1]} : vector<16x32xbf16> to vector<16x8xbf16>
    %24 = vector.extract_strided_slice %20 {offsets = [0, 0], sizes = [16, 8], strides = [1, 1]} : vector<16x32xbf16> to vector<16x8xbf16>
    %cst_17 = arith.constant dense<0.000000e+00> : vector<16x16xf32>
    %25 = tpu.matmul %22, %23, %cst_17 {dimension_numbers = #tpu.dot_dimension_numbers<[1], [1], [0], [0], [0, 0, 1, 0], [], []>} : vector<16x8xbf16>, vector<16x8xbf16>, vector<16x16xf32> -> vector<16x16xf32>
    %cst_18 = arith.constant dense<0xFF800000> : vector<16xf32>
    %26 = vector.multi_reduction <maximumf>, %25, %cst_18 [1] : vector<16x16xf32> to vector<16xf32>
    %27 = vector.shape_cast %26 : vector<16xf32> to vector<16x1xf32>
    %28 = vector.broadcast %27 : vector<16x1xf32> to vector<16x16xf32>
    %29 = arith.subf %25, %28 : vector<16x16xf32>
    %30 = math.exp %29 : vector<16x16xf32>
    %cst_19 = arith.constant dense<0.000000e+00> : vector<16xf32>
    %31 = vector.multi_reduction <add>, %30, %cst_19 [1] : vector<16x16xf32> to vector<16xf32>
    %32 = vector.shape_cast %31 : vector<16xf32> to vector<16x1xf32>
    %33 = tpu.reciprocal %32 {approx = true} : vector<16x1xf32> -> vector<16x1xf32>
    %34 = vector.broadcast %33 : vector<16x1xf32> to vector<16x16xf32>
    %35 = arith.mulf %30, %34 : vector<16x16xf32>
    %36 = arith.truncf %35 : vector<16x16xf32> to vector<16x16xbf16>
    %cst_20 = arith.constant dense<0.000000e+00> : vector<16x8xf32>
    %37 = tpu.matmul %36, %24, %cst_20 {dimension_numbers = #tpu.dot_dimension_numbers<[1], [0], [0], [1], [0, 0, 1, 1], [], []>} : vector<16x16xbf16>, vector<16x8xbf16>, vector<16x8xf32> -> vector<16x8xf32>
    %38 = arith.truncf %37 : vector<16x8xf32> to vector<16x8xbf16>
    %c0_21 = arith.constant 0 : index
    %c0_22 = arith.constant 0 : index
    %c0_23 = arith.constant 0 : index
    %39 = vector.load %arg8[%c0_21, %c0_22, %c0_23] : memref<4x8x32xbf16, #tpu.memory_space<vmem>>, vector<1x8x32xbf16>
    %40 = vector.shape_cast %39 : vector<1x8x32xbf16> to vector<8x32xbf16>
    %cst_24 = arith.constant dense<0.000000e+00> : vector<16x32xf32>
    %41 = tpu.matmul %38, %40, %cst_24 {dimension_numbers = #tpu.dot_dimension_numbers<[1], [0], [0], [1], [0, 0, 1, 1], [], []>} : vector<16x8xbf16>, vector<8x32xbf16>, vector<16x32xf32> -> vector<16x32xf32>
    %42 = arith.addf %21, %41 : vector<16x32xf32>
    %43 = vector.extract_strided_slice %8 {offsets = [0, 8], sizes = [16, 8], strides = [1, 1]} : vector<16x32xbf16> to vector<16x8xbf16>
    %44 = vector.extract_strided_slice %14 {offsets = [0, 8], sizes = [16, 8], strides = [1, 1]} : vector<16x32xbf16> to vector<16x8xbf16>
    %45 = vector.extract_strided_slice %20 {offsets = [0, 8], sizes = [16, 8], strides = [1, 1]} : vector<16x32xbf16> to vector<16x8xbf16>
    %cst_25 = arith.constant dense<0.000000e+00> : vector<16x16xf32>
    %46 = tpu.matmul %43, %44, %cst_25 {dimension_numbers = #tpu.dot_dimension_numbers<[1], [1], [0], [0], [0, 0, 1, 0], [], []>} : vector<16x8xbf16>, vector<16x8xbf16>, vector<16x16xf32> -> vector<16x16xf32>
    %cst_26 = arith.constant dense<0xFF800000> : vector<16xf32>
    %47 = vector.multi_reduction <maximumf>, %46, %cst_26 [1] : vector<16x16xf32> to vector<16xf32>
    %48 = vector.shape_cast %47 : vector<16xf32> to vector<16x1xf32>
    %49 = vector.broadcast %48 : vector<16x1xf32> to vector<16x16xf32>
    %50 = arith.subf %46, %49 : vector<16x16xf32>
    %51 = math.exp %50 : vector<16x16xf32>
    %cst_27 = arith.constant dense<0.000000e+00> : vector<16xf32>
    %52 = vector.multi_reduction <add>, %51, %cst_27 [1] : vector<16x16xf32> to vector<16xf32>
    %53 = vector.shape_cast %52 : vector<16xf32> to vector<16x1xf32>
    %54 = tpu.reciprocal %53 {approx = true} : vector<16x1xf32> -> vector<16x1xf32>
    %55 = vector.broadcast %54 : vector<16x1xf32> to vector<16x16xf32>
    %56 = arith.mulf %51, %55 : vector<16x16xf32>
    %57 = arith.truncf %56 : vector<16x16xf32> to vector<16x16xbf16>
    %cst_28 = arith.constant dense<0.000000e+00> : vector<16x8xf32>
    %58 = tpu.matmul %57, %45, %cst_28 {dimension_numbers = #tpu.dot_dimension_numbers<[1], [0], [0], [1], [0, 0, 1, 1], [], []>} : vector<16x16xbf16>, vector<16x8xbf16>, vector<16x8xf32> -> vector<16x8xf32>
    %59 = arith.truncf %58 : vector<16x8xf32> to vector<16x8xbf16>
    %c1 = arith.constant 1 : index
    %c0_29 = arith.constant 0 : index
    %c0_30 = arith.constant 0 : index
    %60 = vector.load %arg8[%c1, %c0_29, %c0_30] : memref<4x8x32xbf16, #tpu.memory_space<vmem>>, vector<1x8x32xbf16>
    %61 = vector.shape_cast %60 : vector<1x8x32xbf16> to vector<8x32xbf16>
    %cst_31 = arith.constant dense<0.000000e+00> : vector<16x32xf32>
    %62 = tpu.matmul %59, %61, %cst_31 {dimension_numbers = #tpu.dot_dimension_numbers<[1], [0], [0], [1], [0, 0, 1, 1], [], []>} : vector<16x8xbf16>, vector<8x32xbf16>, vector<16x32xf32> -> vector<16x32xf32>
    %63 = arith.addf %42, %62 : vector<16x32xf32>
    %64 = vector.extract_strided_slice %8 {offsets = [0, 16], sizes = [16, 8], strides = [1, 1]} : vector<16x32xbf16> to vector<16x8xbf16>
    %65 = vector.extract_strided_slice %14 {offsets = [0, 16], sizes = [16, 8], strides = [1, 1]} : vector<16x32xbf16> to vector<16x8xbf16>
    %66 = vector.extract_strided_slice %20 {offsets = [0, 16], sizes = [16, 8], strides = [1, 1]} : vector<16x32xbf16> to vector<16x8xbf16>
    %cst_32 = arith.constant dense<0.000000e+00> : vector<16x16xf32>
    %67 = tpu.matmul %64, %65, %cst_32 {dimension_numbers = #tpu.dot_dimension_numbers<[1], [1], [0], [0], [0, 0, 1, 0], [], []>} : vector<16x8xbf16>, vector<16x8xbf16>, vector<16x16xf32> -> vector<16x16xf32>
    %cst_33 = arith.constant dense<0xFF800000> : vector<16xf32>
    %68 = vector.multi_reduction <maximumf>, %67, %cst_33 [1] : vector<16x16xf32> to vector<16xf32>
    %69 = vector.shape_cast %68 : vector<16xf32> to vector<16x1xf32>
    %70 = vector.broadcast %69 : vector<16x1xf32> to vector<16x16xf32>
    %71 = arith.subf %67, %70 : vector<16x16xf32>
    %72 = math.exp %71 : vector<16x16xf32>
    %cst_34 = arith.constant dense<0.000000e+00> : vector<16xf32>
    %73 = vector.multi_reduction <add>, %72, %cst_34 [1] : vector<16x16xf32> to vector<16xf32>
    %74 = vector.shape_cast %73 : vector<16xf32> to vector<16x1xf32>
    %75 = tpu.reciprocal %74 {approx = true} : vector<16x1xf32> -> vector<16x1xf32>
    %76 = vector.broadcast %75 : vector<16x1xf32> to vector<16x16xf32>
    %77 = arith.mulf %72, %76 : vector<16x16xf32>
    %78 = arith.truncf %77 : vector<16x16xf32> to vector<16x16xbf16>
    %cst_35 = arith.constant dense<0.000000e+00> : vector<16x8xf32>
    %79 = tpu.matmul %78, %66, %cst_35 {dimension_numbers = #tpu.dot_dimension_numbers<[1], [0], [0], [1], [0, 0, 1, 1], [], []>} : vector<16x16xbf16>, vector<16x8xbf16>, vector<16x8xf32> -> vector<16x8xf32>
    %80 = arith.truncf %79 : vector<16x8xf32> to vector<16x8xbf16>
    %c2 = arith.constant 2 : index
    %c0_36 = arith.constant 0 : index
    %c0_37 = arith.constant 0 : index
    %81 = vector.load %arg8[%c2, %c0_36, %c0_37] : memref<4x8x32xbf16, #tpu.memory_space<vmem>>, vector<1x8x32xbf16>
    %82 = vector.shape_cast %81 : vector<1x8x32xbf16> to vector<8x32xbf16>
    %cst_38 = arith.constant dense<0.000000e+00> : vector<16x32xf32>
    %83 = tpu.matmul %80, %82, %cst_38 {dimension_numbers = #tpu.dot_dimension_numbers<[1], [0], [0], [1], [0, 0, 1, 1], [], []>} : vector<16x8xbf16>, vector<8x32xbf16>, vector<16x32xf32> -> vector<16x32xf32>
    %84 = arith.addf %63, %83 : vector<16x32xf32>
    %85 = vector.extract_strided_slice %8 {offsets = [0, 24], sizes = [16, 8], strides = [1, 1]} : vector<16x32xbf16> to vector<16x8xbf16>
    %86 = vector.extract_strided_slice %14 {offsets = [0, 24], sizes = [16, 8], strides = [1, 1]} : vector<16x32xbf16> to vector<16x8xbf16>
    %87 = vector.extract_strided_slice %20 {offsets = [0, 24], sizes = [16, 8], strides = [1, 1]} : vector<16x32xbf16> to vector<16x8xbf16>
    %cst_39 = arith.constant dense<0.000000e+00> : vector<16x16xf32>
    %88 = tpu.matmul %85, %86, %cst_39 {dimension_numbers = #tpu.dot_dimension_numbers<[1], [1], [0], [0], [0, 0, 1, 0], [], []>} : vector<16x8xbf16>, vector<16x8xbf16>, vector<16x16xf32> -> vector<16x16xf32>
    %cst_40 = arith.constant dense<0xFF800000> : vector<16xf32>
    %89 = vector.multi_reduction <maximumf>, %88, %cst_40 [1] : vector<16x16xf32> to vector<16xf32>
    %90 = vector.shape_cast %89 : vector<16xf32> to vector<16x1xf32>
    %91 = vector.broadcast %90 : vector<16x1xf32> to vector<16x16xf32>
    %92 = arith.subf %88, %91 : vector<16x16xf32>
    %93 = math.exp %92 : vector<16x16xf32>
    %cst_41 = arith.constant dense<0.000000e+00> : vector<16xf32>
    %94 = vector.multi_reduction <add>, %93, %cst_41 [1] : vector<16x16xf32> to vector<16xf32>
    %95 = vector.shape_cast %94 : vector<16xf32> to vector<16x1xf32>
    %96 = tpu.reciprocal %95 {approx = true} : vector<16x1xf32> -> vector<16x1xf32>
    %97 = vector.broadcast %96 : vector<16x1xf32> to vector<16x16xf32>
    %98 = arith.mulf %93, %97 : vector<16x16xf32>
    %99 = arith.truncf %98 : vector<16x16xf32> to vector<16x16xbf16>
    %cst_42 = arith.constant dense<0.000000e+00> : vector<16x8xf32>
    %100 = tpu.matmul %99, %87, %cst_42 {dimension_numbers = #tpu.dot_dimension_numbers<[1], [0], [0], [1], [0, 0, 1, 1], [], []>} : vector<16x16xbf16>, vector<16x8xbf16>, vector<16x8xf32> -> vector<16x8xf32>
    %101 = arith.truncf %100 : vector<16x8xf32> to vector<16x8xbf16>
    %c3 = arith.constant 3 : index
    %c0_43 = arith.constant 0 : index
    %c0_44 = arith.constant 0 : index
    %102 = vector.load %arg8[%c3, %c0_43, %c0_44] : memref<4x8x32xbf16, #tpu.memory_space<vmem>>, vector<1x8x32xbf16>
    %103 = vector.shape_cast %102 : vector<1x8x32xbf16> to vector<8x32xbf16>
    %cst_45 = arith.constant dense<0.000000e+00> : vector<16x32xf32>
    %104 = tpu.matmul %101, %103, %cst_45 {dimension_numbers = #tpu.dot_dimension_numbers<[1], [0], [0], [1], [0, 0, 1, 1], [], []>} : vector<16x8xbf16>, vector<8x32xbf16>, vector<16x32xf32> -> vector<16x32xf32>
    %105 = arith.addf %84, %104 : vector<16x32xf32>
    %c0_46 = arith.constant 0 : index
    %c0_47 = arith.constant 0 : index
    %106 = vector.load %arg9[%c0_46, %c0_47] : memref<1x32xf32, #tpu.memory_space<vmem>>, vector<1x32xf32>
    %107 = vector.broadcast %106 : vector<1x32xf32> to vector<16x32xf32>
    %108 = arith.addf %105, %107 : vector<16x32xf32>
    %109 = arith.addf %1, %108 : vector<16x32xf32>
    %c0_48 = arith.constant 0 : index
    %c0_49 = arith.constant 0 : index
    %110 = vector.load %arg14[%c0_48, %c0_49] : memref<1x32xf32, #tpu.memory_space<vmem>>, vector<1x32xf32>
    %c0_50 = arith.constant 0 : index
    %c0_51 = arith.constant 0 : index
    %111 = vector.load %arg15[%c0_50, %c0_51] : memref<1x32xf32, #tpu.memory_space<vmem>>, vector<1x32xf32>
    %cst_52 = arith.constant dense<0.000000e+00> : vector<16xf32>
    %112 = vector.multi_reduction <add>, %109, %cst_52 [1] : vector<16x32xf32> to vector<16xf32>
    %113 = vector.shape_cast %112 : vector<16xf32> to vector<16x1xf32>
    %cst_53 = arith.constant 3.200000e+01 : f32
    %114 = vector.broadcast %cst_53 : f32 to vector<16x1xf32>
    %115 = arith.divf %113, %114 : vector<16x1xf32>
    %116 = vector.broadcast %115 : vector<16x1xf32> to vector<16x32xf32>
    %117 = arith.subf %109, %116 : vector<16x32xf32>
    %118 = arith.mulf %117, %117 : vector<16x32xf32>
    %cst_54 = arith.constant dense<0.000000e+00> : vector<16xf32>
    %119 = vector.multi_reduction <add>, %118, %cst_54 [1] : vector<16x32xf32> to vector<16xf32>
    %120 = vector.shape_cast %119 : vector<16xf32> to vector<16x1xf32>
    %cst_55 = arith.constant 3.200000e+01 : f32
    %121 = vector.broadcast %cst_55 : f32 to vector<16x1xf32>
    %122 = arith.divf %120, %121 : vector<16x1xf32>
    %123 = vector.broadcast %115 : vector<16x1xf32> to vector<16x32xf32>
    %124 = arith.subf %109, %123 : vector<16x32xf32>
    %cst_56 = arith.constant 9.99999974E-6 : f32
    %125 = vector.broadcast %cst_56 : f32 to vector<16x1xf32>
    %126 = arith.addf %122, %125 : vector<16x1xf32>
    %127 = math.rsqrt %126 : vector<16x1xf32>
    %128 = vector.broadcast %127 : vector<16x1xf32> to vector<16x32xf32>
    %129 = arith.mulf %124, %128 : vector<16x32xf32>
    %130 = vector.broadcast %110 : vector<1x32xf32> to vector<16x32xf32>
    %131 = arith.mulf %129, %130 : vector<16x32xf32>
    %132 = vector.broadcast %111 : vector<1x32xf32> to vector<16x32xf32>
    %133 = arith.addf %131, %132 : vector<16x32xf32>
    %134 = arith.truncf %133 : vector<16x32xf32> to vector<16x32xbf16>
    %c0_57 = arith.constant 0 : index
    %c0_58 = arith.constant 0 : index
    %135 = vector.load %arg10[%c0_57, %c0_58] : memref<32x128xbf16, #tpu.memory_space<vmem>>, vector<32x128xbf16>
    %cst_59 = arith.constant dense<0.000000e+00> : vector<16x128xf32>
    %136 = tpu.matmul %134, %135, %cst_59 {dimension_numbers = #tpu.dot_dimension_numbers<[1], [0], [0], [1], [0, 0, 1, 1], [], []>} : vector<16x32xbf16>, vector<32x128xbf16>, vector<16x128xf32> -> vector<16x128xf32>
    %c0_60 = arith.constant 0 : index
    %c0_61 = arith.constant 0 : index
    %137 = vector.load %arg11[%c0_60, %c0_61] : memref<1x128xf32, #tpu.memory_space<vmem>>, vector<1x128xf32>
    %138 = vector.broadcast %137 : vector<1x128xf32> to vector<16x128xf32>
    %139 = arith.addf %136, %138 : vector<16x128xf32>
    %cst_62 = arith.constant 0.000000e+00 : f32
    %140 = vector.broadcast %cst_62 : f32 to vector<16x128xf32>
    %141 = arith.maximumf %139, %140 : vector<16x128xf32>
    %142 = arith.truncf %141 : vector<16x128xf32> to vector<16x128xbf16>
    %c0_63 = arith.constant 0 : index
    %c0_64 = arith.constant 0 : index
    %143 = vector.load %arg12[%c0_63, %c0_64] : memref<128x32xbf16, #tpu.memory_space<vmem>>, vector<128x32xbf16>
    %cst_65 = arith.constant dense<0.000000e+00> : vector<16x32xf32>
    %144 = tpu.matmul %142, %143, %cst_65 {dimension_numbers = #tpu.dot_dimension_numbers<[1], [0], [0], [1], [0, 0, 1, 1], [], []>} : vector<16x128xbf16>, vector<128x32xbf16>, vector<16x32xf32> -> vector<16x32xf32>
    %c0_66 = arith.constant 0 : index
    %c0_67 = arith.constant 0 : index
    %145 = vector.load %arg13[%c0_66, %c0_67] : memref<1x32xf32, #tpu.memory_space<vmem>>, vector<1x32xf32>
    %146 = vector.broadcast %145 : vector<1x32xf32> to vector<16x32xf32>
    %147 = arith.addf %144, %146 : vector<16x32xf32>
    %148 = arith.addf %133, %147 : vector<16x32xf32>
    %c0_68 = arith.constant 0 : index
    %c0_69 = arith.constant 0 : index
    %149 = vector.load %arg16[%c0_68, %c0_69] : memref<1x32xf32, #tpu.memory_space<vmem>>, vector<1x32xf32>
    %c0_70 = arith.constant 0 : index
    %c0_71 = arith.constant 0 : index
    %150 = vector.load %arg17[%c0_70, %c0_71] : memref<1x32xf32, #tpu.memory_space<vmem>>, vector<1x32xf32>
    %cst_72 = arith.constant dense<0.000000e+00> : vector<16xf32>
    %151 = vector.multi_reduction <add>, %148, %cst_72 [1] : vector<16x32xf32> to vector<16xf32>
    %152 = vector.shape_cast %151 : vector<16xf32> to vector<16x1xf32>
    %cst_73 = arith.constant 3.200000e+01 : f32
    %153 = vector.broadcast %cst_73 : f32 to vector<16x1xf32>
    %154 = arith.divf %152, %153 : vector<16x1xf32>
    %155 = vector.broadcast %154 : vector<16x1xf32> to vector<16x32xf32>
    %156 = arith.subf %148, %155 : vector<16x32xf32>
    %157 = arith.mulf %156, %156 : vector<16x32xf32>
    %cst_74 = arith.constant dense<0.000000e+00> : vector<16xf32>
    %158 = vector.multi_reduction <add>, %157, %cst_74 [1] : vector<16x32xf32> to vector<16xf32>
    %159 = vector.shape_cast %158 : vector<16xf32> to vector<16x1xf32>
    %cst_75 = arith.constant 3.200000e+01 : f32
    %160 = vector.broadcast %cst_75 : f32 to vector<16x1xf32>
    %161 = arith.divf %159, %160 : vector<16x1xf32>
    %162 = vector.broadcast %154 : vector<16x1xf32> to vector<16x32xf32>
    %163 = arith.subf %148, %162 : vector<16x32xf32>
    %cst_76 = arith.constant 9.99999974E-6 : f32
    %164 = vector.broadcast %cst_76 : f32 to vector<16x1xf32>
    %165 = arith.addf %161, %164 : vector<16x1xf32>
    %166 = math.rsqrt %165 : vector<16x1xf32>
    %167 = vector.broadcast %166 : vector<16x1xf32> to vector<16x32xf32>
    %168 = arith.mulf %163, %167 : vector<16x32xf32>
    %169 = vector.broadcast %149 : vector<1x32xf32> to vector<16x32xf32>
    %170 = arith.mulf %168, %169 : vector<16x32xf32>
    %171 = vector.broadcast %150 : vector<1x32xf32> to vector<16x32xf32>
    %172 = arith.addf %170, %171 : vector<16x32xf32>
    %c0_77 = arith.constant 0 : index
    %c0_78 = arith.constant 0 : index
    %c0_79 = arith.constant 0 : index
    %173 = vector.load %arg18[%c0_77, %c0_78, %c0_79] : memref<1x16x32xf32, #tpu.memory_space<vmem>>, vector<1x16x32xf32>
    %174 = vector.shape_cast %173 : vector<1x16x32xf32> to vector<16x32xf32>
    %175 = vector.shape_cast %172 : vector<16x32xf32> to vector<1x16x32xf32>
    tpu.vector_store %arg18[%c0_77, %c0_78, %c0_79], %175 {strides = array<i32>} : memref<1x16x32xf32, #tpu.memory_space<vmem>>, vector<1x16x32xf32>,
    return
  }
  func.func @transform_0(%arg0: i32) -> (i32, i32, i32) {
    %c0_i32 = arith.constant 0 : i32
    %c0_i32_0 = arith.constant 0 : i32
    %c0_i32_1 = arith.constant 0 : i32
    return %arg0, %c0_i32, %c0_i32_0 : i32, i32, i32
  }
  func.func @transform_1(%arg0: i32) -> (i32, i32) {
    %c0_i32 = arith.constant 0 : i32
    %c0_i32_0 = arith.constant 0 : i32
    %c0_i32_1 = arith.constant 0 : i32
    return %c0_i32, %c0_i32_0 : i32, i32
  }
  func.func @transform_2(%arg0: i32) -> (i32, i32) {
    %c0_i32 = arith.constant 0 : i32
    %c0_i32_0 = arith.constant 0 : i32
    %c0_i32_1 = arith.constant 0 : i32
    return %c0_i32, %c0_i32_0 : i32, i32
  }
  func.func @transform_3(%arg0: i32) -> (i32, i32) {
    %c0_i32 = arith.constant 0 : i32
    %c0_i32_0 = arith.constant 0 : i32
    %c0_i32_1 = arith.constant 0 : i32
    return %c0_i32, %c0_i32_0 : i32, i32
  }
  func.func @transform_4(%arg0: i32) -> (i32, i32) {
    %c0_i32 = arith.constant 0 : i32
    %c0_i32_0 = arith.constant 0 : i32
    %c0_i32_1 = arith.constant 0 : i32
    return %c0_i32, %c0_i32_0 : i32, i32
  }
  func.func @transform_5(%arg0: i32) -> (i32, i32) {
    %c0_i32 = arith.constant 0 : i32
    %c0_i32_0 = arith.constant 0 : i32
    %c0_i32_1 = arith.constant 0 : i32
    return %c0_i32, %c0_i32_0 : i32, i32
  }
  func.func @transform_6(%arg0: i32) -> (i32, i32) {
    %c0_i32 = arith.constant 0 : i32
    %c0_i32_0 = arith.constant 0 : i32
    %c0_i32_1 = arith.constant 0 : i32
    return %c0_i32, %c0_i32_0 : i32, i32
  }
  func.func @transform_7(%arg0: i32) -> (i32, i32, i32) {
    %c0_i32 = arith.constant 0 : i32
    %c0_i32_0 = arith.constant 0 : i32
    %c0_i32_1 = arith.constant 0 : i32
    %c0_i32_2 = arith.constant 0 : i32
    return %c0_i32, %c0_i32_0, %c0_i32_1 : i32, i32, i32
  }
  func.func @transform_8(%arg0: i32) -> (i32, i32) {
    %c0_i32 = arith.constant 0 : i32
    %c0_i32_0 = arith.constant 0 : i32
    %c0_i32_1 = arith.constant 0 : i32
    return %c0_i32, %c0_i32_0 : i32, i32
  }
  func.func @transform_9(%arg0: i32) -> (i32, i32) {
    %c0_i32 = arith.constant 0 : i32
    %c0_i32_0 = arith.constant 0 : i32
    %c0_i32_1 = arith.constant 0 : i32
    return %c0_i32, %c0_i32_0 : i32, i32
  }
  func.func @transform_10(%arg0: i32) -> (i32, i32) {
    %c0_i32 = arith.constant 0 : i32
    %c0_i32_0 = arith.constant 0 : i32
    %c0_i32_1 = arith.constant 0 : i32
    return %c0_i32, %c0_i32_0 : i32, i32
  }
  func.func @transform_11(%arg0: i32) -> (i32, i32) {
    %c0_i32 = arith.constant 0 : i32
    %c0_i32_0 = arith.constant 0 : i32
    %c0_i32_1 = arith.constant 0 : i32
    return %c0_i32, %c0_i32_0 : i32, i32
  }
  func.func @transform_12(%arg0: i32) -> (i32, i32) {
    %c0_i32 = arith.constant 0 : i32
    %c0_i32_0 = arith.constant 0 : i32
    %c0_i32_1 = arith.constant 0 : i32
    return %c0_i32, %c0_i32_0 : i32, i32
  }
  func.func @transform_13(%arg0: i32) -> (i32, i32) {
    %c0_i32 = arith.constant 0 : i32
    %c0_i32_0 = arith.constant 0 : i32
    %c0_i32_1 = arith.constant 0 : i32
    return %c0_i32, %c0_i32_0 : i32, i32
  }
  func.func @transform_14(%arg0: i32) -> (i32, i32) {
    %c0_i32 = arith.constant 0 : i32
    %c0_i32_0 = arith.constant 0 : i32
    %c0_i32_1 = arith.constant 0 : i32
    return %c0_i32, %c0_i32_0 : i32, i32
  }
  func.func @transform_15(%arg0: i32) -> (i32, i32) {
    %c0_i32 = arith.constant 0 : i32
    %c0_i32_0 = arith.constant 0 : i32
    %c0_i32_1 = arith.constant 0 : i32
    return %c0_i32, %c0_i32_0 : i32, i32
  }
  func.func @transform_16(%arg0: i32) -> (i32, i32) {
    %c0_i32 = arith.constant 0 : i32
    %c0_i32_0 = arith.constant 0 : i32
    %c0_i32_1 = arith.constant 0 : i32
    return %c0_i32, %c0_i32_0 : i32, i32
  }
  func.func @transform_17(%arg0: i32) -> (i32, i32, i32) {
    %c0_i32 = arith.constant 0 : i32
    %c0_i32_0 = arith.constant 0 : i32
    %c0_i32_1 = arith.constant 0 : i32
    return %arg0, %c0_i32, %c0_i32_0 : i32, i32, i32
  }
}

module attributes {stable_mosaic.version = 11 : i64} {
  func.func @encoder_layer_kernel(%arg0: i32, %arg1: memref<1x16x32xf32, #tpu.memory_space<vmem>>, %arg2: memref<16x32xf32, #tpu.memory_space<vmem>>, %arg3: memref<32x32xbf16, #tpu.memory_space<vmem>>, %arg4: memref<1x32xf32, #tpu.memory_space<vmem>>, %arg5: memref<32x32xbf16, #tpu.memory_space<vmem>>, %arg6: memref<1x32xf32, #tpu.memory_space<vmem>>, %arg7: memref<32x32xbf16, #tpu.memory_space<vmem>>, %arg8: memref<1x32xf32, #tpu.memory_space<vmem>>, %arg9: memref<4x8x32xbf16, #tpu.memory_space<vmem>>, %arg10: memref<1x32xf32, #tpu.memory_space<vmem>>, %arg11: memref<32x128xbf16, #tpu.memory_space<vmem>>, %arg12: memref<1x128xf32, #tpu.memory_space<vmem>>, %arg13: memref<128x32xbf16, #tpu.memory_space<vmem>>, %arg14: memref<1x32xf32, #tpu.memory_space<vmem>>, %arg15: memref<1x32xf32, #tpu.memory_space<vmem>>, %arg16: memref<1x32xf32, #tpu.memory_space<vmem>>, %arg17: memref<1x32xf32, #tpu.memory_space<vmem>>, %arg18: memref<1x32xf32, #tpu.memory_space<vmem>>, %arg19: memref<1x16x32xf32, #tpu.memory_space<vmem>>) attributes {dimension_semantics = [#tpu.dimension_semantics<parallel>], iteration_bounds = array<i64: 2>, scalar_prefetch = 0 : i64, scratch_operands = 0 : i64, tpu.core_type = #tpu.core_type<tc>, window_params = [{transform_indices = @transform_0, window_bounds = array<i64: 1, 16, 32>}, {pipeline_mode = #tpu.pipeline_mode<synchronous>, transform_indices = @transform_1, window_bounds = array<i64: 16, 32>}, {pipeline_mode = #tpu.pipeline_mode<synchronous>, transform_indices = @transform_2, window_bounds = array<i64: 32, 32>}, {pipeline_mode = #tpu.pipeline_mode<synchronous>, transform_indices = @transform_3, window_bounds = array<i64: 1, 32>}, {pipeline_mode = #tpu.pipeline_mode<synchronous>, transform_indices = @transform_4, window_bounds = array<i64: 32, 32>}, {pipeline_mode = #tpu.pipeline_mode<synchronous>, transform_indices = @transform_5, window_bounds = array<i64: 1, 32>}, {pipeline_mode = #tpu.pipeline_mode<synchronous>, transform_indices = @transform_6, window_bounds = array<i64: 32, 32>}, {pipeline_mode = #tpu.pipeline_mode<synchronous>, transform_indices = @transform_7, window_bounds = array<i64: 1, 32>}, {pipeline_mode = #tpu.pipeline_mode<synchronous>, transform_indices = @transform_8, window_bounds = array<i64: 4, 8, 32>}, {pipeline_mode = #tpu.pipeline_mode<synchronous>, transform_indices = @transform_9, window_bounds = array<i64: 1, 32>}, {pipeline_mode = #tpu.pipeline_mode<synchronous>, transform_indices = @transform_10, window_bounds = array<i64: 32, 128>}, {pipeline_mode = #tpu.pipeline_mode<synchronous>, transform_indices = @transform_11, window_bounds = array<i64: 1, 128>}, {pipeline_mode = #tpu.pipeline_mode<synchronous>, transform_indices = @transform_12, window_bounds = array<i64: 128, 32>}, {pipeline_mode = #tpu.pipeline_mode<synchronous>, transform_indices = @transform_13, window_bounds = array<i64: 1, 32>}, {pipeline_mode = #tpu.pipeline_mode<synchronous>, transform_indices = @transform_14, window_bounds = array<i64: 1, 32>}, {pipeline_mode = #tpu.pipeline_mode<synchronous>, transform_indices = @transform_15, window_bounds = array<i64: 1, 32>}, {pipeline_mode = #tpu.pipeline_mode<synchronous>, transform_indices = @transform_16, window_bounds = array<i64: 1, 32>}, {pipeline_mode = #tpu.pipeline_mode<synchronous>, transform_indices = @transform_17, window_bounds = array<i64: 1, 32>}, {transform_indices = @transform_18, window_bounds = array<i64: 1, 16, 32>}]} {
    %c0 = arith.constant 0 : index
    %c0_0 = arith.constant 0 : index
    %c0_1 = arith.constant 0 : index
    %0 = vector.load %arg1[%c0, %c0_0, %c0_1] : memref<1x16x32xf32, #tpu.memory_space<vmem>>, vector<1x16x32xf32>
    %1 = vector.shape_cast %0 : vector<1x16x32xf32> to vector<16x32xf32>
    %c0_2 = arith.constant 0 : index
    %c0_3 = arith.constant 0 : index
    %2 = vector.load %arg2[%c0_2, %c0_3] : memref<16x32xf32, #tpu.memory_space<vmem>>, vector<16x32xf32>
    %3 = arith.addf %1, %2 : vector<16x32xf32>
    %4 = arith.truncf %3 : vector<16x32xf32> to vector<16x32xbf16>
    %c0_4 = arith.constant 0 : index
    %c0_5 = arith.constant 0 : index
    %5 = vector.load %arg3[%c0_4, %c0_5] : memref<32x32xbf16, #tpu.memory_space<vmem>>, vector<32x32xbf16>
    %cst = arith.constant dense<0.000000e+00> : vector<16x32xf32>
    %6 = tpu.matmul %4, %5, %cst {dimension_numbers = #tpu.dot_dimension_numbers<[1], [0], [0], [1], [0, 0, 1, 1], [], []>} : vector<16x32xbf16>, vector<32x32xbf16>, vector<16x32xf32> -> vector<16x32xf32>
    %c0_6 = arith.constant 0 : index
    %c0_7 = arith.constant 0 : index
    %7 = vector.load %arg4[%c0_6, %c0_7] : memref<1x32xf32, #tpu.memory_space<vmem>>, vector<1x32xf32>
    %8 = vector.broadcast %7 : vector<1x32xf32> to vector<16x32xf32>
    %9 = arith.addf %6, %8 : vector<16x32xf32>
    %10 = arith.truncf %9 : vector<16x32xf32> to vector<16x32xbf16>
    %c0_8 = arith.constant 0 : index
    %c0_9 = arith.constant 0 : index
    %11 = vector.load %arg5[%c0_8, %c0_9] : memref<32x32xbf16, #tpu.memory_space<vmem>>, vector<32x32xbf16>
    %cst_10 = arith.constant dense<0.000000e+00> : vector<16x32xf32>
    %12 = tpu.matmul %4, %11, %cst_10 {dimension_numbers = #tpu.dot_dimension_numbers<[1], [0], [0], [1], [0, 0, 1, 1], [], []>} : vector<16x32xbf16>, vector<32x32xbf16>, vector<16x32xf32> -> vector<16x32xf32>
    %c0_11 = arith.constant 0 : index
    %c0_12 = arith.constant 0 : index
    %13 = vector.load %arg6[%c0_11, %c0_12] : memref<1x32xf32, #tpu.memory_space<vmem>>, vector<1x32xf32>
    %14 = vector.broadcast %13 : vector<1x32xf32> to vector<16x32xf32>
    %15 = arith.addf %12, %14 : vector<16x32xf32>
    %16 = arith.truncf %15 : vector<16x32xf32> to vector<16x32xbf16>
    %c0_13 = arith.constant 0 : index
    %c0_14 = arith.constant 0 : index
    %17 = vector.load %arg7[%c0_13, %c0_14] : memref<32x32xbf16, #tpu.memory_space<vmem>>, vector<32x32xbf16>
    %cst_15 = arith.constant dense<0.000000e+00> : vector<16x32xf32>
    %18 = tpu.matmul %4, %17, %cst_15 {dimension_numbers = #tpu.dot_dimension_numbers<[1], [0], [0], [1], [0, 0, 1, 1], [], []>} : vector<16x32xbf16>, vector<32x32xbf16>, vector<16x32xf32> -> vector<16x32xf32>
    %c0_16 = arith.constant 0 : index
    %c0_17 = arith.constant 0 : index
    %19 = vector.load %arg8[%c0_16, %c0_17] : memref<1x32xf32, #tpu.memory_space<vmem>>, vector<1x32xf32>
    %20 = vector.broadcast %19 : vector<1x32xf32> to vector<16x32xf32>
    %21 = arith.addf %18, %20 : vector<16x32xf32>
    %22 = arith.truncf %21 : vector<16x32xf32> to vector<16x32xbf16>
    %cst_18 = arith.constant 0.000000e+00 : f32
    %23 = vector.broadcast %cst_18 : f32 to vector<16x32xf32>
    %24 = vector.extract_strided_slice %10 {offsets = [0, 0], sizes = [16, 8], strides = [1, 1]} : vector<16x32xbf16> to vector<16x8xbf16>
    %25 = vector.extract_strided_slice %16 {offsets = [0, 0], sizes = [16, 8], strides = [1, 1]} : vector<16x32xbf16> to vector<16x8xbf16>
    %26 = vector.extract_strided_slice %22 {offsets = [0, 0], sizes = [16, 8], strides = [1, 1]} : vector<16x32xbf16> to vector<16x8xbf16>
    %cst_19 = arith.constant dense<0.000000e+00> : vector<16x16xf32>
    %27 = tpu.matmul %24, %25, %cst_19 {dimension_numbers = #tpu.dot_dimension_numbers<[1], [1], [0], [0], [0, 0, 1, 0], [], []>} : vector<16x8xbf16>, vector<16x8xbf16>, vector<16x16xf32> -> vector<16x16xf32>
    %cst_20 = arith.constant dense<0xFF800000> : vector<16xf32>
    %28 = vector.multi_reduction <maximumf>, %27, %cst_20 [1] : vector<16x16xf32> to vector<16xf32>
    %29 = vector.shape_cast %28 : vector<16xf32> to vector<16x1xf32>
    %30 = vector.broadcast %29 : vector<16x1xf32> to vector<16x16xf32>
    %31 = arith.subf %27, %30 : vector<16x16xf32>
    %32 = math.exp %31 : vector<16x16xf32>
    %cst_21 = arith.constant dense<0.000000e+00> : vector<16xf32>
    %33 = vector.multi_reduction <add>, %32, %cst_21 [1] : vector<16x16xf32> to vector<16xf32>
    %34 = vector.shape_cast %33 : vector<16xf32> to vector<16x1xf32>
    %35 = tpu.reciprocal %34 {approx = true} : vector<16x1xf32> -> vector<16x1xf32>
    %36 = vector.broadcast %35 : vector<16x1xf32> to vector<16x16xf32>
    %37 = arith.mulf %32, %36 : vector<16x16xf32>
    %38 = arith.truncf %37 : vector<16x16xf32> to vector<16x16xbf16>
    %cst_22 = arith.constant dense<0.000000e+00> : vector<16x8xf32>
    %39 = tpu.matmul %38, %26, %cst_22 {dimension_numbers = #tpu.dot_dimension_numbers<[1], [0], [0], [1], [0, 0, 1, 1], [], []>} : vector<16x16xbf16>, vector<16x8xbf16>, vector<16x8xf32> -> vector<16x8xf32>
    %40 = arith.truncf %39 : vector<16x8xf32> to vector<16x8xbf16>
    %c0_23 = arith.constant 0 : index
    %c0_24 = arith.constant 0 : index
    %c0_25 = arith.constant 0 : index
    %41 = vector.load %arg9[%c0_23, %c0_24, %c0_25] : memref<4x8x32xbf16, #tpu.memory_space<vmem>>, vector<1x8x32xbf16>
    %42 = vector.shape_cast %41 : vector<1x8x32xbf16> to vector<8x32xbf16>
    %cst_26 = arith.constant dense<0.000000e+00> : vector<16x32xf32>
    %43 = tpu.matmul %40, %42, %cst_26 {dimension_numbers = #tpu.dot_dimension_numbers<[1], [0], [0], [1], [0, 0, 1, 1], [], []>} : vector<16x8xbf16>, vector<8x32xbf16>, vector<16x32xf32> -> vector<16x32xf32>
    %44 = arith.addf %23, %43 : vector<16x32xf32>
    %45 = vector.extract_strided_slice %10 {offsets = [0, 8], sizes = [16, 8], strides = [1, 1]} : vector<16x32xbf16> to vector<16x8xbf16>
    %46 = vector.extract_strided_slice %16 {offsets = [0, 8], sizes = [16, 8], strides = [1, 1]} : vector<16x32xbf16> to vector<16x8xbf16>
    %47 = vector.extract_strided_slice %22 {offsets = [0, 8], sizes = [16, 8], strides = [1, 1]} : vector<16x32xbf16> to vector<16x8xbf16>
    %cst_27 = arith.constant dense<0.000000e+00> : vector<16x16xf32>
    %48 = tpu.matmul %45, %46, %cst_27 {dimension_numbers = #tpu.dot_dimension_numbers<[1], [1], [0], [0], [0, 0, 1, 0], [], []>} : vector<16x8xbf16>, vector<16x8xbf16>, vector<16x16xf32> -> vector<16x16xf32>
    %cst_28 = arith.constant dense<0xFF800000> : vector<16xf32>
    %49 = vector.multi_reduction <maximumf>, %48, %cst_28 [1] : vector<16x16xf32> to vector<16xf32>
    %50 = vector.shape_cast %49 : vector<16xf32> to vector<16x1xf32>
    %51 = vector.broadcast %50 : vector<16x1xf32> to vector<16x16xf32>
    %52 = arith.subf %48, %51 : vector<16x16xf32>
    %53 = math.exp %52 : vector<16x16xf32>
    %cst_29 = arith.constant dense<0.000000e+00> : vector<16xf32>
    %54 = vector.multi_reduction <add>, %53, %cst_29 [1] : vector<16x16xf32> to vector<16xf32>
    %55 = vector.shape_cast %54 : vector<16xf32> to vector<16x1xf32>
    %56 = tpu.reciprocal %55 {approx = true} : vector<16x1xf32> -> vector<16x1xf32>
    %57 = vector.broadcast %56 : vector<16x1xf32> to vector<16x16xf32>
    %58 = arith.mulf %53, %57 : vector<16x16xf32>
    %59 = arith.truncf %58 : vector<16x16xf32> to vector<16x16xbf16>
    %cst_30 = arith.constant dense<0.000000e+00> : vector<16x8xf32>
    %60 = tpu.matmul %59, %47, %cst_30 {dimension_numbers = #tpu.dot_dimension_numbers<[1], [0], [0], [1], [0, 0, 1, 1], [], []>} : vector<16x16xbf16>, vector<16x8xbf16>, vector<16x8xf32> -> vector<16x8xf32>
    %61 = arith.truncf %60 : vector<16x8xf32> to vector<16x8xbf16>
    %c1 = arith.constant 1 : index
    %c0_31 = arith.constant 0 : index
    %c0_32 = arith.constant 0 : index
    %62 = vector.load %arg9[%c1, %c0_31, %c0_32] : memref<4x8x32xbf16, #tpu.memory_space<vmem>>, vector<1x8x32xbf16>
    %63 = vector.shape_cast %62 : vector<1x8x32xbf16> to vector<8x32xbf16>
    %cst_33 = arith.constant dense<0.000000e+00> : vector<16x32xf32>
    %64 = tpu.matmul %61, %63, %cst_33 {dimension_numbers = #tpu.dot_dimension_numbers<[1], [0], [0], [1], [0, 0, 1, 1], [], []>} : vector<16x8xbf16>, vector<8x32xbf16>, vector<16x32xf32> -> vector<16x32xf32>
    %65 = arith.addf %44, %64 : vector<16x32xf32>
    %66 = vector.extract_strided_slice %10 {offsets = [0, 16], sizes = [16, 8], strides = [1, 1]} : vector<16x32xbf16> to vector<16x8xbf16>
    %67 = vector.extract_strided_slice %16 {offsets = [0, 16], sizes = [16, 8], strides = [1, 1]} : vector<16x32xbf16> to vector<16x8xbf16>
    %68 = vector.extract_strided_slice %22 {offsets = [0, 16], sizes = [16, 8], strides = [1, 1]} : vector<16x32xbf16> to vector<16x8xbf16>
    %cst_34 = arith.constant dense<0.000000e+00> : vector<16x16xf32>
    %69 = tpu.matmul %66, %67, %cst_34 {dimension_numbers = #tpu.dot_dimension_numbers<[1], [1], [0], [0], [0, 0, 1, 0], [], []>} : vector<16x8xbf16>, vector<16x8xbf16>, vector<16x16xf32> -> vector<16x16xf32>
    %cst_35 = arith.constant dense<0xFF800000> : vector<16xf32>
    %70 = vector.multi_reduction <maximumf>, %69, %cst_35 [1] : vector<16x16xf32> to vector<16xf32>
    %71 = vector.shape_cast %70 : vector<16xf32> to vector<16x1xf32>
    %72 = vector.broadcast %71 : vector<16x1xf32> to vector<16x16xf32>
    %73 = arith.subf %69, %72 : vector<16x16xf32>
    %74 = math.exp %73 : vector<16x16xf32>
    %cst_36 = arith.constant dense<0.000000e+00> : vector<16xf32>
    %75 = vector.multi_reduction <add>, %74, %cst_36 [1] : vector<16x16xf32> to vector<16xf32>
    %76 = vector.shape_cast %75 : vector<16xf32> to vector<16x1xf32>
    %77 = tpu.reciprocal %76 {approx = true} : vector<16x1xf32> -> vector<16x1xf32>
    %78 = vector.broadcast %77 : vector<16x1xf32> to vector<16x16xf32>
    %79 = arith.mulf %74, %78 : vector<16x16xf32>
    %80 = arith.truncf %79 : vector<16x16xf32> to vector<16x16xbf16>
    %cst_37 = arith.constant dense<0.000000e+00> : vector<16x8xf32>
    %81 = tpu.matmul %80, %68, %cst_37 {dimension_numbers = #tpu.dot_dimension_numbers<[1], [0], [0], [1], [0, 0, 1, 1], [], []>} : vector<16x16xbf16>, vector<16x8xbf16>, vector<16x8xf32> -> vector<16x8xf32>
    %82 = arith.truncf %81 : vector<16x8xf32> to vector<16x8xbf16>
    %c2 = arith.constant 2 : index
    %c0_38 = arith.constant 0 : index
    %c0_39 = arith.constant 0 : index
    %83 = vector.load %arg9[%c2, %c0_38, %c0_39] : memref<4x8x32xbf16, #tpu.memory_space<vmem>>, vector<1x8x32xbf16>
    %84 = vector.shape_cast %83 : vector<1x8x32xbf16> to vector<8x32xbf16>
    %cst_40 = arith.constant dense<0.000000e+00> : vector<16x32xf32>
    %85 = tpu.matmul %82, %84, %cst_40 {dimension_numbers = #tpu.dot_dimension_numbers<[1], [0], [0], [1], [0, 0, 1, 1], [], []>} : vector<16x8xbf16>, vector<8x32xbf16>, vector<16x32xf32> -> vector<16x32xf32>
    %86 = arith.addf %65, %85 : vector<16x32xf32>
    %87 = vector.extract_strided_slice %10 {offsets = [0, 24], sizes = [16, 8], strides = [1, 1]} : vector<16x32xbf16> to vector<16x8xbf16>
    %88 = vector.extract_strided_slice %16 {offsets = [0, 24], sizes = [16, 8], strides = [1, 1]} : vector<16x32xbf16> to vector<16x8xbf16>
    %89 = vector.extract_strided_slice %22 {offsets = [0, 24], sizes = [16, 8], strides = [1, 1]} : vector<16x32xbf16> to vector<16x8xbf16>
    %cst_41 = arith.constant dense<0.000000e+00> : vector<16x16xf32>
    %90 = tpu.matmul %87, %88, %cst_41 {dimension_numbers = #tpu.dot_dimension_numbers<[1], [1], [0], [0], [0, 0, 1, 0], [], []>} : vector<16x8xbf16>, vector<16x8xbf16>, vector<16x16xf32> -> vector<16x16xf32>
    %cst_42 = arith.constant dense<0xFF800000> : vector<16xf32>
    %91 = vector.multi_reduction <maximumf>, %90, %cst_42 [1] : vector<16x16xf32> to vector<16xf32>
    %92 = vector.shape_cast %91 : vector<16xf32> to vector<16x1xf32>
    %93 = vector.broadcast %92 : vector<16x1xf32> to vector<16x16xf32>
    %94 = arith.subf %90, %93 : vector<16x16xf32>
    %95 = math.exp %94 : vector<16x16xf32>
    %cst_43 = arith.constant dense<0.000000e+00> : vector<16xf32>
    %96 = vector.multi_reduction <add>, %95, %cst_43 [1] : vector<16x16xf32> to vector<16xf32>
    %97 = vector.shape_cast %96 : vector<16xf32> to vector<16x1xf32>
    %98 = tpu.reciprocal %97 {approx = true} : vector<16x1xf32> -> vector<16x1xf32>
    %99 = vector.broadcast %98 : vector<16x1xf32> to vector<16x16xf32>
    %100 = arith.mulf %95, %99 : vector<16x16xf32>
    %101 = arith.truncf %100 : vector<16x16xf32> to vector<16x16xbf16>
    %cst_44 = arith.constant dense<0.000000e+00> : vector<16x8xf32>
    %102 = tpu.matmul %101, %89, %cst_44 {dimension_numbers = #tpu.dot_dimension_numbers<[1], [0], [0], [1], [0, 0, 1, 1], [], []>} : vector<16x16xbf16>, vector<16x8xbf16>, vector<16x8xf32> -> vector<16x8xf32>
    %103 = arith.truncf %102 : vector<16x8xf32> to vector<16x8xbf16>
    %c3 = arith.constant 3 : index
    %c0_45 = arith.constant 0 : index
    %c0_46 = arith.constant 0 : index
    %104 = vector.load %arg9[%c3, %c0_45, %c0_46] : memref<4x8x32xbf16, #tpu.memory_space<vmem>>, vector<1x8x32xbf16>
    %105 = vector.shape_cast %104 : vector<1x8x32xbf16> to vector<8x32xbf16>
    %cst_47 = arith.constant dense<0.000000e+00> : vector<16x32xf32>
    %106 = tpu.matmul %103, %105, %cst_47 {dimension_numbers = #tpu.dot_dimension_numbers<[1], [0], [0], [1], [0, 0, 1, 1], [], []>} : vector<16x8xbf16>, vector<8x32xbf16>, vector<16x32xf32> -> vector<16x32xf32>
    %107 = arith.addf %86, %106 : vector<16x32xf32>
    %c0_48 = arith.constant 0 : index
    %c0_49 = arith.constant 0 : index
    %108 = vector.load %arg10[%c0_48, %c0_49] : memref<1x32xf32, #tpu.memory_space<vmem>>, vector<1x32xf32>
    %109 = vector.broadcast %108 : vector<1x32xf32> to vector<16x32xf32>
    %110 = arith.addf %107, %109 : vector<16x32xf32>
    %111 = arith.addf %3, %110 : vector<16x32xf32>
    %c0_50 = arith.constant 0 : index
    %c0_51 = arith.constant 0 : index
    %112 = vector.load %arg15[%c0_50, %c0_51] : memref<1x32xf32, #tpu.memory_space<vmem>>, vector<1x32xf32>
    %c0_52 = arith.constant 0 : index
    %c0_53 = arith.constant 0 : index
    %113 = vector.load %arg16[%c0_52, %c0_53] : memref<1x32xf32, #tpu.memory_space<vmem>>, vector<1x32xf32>
    %cst_54 = arith.constant dense<0.000000e+00> : vector<16xf32>
    %114 = vector.multi_reduction <add>, %111, %cst_54 [1] : vector<16x32xf32> to vector<16xf32>
    %115 = vector.shape_cast %114 : vector<16xf32> to vector<16x1xf32>
    %cst_55 = arith.constant 3.200000e+01 : f32
    %116 = vector.broadcast %cst_55 : f32 to vector<16x1xf32>
    %117 = arith.divf %115, %116 : vector<16x1xf32>
    %118 = vector.broadcast %117 : vector<16x1xf32> to vector<16x32xf32>
    %119 = arith.subf %111, %118 : vector<16x32xf32>
    %120 = arith.mulf %119, %119 : vector<16x32xf32>
    %cst_56 = arith.constant dense<0.000000e+00> : vector<16xf32>
    %121 = vector.multi_reduction <add>, %120, %cst_56 [1] : vector<16x32xf32> to vector<16xf32>
    %122 = vector.shape_cast %121 : vector<16xf32> to vector<16x1xf32>
    %cst_57 = arith.constant 3.200000e+01 : f32
    %123 = vector.broadcast %cst_57 : f32 to vector<16x1xf32>
    %124 = arith.divf %122, %123 : vector<16x1xf32>
    %125 = vector.broadcast %117 : vector<16x1xf32> to vector<16x32xf32>
    %126 = arith.subf %111, %125 : vector<16x32xf32>
    %cst_58 = arith.constant 9.99999974E-6 : f32
    %127 = vector.broadcast %cst_58 : f32 to vector<16x1xf32>
    %128 = arith.addf %124, %127 : vector<16x1xf32>
    %129 = math.rsqrt %128 : vector<16x1xf32>
    %130 = vector.broadcast %129 : vector<16x1xf32> to vector<16x32xf32>
    %131 = arith.mulf %126, %130 : vector<16x32xf32>
    %132 = vector.broadcast %112 : vector<1x32xf32> to vector<16x32xf32>
    %133 = arith.mulf %131, %132 : vector<16x32xf32>
    %134 = vector.broadcast %113 : vector<1x32xf32> to vector<16x32xf32>
    %135 = arith.addf %133, %134 : vector<16x32xf32>
    %136 = arith.truncf %135 : vector<16x32xf32> to vector<16x32xbf16>
    %c0_59 = arith.constant 0 : index
    %c0_60 = arith.constant 0 : index
    %137 = vector.load %arg11[%c0_59, %c0_60] : memref<32x128xbf16, #tpu.memory_space<vmem>>, vector<32x128xbf16>
    %cst_61 = arith.constant dense<0.000000e+00> : vector<16x128xf32>
    %138 = tpu.matmul %136, %137, %cst_61 {dimension_numbers = #tpu.dot_dimension_numbers<[1], [0], [0], [1], [0, 0, 1, 1], [], []>} : vector<16x32xbf16>, vector<32x128xbf16>, vector<16x128xf32> -> vector<16x128xf32>
    %c0_62 = arith.constant 0 : index
    %c0_63 = arith.constant 0 : index
    %139 = vector.load %arg12[%c0_62, %c0_63] : memref<1x128xf32, #tpu.memory_space<vmem>>, vector<1x128xf32>
    %140 = vector.broadcast %139 : vector<1x128xf32> to vector<16x128xf32>
    %141 = arith.addf %138, %140 : vector<16x128xf32>
    %cst_64 = arith.constant 0.000000e+00 : f32
    %142 = vector.broadcast %cst_64 : f32 to vector<16x128xf32>
    %143 = arith.maximumf %141, %142 : vector<16x128xf32>
    %144 = arith.truncf %143 : vector<16x128xf32> to vector<16x128xbf16>
    %c0_65 = arith.constant 0 : index
    %c0_66 = arith.constant 0 : index
    %145 = vector.load %arg13[%c0_65, %c0_66] : memref<128x32xbf16, #tpu.memory_space<vmem>>, vector<128x32xbf16>
    %cst_67 = arith.constant dense<0.000000e+00> : vector<16x32xf32>
    %146 = tpu.matmul %144, %145, %cst_67 {dimension_numbers = #tpu.dot_dimension_numbers<[1], [0], [0], [1], [0, 0, 1, 1], [], []>} : vector<16x128xbf16>, vector<128x32xbf16>, vector<16x32xf32> -> vector<16x32xf32>
    %c0_68 = arith.constant 0 : index
    %c0_69 = arith.constant 0 : index
    %147 = vector.load %arg14[%c0_68, %c0_69] : memref<1x32xf32, #tpu.memory_space<vmem>>, vector<1x32xf32>
    %148 = vector.broadcast %147 : vector<1x32xf32> to vector<16x32xf32>
    %149 = arith.addf %146, %148 : vector<16x32xf32>
    %150 = arith.addf %135, %149 : vector<16x32xf32>
    %c0_70 = arith.constant 0 : index
    %c0_71 = arith.constant 0 : index
    %151 = vector.load %arg17[%c0_70, %c0_71] : memref<1x32xf32, #tpu.memory_space<vmem>>, vector<1x32xf32>
    %c0_72 = arith.constant 0 : index
    %c0_73 = arith.constant 0 : index
    %152 = vector.load %arg18[%c0_72, %c0_73] : memref<1x32xf32, #tpu.memory_space<vmem>>, vector<1x32xf32>
    %cst_74 = arith.constant dense<0.000000e+00> : vector<16xf32>
    %153 = vector.multi_reduction <add>, %150, %cst_74 [1] : vector<16x32xf32> to vector<16xf32>
    %154 = vector.shape_cast %153 : vector<16xf32> to vector<16x1xf32>
    %cst_75 = arith.constant 3.200000e+01 : f32
    %155 = vector.broadcast %cst_75 : f32 to vector<16x1xf32>
    %156 = arith.divf %154, %155 : vector<16x1xf32>
    %157 = vector.broadcast %156 : vector<16x1xf32> to vector<16x32xf32>
    %158 = arith.subf %150, %157 : vector<16x32xf32>
    %159 = arith.mulf %158, %158 : vector<16x32xf32>
    %cst_76 = arith.constant dense<0.000000e+00> : vector<16xf32>
    %160 = vector.multi_reduction <add>, %159, %cst_76 [1] : vector<16x32xf32> to vector<16xf32>
    %161 = vector.shape_cast %160 : vector<16xf32> to vector<16x1xf32>
    %cst_77 = arith.constant 3.200000e+01 : f32
    %162 = vector.broadcast %cst_77 : f32 to vector<16x1xf32>
    %163 = arith.divf %161, %162 : vector<16x1xf32>
    %164 = vector.broadcast %156 : vector<16x1xf32> to vector<16x32xf32>
    %165 = arith.subf %150, %164 : vector<16x32xf32>
    %cst_78 = arith.constant 9.99999974E-6 : f32
    %166 = vector.broadcast %cst_78 : f32 to vector<16x1xf32>
    %167 = arith.addf %163, %166 : vector<16x1xf32>
    %168 = math.rsqrt %167 : vector<16x1xf32>
    %169 = vector.broadcast %168 : vector<16x1xf32> to vector<16x32xf32>
    %170 = arith.mulf %165, %169 : vector<16x32xf32>
    %171 = vector.broadcast %151 : vector<1x32xf32> to vector<16x32xf32>
    %172 = arith.mulf %170, %171 : vector<16x32xf32>
    %173 = vector.broadcast %152 : vector<1x32xf32> to vector<16x32xf32>
    %174 = arith.addf %172, %173 : vector<16x32xf32>
    %c0_79 = arith.constant 0 : index
    %c0_80 = arith.constant 0 : index
    %c0_81 = arith.constant 0 : index
    %175 = vector.load %arg19[%c0_79, %c0_80, %c0_81] : memref<1x16x32xf32, #tpu.memory_space<vmem>>, vector<1x16x32xf32>
    %176 = vector.shape_cast %175 : vector<1x16x32xf32> to vector<16x32xf32>
    %177 = vector.shape_cast %174 : vector<16x32xf32> to vector<1x16x32xf32>
    tpu.vector_store %arg19[%c0_79, %c0_80, %c0_81], %177 {strides = array<i32>} : memref<1x16x32xf32, #tpu.memory_space<vmem>>, vector<1x16x32xf32>,
    return
  }
  func.func @transform_0(%arg0: i32) -> (i32, i32, i32) {
    %c0_i32 = arith.constant 0 : i32
    %c0_i32_0 = arith.constant 0 : i32
    %c0_i32_1 = arith.constant 0 : i32
    return %arg0, %c0_i32, %c0_i32_0 : i32, i32, i32
  }
  func.func @transform_1(%arg0: i32) -> (i32, i32) {
    %c0_i32 = arith.constant 0 : i32
    %c0_i32_0 = arith.constant 0 : i32
    %c0_i32_1 = arith.constant 0 : i32
    return %c0_i32, %c0_i32_0 : i32, i32
  }
  func.func @transform_2(%arg0: i32) -> (i32, i32) {
    %c0_i32 = arith.constant 0 : i32
    %c0_i32_0 = arith.constant 0 : i32
    %c0_i32_1 = arith.constant 0 : i32
    return %c0_i32, %c0_i32_0 : i32, i32
  }
  func.func @transform_3(%arg0: i32) -> (i32, i32) {
    %c0_i32 = arith.constant 0 : i32
    %c0_i32_0 = arith.constant 0 : i32
    %c0_i32_1 = arith.constant 0 : i32
    return %c0_i32, %c0_i32_0 : i32, i32
  }
  func.func @transform_4(%arg0: i32) -> (i32, i32) {
    %c0_i32 = arith.constant 0 : i32
    %c0_i32_0 = arith.constant 0 : i32
    %c0_i32_1 = arith.constant 0 : i32
    return %c0_i32, %c0_i32_0 : i32, i32
  }
  func.func @transform_5(%arg0: i32) -> (i32, i32) {
    %c0_i32 = arith.constant 0 : i32
    %c0_i32_0 = arith.constant 0 : i32
    %c0_i32_1 = arith.constant 0 : i32
    return %c0_i32, %c0_i32_0 : i32, i32
  }
  func.func @transform_6(%arg0: i32) -> (i32, i32) {
    %c0_i32 = arith.constant 0 : i32
    %c0_i32_0 = arith.constant 0 : i32
    %c0_i32_1 = arith.constant 0 : i32
    return %c0_i32, %c0_i32_0 : i32, i32
  }
  func.func @transform_7(%arg0: i32) -> (i32, i32) {
    %c0_i32 = arith.constant 0 : i32
    %c0_i32_0 = arith.constant 0 : i32
    %c0_i32_1 = arith.constant 0 : i32
    return %c0_i32, %c0_i32_0 : i32, i32
  }
  func.func @transform_8(%arg0: i32) -> (i32, i32, i32) {
    %c0_i32 = arith.constant 0 : i32
    %c0_i32_0 = arith.constant 0 : i32
    %c0_i32_1 = arith.constant 0 : i32
    %c0_i32_2 = arith.constant 0 : i32
    return %c0_i32, %c0_i32_0, %c0_i32_1 : i32, i32, i32
  }
  func.func @transform_9(%arg0: i32) -> (i32, i32) {
    %c0_i32 = arith.constant 0 : i32
    %c0_i32_0 = arith.constant 0 : i32
    %c0_i32_1 = arith.constant 0 : i32
    return %c0_i32, %c0_i32_0 : i32, i32
  }
  func.func @transform_10(%arg0: i32) -> (i32, i32) {
    %c0_i32 = arith.constant 0 : i32
    %c0_i32_0 = arith.constant 0 : i32
    %c0_i32_1 = arith.constant 0 : i32
    return %c0_i32, %c0_i32_0 : i32, i32
  }
  func.func @transform_11(%arg0: i32) -> (i32, i32) {
    %c0_i32 = arith.constant 0 : i32
    %c0_i32_0 = arith.constant 0 : i32
    %c0_i32_1 = arith.constant 0 : i32
    return %c0_i32, %c0_i32_0 : i32, i32
  }
  func.func @transform_12(%arg0: i32) -> (i32, i32) {
    %c0_i32 = arith.constant 0 : i32
    %c0_i32_0 = arith.constant 0 : i32
    %c0_i32_1 = arith.constant 0 : i32
    return %c0_i32, %c0_i32_0 : i32, i32
  }
  func.func @transform_13(%arg0: i32) -> (i32, i32) {
    %c0_i32 = arith.constant 0 : i32
    %c0_i32_0 = arith.constant 0 : i32
    %c0_i32_1 = arith.constant 0 : i32
    return %c0_i32, %c0_i32_0 : i32, i32
  }
  func.func @transform_14(%arg0: i32) -> (i32, i32) {
    %c0_i32 = arith.constant 0 : i32
    %c0_i32_0 = arith.constant 0 : i32
    %c0_i32_1 = arith.constant 0 : i32
    return %c0_i32, %c0_i32_0 : i32, i32
  }
  func.func @transform_15(%arg0: i32) -> (i32, i32) {
    %c0_i32 = arith.constant 0 : i32
    %c0_i32_0 = arith.constant 0 : i32
    %c0_i32_1 = arith.constant 0 : i32
    return %c0_i32, %c0_i32_0 : i32, i32
  }
  func.func @transform_16(%arg0: i32) -> (i32, i32) {
    %c0_i32 = arith.constant 0 : i32
    %c0_i32_0 = arith.constant 0 : i32
    %c0_i32_1 = arith.constant 0 : i32
    return %c0_i32, %c0_i32_0 : i32, i32
  }
  func.func @transform_17(%arg0: i32) -> (i32, i32) {
    %c0_i32 = arith.constant 0 : i32
    %c0_i32_0 = arith.constant 0 : i32
    %c0_i32_1 = arith.constant 0 : i32
    return %c0_i32, %c0_i32_0 : i32, i32
  }
  func.func @transform_18(%arg0: i32) -> (i32, i32, i32) {
    %c0_i32 = arith.constant 0 : i32
    %c0_i32_0 = arith.constant 0 : i32
    %c0_i32_1 = arith.constant 0 : i32
    return %arg0, %c0_i32, %c0_i32_0 : i32, i32, i32
  }
}

module attributes {stable_mosaic.version = 11 : i64} {
  func.func @encoder_layer_kernel(%arg0: i32, %arg1: memref<1x16x32xf32, #tpu.memory_space<vmem>>, %arg2: memref<32x32xbf16, #tpu.memory_space<vmem>>, %arg3: memref<1x32xf32, #tpu.memory_space<vmem>>, %arg4: memref<32x32xbf16, #tpu.memory_space<vmem>>, %arg5: memref<1x32xf32, #tpu.memory_space<vmem>>, %arg6: memref<32x32xbf16, #tpu.memory_space<vmem>>, %arg7: memref<1x32xf32, #tpu.memory_space<vmem>>, %arg8: memref<4x8x32xbf16, #tpu.memory_space<vmem>>, %arg9: memref<1x32xf32, #tpu.memory_space<vmem>>, %arg10: memref<32x128xbf16, #tpu.memory_space<vmem>>, %arg11: memref<1x128xf32, #tpu.memory_space<vmem>>, %arg12: memref<128x32xbf16, #tpu.memory_space<vmem>>, %arg13: memref<1x32xf32, #tpu.memory_space<vmem>>, %arg14: memref<1x32xf32, #tpu.memory_space<vmem>>, %arg15: memref<1x32xf32, #tpu.memory_space<vmem>>, %arg16: memref<1x32xf32, #tpu.memory_space<vmem>>, %arg17: memref<1x32xf32, #tpu.memory_space<vmem>>, %arg18: memref<1x16x32xf32, #tpu.memory_space<vmem>>) attributes {dimension_semantics = [#tpu.dimension_semantics<parallel>], iteration_bounds = array<i64: 2>, scalar_prefetch = 0 : i64, scratch_operands = 0 : i64, tpu.core_type = #tpu.core_type<tc>, window_params = [{transform_indices = @transform_0, window_bounds = array<i64: 1, 16, 32>}, {pipeline_mode = #tpu.pipeline_mode<synchronous>, transform_indices = @transform_1, window_bounds = array<i64: 32, 32>}, {pipeline_mode = #tpu.pipeline_mode<synchronous>, transform_indices = @transform_2, window_bounds = array<i64: 1, 32>}, {pipeline_mode = #tpu.pipeline_mode<synchronous>, transform_indices = @transform_3, window_bounds = array<i64: 32, 32>}, {pipeline_mode = #tpu.pipeline_mode<synchronous>, transform_indices = @transform_4, window_bounds = array<i64: 1, 32>}, {pipeline_mode = #tpu.pipeline_mode<synchronous>, transform_indices = @transform_5, window_bounds = array<i64: 32, 32>}, {pipeline_mode = #tpu.pipeline_mode<synchronous>, transform_indices = @transform_6, window_bounds = array<i64: 1, 32>}, {pipeline_mode = #tpu.pipeline_mode<synchronous>, transform_indices = @transform_7, window_bounds = array<i64: 4, 8, 32>}, {pipeline_mode = #tpu.pipeline_mode<synchronous>, transform_indices = @transform_8, window_bounds = array<i64: 1, 32>}, {pipeline_mode = #tpu.pipeline_mode<synchronous>, transform_indices = @transform_9, window_bounds = array<i64: 32, 128>}, {pipeline_mode = #tpu.pipeline_mode<synchronous>, transform_indices = @transform_10, window_bounds = array<i64: 1, 128>}, {pipeline_mode = #tpu.pipeline_mode<synchronous>, transform_indices = @transform_11, window_bounds = array<i64: 128, 32>}, {pipeline_mode = #tpu.pipeline_mode<synchronous>, transform_indices = @transform_12, window_bounds = array<i64: 1, 32>}, {pipeline_mode = #tpu.pipeline_mode<synchronous>, transform_indices = @transform_13, window_bounds = array<i64: 1, 32>}, {pipeline_mode = #tpu.pipeline_mode<synchronous>, transform_indices = @transform_14, window_bounds = array<i64: 1, 32>}, {pipeline_mode = #tpu.pipeline_mode<synchronous>, transform_indices = @transform_15, window_bounds = array<i64: 1, 32>}, {pipeline_mode = #tpu.pipeline_mode<synchronous>, transform_indices = @transform_16, window_bounds = array<i64: 1, 32>}, {transform_indices = @transform_17, window_bounds = array<i64: 1, 16, 32>}]} {
    %c0 = arith.constant 0 : index
    %c0_0 = arith.constant 0 : index
    %c0_1 = arith.constant 0 : index
    %0 = vector.load %arg1[%c0, %c0_0, %c0_1] : memref<1x16x32xf32, #tpu.memory_space<vmem>>, vector<1x16x32xf32>
    %1 = vector.shape_cast %0 : vector<1x16x32xf32> to vector<16x32xf32>
    %2 = arith.truncf %1 : vector<16x32xf32> to vector<16x32xbf16>
    %c0_2 = arith.constant 0 : index
    %c0_3 = arith.constant 0 : index
    %3 = vector.load %arg2[%c0_2, %c0_3] : memref<32x32xbf16, #tpu.memory_space<vmem>>, vector<32x32xbf16>
    %cst = arith.constant dense<0.000000e+00> : vector<16x32xf32>
    %4 = tpu.matmul %2, %3, %cst {dimension_numbers = #tpu.dot_dimension_numbers<[1], [0], [0], [1], [0, 0, 1, 1], [], []>} : vector<16x32xbf16>, vector<32x32xbf16>, vector<16x32xf32> -> vector<16x32xf32>
    %c0_4 = arith.constant 0 : index
    %c0_5 = arith.constant 0 : index
    %5 = vector.load %arg3[%c0_4, %c0_5] : memref<1x32xf32, #tpu.memory_space<vmem>>, vector<1x32xf32>
    %6 = vector.broadcast %5 : vector<1x32xf32> to vector<16x32xf32>
    %7 = arith.addf %4, %6 : vector<16x32xf32>
    %8 = arith.truncf %7 : vector<16x32xf32> to vector<16x32xbf16>
    %c0_6 = arith.constant 0 : index
    %c0_7 = arith.constant 0 : index
    %9 = vector.load %arg4[%c0_6, %c0_7] : memref<32x32xbf16, #tpu.memory_space<vmem>>, vector<32x32xbf16>
    %cst_8 = arith.constant dense<0.000000e+00> : vector<16x32xf32>
    %10 = tpu.matmul %2, %9, %cst_8 {dimension_numbers = #tpu.dot_dimension_numbers<[1], [0], [0], [1], [0, 0, 1, 1], [], []>} : vector<16x32xbf16>, vector<32x32xbf16>, vector<16x32xf32> -> vector<16x32xf32>
    %c0_9 = arith.constant 0 : index
    %c0_10 = arith.constant 0 : index
    %11 = vector.load %arg5[%c0_9, %c0_10] : memref<1x32xf32, #tpu.memory_space<vmem>>, vector<1x32xf32>
    %12 = vector.broadcast %11 : vector<1x32xf32> to vector<16x32xf32>
    %13 = arith.addf %10, %12 : vector<16x32xf32>
    %14 = arith.truncf %13 : vector<16x32xf32> to vector<16x32xbf16>
    %c0_11 = arith.constant 0 : index
    %c0_12 = arith.constant 0 : index
    %15 = vector.load %arg6[%c0_11, %c0_12] : memref<32x32xbf16, #tpu.memory_space<vmem>>, vector<32x32xbf16>
    %cst_13 = arith.constant dense<0.000000e+00> : vector<16x32xf32>
    %16 = tpu.matmul %2, %15, %cst_13 {dimension_numbers = #tpu.dot_dimension_numbers<[1], [0], [0], [1], [0, 0, 1, 1], [], []>} : vector<16x32xbf16>, vector<32x32xbf16>, vector<16x32xf32> -> vector<16x32xf32>
    %c0_14 = arith.constant 0 : index
    %c0_15 = arith.constant 0 : index
    %17 = vector.load %arg7[%c0_14, %c0_15] : memref<1x32xf32, #tpu.memory_space<vmem>>, vector<1x32xf32>
    %18 = vector.broadcast %17 : vector<1x32xf32> to vector<16x32xf32>
    %19 = arith.addf %16, %18 : vector<16x32xf32>
    %20 = arith.truncf %19 : vector<16x32xf32> to vector<16x32xbf16>
    %cst_16 = arith.constant 0.000000e+00 : f32
    %21 = vector.broadcast %cst_16 : f32 to vector<16x32xf32>
    %22 = vector.extract_strided_slice %8 {offsets = [0, 0], sizes = [16, 8], strides = [1, 1]} : vector<16x32xbf16> to vector<16x8xbf16>
    %23 = vector.extract_strided_slice %14 {offsets = [0, 0], sizes = [16, 8], strides = [1, 1]} : vector<16x32xbf16> to vector<16x8xbf16>
    %24 = vector.extract_strided_slice %20 {offsets = [0, 0], sizes = [16, 8], strides = [1, 1]} : vector<16x32xbf16> to vector<16x8xbf16>
    %cst_17 = arith.constant dense<0.000000e+00> : vector<16x16xf32>
    %25 = tpu.matmul %22, %23, %cst_17 {dimension_numbers = #tpu.dot_dimension_numbers<[1], [1], [0], [0], [0, 0, 1, 0], [], []>} : vector<16x8xbf16>, vector<16x8xbf16>, vector<16x16xf32> -> vector<16x16xf32>
    %cst_18 = arith.constant dense<0xFF800000> : vector<16xf32>
    %26 = vector.multi_reduction <maximumf>, %25, %cst_18 [1] : vector<16x16xf32> to vector<16xf32>
    %27 = vector.shape_cast %26 : vector<16xf32> to vector<16x1xf32>
    %28 = vector.broadcast %27 : vector<16x1xf32> to vector<16x16xf32>
    %29 = arith.subf %25, %28 : vector<16x16xf32>
    %30 = math.exp %29 : vector<16x16xf32>
    %cst_19 = arith.constant dense<0.000000e+00> : vector<16xf32>
    %31 = vector.multi_reduction <add>, %30, %cst_19 [1] : vector<16x16xf32> to vector<16xf32>
    %32 = vector.shape_cast %31 : vector<16xf32> to vector<16x1xf32>
    %33 = tpu.reciprocal %32 {approx = true} : vector<16x1xf32> -> vector<16x1xf32>
    %34 = vector.broadcast %33 : vector<16x1xf32> to vector<16x16xf32>
    %35 = arith.mulf %30, %34 : vector<16x16xf32>
    %36 = arith.truncf %35 : vector<16x16xf32> to vector<16x16xbf16>
    %cst_20 = arith.constant dense<0.000000e+00> : vector<16x8xf32>
    %37 = tpu.matmul %36, %24, %cst_20 {dimension_numbers = #tpu.dot_dimension_numbers<[1], [0], [0], [1], [0, 0, 1, 1], [], []>} : vector<16x16xbf16>, vector<16x8xbf16>, vector<16x8xf32> -> vector<16x8xf32>
    %38 = arith.truncf %37 : vector<16x8xf32> to vector<16x8xbf16>
    %c0_21 = arith.constant 0 : index
    %c0_22 = arith.constant 0 : index
    %c0_23 = arith.constant 0 : index
    %39 = vector.load %arg8[%c0_21, %c0_22, %c0_23] : memref<4x8x32xbf16, #tpu.memory_space<vmem>>, vector<1x8x32xbf16>
    %40 = vector.shape_cast %39 : vector<1x8x32xbf16> to vector<8x32xbf16>
    %cst_24 = arith.constant dense<0.000000e+00> : vector<16x32xf32>
    %41 = tpu.matmul %38, %40, %cst_24 {dimension_numbers = #tpu.dot_dimension_numbers<[1], [0], [0], [1], [0, 0, 1, 1], [], []>} : vector<16x8xbf16>, vector<8x32xbf16>, vector<16x32xf32> -> vector<16x32xf32>
    %42 = arith.addf %21, %41 : vector<16x32xf32>
    %43 = vector.extract_strided_slice %8 {offsets = [0, 8], sizes = [16, 8], strides = [1, 1]} : vector<16x32xbf16> to vector<16x8xbf16>
    %44 = vector.extract_strided_slice %14 {offsets = [0, 8], sizes = [16, 8], strides = [1, 1]} : vector<16x32xbf16> to vector<16x8xbf16>
    %45 = vector.extract_strided_slice %20 {offsets = [0, 8], sizes = [16, 8], strides = [1, 1]} : vector<16x32xbf16> to vector<16x8xbf16>
    %cst_25 = arith.constant dense<0.000000e+00> : vector<16x16xf32>
    %46 = tpu.matmul %43, %44, %cst_25 {dimension_numbers = #tpu.dot_dimension_numbers<[1], [1], [0], [0], [0, 0, 1, 0], [], []>} : vector<16x8xbf16>, vector<16x8xbf16>, vector<16x16xf32> -> vector<16x16xf32>
    %cst_26 = arith.constant dense<0xFF800000> : vector<16xf32>
    %47 = vector.multi_reduction <maximumf>, %46, %cst_26 [1] : vector<16x16xf32> to vector<16xf32>
    %48 = vector.shape_cast %47 : vector<16xf32> to vector<16x1xf32>
    %49 = vector.broadcast %48 : vector<16x1xf32> to vector<16x16xf32>
    %50 = arith.subf %46, %49 : vector<16x16xf32>
    %51 = math.exp %50 : vector<16x16xf32>
    %cst_27 = arith.constant dense<0.000000e+00> : vector<16xf32>
    %52 = vector.multi_reduction <add>, %51, %cst_27 [1] : vector<16x16xf32> to vector<16xf32>
    %53 = vector.shape_cast %52 : vector<16xf32> to vector<16x1xf32>
    %54 = tpu.reciprocal %53 {approx = true} : vector<16x1xf32> -> vector<16x1xf32>
    %55 = vector.broadcast %54 : vector<16x1xf32> to vector<16x16xf32>
    %56 = arith.mulf %51, %55 : vector<16x16xf32>
    %57 = arith.truncf %56 : vector<16x16xf32> to vector<16x16xbf16>
    %cst_28 = arith.constant dense<0.000000e+00> : vector<16x8xf32>
    %58 = tpu.matmul %57, %45, %cst_28 {dimension_numbers = #tpu.dot_dimension_numbers<[1], [0], [0], [1], [0, 0, 1, 1], [], []>} : vector<16x16xbf16>, vector<16x8xbf16>, vector<16x8xf32> -> vector<16x8xf32>
    %59 = arith.truncf %58 : vector<16x8xf32> to vector<16x8xbf16>
    %c1 = arith.constant 1 : index
    %c0_29 = arith.constant 0 : index
    %c0_30 = arith.constant 0 : index
    %60 = vector.load %arg8[%c1, %c0_29, %c0_30] : memref<4x8x32xbf16, #tpu.memory_space<vmem>>, vector<1x8x32xbf16>
    %61 = vector.shape_cast %60 : vector<1x8x32xbf16> to vector<8x32xbf16>
    %cst_31 = arith.constant dense<0.000000e+00> : vector<16x32xf32>
    %62 = tpu.matmul %59, %61, %cst_31 {dimension_numbers = #tpu.dot_dimension_numbers<[1], [0], [0], [1], [0, 0, 1, 1], [], []>} : vector<16x8xbf16>, vector<8x32xbf16>, vector<16x32xf32> -> vector<16x32xf32>
    %63 = arith.addf %42, %62 : vector<16x32xf32>
    %64 = vector.extract_strided_slice %8 {offsets = [0, 16], sizes = [16, 8], strides = [1, 1]} : vector<16x32xbf16> to vector<16x8xbf16>
    %65 = vector.extract_strided_slice %14 {offsets = [0, 16], sizes = [16, 8], strides = [1, 1]} : vector<16x32xbf16> to vector<16x8xbf16>
    %66 = vector.extract_strided_slice %20 {offsets = [0, 16], sizes = [16, 8], strides = [1, 1]} : vector<16x32xbf16> to vector<16x8xbf16>
    %cst_32 = arith.constant dense<0.000000e+00> : vector<16x16xf32>
    %67 = tpu.matmul %64, %65, %cst_32 {dimension_numbers = #tpu.dot_dimension_numbers<[1], [1], [0], [0], [0, 0, 1, 0], [], []>} : vector<16x8xbf16>, vector<16x8xbf16>, vector<16x16xf32> -> vector<16x16xf32>
    %cst_33 = arith.constant dense<0xFF800000> : vector<16xf32>
    %68 = vector.multi_reduction <maximumf>, %67, %cst_33 [1] : vector<16x16xf32> to vector<16xf32>
    %69 = vector.shape_cast %68 : vector<16xf32> to vector<16x1xf32>
    %70 = vector.broadcast %69 : vector<16x1xf32> to vector<16x16xf32>
    %71 = arith.subf %67, %70 : vector<16x16xf32>
    %72 = math.exp %71 : vector<16x16xf32>
    %cst_34 = arith.constant dense<0.000000e+00> : vector<16xf32>
    %73 = vector.multi_reduction <add>, %72, %cst_34 [1] : vector<16x16xf32> to vector<16xf32>
    %74 = vector.shape_cast %73 : vector<16xf32> to vector<16x1xf32>
    %75 = tpu.reciprocal %74 {approx = true} : vector<16x1xf32> -> vector<16x1xf32>
    %76 = vector.broadcast %75 : vector<16x1xf32> to vector<16x16xf32>
    %77 = arith.mulf %72, %76 : vector<16x16xf32>
    %78 = arith.truncf %77 : vector<16x16xf32> to vector<16x16xbf16>
    %cst_35 = arith.constant dense<0.000000e+00> : vector<16x8xf32>
    %79 = tpu.matmul %78, %66, %cst_35 {dimension_numbers = #tpu.dot_dimension_numbers<[1], [0], [0], [1], [0, 0, 1, 1], [], []>} : vector<16x16xbf16>, vector<16x8xbf16>, vector<16x8xf32> -> vector<16x8xf32>
    %80 = arith.truncf %79 : vector<16x8xf32> to vector<16x8xbf16>
    %c2 = arith.constant 2 : index
    %c0_36 = arith.constant 0 : index
    %c0_37 = arith.constant 0 : index
    %81 = vector.load %arg8[%c2, %c0_36, %c0_37] : memref<4x8x32xbf16, #tpu.memory_space<vmem>>, vector<1x8x32xbf16>
    %82 = vector.shape_cast %81 : vector<1x8x32xbf16> to vector<8x32xbf16>
    %cst_38 = arith.constant dense<0.000000e+00> : vector<16x32xf32>
    %83 = tpu.matmul %80, %82, %cst_38 {dimension_numbers = #tpu.dot_dimension_numbers<[1], [0], [0], [1], [0, 0, 1, 1], [], []>} : vector<16x8xbf16>, vector<8x32xbf16>, vector<16x32xf32> -> vector<16x32xf32>
    %84 = arith.addf %63, %83 : vector<16x32xf32>
    %85 = vector.extract_strided_slice %8 {offsets = [0, 24], sizes = [16, 8], strides = [1, 1]} : vector<16x32xbf16> to vector<16x8xbf16>
    %86 = vector.extract_strided_slice %14 {offsets = [0, 24], sizes = [16, 8], strides = [1, 1]} : vector<16x32xbf16> to vector<16x8xbf16>
    %87 = vector.extract_strided_slice %20 {offsets = [0, 24], sizes = [16, 8], strides = [1, 1]} : vector<16x32xbf16> to vector<16x8xbf16>
    %cst_39 = arith.constant dense<0.000000e+00> : vector<16x16xf32>
    %88 = tpu.matmul %85, %86, %cst_39 {dimension_numbers = #tpu.dot_dimension_numbers<[1], [1], [0], [0], [0, 0, 1, 0], [], []>} : vector<16x8xbf16>, vector<16x8xbf16>, vector<16x16xf32> -> vector<16x16xf32>
    %cst_40 = arith.constant dense<0xFF800000> : vector<16xf32>
    %89 = vector.multi_reduction <maximumf>, %88, %cst_40 [1] : vector<16x16xf32> to vector<16xf32>
    %90 = vector.shape_cast %89 : vector<16xf32> to vector<16x1xf32>
    %91 = vector.broadcast %90 : vector<16x1xf32> to vector<16x16xf32>
    %92 = arith.subf %88, %91 : vector<16x16xf32>
    %93 = math.exp %92 : vector<16x16xf32>
    %cst_41 = arith.constant dense<0.000000e+00> : vector<16xf32>
    %94 = vector.multi_reduction <add>, %93, %cst_41 [1] : vector<16x16xf32> to vector<16xf32>
    %95 = vector.shape_cast %94 : vector<16xf32> to vector<16x1xf32>
    %96 = tpu.reciprocal %95 {approx = true} : vector<16x1xf32> -> vector<16x1xf32>
    %97 = vector.broadcast %96 : vector<16x1xf32> to vector<16x16xf32>
    %98 = arith.mulf %93, %97 : vector<16x16xf32>
    %99 = arith.truncf %98 : vector<16x16xf32> to vector<16x16xbf16>
    %cst_42 = arith.constant dense<0.000000e+00> : vector<16x8xf32>
    %100 = tpu.matmul %99, %87, %cst_42 {dimension_numbers = #tpu.dot_dimension_numbers<[1], [0], [0], [1], [0, 0, 1, 1], [], []>} : vector<16x16xbf16>, vector<16x8xbf16>, vector<16x8xf32> -> vector<16x8xf32>
    %101 = arith.truncf %100 : vector<16x8xf32> to vector<16x8xbf16>
    %c3 = arith.constant 3 : index
    %c0_43 = arith.constant 0 : index
    %c0_44 = arith.constant 0 : index
    %102 = vector.load %arg8[%c3, %c0_43, %c0_44] : memref<4x8x32xbf16, #tpu.memory_space<vmem>>, vector<1x8x32xbf16>
    %103 = vector.shape_cast %102 : vector<1x8x32xbf16> to vector<8x32xbf16>
    %cst_45 = arith.constant dense<0.000000e+00> : vector<16x32xf32>
    %104 = tpu.matmul %101, %103, %cst_45 {dimension_numbers = #tpu.dot_dimension_numbers<[1], [0], [0], [1], [0, 0, 1, 1], [], []>} : vector<16x8xbf16>, vector<8x32xbf16>, vector<16x32xf32> -> vector<16x32xf32>
    %105 = arith.addf %84, %104 : vector<16x32xf32>
    %c0_46 = arith.constant 0 : index
    %c0_47 = arith.constant 0 : index
    %106 = vector.load %arg9[%c0_46, %c0_47] : memref<1x32xf32, #tpu.memory_space<vmem>>, vector<1x32xf32>
    %107 = vector.broadcast %106 : vector<1x32xf32> to vector<16x32xf32>
    %108 = arith.addf %105, %107 : vector<16x32xf32>
    %109 = arith.addf %1, %108 : vector<16x32xf32>
    %c0_48 = arith.constant 0 : index
    %c0_49 = arith.constant 0 : index
    %110 = vector.load %arg14[%c0_48, %c0_49] : memref<1x32xf32, #tpu.memory_space<vmem>>, vector<1x32xf32>
    %c0_50 = arith.constant 0 : index
    %c0_51 = arith.constant 0 : index
    %111 = vector.load %arg15[%c0_50, %c0_51] : memref<1x32xf32, #tpu.memory_space<vmem>>, vector<1x32xf32>
    %cst_52 = arith.constant dense<0.000000e+00> : vector<16xf32>
    %112 = vector.multi_reduction <add>, %109, %cst_52 [1] : vector<16x32xf32> to vector<16xf32>
    %113 = vector.shape_cast %112 : vector<16xf32> to vector<16x1xf32>
    %cst_53 = arith.constant 3.200000e+01 : f32
    %114 = vector.broadcast %cst_53 : f32 to vector<16x1xf32>
    %115 = arith.divf %113, %114 : vector<16x1xf32>
    %116 = vector.broadcast %115 : vector<16x1xf32> to vector<16x32xf32>
    %117 = arith.subf %109, %116 : vector<16x32xf32>
    %118 = arith.mulf %117, %117 : vector<16x32xf32>
    %cst_54 = arith.constant dense<0.000000e+00> : vector<16xf32>
    %119 = vector.multi_reduction <add>, %118, %cst_54 [1] : vector<16x32xf32> to vector<16xf32>
    %120 = vector.shape_cast %119 : vector<16xf32> to vector<16x1xf32>
    %cst_55 = arith.constant 3.200000e+01 : f32
    %121 = vector.broadcast %cst_55 : f32 to vector<16x1xf32>
    %122 = arith.divf %120, %121 : vector<16x1xf32>
    %123 = vector.broadcast %115 : vector<16x1xf32> to vector<16x32xf32>
    %124 = arith.subf %109, %123 : vector<16x32xf32>
    %cst_56 = arith.constant 9.99999974E-6 : f32
    %125 = vector.broadcast %cst_56 : f32 to vector<16x1xf32>
    %126 = arith.addf %122, %125 : vector<16x1xf32>
    %127 = math.rsqrt %126 : vector<16x1xf32>
    %128 = vector.broadcast %127 : vector<16x1xf32> to vector<16x32xf32>
    %129 = arith.mulf %124, %128 : vector<16x32xf32>
    %130 = vector.broadcast %110 : vector<1x32xf32> to vector<16x32xf32>
    %131 = arith.mulf %129, %130 : vector<16x32xf32>
    %132 = vector.broadcast %111 : vector<1x32xf32> to vector<16x32xf32>
    %133 = arith.addf %131, %132 : vector<16x32xf32>
    %134 = arith.truncf %133 : vector<16x32xf32> to vector<16x32xbf16>
    %c0_57 = arith.constant 0 : index
    %c0_58 = arith.constant 0 : index
    %135 = vector.load %arg10[%c0_57, %c0_58] : memref<32x128xbf16, #tpu.memory_space<vmem>>, vector<32x128xbf16>
    %cst_59 = arith.constant dense<0.000000e+00> : vector<16x128xf32>
    %136 = tpu.matmul %134, %135, %cst_59 {dimension_numbers = #tpu.dot_dimension_numbers<[1], [0], [0], [1], [0, 0, 1, 1], [], []>} : vector<16x32xbf16>, vector<32x128xbf16>, vector<16x128xf32> -> vector<16x128xf32>
    %c0_60 = arith.constant 0 : index
    %c0_61 = arith.constant 0 : index
    %137 = vector.load %arg11[%c0_60, %c0_61] : memref<1x128xf32, #tpu.memory_space<vmem>>, vector<1x128xf32>
    %138 = vector.broadcast %137 : vector<1x128xf32> to vector<16x128xf32>
    %139 = arith.addf %136, %138 : vector<16x128xf32>
    %cst_62 = arith.constant 0.000000e+00 : f32
    %140 = vector.broadcast %cst_62 : f32 to vector<16x128xf32>
    %141 = arith.maximumf %139, %140 : vector<16x128xf32>
    %142 = arith.truncf %141 : vector<16x128xf32> to vector<16x128xbf16>
    %c0_63 = arith.constant 0 : index
    %c0_64 = arith.constant 0 : index
    %143 = vector.load %arg12[%c0_63, %c0_64] : memref<128x32xbf16, #tpu.memory_space<vmem>>, vector<128x32xbf16>
    %cst_65 = arith.constant dense<0.000000e+00> : vector<16x32xf32>
    %144 = tpu.matmul %142, %143, %cst_65 {dimension_numbers = #tpu.dot_dimension_numbers<[1], [0], [0], [1], [0, 0, 1, 1], [], []>} : vector<16x128xbf16>, vector<128x32xbf16>, vector<16x32xf32> -> vector<16x32xf32>
    %c0_66 = arith.constant 0 : index
    %c0_67 = arith.constant 0 : index
    %145 = vector.load %arg13[%c0_66, %c0_67] : memref<1x32xf32, #tpu.memory_space<vmem>>, vector<1x32xf32>
    %146 = vector.broadcast %145 : vector<1x32xf32> to vector<16x32xf32>
    %147 = arith.addf %144, %146 : vector<16x32xf32>
    %148 = arith.addf %133, %147 : vector<16x32xf32>
    %c0_68 = arith.constant 0 : index
    %c0_69 = arith.constant 0 : index
    %149 = vector.load %arg16[%c0_68, %c0_69] : memref<1x32xf32, #tpu.memory_space<vmem>>, vector<1x32xf32>
    %c0_70 = arith.constant 0 : index
    %c0_71 = arith.constant 0 : index
    %150 = vector.load %arg17[%c0_70, %c0_71] : memref<1x32xf32, #tpu.memory_space<vmem>>, vector<1x32xf32>
    %cst_72 = arith.constant dense<0.000000e+00> : vector<16xf32>
    %151 = vector.multi_reduction <add>, %148, %cst_72 [1] : vector<16x32xf32> to vector<16xf32>
    %152 = vector.shape_cast %151 : vector<16xf32> to vector<16x1xf32>
    %cst_73 = arith.constant 3.200000e+01 : f32
    %153 = vector.broadcast %cst_73 : f32 to vector<16x1xf32>
    %154 = arith.divf %152, %153 : vector<16x1xf32>
    %155 = vector.broadcast %154 : vector<16x1xf32> to vector<16x32xf32>
    %156 = arith.subf %148, %155 : vector<16x32xf32>
    %157 = arith.mulf %156, %156 : vector<16x32xf32>
    %cst_74 = arith.constant dense<0.000000e+00> : vector<16xf32>
    %158 = vector.multi_reduction <add>, %157, %cst_74 [1] : vector<16x32xf32> to vector<16xf32>
    %159 = vector.shape_cast %158 : vector<16xf32> to vector<16x1xf32>
    %cst_75 = arith.constant 3.200000e+01 : f32
    %160 = vector.broadcast %cst_75 : f32 to vector<16x1xf32>
    %161 = arith.divf %159, %160 : vector<16x1xf32>
    %162 = vector.broadcast %154 : vector<16x1xf32> to vector<16x32xf32>
    %163 = arith.subf %148, %162 : vector<16x32xf32>
    %cst_76 = arith.constant 9.99999974E-6 : f32
    %164 = vector.broadcast %cst_76 : f32 to vector<16x1xf32>
    %165 = arith.addf %161, %164 : vector<16x1xf32>
    %166 = math.rsqrt %165 : vector<16x1xf32>
    %167 = vector.broadcast %166 : vector<16x1xf32> to vector<16x32xf32>
    %168 = arith.mulf %163, %167 : vector<16x32xf32>
    %169 = vector.broadcast %149 : vector<1x32xf32> to vector<16x32xf32>
    %170 = arith.mulf %168, %169 : vector<16x32xf32>
    %171 = vector.broadcast %150 : vector<1x32xf32> to vector<16x32xf32>
    %172 = arith.addf %170, %171 : vector<16x32xf32>
    %c0_77 = arith.constant 0 : index
    %c0_78 = arith.constant 0 : index
    %c0_79 = arith.constant 0 : index
    %173 = vector.load %arg18[%c0_77, %c0_78, %c0_79] : memref<1x16x32xf32, #tpu.memory_space<vmem>>, vector<1x16x32xf32>
    %174 = vector.shape_cast %173 : vector<1x16x32xf32> to vector<16x32xf32>
    %175 = vector.shape_cast %172 : vector<16x32xf32> to vector<1x16x32xf32>
    tpu.vector_store %arg18[%c0_77, %c0_78, %c0_79], %175 {strides = array<i32>} : memref<1x16x32xf32, #tpu.memory_space<vmem>>, vector<1x16x32xf32>,
    return
  }
  func.func @transform_0(%arg0: i32) -> (i32, i32, i32) {
    %c0_i32 = arith.constant 0 : i32
    %c0_i32_0 = arith.constant 0 : i32
    %c0_i32_1 = arith.constant 0 : i32
    return %arg0, %c0_i32, %c0_i32_0 : i32, i32, i32
  }
  func.func @transform_1(%arg0: i32) -> (i32, i32) {
    %c0_i32 = arith.constant 0 : i32
    %c0_i32_0 = arith.constant 0 : i32
    %c0_i32_1 = arith.constant 0 : i32
    return %c0_i32, %c0_i32_0 : i32, i32
  }
  func.func @transform_2(%arg0: i32) -> (i32, i32) {
    %c0_i32 = arith.constant 0 : i32
    %c0_i32_0 = arith.constant 0 : i32
    %c0_i32_1 = arith.constant 0 : i32
    return %c0_i32, %c0_i32_0 : i32, i32
  }
  func.func @transform_3(%arg0: i32) -> (i32, i32) {
    %c0_i32 = arith.constant 0 : i32
    %c0_i32_0 = arith.constant 0 : i32
    %c0_i32_1 = arith.constant 0 : i32
    return %c0_i32, %c0_i32_0 : i32, i32
  }
  func.func @transform_4(%arg0: i32) -> (i32, i32) {
    %c0_i32 = arith.constant 0 : i32
    %c0_i32_0 = arith.constant 0 : i32
    %c0_i32_1 = arith.constant 0 : i32
    return %c0_i32, %c0_i32_0 : i32, i32
  }
  func.func @transform_5(%arg0: i32) -> (i32, i32) {
    %c0_i32 = arith.constant 0 : i32
    %c0_i32_0 = arith.constant 0 : i32
    %c0_i32_1 = arith.constant 0 : i32
    return %c0_i32, %c0_i32_0 : i32, i32
  }
  func.func @transform_6(%arg0: i32) -> (i32, i32) {
    %c0_i32 = arith.constant 0 : i32
    %c0_i32_0 = arith.constant 0 : i32
    %c0_i32_1 = arith.constant 0 : i32
    return %c0_i32, %c0_i32_0 : i32, i32
  }
  func.func @transform_7(%arg0: i32) -> (i32, i32, i32) {
    %c0_i32 = arith.constant 0 : i32
    %c0_i32_0 = arith.constant 0 : i32
    %c0_i32_1 = arith.constant 0 : i32
    %c0_i32_2 = arith.constant 0 : i32
    return %c0_i32, %c0_i32_0, %c0_i32_1 : i32, i32, i32
  }
  func.func @transform_8(%arg0: i32) -> (i32, i32) {
    %c0_i32 = arith.constant 0 : i32
    %c0_i32_0 = arith.constant 0 : i32
    %c0_i32_1 = arith.constant 0 : i32
    return %c0_i32, %c0_i32_0 : i32, i32
  }
  func.func @transform_9(%arg0: i32) -> (i32, i32) {
    %c0_i32 = arith.constant 0 : i32
    %c0_i32_0 = arith.constant 0 : i32
    %c0_i32_1 = arith.constant 0 : i32
    return %c0_i32, %c0_i32_0 : i32, i32
  }
  func.func @transform_10(%arg0: i32) -> (i32, i32) {
    %c0_i32 = arith.constant 0 : i32
    %c0_i32_0 = arith.constant 0 : i32
    %c0_i32_1 = arith.constant 0 : i32
    return %c0_i32, %c0_i32_0 : i32, i32
  }
  func.func @transform_11(%arg0: i32) -> (i32, i32) {
    %c0_i32 = arith.constant 0 : i32
    %c0_i32_0 = arith.constant 0 : i32
    %c0_i32_1 = arith.constant 0 : i32
    return %c0_i32, %c0_i32_0 : i32, i32
  }
  func.func @transform_12(%arg0: i32) -> (i32, i32) {
    %c0_i32 = arith.constant 0 : i32
    %c0_i32_0 = arith.constant 0 : i32
    %c0_i32_1 = arith.constant 0 : i32
    return %c0_i32, %c0_i32_0 : i32, i32
  }
  func.func @transform_13(%arg0: i32) -> (i32, i32) {
    %c0_i32 = arith.constant 0 : i32
    %c0_i32_0 = arith.constant 0 : i32
    %c0_i32_1 = arith.constant 0 : i32
    return %c0_i32, %c0_i32_0 : i32, i32
  }
  func.func @transform_14(%arg0: i32) -> (i32, i32) {
    %c0_i32 = arith.constant 0 : i32
    %c0_i32_0 = arith.constant 0 : i32
    %c0_i32_1 = arith.constant 0 : i32
    return %c0_i32, %c0_i32_0 : i32, i32
  }
  func.func @transform_15(%arg0: i32) -> (i32, i32) {
    %c0_i32 = arith.constant 0 : i32
    %c0_i32_0 = arith.constant 0 : i32
    %c0_i32_1 = arith.constant 0 : i32
    return %c0_i32, %c0_i32_0 : i32, i32
  }
  func.func @transform_16(%arg0: i32) -> (i32, i32) {
    %c0_i32 = arith.constant 0 : i32
    %c0_i32_0 = arith.constant 0 : i32
    %c0_i32_1 = arith.constant 0 : i32
    return %c0_i32, %c0_i32_0 : i32, i32
  }
  func.func @transform_17(%arg0: i32) -> (i32, i32, i32) {
    %c0_i32 = arith.constant 0 : i32
    %c0_i32_0 = arith.constant 0 : i32
    %c0_i32_1 = arith.constant 0 : i32
    return %arg0, %c0_i32, %c0_i32_0 : i32, i32, i32
  }
}

</mosaic_0001>

<llo_original>
// kernel: encoder_forward.6
$region0: #{encoder_forward.6}
  #allocation0 [shape = 'u32[]', space=smem, size = 0x4, offset = 0x4, fixed_abs, tag = 'smem constant byte address 0x4 - core index']
  #allocation1 [shape = 'u32[144,128]{1,0:T(1,128)}', space=vmem, size = 0x12000, scoped, tag = 'internal scratch']
  %s0 = inlined_call_operand.vmem [shape: bf16[512,147], index: 0, kind: input, shape index: {}]
  %s1 = inlined_call_operand.vmem [shape: bf16[147,32], index: 1, kind: input, shape index: {}]
  %s2 = inlined_call_operand.vmem [shape: f32[1,32], index: 2, kind: input, shape index: {}]
  %s3 = inlined_call_operand.vmem [shape: bf16[512,32], index: 3, kind: output, shape index: {}]
  %s4 = sld [smem:[#allocation0]]
  $region45: #{encoder_forward.6} parent=0
    _
  %s6 = ssub.s32 1, %s4
  %s7 = scalar_select 0, %s6, %s4
  loop: start=0, step=1, limit=4
  $region2: #{encoder_forward.6} parent=0 // loop_pre_header
    _
  $region3: #{encoder_forward.6} parent=0 // loop_header
    %s9 = sphi 0, %s13
    %p10 = scmp.ge.s32.totalorder %s9, 4
    %s19 = sphi 0, %s21
    %s22 = sphi 0, %s19
    %s23 = sphi 0, %s22
    %s39 = sphi 0, %s23
    %s43 = sphi 0, %s43
    %s45 = sphi 0, %s43
    %s46 = sphi 0, %s45
    %s60 = sphi 0, %s46
    %s64 = sphi 0, %s64
    %s66 = sphi 0, %s64
    %s67 = sphi 0, %s66
    %s81 = sphi 0, %s67
    %s87 = sphi 0, %s89
    %s90 = sphi 0, %s87
    %s91 = sphi 0, %s90
    %s107 = sphi 0, %s91
  $region4: #{encoder_forward.6} parent=0 // loop_header_branch
    %12 = sbr.rel (%p10) target = $region8
  $region5: #{encoder_forward.6} parent=0 // loop_body
    %s14 = ssub.s32 %s9, 1
    %s15 = ssub.s32 %s9, 2
    %s16 = sadd.s32 %s9, 1
    %s17 = ssub.s32 %s9, %s16
    %p18 = scmp.eq.s32.totalorder %s17, 0
    %s20 = sadd.s32 %s19, 1
    %s21 = scalar_select %p18, %s19, %s20
    %p24 = pneg %p18
    %p25 = scmp.eq.s32.totalorder %s9, 1
    %p26 = por %p24, %p25
    %p27 = scmp.ne.s32.totalorder %s19, %s22
    %p28 = scmp.eq.s32.totalorder %s9, 0
    %p29 = por %p27, %p28
    %p30 = scmp.ne.s32.totalorder %s19, %s22
    %p31 = scmp.eq.s32.totalorder %s14, 1
    %p32 = por %p30, %p31
    %p33 = scmp.ne.s32.totalorder %s22, %s23
    %p34 = scmp.eq.s32.totalorder %s14, 0
    %p35 = por %p33, %p34
    %p36 = scmp.ne.s32.totalorder %s22, %s23
    %p37 = scmp.eq.s32.totalorder %s15, 1
    %p38 = por %p36, %p37
    %p40 = scmp.ne.s32.totalorder %s23, %s39
    %p41 = scmp.eq.s32.totalorder %s15, 0
    %p42 = por %p40, %p41
    %s44 = sadd.s32 %s43, 1
    %p47 = scmp.eq.s32.totalorder %s9, 1
    %p48 = scmp.ne.s32.totalorder %s43, %s45
    %p49 = scmp.eq.s32.totalorder %s9, 0
    %p50 = por %p48, %p49
    %p51 = scmp.ne.s32.totalorder %s43, %s45
    %p52 = scmp.eq.s32.totalorder %s14, 1
    %p53 = por %p51, %p52
    %p54 = scmp.ne.s32.totalorder %s45, %s46
    %p55 = scmp.eq.s32.totalorder %s14, 0
    %p56 = por %p54, %p55
    %p57 = scmp.ne.s32.totalorder %s45, %s46
    %p58 = scmp.eq.s32.totalorder %s15, 1
    %p59 = por %p57, %p58
    %p61 = scmp.ne.s32.totalorder %s46, %s60
    %p62 = scmp.eq.s32.totalorder %s15, 0
    %p63 = por %p61, %p62
    %s65 = sadd.s32 %s64, 1
    %p68 = scmp.eq.s32.totalorder %s9, 1
    %p69 = scmp.ne.s32.totalorder %s64, %s66
    %p70 = scmp.eq.s32.totalorder %s9, 0
    %p71 = por %p69, %p70
    %p72 = scmp.ne.s32.totalorder %s64, %s66
    %p73 = scmp.eq.s32.totalorder %s14, 1
    %p74 = por %p72, %p73
    %p75 = scmp.ne.s32.totalorder %s66, %s67
    %p76 = scmp.eq.s32.totalorder %s14, 0
    %p77 = por %p75, %p76
    %p78 = scmp.ne.s32.totalorder %s66, %s67
    %p79 = scmp.eq.s32.totalorder %s15, 1
    %p80 = por %p78, %p79
    %p82 = scmp.ne.s32.totalorder %s67, %s81
    %p83 = scmp.eq.s32.totalorder %s15, 0
    %p84 = por %p82, %p83
    %s85 = ssub.s32 %s9, %s16
    %p86 = scmp.eq.s32.totalorder %s85, 0
    %s88 = sadd.s32 %s87, 1
    %s89 = scalar_select %p86, %s87, %s88
    %p92 = pneg %p86
    %p93 = scmp.eq.s32.totalorder %s9, 1
    %p94 = por %p92, %p93
    %p95 = scmp.ne.s32.totalorder %s87, %s90
    %p96 = scmp.eq.s32.totalorder %s9, 0
    %p97 = por %p95, %p96
    %p98 = scmp.ne.s32.totalorder %s87, %s90
    %p99 = scmp.eq.s32.totalorder %s14, 1
    %p100 = por %p98, %p99
    %p101 = scmp.ne.s32.totalorder %s90, %s91
    %p102 = scmp.eq.s32.totalorder %s14, 0
    %p103 = por %p101, %p102
    %p104 = scmp.ne.s32.totalorder %s90, %s91
    %p105 = scmp.eq.s32.totalorder %s15, 1
    %p106 = por %p104, %p105
    %p108 = scmp.ne.s32.totalorder %s91, %s107
    %p109 = scmp.eq.s32.totalorder %s15, 0
    %p110 = por %p108, %p109
    %p111 = scmp.le.s32.totalorder 1, %s9
    %p112 = scmp.lt.s32.totalorder %s9, 3
    %p113 = pnand %p111, %p112
    %p114 = pneg %p113
    // Predicated region
    $region9: #{encoder_forward.6} parent=5 // pred_check
      _
    $region10: #{encoder_forward.6} parent=5 // pred_check_branch
      %116 = sbr.rel (%p113) target = $region12
    $region11: #{encoder_forward.6} parent=5 // pred_region
      %s117 = ssub.s32 %s9, 1
      // Predicated region
      $region13: #{encoder_forward.6} parent=11 // pred_check
        %p118 = pneg %p56
      $region14: #{encoder_forward.6} parent=11 // pred_check_branch
        %120 = sbr.rel (%p118) target = $region16
      $region15: #{encoder_forward.6} parent=11 // pred_region
        _
      $region16: #{encoder_forward.6} parent=11 // pred_fallthru
        _
      // Predicated region
      $region17: #{encoder_forward.6} parent=11 // pred_check
        %p121 = pneg %p77
      $region18: #{encoder_forward.6} parent=11 // pred_check_branch
        %123 = sbr.rel (%p121) target = $region20
      $region19: #{encoder_forward.6} parent=11 // pred_region
        _
      $region20: #{encoder_forward.6} parent=11 // pred_fallthru
        _
    $region12: #{encoder_forward.6} parent=5 // pred_fallthru
      _
    %p124 = scmp.lt.s32.totalorder %s9, 2
    // Predicated region
    $region21: #{encoder_forward.6} parent=5 // pred_check
      %p125 = pneg %p124
    $region22: #{encoder_forward.6} parent=5 // pred_check_branch
      %127 = sbr.rel (%p125) target = $region24
    $region23: #{encoder_forward.6} parent=5 // pred_region
      // Predicated region
      $region25: #{encoder_forward.6} parent=23 // pred_check
        %p128 = pneg %p29
      $region26: #{encoder_forward.6} parent=23 // pred_check_branch
        %130 = sbr.rel (%p128) target = $region28
      $region27: #{encoder_forward.6} parent=23 // pred_region
        %s131 = smul.u32 32, %s9
        %p132 = scmp.lt.s32.totalorder %s131, 63
        %s133 = scalar_select %p132, %s131, 63
        %s134 = smul.addr %s133, 2
        %s135 = smul.addr %s134, 4
        %s136 = scalar_lea.vmem %s0, %s135
        %s137 = smul.u32 32, %s9
      $region28: #{encoder_forward.6} parent=23 // pred_fallthru
        _
    $region24: #{encoder_forward.6} parent=5 // pred_fallthru
      _
    %p138 = scmp.le.s32.totalorder 1, %s9
    %p139 = scmp.lt.s32.totalorder %s9, 3
    %p140 = pnand %p138, %p139
    %p141 = pneg %p140
    // Predicated region
    $region29: #{encoder_forward.6} parent=5 // pred_check
      _
    $region30: #{encoder_forward.6} parent=5 // pred_check_branch
      %143 = sbr.rel (%p140) target = $region32
    $region31: #{encoder_forward.6} parent=5 // pred_region
      %s144 = ssub.s32 %s9, 1
      %s145 = smul.u32 32, %s14
      %p146 = scmp.lt.s32.totalorder %s145, 63
      %s147 = scalar_select %p146, %s145, 63
      %s148 = smul.addr %s147, 2
      %s149 = smul.addr %s148, 4
      %s150 = scalar_lea.vmem %s0, %s149
      %p151 = pneg %p35
      %p152 = pneg %p32
      %p153 = pneg %p56
      %p154 = pneg %p53
      %p155 = pneg %p77
      %p156 = pneg %p74
      %p157 = pneg %p103
      %p158 = pneg %p100
      %s159 = smul.u32 32, %s14
      %p160 = scmp.lt.s32.totalorder %s159, 63
      %s161 = scalar_select %p160, %s159, 63
      %s162 = smul.addr %s161, 4
      %s163 = scalar_lea.vmem %s3, %s162
      %s164 = smul.u32 32, %s14
      %p165 = scmp.lt.s32.totalorder %s164, 63
      %s166 = scalar_select %p165, %s164, 63
      %s167 = smul.addr %s166, 2
      %s168 = smul.addr %s167, 4
      %s169 = scalar_lea.vmem %s0, %s168
      %s170 = smul.u32 32, %s14
      %s171 = smul.u32 32, %s14
      %p172 = scmp.lt.s32.totalorder %s171, 63
      %s173 = scalar_select %p172, %s171, 63
      %s174 = smul.addr %s173, 4
      %s175 = scalar_lea.vmem %s3, %s174
      %s176 = smul.u32 32, %s14
      %v178 = vld [vmem:[%s169] sm:$0xff]
      %v179 = vld [vmem:[%s169 + $0x8] sm:$0xff]
      %v180 = vld [vmem:[%s169 + $0x10] sm:$0xff]
      %v181 = vld [vmem:[%s169 + $0x18] sm:$0xff]
      %v182 = vld [vmem:[%s169 + $0x20] sm:$0xff]
      %v183 = vld [vmem:[%s169 + $0x28] sm:$0xff]
      %v184 = vld [vmem:[%s169 + $0x30] sm:$0xff]
      %v185 = vld [vmem:[%s169 + $0x38] sm:$0xff]
      %v186 = vld [vmem:[%s169 + $0x40] sm:$0xff]
      %v187 = vld [vmem:[%s169 + $0x48] sm:$0xff]
      %v188 = vld [vmem:[%s169 + $0x50] sm:$0xff]
      %v189 = vld [vmem:[%s169 + $0x58] sm:$0xff]
      %v190 = vld [vmem:[%s169 + $0x60] sm:$0xff]
      %v191 = vld [vmem:[%s169 + $0x68] sm:$0xff]
      %v192 = vld [vmem:[%s169 + $0x70] sm:$0xff]
      %v193 = vld [vmem:[%s169 + $0x78] sm:$0xff]
      %v194 = vld [vmem:[%s169 + $0x80] sm:$0xff]
      %v195 = vld [vmem:[%s169 + $0x88] sm:$0xff]
      %v196 = vld [vmem:[%s169 + $0x90] sm:$0xff]
      %v197 = vld [vmem:[%s169 + $0x98] sm:$0xff]
      %v198 = vld [vmem:[%s169 + $0xa0] sm:$0xff]
      %v199 = vld [vmem:[%s169 + $0xa8] sm:$0xff]
      %v200 = vld [vmem:[%s169 + $0xb0] sm:$0xff]
      %v201 = vld [vmem:[%s169 + $0xb8] sm:$0xff]
      %v202 = vld [vmem:[%s169 + $0xc0] sm:$0xff]
      %v203 = vld [vmem:[%s169 + $0xc8] sm:$0xff]
      %v204 = vld [vmem:[%s169 + $0xd0] sm:$0xff]
      %v205 = vld [vmem:[%s169 + $0xd8] sm:$0xff]
      %v206 = vld [vmem:[%s169 + $0xe0] sm:$0xff]
      %v207 = vld [vmem:[%s169 + $0xe8] sm:$0xff]
      %v208 = vld [vmem:[%s169 + $0xf0] sm:$0xff]
      %v209 = vld [vmem:[%s169 + $0xf8] sm:$0xff]
      %v210 = vld [vmem:[%s1] sm:$0xf]
      %v211 = vld [vmem:[%s1 + $0x4] sm:$0xf]
      %v212 = vld [vmem:[%s1 + $0x8] sm:$0xf]
      %v213 = vld [vmem:[%s1 + $0xc] sm:$0xf]
      %v214 = vld [vmem:[%s1 + $0x10] sm:$0xf]
      %v215 = vld [vmem:[%s1 + $0x14] sm:$0xf]
      %v216 = vld [vmem:[%s1 + $0x18] sm:$0xf]
      %v217 = vld [vmem:[%s1 + $0x1c] sm:$0xf]
      %v218 = vld [vmem:[%s1 + $0x20] sm:$0xf]
      %v219 = vld [vmem:[%s1 + $0x24] sm:$0xf]
      %v220 = vld [vmem:[%s1 + $0x28] sm:$0xf]
      %v221 = vld [vmem:[%s1 + $0x2c] sm:$0xf]
      %v222 = vld [vmem:[%s1 + $0x30] sm:$0xf]
      %v223 = vld [vmem:[%s1 + $0x34] sm:$0xf]
      %v224 = vld [vmem:[%s1 + $0x38] sm:$0xf]
      %v225 = vld [vmem:[%s1 + $0x3c] sm:$0xf]
      %v226 = vld [vmem:[%s1 + $0x40] sm:$0xf]
      %v227 = vld [vmem:[%s1 + $0x44] sm:$0xf]
      %v228 = vld [vmem:[%s1 + $0x48] sm:$0x3]
      %v229 = vld [vmem:[%s2] sm:$0x1]
      %v231 = vlaneseq
      %v232 = vshrl.u32 %v231, 7
      %v233 = vsub.s32 0, %v232
      %v234 = vrot.slane %v229, %v233
      %v268 = vunpack.c.l.b16 %v178
      %v269 = vunpack.c.h.b16 %v178
      %v270 = vunpack.c.l.b16 %v179
      %v271 = vunpack.c.h.b16 %v179
      %v272 = vunpack.c.l.b16 %v180
      %v273 = vunpack.c.h.b16 %v180
      %v274 = vunpack.c.l.b16 %v181
      %v275 = vunpack.c.h.b16 %v181
      %v276 = vunpack.c.l.b16 %v182
      %v277 = vunpack.c.h.b16 %v182
      %v278 = vunpack.c.l.b16 %v183
      %v279 = vunpack.c.h.b16 %v183
      %v280 = vunpack.c.l.b16 %v184
      %v281 = vunpack.c.h.b16 %v184
      %v282 = vunpack.c.l.b16 %v185
      %v283 = vunpack.c.h.b16 %v185
      %v284 = vunpack.c.l.b16 %v186
      %v285 = vunpack.c.h.b16 %v186
      %v286 = vunpack.c.l.b16 %v187
      %v287 = vunpack.c.h.b16 %v187
      %v288 = vunpack.c.l.b16 %v188
      %v289 = vunpack.c.h.b16 %v188
      %v290 = vunpack.c.l.b16 %v189
      %v291 = vunpack.c.h.b16 %v189
      %v292 = vunpack.c.l.b16 %v190
      %v293 = vunpack.c.h.b16 %v190
      %v294 = vunpack.c.l.b16 %v191
      %v295 = vunpack.c.h.b16 %v191
      %v296 = vunpack.c.l.b16 %v192
      %v297 = vunpack.c.h.b16 %v192
      %v298 = vunpack.c.l.b16 %v193
      %v299 = vunpack.c.h.b16 %v193
      %v300 = vunpack.c.l.b16 %v194
      %v301 = vunpack.c.h.b16 %v194
      %v302 = vunpack.c.l.b16 %v195
      %v303 = vunpack.c.h.b16 %v195
      %v304 = vunpack.c.l.b16 %v196
      %v305 = vunpack.c.h.b16 %v196
      %v306 = vunpack.c.l.b16 %v197
      %v307 = vunpack.c.h.b16 %v197
      %v308 = vunpack.c.l.b16 %v198
      %v309 = vunpack.c.h.b16 %v198
      %v310 = vunpack.c.l.b16 %v199
      %v311 = vunpack.c.h.b16 %v199
      %v312 = vunpack.c.l.b16 %v200
      %v313 = vunpack.c.h.b16 %v200
      %v314 = vunpack.c.l.b16 %v201
      %v315 = vunpack.c.h.b16 %v201
      %v316 = vunpack.c.l.b16 %v202
      %v317 = vunpack.c.h.b16 %v202
      %v318 = vunpack.c.l.b16 %v203
      %v319 = vunpack.c.h.b16 %v203
      %v320 = vunpack.c.l.b16 %v204
      %v321 = vunpack.c.h.b16 %v204
      %v322 = vunpack.c.l.b16 %v205
      %v323 = vunpack.c.h.b16 %v205
      %v324 = vunpack.c.l.b16 %v206
      %v325 = vunpack.c.h.b16 %v206
      %v326 = vunpack.c.l.b16 %v207
      %v327 = vunpack.c.h.b16 %v207
      %v328 = vunpack.c.l.b16 %v208
      %v329 = vunpack.c.h.b16 %v208
      %v330 = vunpack.c.l.b16 %v209
      %v331 = vunpack.c.h.b16 %v209
      %v332 = vpack.c.b16 %v270, %v268
      %v333 = vpack.c.b16 %v271, %v269
      %v334 = vpack.c.b16 %v274, %v272
      %v335 = vpack.c.b16 %v275, %v273
      %v336 = vpack.c.b16 %v278, %v276
      %v337 = vpack.c.b16 %v279, %v277
      %v338 = vpack.c.b16 %v282, %v280
      %v339 = vpack.c.b16 %v283, %v281
      %v340 = vpack.c.b16 %v286, %v284
      %v341 = vpack.c.b16 %v287, %v285
      %v342 = vpack.c.b16 %v290, %v288
      %v343 = vpack.c.b16 %v291, %v289
      %v344 = vpack.c.b16 %v294, %v292
      %v345 = vpack.c.b16 %v295, %v293
      %v346 = vpack.c.b16 %v298, %v296
      %v347 = vpack.c.b16 %v299, %v297
      %v348 = vpack.c.b16 %v302, %v300
      %v349 = vpack.c.b16 %v303, %v301
      %v350 = vpack.c.b16 %v306, %v304
      %v351 = vpack.c.b16 %v307, %v305
      %v352 = vpack.c.b16 %v310, %v308
      %v353 = vpack.c.b16 %v311, %v309
      %v354 = vpack.c.b16 %v314, %v312
      %v355 = vpack.c.b16 %v315, %v313
      %v356 = vpack.c.b16 %v318, %v316
      %v357 = vpack.c.b16 %v319, %v317
      %v358 = vpack.c.b16 %v322, %v320
      %v359 = vpack.c.b16 %v323, %v321
      %v360 = vpack.c.b16 %v326, %v324
      %v361 = vpack.c.b16 %v327, %v325
      %v362 = vpack.c.b16 %v330, %v328
      %v363 = vpack.c.b16 %v331, %v329
      %v399 = vunpack.c.l.b16 %v210
      %v400 = vunpack.c.l.b16 %v211
      %v401 = vunpack.c.l.b16 %v212
      %v402 = vunpack.c.l.b16 %v213
      %v403 = vunpack.c.l.b16 %v214
      %v404 = vunpack.c.l.b16 %v215
      %v405 = vunpack.c.l.b16 %v216
      %v406 = vunpack.c.l.b16 %v217
      %v407 = vunpack.c.l.b16 %v218
      %v408 = vunpack.c.l.b16 %v219
      %v409 = vunpack.c.l.b16 %v220
      %v410 = vunpack.c.l.b16 %v221
      %v411 = vunpack.c.l.b16 %v222
      %v412 = vunpack.c.l.b16 %v223
      %v413 = vunpack.c.l.b16 %v224
      %v414 = vunpack.c.l.b16 %v225
      %v415 = vunpack.c.l.b16 %v226
      %v416 = vunpack.c.l.b16 %v227
      %v417 = vunpack.c.l.b16 %v228
      %v418 = vpack.c.b16 %v400, %v399
      %v419 = vpack.c.b16 %v402, %v401
      %v420 = vpack.c.b16 %v404, %v403
      %v421 = vpack.c.b16 %v406, %v405
      %v422 = vpack.c.b16 %v408, %v407
      %v423 = vpack.c.b16 %v410, %v409
      %v424 = vpack.c.b16 %v412, %v411
      %v425 = vpack.c.b16 %v414, %v413
      %v426 = vpack.c.b16 %v416, %v415
      %v427 = vpack.c.b16 %v417, %v417
      %vm437 = vcmask 154624
      %v439 = vsel %vm437, %v333, 0
      %v442 = vsel %vm437, %v335, 0
      %v445 = vsel %vm437, %v337, 0
      %v448 = vsel %vm437, %v339, 0
      %v451 = vsel %vm437, %v341, 0
      %v454 = vsel %vm437, %v343, 0
      %v457 = vsel %vm437, %v345, 0
      %v460 = vsel %vm437, %v347, 0
      %v463 = vsel %vm437, %v349, 0
      %v466 = vsel %vm437, %v351, 0
      %v469 = vsel %vm437, %v353, 0
      %v472 = vsel %vm437, %v355, 0
      %v475 = vsel %vm437, %v357, 0
      %v478 = vsel %vm437, %v359, 0
      %v481 = vsel %vm437, %v361, 0
      %v484 = vsel %vm437, %v363, 0
      %vm486 = vcmask 1040384
      %vm487 = vcmask 1041408
      %v488 = vsel %vm486, 4294967295, 65535
      %v489 = vsel %vm487, %v488, 0
      %v491 = vand.u32 %v427, %v489
      %493 = vmatprep.subr.bf16.mxu0 0
      %494 = vmatpush1.bf16.msra.mxu0 %v418
      %495 = vmatprep.subr.bf16.mxu0 0
      %496 = vmatpush1.bf16.msra.mxu0 %v419
      %497 = vmatprep.subr.bf16.mxu0 0
      %498 = vmatpush1.bf16.msra.mxu0 %v420
      %499 = vmatprep.subr.bf16.mxu0 0
      %500 = vmatpush1.bf16.msra.mxu0 %v421
      %501 = vmatprep.subr.bf16.mxu0 0
      %502 = vmatpush1.bf16.msra.mxu0 %v422
      %503 = vmatprep.subr.bf16.mxu0 0
      %504 = vmatpush1.bf16.msra.mxu0 %v423
      %505 = vmatprep.subr.bf16.mxu0 0
      %506 = vmatpush1.bf16.msra.mxu0 %v424
      %507 = vmatprep.subr.bf16.mxu0 0
      %508 = vmatpush1.bf16.msra.mxu0 %v425
      %509 = vmatprep.subr.bf16.mxu0 0
      %510 = vmatpush1.bf16.msra.mxu0 %v426
      %511 = vmatprep.subr.bf16.mxu0 0
      %512 = vmatpush1.bf16.msra.mxu0 %v491
      %513 = vmatprep.subr.bf16.mxu0 0
      %514 = vmatpush1.bf16.msra.mxu0 0
      %515 = vmatprep.subr.bf16.mxu0 0
      %516 = vmatpush1.bf16.msra.mxu0 0
      %517 = vmatprep.subr.bf16.mxu0 0
      %518 = vmatpush1.bf16.msra.mxu0 0
      %519 = vmatprep.subr.bf16.mxu0 0
      %520 = vmatpush1.bf16.msra.mxu0 0
      %521 = vmatprep.subr.bf16.mxu0 0
      %522 = vmatpush1.bf16.msra.mxu0 0
      %523 = vmatprep.subr.bf16.mxu0 0
      %524 = vmatpush1.bf16.msra.mxu0 0
      %525 = vmatprep.mubr.bf16.mxu0 %v439
      %526 = vmatmul.mubr.bf16.gmra.mrb[0].mxu0 %v332
      %v527 = vpop.f32.mrb[0].mxu0
      %v528 = vadd.f32 %v234, %v527
      %v529 = vpop.f32.mrb[0].mxu0
      %v530 = vpop.f32.mrb[0].mxu0
      %v531 = vadd.f32 %v234, %v530
      %v532 = vpop.f32.mrb[0].mxu0
      %533 = vmatprep.mubr.bf16.mxu0 %v442
      %534 = vmatmul.mubr.bf16.gmra.mrb[0].mxu0 %v334
      %v535 = vpop.f32.mrb[0].mxu0
      %v536 = vadd.f32 %v234, %v535
      %v537 = vpop.f32.mrb[0].mxu0
      %v538 = vpop.f32.mrb[0].mxu0
      %v539 = vadd.f32 %v234, %v538
      %v540 = vpop.f32.mrb[0].mxu0
      %541 = vmatprep.mubr.bf16.mxu0 %v445
      %542 = vmatmul.mubr.bf16.gmra.mrb[0].mxu0 %v336
      %v543 = vpop.f32.mrb[0].mxu0
      %v544 = vadd.f32 %v234, %v543
      %v545 = vpop.f32.mrb[0].mxu0
      %v546 = vpop.f32.mrb[0].mxu0
      %v547 = vadd.f32 %v234, %v546
      %v548 = vpop.f32.mrb[0].mxu0
      %549 = vmatprep.mubr.bf16.mxu0 %v448
      %550 = vmatmul.mubr.bf16.gmra.mrb[0].mxu0 %v338
      %v551 = vpop.f32.mrb[0].mxu0
      %v552 = vadd.f32 %v234, %v551
      %v553 = vpop.f32.mrb[0].mxu0
      %v554 = vpop.f32.mrb[0].mxu0
      %v555 = vadd.f32 %v234, %v554
      %v556 = vpop.f32.mrb[0].mxu0
      %557 = vmatprep.mubr.bf16.mxu0 %v451
      %558 = vmatmul.mubr.bf16.gmra.mrb[0].mxu0 %v340
      %v559 = vpop.f32.mrb[0].mxu0
      %v560 = vadd.f32 %v234, %v559
      %v561 = vpop.f32.mrb[0].mxu0
      %v562 = vpop.f32.mrb[0].mxu0
      %v563 = vadd.f32 %v234, %v562
      %v564 = vpop.f32.mrb[0].mxu0
      %565 = vmatprep.mubr.bf16.mxu0 %v454
      %566 = vmatmul.mubr.bf16.gmra.mrb[0].mxu0 %v342
      %v567 = vpop.f32.mrb[0].mxu0
      %v568 = vadd.f32 %v234, %v567
      %v569 = vpop.f32.mrb[0].mxu0
      %v570 = vpop.f32.mrb[0].mxu0
      %v571 = vadd.f32 %v234, %v570
      %v572 = vpop.f32.mrb[0].mxu0
      %573 = vmatprep.mubr.bf16.mxu0 %v457
      %574 = vmatmul.mubr.bf16.gmra.mrb[0].mxu0 %v344
      %v575 = vpop.f32.mrb[0].mxu0
      %v576 = vadd.f32 %v234, %v575
      %v577 = vpop.f32.mrb[0].mxu0
      %v578 = vpop.f32.mrb[0].mxu0
      %v579 = vadd.f32 %v234, %v578
      %v580 = vpop.f32.mrb[0].mxu0
      %581 = vmatprep.mubr.bf16.mxu0 %v460
      %582 = vmatmul.mubr.bf16.gmra.mrb[0].mxu0 %v346
      %v583 = vpop.f32.mrb[0].mxu0
      %v584 = vadd.f32 %v234, %v583
      %v585 = vpop.f32.mrb[0].mxu0
      %v586 = vpop.f32.mrb[0].mxu0
      %v587 = vadd.f32 %v234, %v586
      %v588 = vpop.f32.mrb[0].mxu0
      %589 = vmatprep.mubr.bf16.mxu0 %v463
      %590 = vmatmul.mubr.bf16.gmra.mrb[0].mxu0 %v348
      %v591 = vpop.f32.mrb[0].mxu0
      %v592 = vadd.f32 %v234, %v591
      %v593 = vpop.f32.mrb[0].mxu0
      %v594 = vpop.f32.mrb[0].mxu0
      %v595 = vadd.f32 %v234, %v594
      %v596 = vpop.f32.mrb[0].mxu0
      %597 = vmatprep.mubr.bf16.mxu0 %v466
      %598 = vmatmul.mubr.bf16.gmra.mrb[0].mxu0 %v350
      %v599 = vpop.f32.mrb[0].mxu0
      %v600 = vadd.f32 %v234, %v599
      %v601 = vpop.f32.mrb[0].mxu0
      %v602 = vpop.f32.mrb[0].mxu0
      %v603 = vadd.f32 %v234, %v602
      %v604 = vpop.f32.mrb[0].mxu0
      %605 = vmatprep.mubr.bf16.mxu0 %v469
      %606 = vmatmul.mubr.bf16.gmra.mrb[0].mxu0 %v352
      %v607 = vpop.f32.mrb[0].mxu0
      %v608 = vadd.f32 %v234, %v607
      %v609 = vpop.f32.mrb[0].mxu0
      %v610 = vpop.f32.mrb[0].mxu0
      %v611 = vadd.f32 %v234, %v610
      %v612 = vpop.f32.mrb[0].mxu0
      %613 = vmatprep.mubr.bf16.mxu0 %v472
      %614 = vmatmul.mubr.bf16.gmra.mrb[0].mxu0 %v354
      %v615 = vpop.f32.mrb[0].mxu0
      %v616 = vadd.f32 %v234, %v615
      %v617 = vpop.f32.mrb[0].mxu0
      %v618 = vpop.f32.mrb[0].mxu0
      %v619 = vadd.f32 %v234, %v618
      %v620 = vpop.f32.mrb[0].mxu0
      %621 = vmatprep.mubr.bf16.mxu0 %v475
      %622 = vmatmul.mubr.bf16.gmra.mrb[0].mxu0 %v356
      %v623 = vpop.f32.mrb[0].mxu0
      %v624 = vadd.f32 %v234, %v623
      %v625 = vpop.f32.mrb[0].mxu0
      %v626 = vpop.f32.mrb[0].mxu0
      %v627 = vadd.f32 %v234, %v626
      %v628 = vpop.f32.mrb[0].mxu0
      %629 = vmatprep.mubr.bf16.mxu0 %v478
      %630 = vmatmul.mubr.bf16.gmra.mrb[0].mxu0 %v358
      %v631 = vpop.f32.mrb[0].mxu0
      %v632 = vadd.f32 %v234, %v631
      %v633 = vpop.f32.mrb[0].mxu0
      %v634 = vpop.f32.mrb[0].mxu0
      %v635 = vadd.f32 %v234, %v634
      %v636 = vpop.f32.mrb[0].mxu0
      %637 = vmatprep.mubr.bf16.mxu0 %v481
      %638 = vmatmul.mubr.bf16.gmra.mrb[0].mxu0 %v360
      %v639 = vpop.f32.mrb[0].mxu0
      %v640 = vadd.f32 %v234, %v639
      %v641 = vpop.f32.mrb[0].mxu0
      %v642 = vpop.f32.mrb[0].mxu0
      %v643 = vadd.f32 %v234, %v642
      %v644 = vpop.f32.mrb[0].mxu0
      %645 = vmatprep.mubr.bf16.mxu0 %v484
      %646 = vmatmul.mubr.bf16.gmra.mrb[0].mxu0 %v362
      %v647 = vpop.f32.mrb[0].mxu0
      %v648 = vadd.f32 %v234, %v647
      %v649 = vpop.f32.mrb[0].mxu0
      %v650 = vpop.f32.mrb[0].mxu0
      %v651 = vadd.f32 %v234, %v650
      %v652 = vpop.f32.mrb[0].mxu0
      %653 = vdwg.mxu0
      %v654 = vmax.f32 %v528, 0.0
      %v655 = vmax.f32 %v531, 0.0
      %v656 = vmax.f32 %v536, 0.0
      %v657 = vmax.f32 %v539, 0.0
      %v658 = vmax.f32 %v544, 0.0
      %v659 = vmax.f32 %v547, 0.0
      %v660 = vmax.f32 %v552, 0.0
      %v661 = vmax.f32 %v555, 0.0
      %v662 = vmax.f32 %v560, 0.0
      %v663 = vmax.f32 %v563, 0.0
      %v664 = vmax.f32 %v568, 0.0
      %v665 = vmax.f32 %v571, 0.0
      %v666 = vmax.f32 %v576, 0.0
      %v667 = vmax.f32 %v579, 0.0
      %v668 = vmax.f32 %v584, 0.0
      %v669 = vmax.f32 %v587, 0.0
      %v670 = vmax.f32 %v592, 0.0
      %v671 = vmax.f32 %v595, 0.0
      %v672 = vmax.f32 %v600, 0.0
      %v673 = vmax.f32 %v603, 0.0
      %v674 = vmax.f32 %v608, 0.0
      %v675 = vmax.f32 %v611, 0.0
      %v676 = vmax.f32 %v616, 0.0
      %v677 = vmax.f32 %v619, 0.0
      %v678 = vmax.f32 %v624, 0.0
      %v679 = vmax.f32 %v627, 0.0
      %v680 = vmax.f32 %v632, 0.0
      %v681 = vmax.f32 %v635, 0.0
      %v682 = vmax.f32 %v640, 0.0
      %v683 = vmax.f32 %v643, 0.0
      %v684 = vmax.f32 %v648, 0.0
      %v685 = vmax.f32 %v651, 0.0
      %v686 = vpack.c.bf16 %v655, %v654
      %v687 = vpack.c.bf16 %v657, %v656
      %v688 = vpack.c.bf16 %v659, %v658
      %v689 = vpack.c.bf16 %v661, %v660
      %v690 = vpack.c.bf16 %v663, %v662
      %v691 = vpack.c.bf16 %v665, %v664
      %v692 = vpack.c.bf16 %v667, %v666
      %v693 = vpack.c.bf16 %v669, %v668
      %v694 = vpack.c.bf16 %v671, %v670
      %v695 = vpack.c.bf16 %v673, %v672
      %v696 = vpack.c.bf16 %v675, %v674
      %v697 = vpack.c.bf16 %v677, %v676
      %v698 = vpack.c.bf16 %v679, %v678
      %v699 = vpack.c.bf16 %v681, %v680
      %v700 = vpack.c.bf16 %v683, %v682
      %v701 = vpack.c.bf16 %v685, %v684
      %v718 = vunpack.c.l.b16 %v686
      %v719 = vunpack.c.h.b16 %v686
      %v720 = vunpack.c.l.b16 %v687
      %v721 = vunpack.c.h.b16 %v687
      %v722 = vunpack.c.l.b16 %v688
      %v723 = vunpack.c.h.b16 %v688
      %v724 = vunpack.c.l.b16 %v689
      %v725 = vunpack.c.h.b16 %v689
      %v726 = vunpack.c.l.b16 %v690
      %v727 = vunpack.c.h.b16 %v690
      %v728 = vunpack.c.l.b16 %v691
      %v729 = vunpack.c.h.b16 %v691
      %v730 = vunpack.c.l.b16 %v692
      %v731 = vunpack.c.h.b16 %v692
      %v732 = vunpack.c.l.b16 %v693
      %v733 = vunpack.c.h.b16 %v693
      %v734 = vunpack.c.l.b16 %v694
      %v735 = vunpack.c.h.b16 %v694
      %v736 = vunpack.c.l.b16 %v695
      %v737 = vunpack.c.h.b16 %v695
      %v738 = vunpack.c.l.b16 %v696
      %v739 = vunpack.c.h.b16 %v696
      %v740 = vunpack.c.l.b16 %v697
      %v741 = vunpack.c.h.b16 %v697
      %v742 = vunpack.c.l.b16 %v698
      %v743 = vunpack.c.h.b16 %v698
      %v744 = vunpack.c.l.b16 %v699
      %v745 = vunpack.c.h.b16 %v699
      %v746 = vunpack.c.l.b16 %v700
      %v747 = vunpack.c.h.b16 %v700
      %v748 = vunpack.c.l.b16 %v701
      %v749 = vunpack.c.h.b16 %v701
      %v750 = vpack.c.b16 %v718, %v718
      %v751 = vpack.c.b16 %v719, %v719
      %v752 = vpack.c.b16 %v720, %v720
      %v753 = vpack.c.b16 %v721, %v721
      %v754 = vpack.c.b16 %v722, %v722
      %v755 = vpack.c.b16 %v723, %v723
      %v756 = vpack.c.b16 %v724, %v724
      %v757 = vpack.c.b16 %v725, %v725
      %v758 = vpack.c.b16 %v726, %v726
      %v759 = vpack.c.b16 %v727, %v727
      %v760 = vpack.c.b16 %v728, %v728
      %v761 = vpack.c.b16 %v729, %v729
      %v762 = vpack.c.b16 %v730, %v730
      %v763 = vpack.c.b16 %v731, %v731
      %v764 = vpack.c.b16 %v732, %v732
      %v765 = vpack.c.b16 %v733, %v733
      %v766 = vpack.c.b16 %v734, %v734
      %v767 = vpack.c.b16 %v735, %v735
      %v768 = vpack.c.b16 %v736, %v736
      %v769 = vpack.c.b16 %v737, %v737
      %v770 = vpack.c.b16 %v738, %v738
      %v771 = vpack.c.b16 %v739, %v739
      %v772 = vpack.c.b16 %v740, %v740
      %v773 = vpack.c.b16 %v741, %v741
      %v774 = vpack.c.b16 %v742, %v742
      %v775 = vpack.c.b16 %v743, %v743
      %v776 = vpack.c.b16 %v744, %v744
      %v777 = vpack.c.b16 %v745, %v745
      %v778 = vpack.c.b16 %v746, %v746
      %v779 = vpack.c.b16 %v747, %v747
      %v780 = vpack.c.b16 %v748, %v748
      %v781 = vpack.c.b16 %v749, %v749
      %vm814 = vcmask 257024
      %815 = vst.msk [vmem:[%s175] sm:$0xf] %vm814, %v750
      %816 = vst.msk [vmem:[%s175 + $0x4] sm:$0xf] %vm814, %v751
      %817 = vst.msk [vmem:[%s175 + $0x8] sm:$0xf] %vm814, %v752
      %818 = vst.msk [vmem:[%s175 + $0xc] sm:$0xf] %vm814, %v753
      %819 = vst.msk [vmem:[%s175 + $0x10] sm:$0xf] %vm814, %v754
      %820 = vst.msk [vmem:[%s175 + $0x14] sm:$0xf] %vm814, %v755
      %821 = vst.msk [vmem:[%s175 + $0x18] sm:$0xf] %vm814, %v756
      %822 = vst.msk [vmem:[%s175 + $0x1c] sm:$0xf] %vm814, %v757
      %823 = vst.msk [vmem:[%s175 + $0x20] sm:$0xf] %vm814, %v758
      %824 = vst.msk [vmem:[%s175 + $0x24] sm:$0xf] %vm814, %v759
      %825 = vst.msk [vmem:[%s175 + $0x28] sm:$0xf] %vm814, %v760
      %826 = vst.msk [vmem:[%s175 + $0x2c] sm:$0xf] %vm814, %v761
      %827 = vst.msk [vmem:[%s175 + $0x30] sm:$0xf] %vm814, %v762
      %828 = vst.msk [vmem:[%s175 + $0x34] sm:$0xf] %vm814, %v763
      %829 = vst.msk [vmem:[%s175 + $0x38] sm:$0xf] %vm814, %v764
      %830 = vst.msk [vmem:[%s175 + $0x3c] sm:$0xf] %vm814, %v765
      %831 = vst.msk [vmem:[%s175 + $0x40] sm:$0xf] %vm814, %v766
      %832 = vst.msk [vmem:[%s175 + $0x44] sm:$0xf] %vm814, %v767
      %833 = vst.msk [vmem:[%s175 + $0x48] sm:$0xf] %vm814, %v768
      %834 = vst.msk [vmem:[%s175 + $0x4c] sm:$0xf] %vm814, %v769
      %835 = vst.msk [vmem:[%s175 + $0x50] sm:$0xf] %vm814, %v770
      %836 = vst.msk [vmem:[%s175 + $0x54] sm:$0xf] %vm814, %v771
      %837 = vst.msk [vmem:[%s175 + $0x58] sm:$0xf] %vm814, %v772
      %838 = vst.msk [vmem:[%s175 + $0x5c] sm:$0xf] %vm814, %v773
      %839 = vst.msk [vmem:[%s175 + $0x60] sm:$0xf] %vm814, %v774
      %840 = vst.msk [vmem:[%s175 + $0x64] sm:$0xf] %vm814, %v775
      %841 = vst.msk [vmem:[%s175 + $0x68] sm:$0xf] %vm814, %v776
      %842 = vst.msk [vmem:[%s175 + $0x6c] sm:$0xf] %vm814, %v777
      %843 = vst.msk [vmem:[%s175 + $0x70] sm:$0xf] %vm814, %v778
      %844 = vst.msk [vmem:[%s175 + $0x74] sm:$0xf] %vm814, %v779
      %845 = vst.msk [vmem:[%s175 + $0x78] sm:$0xf] %vm814, %v780
      %846 = vst.msk [vmem:[%s175 + $0x7c] sm:$0xf] %vm814, %v781
      %s847 = smul.u32 32, %s14
      %p848 = scmp.lt.s32.totalorder %s847, 63
      %s849 = scalar_select %p848, %s847, 63
      %s850 = smul.addr %s849, 4
      %s851 = scalar_lea.vmem %s3, %s850
      // Predicated region
      $region33: #{encoder_forward.6} parent=31 // pred_check
        %p852 = pneg %p100
      $region34: #{encoder_forward.6} parent=31 // pred_check_branch
        %854 = sbr.rel (%p852) target = $region36
      $region35: #{encoder_forward.6} parent=31 // pred_region
        %s855 = smul.u32 32, %s14
      $region36: #{encoder_forward.6} parent=31 // pred_fallthru
        _
    $region32: #{encoder_forward.6} parent=5 // pred_fallthru
      _
    %p856 = scmp.le.s32.totalorder 2, %s9
    // Predicated region
    $region37: #{encoder_forward.6} parent=5 // pred_check
      %p857 = pneg %p856
    $region38: #{encoder_forward.6} parent=5 // pred_check_branch
      %859 = sbr.rel (%p857) target = $region40
    $region39: #{encoder_forward.6} parent=5 // pred_region
      %s860 = ssub.s32 %s9, 2
      // Predicated region
      $region41: #{encoder_forward.6} parent=39 // pred_check
        %p861 = pneg %p106
      $region42: #{encoder_forward.6} parent=39 // pred_check_branch
        %863 = sbr.rel (%p861) target = $region44
      $region43: #{encoder_forward.6} parent=39 // pred_region
        %s864 = smul.u32 32, %s15
        %p865 = scmp.lt.s32.totalorder %s864, 63
        %s866 = scalar_select %p865, %s864, 63
        %s867 = smul.addr %s866, 4
        %s868 = scalar_lea.vmem %s3, %s867
      $region44: #{encoder_forward.6} parent=39 // pred_fallthru
        _
    $region40: #{encoder_forward.6} parent=5 // pred_fallthru
      _
  $region6: #{encoder_forward.6} parent=0 // loop_footer
    %s13 = sadd.s32 1, %s9
  $region7: #{encoder_forward.6} parent=0 // loop_footer_branch
    %8 = sbr.rel target = $region3
  $region8: #{encoder_forward.6} parent=0 // loop_exit
    _

// kernel: encoder_forward.7
$region0: #{encoder_forward.7}
  #allocation0 [shape = 'u32[]', space=smem, size = 0x4, offset = 0x4, fixed_abs, tag = 'smem constant byte address 0x4 - core index']
  #allocation1 [shape = 'u32[144,128]{1,0:T(1,128)}', space=vmem, size = 0x12000, scoped, tag = 'internal scratch']
  %s0 = inlined_call_operand.vmem [shape: bf16[128,1568], index: 0, kind: input, shape index: {}]
  %s1 = inlined_call_operand.vmem [shape: bf16[1568,64], index: 1, kind: input, shape index: {}]
  %s2 = inlined_call_operand.vmem [shape: f32[1,64], index: 2, kind: input, shape index: {}]
  %s3 = inlined_call_operand.vmem [shape: bf16[128,64], index: 3, kind: output, shape index: {}]
  %s4 = sld [smem:[#allocation0]]
  $region22: #{encoder_forward.7} parent=0
    _
  %s6 = ssub.s32 1, %s4
  %s7 = scalar_select 0, %s6, %s4
  // Predicated region
  $region2: #{encoder_forward.7} parent=0 // pred_check
    _
  $region3: #{encoder_forward.7} parent=0 // pred_check_branch
    %9 = sbr.rel (0) target = $region5
  $region4: #{encoder_forward.7} parent=0 // pred_region
    _
  $region5: #{encoder_forward.7} parent=0 // pred_fallthru
    _
  // Predicated region
  $region6: #{encoder_forward.7} parent=0 // pred_check
    _
  $region7: #{encoder_forward.7} parent=0 // pred_check_branch
    %11 = sbr.rel (0) target = $region9
  $region8: #{encoder_forward.7} parent=0 // pred_region
    _
  $region9: #{encoder_forward.7} parent=0 // pred_fallthru
    _
  // Predicated region
  $region10: #{encoder_forward.7} parent=0 // pred_check
    _
  $region11: #{encoder_forward.7} parent=0 // pred_check_branch
    %13 = sbr.rel (0) target = $region13
  $region12: #{encoder_forward.7} parent=0 // pred_region
    _
  $region13: #{encoder_forward.7} parent=0 // pred_fallthru
    _
  %v15 = vld [vmem:[%s0] sm:$0xff]
  %v16 = vld [vmem:[%s0 + $0x8] sm:$0xff]
  %v17 = vld [vmem:[%s0 + $0x10] sm:$0xff]
  %v18 = vld [vmem:[%s0 + $0x18] sm:$0xff]
  %v19 = vld [vmem:[%s0 + $0x20] sm:$0xff]
  %v20 = vld [vmem:[%s0 + $0x28] sm:$0xff]
  %v21 = vld [vmem:[%s0 + $0x30] sm:$0xf]
  %v22 = vld [vmem:[%s0 + $0x34] sm:$0xff]
  %v23 = vld [vmem:[%s0 + $0x3c] sm:$0xff]
  %v24 = vld [vmem:[%s0 + $0x44] sm:$0xff]
  %v25 = vld [vmem:[%s0 + $0x4c] sm:$0xff]
  %v26 = vld [vmem:[%s0 + $0x54] sm:$0xff]
  %v27 = vld [vmem:[%s0 + $0x5c] sm:$0xff]
  %v28 = vld [vmem:[%s0 + $0x64] sm:$0xf]
  %v29 = vld [vmem:[%s0 + $0x68] sm:$0xff]
  %v30 = vld [vmem:[%s0 + $0x70] sm:$0xff]
  %v31 = vld [vmem:[%s0 + $0x78] sm:$0xff]
  %v32 = vld [vmem:[%s0 + $0x80] sm:$0xff]
  %v33 = vld [vmem:[%s0 + $0x88] sm:$0xff]
  %v34 = vld [vmem:[%s0 + $0x90] sm:$0xff]
  %v35 = vld [vmem:[%s0 + $0x98] sm:$0xf]
  %v36 = vld [vmem:[%s0 + $0x9c] sm:$0xff]
  %v37 = vld [vmem:[%s0 + $0xa4] sm:$0xff]
  %v38 = vld [vmem:[%s0 + $0xac] sm:$0xff]
  %v39 = vld [vmem:[%s0 + $0xb4] sm:$0xff]
  %v40 = vld [vmem:[%s0 + $0xbc] sm:$0xff]
  %v41 = vld [vmem:[%s0 + $0xc4] sm:$0xff]
  %v42 = vld [vmem:[%s0 + $0xcc] sm:$0xf]
  %v43 = vld [vmem:[%s0 + $0xd0] sm:$0xff]
  %v44 = vld [vmem:[%s0 + $0xd8] sm:$0xff]
  %v45 = vld [vmem:[%s0 + $0xe0] sm:$0xff]
  %v46 = vld [vmem:[%s0 + $0xe8] sm:$0xff]
  %v47 = vld [vmem:[%s0 + $0xf0] sm:$0xff]
  %v48 = vld [vmem:[%s0 + $0xf8] sm:$0xff]
  %v49 = vld [vmem:[%s0 + $0x100] sm:$0xf]
  %v50 = vld [vmem:[%s0 + $0x104] sm:$0xff]
  %v51 = vld [vmem:[%s0 + $0x10c] sm:$0xff]
  %v52 = vld [vmem:[%s0 + $0x114] sm:$0xff]
  %v53 = vld [vmem:[%s0 + $0x11c] sm:$0xff]
  %v54 = vld [vmem:[%s0 + $0x124] sm:$0xff]
  %v55 = vld [vmem:[%s0 + $0x12c] sm:$0xff]
  %v56 = vld [vmem:[%s0 + $0x134] sm:$0xf]
  %v57 = vld [vmem:[%s0 + $0x138] sm:$0xff]
  %v58 = vld [vmem:[%s0 + $0x140] sm:$0xff]
  %v59 = vld [vmem:[%s0 + $0x148] sm:$0xff]
  %v60 = vld [vmem:[%s0 + $0x150] sm:$0xff]
  %v61 = vld [vmem:[%s0 + $0x158] sm:$0xff]
  %v62 = vld [vmem:[%s0 + $0x160] sm:$0xff]
  %v63 = vld [vmem:[%s0 + $0x168] sm:$0xf]
  %v64 = vld [vmem:[%s0 + $0x16c] sm:$0xff]
  %v65 = vld [vmem:[%s0 + $0x174] sm:$0xff]
  %v66 = vld [vmem:[%s0 + $0x17c] sm:$0xff]
  %v67 = vld [vmem:[%s0 + $0x184] sm:$0xff]
  %v68 = vld [vmem:[%s0 + $0x18c] sm:$0xff]
  %v69 = vld [vmem:[%s0 + $0x194] sm:$0xff]
  %v70 = vld [vmem:[%s0 + $0x19c] sm:$0xf]
  %v71 = vld [vmem:[%s0 + $0x1a0] sm:$0xff]
  %v72 = vld [vmem:[%s0 + $0x1a8] sm:$0xff]
  %v73 = vld [vmem:[%s0 + $0x1b0] sm:$0xff]
  %v74 = vld [vmem:[%s0 + $0x1b8] sm:$0xff]
  %v75 = vld [vmem:[%s0 + $0x1c0] sm:$0xff]
  %v76 = vld [vmem:[%s0 + $0x1c8] sm:$0xff]
  %v77 = vld [vmem:[%s0 + $0x1d0] sm:$0xf]
  %v78 = vld [vmem:[%s0 + $0x1d4] sm:$0xff]
  %v79 = vld [vmem:[%s0 + $0x1dc] sm:$0xff]
  %v80 = vld [vmem:[%s0 + $0x1e4] sm:$0xff]
  %v81 = vld [vmem:[%s0 + $0x1ec] sm:$0xff]
  %v82 = vld [vmem:[%s0 + $0x1f4] sm:$0xff]
  %v83 = vld [vmem:[%s0 + $0x1fc] sm:$0xff]
  %v84 = vld [vmem:[%s0 + $0x204] sm:$0xf]
  %v85 = vld [vmem:[%s0 + $0x208] sm:$0xff]
  %v86 = vld [vmem:[%s0 + $0x210] sm:$0xff]
  %v87 = vld [vmem:[%s0 + $0x218] sm:$0xff]
  %v88 = vld [vmem:[%s0 + $0x220] sm:$0xff]
  %v89 = vld [vmem:[%s0 + $0x228] sm:$0xff]
  %v90 = vld [vmem:[%s0 + $0x230] sm:$0xff]
  %v91 = vld [vmem:[%s0 + $0x238] sm:$0xf]
  %v92 = vld [vmem:[%s0 + $0x23c] sm:$0xff]
  %v93 = vld [vmem:[%s0 + $0x244] sm:$0xff]
  %v94 = vld [vmem:[%s0 + $0x24c] sm:$0xff]
  %v95 = vld [vmem:[%s0 + $0x254] sm:$0xff]
  %v96 = vld [vmem:[%s0 + $0x25c] sm:$0xff]
  %v97 = vld [vmem:[%s0 + $0x264] sm:$0xff]
  %v98 = vld [vmem:[%s0 + $0x26c] sm:$0xf]
  %v99 = vld [vmem:[%s0 + $0x270] sm:$0xff]
  %v100 = vld [vmem:[%s0 + $0x278] sm:$0xff]
  %v101 = vld [vmem:[%s0 + $0x280] sm:$0xff]
  %v102 = vld [vmem:[%s0 + $0x288] sm:$0xff]
  %v103 = vld [vmem:[%s0 + $0x290] sm:$0xff]
  %v104 = vld [vmem:[%s0 + $0x298] sm:$0xff]
  %v105 = vld [vmem:[%s0 + $0x2a0] sm:$0xf]
  %v106 = vld [vmem:[%s0 + $0x2a4] sm:$0xff]
  %v107 = vld [vmem:[%s0 + $0x2ac] sm:$0xff]
  %v108 = vld [vmem:[%s0 + $0x2b4] sm:$0xff]
  %v109 = vld [vmem:[%s0 + $0x2bc] sm:$0xff]
  %v110 = vld [vmem:[%s0 + $0x2c4] sm:$0xff]
  %v111 = vld [vmem:[%s0 + $0x2cc] sm:$0xff]
  %v112 = vld [vmem:[%s0 + $0x2d4] sm:$0xf]
  %v113 = vld [vmem:[%s0 + $0x2d8] sm:$0xff]
  %v114 = vld [vmem:[%s0 + $0x2e0] sm:$0xff]
  %v115 = vld [vmem:[%s0 + $0x2e8] sm:$0xff]
  %v116 = vld [vmem:[%s0 + $0x2f0] sm:$0xff]
  %v117 = vld [vmem:[%s0 + $0x2f8] sm:$0xff]
  %v118 = vld [vmem:[%s0 + $0x300] sm:$0xff]
  %v119 = vld [vmem:[%s0 + $0x308] sm:$0xf]
  %v120 = vld [vmem:[%s0 + $0x30c] sm:$0xff]
  %v121 = vld [vmem:[%s0 + $0x314] sm:$0xff]
  %v122 = vld [vmem:[%s0 + $0x31c] sm:$0xff]
  %v123 = vld [vmem:[%s0 + $0x324] sm:$0xff]
  %v124 = vld [vmem:[%s0 + $0x32c] sm:$0xff]
  %v125 = vld [vmem:[%s0 + $0x334] sm:$0xff]
  %v126 = vld [vmem:[%s0 + $0x33c] sm:$0xf]
  %v127 = vld [vmem:[%s1] sm:$0xf]
  %v128 = vld [vmem:[%s1 + $0x4] sm:$0xf]
  %v129 = vld [vmem:[%s1 + $0x8] sm:$0xf]
  %v130 = vld [vmem:[%s1 + $0xc] sm:$0xf]
  %v131 = vld [vmem:[%s1 + $0x10] sm:$0xf]
  %v132 = vld [vmem:[%s1 + $0x14] sm:$0xf]
  %v133 = vld [vmem:[%s1 + $0x18] sm:$0xf]
  %v134 = vld [vmem:[%s1 + $0x1c] sm:$0xf]
  %v135 = vld [vmem:[%s1 + $0x20] sm:$0xf]
  %v136 = vld [vmem:[%s1 + $0x24] sm:$0xf]
  %v137 = vld [vmem:[%s1 + $0x28] sm:$0xf]
  %v138 = vld [vmem:[%s1 + $0x2c] sm:$0xf]
  %v139 = vld [vmem:[%s1 + $0x30] sm:$0xf]
  %v140 = vld [vmem:[%s1 + $0x34] sm:$0xf]
  %v141 = vld [vmem:[%s1 + $0x38] sm:$0xf]
  %v142 = vld [vmem:[%s1 + $0x3c] sm:$0xf]
  %v143 = vld [vmem:[%s1 + $0x40] sm:$0xf]
  %v144 = vld [vmem:[%s1 + $0x44] sm:$0xf]
  %v145 = vld [vmem:[%s1 + $0x48] sm:$0xf]
  %v146 = vld [vmem:[%s1 + $0x4c] sm:$0xf]
  %v147 = vld [vmem:[%s1 + $0x50] sm:$0xf]
  %v148 = vld [vmem:[%s1 + $0x54] sm:$0xf]
  %v149 = vld [vmem:[%s1 + $0x58] sm:$0xf]
  %v150 = vld [vmem:[%s1 + $0x5c] sm:$0xf]
  %v151 = vld [vmem:[%s1 + $0x60] sm:$0xf]
  %v152 = vld [vmem:[%s1 + $0x64] sm:$0xf]
  %v153 = vld [vmem:[%s1 + $0x68] sm:$0xf]
  %v154 = vld [vmem:[%s1 + $0x6c] sm:$0xf]
  %v155 = vld [vmem:[%s1 + $0x70] sm:$0xf]
  %v156 = vld [vmem:[%s1 + $0x74] sm:$0xf]
  %v157 = vld [vmem:[%s1 + $0x78] sm:$0xf]
  %v158 = vld [vmem:[%s1 + $0x7c] sm:$0xf]
  %v159 = vld [vmem:[%s1 + $0x80] sm:$0xf]
  %v160 = vld [vmem:[%s1 + $0x84] sm:$0xf]
  %v161 = vld [vmem:[%s1 + $0x88] sm:$0xf]
  %v162 = vld [vmem:[%s1 + $0x8c] sm:$0xf]
  %v163 = vld [vmem:[%s1 + $0x90] sm:$0xf]
  %v164 = vld [vmem:[%s1 + $0x94] sm:$0xf]
  %v165 = vld [vmem:[%s1 + $0x98] sm:$0xf]
  %v166 = vld [vmem:[%s1 + $0x9c] sm:$0xf]
  %v167 = vld [vmem:[%s1 + $0xa0] sm:$0xf]
  %v168 = vld [vmem:[%s1 + $0xa4] sm:$0xf]
  %v169 = vld [vmem:[%s1 + $0xa8] sm:$0xf]
  %v170 = vld [vmem:[%s1 + $0xac] sm:$0xf]
  %v171 = vld [vmem:[%s1 + $0xb0] sm:$0xf]
  %v172 = vld [vmem:[%s1 + $0xb4] sm:$0xf]
  %v173 = vld [vmem:[%s1 + $0xb8] sm:$0xf]
  %v174 = vld [vmem:[%s1 + $0xbc] sm:$0xf]
  %v175 = vld [vmem:[%s1 + $0xc0] sm:$0xf]
  %v176 = vld [vmem:[%s1 + $0xc4] sm:$0xf]
  %v177 = vld [vmem:[%s1 + $0xc8] sm:$0xf]
  %v178 = vld [vmem:[%s1 + $0xcc] sm:$0xf]
  %v179 = vld [vmem:[%s1 + $0xd0] sm:$0xf]
  %v180 = vld [vmem:[%s1 + $0xd4] sm:$0xf]
  %v181 = vld [vmem:[%s1 + $0xd8] sm:$0xf]
  %v182 = vld [vmem:[%s1 + $0xdc] sm:$0xf]
  %v183 = vld [vmem:[%s1 + $0xe0] sm:$0xf]
  %v184 = vld [vmem:[%s1 + $0xe4] sm:$0xf]
  %v185 = vld [vmem:[%s1 + $0xe8] sm:$0xf]
  %v186 = vld [vmem:[%s1 + $0xec] sm:$0xf]
  %v187 = vld [vmem:[%s1 + $0xf0] sm:$0xf]
  %v188 = vld [vmem:[%s1 + $0xf4] sm:$0xf]
  %v189 = vld [vmem:[%s1 + $0xf8] sm:$0xf]
  %v190 = vld [vmem:[%s1 + $0xfc] sm:$0xf]
  %v191 = vld [vmem:[%s1 + $0x100] sm:$0xf]
  %v192 = vld [vmem:[%s1 + $0x104] sm:$0xf]
  %v193 = vld [vmem:[%s1 + $0x108] sm:$0xf]
  %v194 = vld [vmem:[%s1 + $0x10c] sm:$0xf]
  %v195 = vld [vmem:[%s1 + $0x110] sm:$0xf]
  %v196 = vld [vmem:[%s1 + $0x114] sm:$0xf]
  %v197 = vld [vmem:[%s1 + $0x118] sm:$0xf]
  %v198 = vld [vmem:[%s1 + $0x11c] sm:$0xf]
  %v199 = vld [vmem:[%s1 + $0x120] sm:$0xf]
  %v200 = vld [vmem:[%s1 + $0x124] sm:$0xf]
  %v201 = vld [vmem:[%s1 + $0x128] sm:$0xf]
  %v202 = vld [vmem:[%s1 + $0x12c] sm:$0xf]
  %v203 = vld [vmem:[%s1 + $0x130] sm:$0xf]
  %v204 = vld [vmem:[%s1 + $0x134] sm:$0xf]
  %v205 = vld [vmem:[%s1 + $0x138] sm:$0xf]
  %v206 = vld [vmem:[%s1 + $0x13c] sm:$0xf]
  %v207 = vld [vmem:[%s1 + $0x140] sm:$0xf]
  %v208 = vld [vmem:[%s1 + $0x144] sm:$0xf]
  %v209 = vld [vmem:[%s1 + $0x148] sm:$0xf]
  %v210 = vld [vmem:[%s1 + $0x14c] sm:$0xf]
  %v211 = vld [vmem:[%s1 + $0x150] sm:$0xf]
  %v212 = vld [vmem:[%s1 + $0x154] sm:$0xf]
  %v213 = vld [vmem:[%s1 + $0x158] sm:$0xf]
  %v214 = vld [vmem:[%s1 + $0x15c] sm:$0xf]
  %v215 = vld [vmem:[%s1 + $0x160] sm:$0xf]
  %v216 = vld [vmem:[%s1 + $0x164] sm:$0xf]
  %v217 = vld [vmem:[%s1 + $0x168] sm:$0xf]
  %v218 = vld [vmem:[%s1 + $0x16c] sm:$0xf]
  %v219 = vld [vmem:[%s1 + $0x170] sm:$0xf]
  %v220 = vld [vmem:[%s1 + $0x174] sm:$0xf]
  %v221 = vld [vmem:[%s1 + $0x178] sm:$0xf]
  %v222 = vld [vmem:[%s1 + $0x17c] sm:$0xf]
  %v223 = vld [vmem:[%s1 + $0x180] sm:$0xf]
  %v224 = vld [vmem:[%s1 + $0x184] sm:$0xf]
  %v225 = vld [vmem:[%s1 + $0x188] sm:$0xf]
  %v226 = vld [vmem:[%s1 + $0x18c] sm:$0xf]
  %v227 = vld [vmem:[%s1 + $0x190] sm:$0xf]
  %v228 = vld [vmem:[%s1 + $0x194] sm:$0xf]
  %v229 = vld [vmem:[%s1 + $0x198] sm:$0xf]
  %v230 = vld [vmem:[%s1 + $0x19c] sm:$0xf]
  %v231 = vld [vmem:[%s1 + $0x1a0] sm:$0xf]
  %v232 = vld [vmem:[%s1 + $0x1a4] sm:$0xf]
  %v233 = vld [vmem:[%s1 + $0x1a8] sm:$0xf]
  %v234 = vld [vmem:[%s1 + $0x1ac] sm:$0xf]
  %v235 = vld [vmem:[%s1 + $0x1b0] sm:$0xf]
  %v236 = vld [vmem:[%s1 + $0x1b4] sm:$0xf]
  %v237 = vld [vmem:[%s1 + $0x1b8] sm:$0xf]
  %v238 = vld [vmem:[%s1 + $0x1bc] sm:$0xf]
  %v239 = vld [vmem:[%s1 + $0x1c0] sm:$0xf]
  %v240 = vld [vmem:[%s1 + $0x1c4] sm:$0xf]
  %v241 = vld [vmem:[%s1 + $0x1c8] sm:$0xf]
  %v242 = vld [vmem:[%s1 + $0x1cc] sm:$0xf]
  %v243 = vld [vmem:[%s1 + $0x1d0] sm:$0xf]
  %v244 = vld [vmem:[%s1 + $0x1d4] sm:$0xf]
  %v245 = vld [vmem:[%s1 + $0x1d8] sm:$0xf]
  %v246 = vld [vmem:[%s1 + $0x1dc] sm:$0xf]
  %v247 = vld [vmem:[%s1 + $0x1e0] sm:$0xf]
  %v248 = vld [vmem:[%s1 + $0x1e4] sm:$0xf]
  %v249 = vld [vmem:[%s1 + $0x1e8] sm:$0xf]
  %v250 = vld [vmem:[%s1 + $0x1ec] sm:$0xf]
  %v251 = vld [vmem:[%s1 + $0x1f0] sm:$0xf]
  %v252 = vld [vmem:[%s1 + $0x1f4] sm:$0xf]
  %v253 = vld [vmem:[%s1 + $0x1f8] sm:$0xf]
  %v254 = vld [vmem:[%s1 + $0x1fc] sm:$0xf]
  %v255 = vld [vmem:[%s1 + $0x200] sm:$0xf]
  %v256 = vld [vmem:[%s1 + $0x204] sm:$0xf]
  %v257 = vld [vmem:[%s1 + $0x208] sm:$0xf]
  %v258 = vld [vmem:[%s1 + $0x20c] sm:$0xf]
  %v259 = vld [vmem:[%s1 + $0x210] sm:$0xf]
  %v260 = vld [vmem:[%s1 + $0x214] sm:$0xf]
  %v261 = vld [vmem:[%s1 + $0x218] sm:$0xf]
  %v262 = vld [vmem:[%s1 + $0x21c] sm:$0xf]
  %v263 = vld [vmem:[%s1 + $0x220] sm:$0xf]
  %v264 = vld [vmem:[%s1 + $0x224] sm:$0xf]
  %v265 = vld [vmem:[%s1 + $0x228] sm:$0xf]
  %v266 = vld [vmem:[%s1 + $0x22c] sm:$0xf]
  %v267 = vld [vmem:[%s1 + $0x230] sm:$0xf]
  %v268 = vld [vmem:[%s1 + $0x234] sm:$0xf]
  %v269 = vld [vmem:[%s1 + $0x238] sm:$0xf]
  %v270 = vld [vmem:[%s1 + $0x23c] sm:$0xf]
  %v271 = vld [vmem:[%s1 + $0x240] sm:$0xf]
  %v272 = vld [vmem:[%s1 + $0x244] sm:$0xf]
  %v273 = vld [vmem:[%s1 + $0x248] sm:$0xf]
  %v274 = vld [vmem:[%s1 + $0x24c] sm:$0xf]
  %v275 = vld [vmem:[%s1 + $0x250] sm:$0xf]
  %v276 = vld [vmem:[%s1 + $0x254] sm:$0xf]
  %v277 = vld [vmem:[%s1 + $0x258] sm:$0xf]
  %v278 = vld [vmem:[%s1 + $0x25c] sm:$0xf]
  %v279 = vld [vmem:[%s1 + $0x260] sm:$0xf]
  %v280 = vld [vmem:[%s1 + $0x264] sm:$0xf]
  %v281 = vld [vmem:[%s1 + $0x268] sm:$0xf]
  %v282 = vld [vmem:[%s1 + $0x26c] sm:$0xf]
  %v283 = vld [vmem:[%s1 + $0x270] sm:$0xf]
  %v284 = vld [vmem:[%s1 + $0x274] sm:$0xf]
  %v285 = vld [vmem:[%s1 + $0x278] sm:$0xf]
  %v286 = vld [vmem:[%s1 + $0x27c] sm:$0xf]
  %v287 = vld [vmem:[%s1 + $0x280] sm:$0xf]
  %v288 = vld [vmem:[%s1 + $0x284] sm:$0xf]
  %v289 = vld [vmem:[%s1 + $0x288] sm:$0xf]
  %v290 = vld [vmem:[%s1 + $0x28c] sm:$0xf]
  %v291 = vld [vmem:[%s1 + $0x290] sm:$0xf]
  %v292 = vld [vmem:[%s1 + $0x294] sm:$0xf]
  %v293 = vld [vmem:[%s1 + $0x298] sm:$0xf]
  %v294 = vld [vmem:[%s1 + $0x29c] sm:$0xf]
  %v295 = vld [vmem:[%s1 + $0x2a0] sm:$0xf]
  %v296 = vld [vmem:[%s1 + $0x2a4] sm:$0xf]
  %v297 = vld [vmem:[%s1 + $0x2a8] sm:$0xf]
  %v298 = vld [vmem:[%s1 + $0x2ac] sm:$0xf]
  %v299 = vld [vmem:[%s1 + $0x2b0] sm:$0xf]
  %v300 = vld [vmem:[%s1 + $0x2b4] sm:$0xf]
  %v301 = vld [vmem:[%s1 + $0x2b8] sm:$0xf]
  %v302 = vld [vmem:[%s1 + $0x2bc] sm:$0xf]
  %v303 = vld [vmem:[%s1 + $0x2c0] sm:$0xf]
  %v304 = vld [vmem:[%s1 + $0x2c4] sm:$0xf]
  %v305 = vld [vmem:[%s1 + $0x2c8] sm:$0xf]
  %v306 = vld [vmem:[%s1 + $0x2cc] sm:$0xf]
  %v307 = vld [vmem:[%s1 + $0x2d0] sm:$0xf]
  %v308 = vld [vmem:[%s1 + $0x2d4] sm:$0xf]
  %v309 = vld [vmem:[%s1 + $0x2d8] sm:$0xf]
  %v310 = vld [vmem:[%s1 + $0x2dc] sm:$0xf]
  %v311 = vld [vmem:[%s1 + $0x2e0] sm:$0xf]
  %v312 = vld [vmem:[%s1 + $0x2e4] sm:$0xf]
  %v313 = vld [vmem:[%s1 + $0x2e8] sm:$0xf]
  %v314 = vld [vmem:[%s1 + $0x2ec] sm:$0xf]
  %v315 = vld [vmem:[%s1 + $0x2f0] sm:$0xf]
  %v316 = vld [vmem:[%s1 + $0x2f4] sm:$0xf]
  %v317 = vld [vmem:[%s1 + $0x2f8] sm:$0xf]
  %v318 = vld [vmem:[%s1 + $0x2fc] sm:$0xf]
  %v319 = vld [vmem:[%s1 + $0x300] sm:$0xf]
  %v320 = vld [vmem:[%s1 + $0x304] sm:$0xf]
  %v321 = vld [vmem:[%s1 + $0x308] sm:$0xf]
  %v322 = vld [vmem:[%s1 + $0x30c] sm:$0xf]
  %v323 = vld [vmem:[%s2] sm:$0x1]
  %v325 = vlaneseq
  %v326 = vshrl.u32 %v325, 7
  %v327 = vsub.s32 0, %v326
  %v328 = vrot.slane %v323, %v327
  %v442 = vunpack.c.l.b16 %v15
  %v443 = vunpack.c.h.b16 %v15
  %v444 = vunpack.c.l.b16 %v16
  %v445 = vunpack.c.h.b16 %v16
  %v446 = vunpack.c.l.b16 %v17
  %v447 = vunpack.c.h.b16 %v17
  %v448 = vunpack.c.l.b16 %v18
  %v449 = vunpack.c.h.b16 %v18
  %v450 = vunpack.c.l.b16 %v19
  %v451 = vunpack.c.h.b16 %v19
  %v452 = vunpack.c.l.b16 %v20
  %v453 = vunpack.c.h.b16 %v20
  %v454 = vunpack.c.l.b16 %v21
  %v455 = vunpack.c.l.b16 %v22
  %v456 = vunpack.c.h.b16 %v22
  %v457 = vunpack.c.l.b16 %v23
  %v458 = vunpack.c.h.b16 %v23
  %v459 = vunpack.c.l.b16 %v24
  %v460 = vunpack.c.h.b16 %v24
  %v461 = vunpack.c.l.b16 %v25
  %v462 = vunpack.c.h.b16 %v25
  %v463 = vunpack.c.l.b16 %v26
  %v464 = vunpack.c.h.b16 %v26
  %v465 = vunpack.c.l.b16 %v27
  %v466 = vunpack.c.h.b16 %v27
  %v467 = vunpack.c.l.b16 %v28
  %v468 = vunpack.c.l.b16 %v29
  %v469 = vunpack.c.h.b16 %v29
  %v470 = vunpack.c.l.b16 %v30
  %v471 = vunpack.c.h.b16 %v30
  %v472 = vunpack.c.l.b16 %v31
  %v473 = vunpack.c.h.b16 %v31
  %v474 = vunpack.c.l.b16 %v32
  %v475 = vunpack.c.h.b16 %v32
  %v476 = vunpack.c.l.b16 %v33
  %v477 = vunpack.c.h.b16 %v33
  %v478 = vunpack.c.l.b16 %v34
  %v479 = vunpack.c.h.b16 %v34
  %v480 = vunpack.c.l.b16 %v35
  %v481 = vunpack.c.l.b16 %v36
  %v482 = vunpack.c.h.b16 %v36
  %v483 = vunpack.c.l.b16 %v37
  %v484 = vunpack.c.h.b16 %v37
  %v485 = vunpack.c.l.b16 %v38
  %v486 = vunpack.c.h.b16 %v38
  %v487 = vunpack.c.l.b16 %v39
  %v488 = vunpack.c.h.b16 %v39
  %v489 = vunpack.c.l.b16 %v40
  %v490 = vunpack.c.h.b16 %v40
  %v491 = vunpack.c.l.b16 %v41
  %v492 = vunpack.c.h.b16 %v41
  %v493 = vunpack.c.l.b16 %v42
  %v494 = vunpack.c.l.b16 %v43
  %v495 = vunpack.c.h.b16 %v43
  %v496 = vunpack.c.l.b16 %v44
  %v497 = vunpack.c.h.b16 %v44
  %v498 = vunpack.c.l.b16 %v45
  %v499 = vunpack.c.h.b16 %v45
  %v500 = vunpack.c.l.b16 %v46
  %v501 = vunpack.c.h.b16 %v46
  %v502 = vunpack.c.l.b16 %v47
  %v503 = vunpack.c.h.b16 %v47
  %v504 = vunpack.c.l.b16 %v48
  %v505 = vunpack.c.h.b16 %v48
  %v506 = vunpack.c.l.b16 %v49
  %v507 = vunpack.c.l.b16 %v50
  %v508 = vunpack.c.h.b16 %v50
  %v509 = vunpack.c.l.b16 %v51
  %v510 = vunpack.c.h.b16 %v51
  %v511 = vunpack.c.l.b16 %v52
  %v512 = vunpack.c.h.b16 %v52
  %v513 = vunpack.c.l.b16 %v53
  %v514 = vunpack.c.h.b16 %v53
  %v515 = vunpack.c.l.b16 %v54
  %v516 = vunpack.c.h.b16 %v54
  %v517 = vunpack.c.l.b16 %v55
  %v518 = vunpack.c.h.b16 %v55
  %v519 = vunpack.c.l.b16 %v56
  %v520 = vunpack.c.l.b16 %v57
  %v521 = vunpack.c.h.b16 %v57
  %v522 = vunpack.c.l.b16 %v58
  %v523 = vunpack.c.h.b16 %v58
  %v524 = vunpack.c.l.b16 %v59
  %v525 = vunpack.c.h.b16 %v59
  %v526 = vunpack.c.l.b16 %v60
  %v527 = vunpack.c.h.b16 %v60
  %v528 = vunpack.c.l.b16 %v61
  %v529 = vunpack.c.h.b16 %v61
  %v530 = vunpack.c.l.b16 %v62
  %v531 = vunpack.c.h.b16 %v62
  %v532 = vunpack.c.l.b16 %v63
  %v533 = vunpack.c.l.b16 %v64
  %v534 = vunpack.c.h.b16 %v64
  %v535 = vunpack.c.l.b16 %v65
  %v536 = vunpack.c.h.b16 %v65
  %v537 = vunpack.c.l.b16 %v66
  %v538 = vunpack.c.h.b16 %v66
  %v539 = vunpack.c.l.b16 %v67
  %v540 = vunpack.c.h.b16 %v67
  %v541 = vunpack.c.l.b16 %v68
  %v542 = vunpack.c.h.b16 %v68
  %v543 = vunpack.c.l.b16 %v69
  %v544 = vunpack.c.h.b16 %v69
  %v545 = vunpack.c.l.b16 %v70
  %v546 = vunpack.c.l.b16 %v71
  %v547 = vunpack.c.h.b16 %v71
  %v548 = vunpack.c.l.b16 %v72
  %v549 = vunpack.c.h.b16 %v72
  %v550 = vunpack.c.l.b16 %v73
  %v551 = vunpack.c.h.b16 %v73
  %v552 = vunpack.c.l.b16 %v74
  %v553 = vunpack.c.h.b16 %v74
  %v554 = vunpack.c.l.b16 %v75
  %v555 = vunpack.c.h.b16 %v75
  %v556 = vunpack.c.l.b16 %v76
  %v557 = vunpack.c.h.b16 %v76
  %v558 = vunpack.c.l.b16 %v77
  %v559 = vunpack.c.l.b16 %v78
  %v560 = vunpack.c.h.b16 %v78
  %v561 = vunpack.c.l.b16 %v79
  %v562 = vunpack.c.h.b16 %v79
  %v563 = vunpack.c.l.b16 %v80
  %v564 = vunpack.c.h.b16 %v80
  %v565 = vunpack.c.l.b16 %v81
  %v566 = vunpack.c.h.b16 %v81
  %v567 = vunpack.c.l.b16 %v82
  %v568 = vunpack.c.h.b16 %v82
  %v569 = vunpack.c.l.b16 %v83
  %v570 = vunpack.c.h.b16 %v83
  %v571 = vunpack.c.l.b16 %v84
  %v572 = vunpack.c.l.b16 %v85
  %v573 = vunpack.c.h.b16 %v85
  %v574 = vunpack.c.l.b16 %v86
  %v575 = vunpack.c.h.b16 %v86
  %v576 = vunpack.c.l.b16 %v87
  %v577 = vunpack.c.h.b16 %v87
  %v578 = vunpack.c.l.b16 %v88
  %v579 = vunpack.c.h.b16 %v88
  %v580 = vunpack.c.l.b16 %v89
  %v581 = vunpack.c.h.b16 %v89
  %v582 = vunpack.c.l.b16 %v90
  %v583 = vunpack.c.h.b16 %v90
  %v584 = vunpack.c.l.b16 %v91
  %v585 = vunpack.c.l.b16 %v92
  %v586 = vunpack.c.h.b16 %v92
  %v587 = vunpack.c.l.b16 %v93
  %v588 = vunpack.c.h.b16 %v93
  %v589 = vunpack.c.l.b16 %v94
  %v590 = vunpack.c.h.b16 %v94
  %v591 = vunpack.c.l.b16 %v95
  %v592 = vunpack.c.h.b16 %v95
  %v593 = vunpack.c.l.b16 %v96
  %v594 = vunpack.c.h.b16 %v96
  %v595 = vunpack.c.l.b16 %v97
  %v596 = vunpack.c.h.b16 %v97
  %v597 = vunpack.c.l.b16 %v98
  %v598 = vunpack.c.l.b16 %v99
  %v599 = vunpack.c.h.b16 %v99
  %v600 = vunpack.c.l.b16 %v100
  %v601 = vunpack.c.h.b16 %v100
  %v602 = vunpack.c.l.b16 %v101
  %v603 = vunpack.c.h.b16 %v101
  %v604 = vunpack.c.l.b16 %v102
  %v605 = vunpack.c.h.b16 %v102
  %v606 = vunpack.c.l.b16 %v103
  %v607 = vunpack.c.h.b16 %v103
  %v608 = vunpack.c.l.b16 %v104
  %v609 = vunpack.c.h.b16 %v104
  %v610 = vunpack.c.l.b16 %v105
  %v611 = vunpack.c.l.b16 %v106
  %v612 = vunpack.c.h.b16 %v106
  %v613 = vunpack.c.l.b16 %v107
  %v614 = vunpack.c.h.b16 %v107
  %v615 = vunpack.c.l.b16 %v108
  %v616 = vunpack.c.h.b16 %v108
  %v617 = vunpack.c.l.b16 %v109
  %v618 = vunpack.c.h.b16 %v109
  %v619 = vunpack.c.l.b16 %v110
  %v620 = vunpack.c.h.b16 %v110
  %v621 = vunpack.c.l.b16 %v111
  %v622 = vunpack.c.h.b16 %v111
  %v623 = vunpack.c.l.b16 %v112
  %v624 = vunpack.c.l.b16 %v113
  %v625 = vunpack.c.h.b16 %v113
  %v626 = vunpack.c.l.b16 %v114
  %v627 = vunpack.c.h.b16 %v114
  %v628 = vunpack.c.l.b16 %v115
  %v629 = vunpack.c.h.b16 %v115
  %v630 = vunpack.c.l.b16 %v116
  %v631 = vunpack.c.h.b16 %v116
  %v632 = vunpack.c.l.b16 %v117
  %v633 = vunpack.c.h.b16 %v117
  %v634 = vunpack.c.l.b16 %v118
  %v635 = vunpack.c.h.b16 %v118
  %v636 = vunpack.c.l.b16 %v119
  %v637 = vunpack.c.l.b16 %v120
  %v638 = vunpack.c.h.b16 %v120
  %v639 = vunpack.c.l.b16 %v121
  %v640 = vunpack.c.h.b16 %v121
  %v641 = vunpack.c.l.b16 %v122
  %v642 = vunpack.c.h.b16 %v122
  %v643 = vunpack.c.l.b16 %v123
  %v644 = vunpack.c.h.b16 %v123
  %v645 = vunpack.c.l.b16 %v124
  %v646 = vunpack.c.h.b16 %v124
  %v647 = vunpack.c.l.b16 %v125
  %v648 = vunpack.c.h.b16 %v125
  %v649 = vunpack.c.l.b16 %v126
  %v650 = vpack.c.b16 %v455, %v442
  %v651 = vpack.c.b16 %v456, %v443
  %v652 = vpack.c.b16 %v457, %v444
  %v653 = vpack.c.b16 %v458, %v445
  %v654 = vpack.c.b16 %v459, %v446
  %v655 = vpack.c.b16 %v460, %v447
  %v656 = vpack.c.b16 %v461, %v448
  %v657 = vpack.c.b16 %v462, %v449
  %v658 = vpack.c.b16 %v463, %v450
  %v659 = vpack.c.b16 %v464, %v451
  %v660 = vpack.c.b16 %v465, %v452
  %v661 = vpack.c.b16 %v466, %v453
  %v662 = vpack.c.b16 %v467, %v454
  %v663 = vpack.c.b16 %v481, %v468
  %v664 = vpack.c.b16 %v482, %v469
  %v665 = vpack.c.b16 %v483, %v470
  %v666 = vpack.c.b16 %v484, %v471
  %v667 = vpack.c.b16 %v485, %v472
  %v668 = vpack.c.b16 %v486, %v473
  %v669 = vpack.c.b16 %v487, %v474
  %v670 = vpack.c.b16 %v488, %v475
  %v671 = vpack.c.b16 %v489, %v476
  %v672 = vpack.c.b16 %v490, %v477
  %v673 = vpack.c.b16 %v491, %v478
  %v674 = vpack.c.b16 %v492, %v479
  %v675 = vpack.c.b16 %v493, %v480
  %v676 = vpack.c.b16 %v507, %v494
  %v677 = vpack.c.b16 %v508, %v495
  %v678 = vpack.c.b16 %v509, %v496
  %v679 = vpack.c.b16 %v510, %v497
  %v680 = vpack.c.b16 %v511, %v498
  %v681 = vpack.c.b16 %v512, %v499
  %v682 = vpack.c.b16 %v513, %v500
  %v683 = vpack.c.b16 %v514, %v501
  %v684 = vpack.c.b16 %v515, %v502
  %v685 = vpack.c.b16 %v516, %v503
  %v686 = vpack.c.b16 %v517, %v504
  %v687 = vpack.c.b16 %v518, %v505
  %v688 = vpack.c.b16 %v519, %v506
  %v689 = vpack.c.b16 %v533, %v520
  %v690 = vpack.c.b16 %v534, %v521
  %v691 = vpack.c.b16 %v535, %v522
  %v692 = vpack.c.b16 %v536, %v523
  %v693 = vpack.c.b16 %v537, %v524
  %v694 = vpack.c.b16 %v538, %v525
  %v695 = vpack.c.b16 %v539, %v526
  %v696 = vpack.c.b16 %v540, %v527
  %v697 = vpack.c.b16 %v541, %v528
  %v698 = vpack.c.b16 %v542, %v529
  %v699 = vpack.c.b16 %v543, %v530
  %v700 = vpack.c.b16 %v544, %v531
  %v701 = vpack.c.b16 %v545, %v532
  %v702 = vpack.c.b16 %v559, %v546
  %v703 = vpack.c.b16 %v560, %v547
  %v704 = vpack.c.b16 %v561, %v548
  %v705 = vpack.c.b16 %v562, %v549
  %v706 = vpack.c.b16 %v563, %v550
  %v707 = vpack.c.b16 %v564, %v551
  %v708 = vpack.c.b16 %v565, %v552
  %v709 = vpack.c.b16 %v566, %v553
  %v710 = vpack.c.b16 %v567, %v554
  %v711 = vpack.c.b16 %v568, %v555
  %v712 = vpack.c.b16 %v569, %v556
  %v713 = vpack.c.b16 %v570, %v557
  %v714 = vpack.c.b16 %v571, %v558
  %v715 = vpack.c.b16 %v585, %v572
  %v716 = vpack.c.b16 %v586, %v573
  %v717 = vpack.c.b16 %v587, %v574
  %v718 = vpack.c.b16 %v588, %v575
  %v719 = vpack.c.b16 %v589, %v576
  %v720 = vpack.c.b16 %v590, %v577
  %v721 = vpack.c.b16 %v591, %v578
  %v722 = vpack.c.b16 %v592, %v579
  %v723 = vpack.c.b16 %v593, %v580
  %v724 = vpack.c.b16 %v594, %v581
  %v725 = vpack.c.b16 %v595, %v582
  %v726 = vpack.c.b16 %v596, %v583
  %v727 = vpack.c.b16 %v597, %v584
  %v728 = vpack.c.b16 %v611, %v598
  %v729 = vpack.c.b16 %v612, %v599
  %v730 = vpack.c.b16 %v613, %v600
  %v731 = vpack.c.b16 %v614, %v601
  %v732 = vpack.c.b16 %v615, %v602
  %v733 = vpack.c.b16 %v616, %v603
  %v734 = vpack.c.b16 %v617, %v604
  %v735 = vpack.c.b16 %v618, %v605
  %v736 = vpack.c.b16 %v619, %v606
  %v737 = vpack.c.b16 %v620, %v607
  %v738 = vpack.c.b16 %v621, %v608
  %v739 = vpack.c.b16 %v622, %v609
  %v740 = vpack.c.b16 %v623, %v610
  %v741 = vpack.c.b16 %v637, %v624
  %v742 = vpack.c.b16 %v638, %v625
  %v743 = vpack.c.b16 %v639, %v626
  %v744 = vpack.c.b16 %v640, %v627
  %v745 = vpack.c.b16 %v641, %v628
  %v746 = vpack.c.b16 %v642, %v629
  %v747 = vpack.c.b16 %v643, %v630
  %v748 = vpack.c.b16 %v644, %v631
  %v749 = vpack.c.b16 %v645, %v632
  %v750 = vpack.c.b16 %v646, %v633
  %v751 = vpack.c.b16 %v647, %v634
  %v752 = vpack.c.b16 %v648, %v635
  %v753 = vpack.c.b16 %v649, %v636
  %v1046 = vunpack.c.l.b16 %v127
  %v1047 = vunpack.c.l.b16 %v128
  %v1048 = vunpack.c.l.b16 %v129
  %v1049 = vunpack.c.l.b16 %v130
  %v1050 = vunpack.c.l.b16 %v131
  %v1051 = vunpack.c.l.b16 %v132
  %v1052 = vunpack.c.l.b16 %v133
  %v1053 = vunpack.c.l.b16 %v134
  %v1054 = vunpack.c.l.b16 %v135
  %v1055 = vunpack.c.l.b16 %v136
  %v1056 = vunpack.c.l.b16 %v137
  %v1057 = vunpack.c.l.b16 %v138
  %v1058 = vunpack.c.l.b16 %v139
  %v1059 = vunpack.c.l.b16 %v140
  %v1060 = vunpack.c.l.b16 %v141
  %v1061 = vunpack.c.l.b16 %v142
  %v1062 = vunpack.c.l.b16 %v143
  %v1063 = vunpack.c.l.b16 %v144
  %v1064 = vunpack.c.l.b16 %v145
  %v1065 = vunpack.c.l.b16 %v146
  %v1066 = vunpack.c.l.b16 %v147
  %v1067 = vunpack.c.l.b16 %v148
  %v1068 = vunpack.c.l.b16 %v149
  %v1069 = vunpack.c.l.b16 %v150
  %v1070 = vunpack.c.l.b16 %v151
  %v1071 = vunpack.c.l.b16 %v152
  %v1072 = vunpack.c.l.b16 %v153
  %v1073 = vunpack.c.l.b16 %v154
  %v1074 = vunpack.c.l.b16 %v155
  %v1075 = vunpack.c.l.b16 %v156
  %v1076 = vunpack.c.l.b16 %v157
  %v1077 = vunpack.c.l.b16 %v158
  %v1078 = vunpack.c.l.b16 %v159
  %v1079 = vunpack.c.l.b16 %v160
  %v1080 = vunpack.c.l.b16 %v161
  %v1081 = vunpack.c.l.b16 %v162
  %v1082 = vunpack.c.l.b16 %v163
  %v1083 = vunpack.c.l.b16 %v164
  %v1084 = vunpack.c.l.b16 %v165
  %v1085 = vunpack.c.l.b16 %v166
  %v1086 = vunpack.c.l.b16 %v167
  %v1087 = vunpack.c.l.b16 %v168
  %v1088 = vunpack.c.l.b16 %v169
  %v1089 = vunpack.c.l.b16 %v170
  %v1090 = vunpack.c.l.b16 %v171
  %v1091 = vunpack.c.l.b16 %v172
  %v1092 = vunpack.c.l.b16 %v173
  %v1093 = vunpack.c.l.b16 %v174
  %v1094 = vunpack.c.l.b16 %v175
  %v1095 = vunpack.c.l.b16 %v176
  %v1096 = vunpack.c.l.b16 %v177
  %v1097 = vunpack.c.l.b16 %v178
  %v1098 = vunpack.c.l.b16 %v179
  %v1099 = vunpack.c.l.b16 %v180
  %v1100 = vunpack.c.l.b16 %v181
  %v1101 = vunpack.c.l.b16 %v182
  %v1102 = vunpack.c.l.b16 %v183
  %v1103 = vunpack.c.l.b16 %v184
  %v1104 = vunpack.c.l.b16 %v185
  %v1105 = vunpack.c.l.b16 %v186
  %v1106 = vunpack.c.l.b16 %v187
  %v1107 = vunpack.c.l.b16 %v188
  %v1108 = vunpack.c.l.b16 %v189
  %v1109 = vunpack.c.l.b16 %v190
  %v1110 = vunpack.c.l.b16 %v191
  %v1111 = vunpack.c.l.b16 %v192
  %v1112 = vunpack.c.l.b16 %v193
  %v1113 = vunpack.c.l.b16 %v194
  %v1114 = vunpack.c.l.b16 %v195
  %v1115 = vunpack.c.l.b16 %v196
  %v1116 = vunpack.c.l.b16 %v197
  %v1117 = vunpack.c.l.b16 %v198
  %v1118 = vunpack.c.l.b16 %v199
  %v1119 = vunpack.c.l.b16 %v200
  %v1120 = vunpack.c.l.b16 %v201
  %v1121 = vunpack.c.l.b16 %v202
  %v1122 = vunpack.c.l.b16 %v203
  %v1123 = vunpack.c.l.b16 %v204
  %v1124 = vunpack.c.l.b16 %v205
  %v1125 = vunpack.c.l.b16 %v206
  %v1126 = vunpack.c.l.b16 %v207
  %v1127 = vunpack.c.l.b16 %v208
  %v1128 = vunpack.c.l.b16 %v209
  %v1129 = vunpack.c.l.b16 %v210
  %v1130 = vunpack.c.l.b16 %v211
  %v1131 = vunpack.c.l.b16 %v212
  %v1132 = vunpack.c.l.b16 %v213
  %v1133 = vunpack.c.l.b16 %v214
  %v1134 = vunpack.c.l.b16 %v215
  %v1135 = vunpack.c.l.b16 %v216
  %v1136 = vunpack.c.l.b16 %v217
  %v1137 = vunpack.c.l.b16 %v218
  %v1138 = vunpack.c.l.b16 %v219
  %v1139 = vunpack.c.l.b16 %v220
  %v1140 = vunpack.c.l.b16 %v221
  %v1141 = vunpack.c.l.b16 %v222
  %v1142 = vunpack.c.l.b16 %v223
  %v1143 = vunpack.c.l.b16 %v224
  %v1144 = vunpack.c.l.b16 %v225
  %v1145 = vunpack.c.l.b16 %v226
  %v1146 = vunpack.c.l.b16 %v227
  %v1147 = vunpack.c.l.b16 %v228
  %v1148 = vunpack.c.l.b16 %v229
  %v1149 = vunpack.c.l.b16 %v230
  %v1150 = vunpack.c.l.b16 %v231
  %v1151 = vunpack.c.l.b16 %v232
  %v1152 = vunpack.c.l.b16 %v233
  %v1153 = vunpack.c.l.b16 %v234
  %v1154 = vunpack.c.l.b16 %v235
  %v1155 = vunpack.c.l.b16 %v236
  %v1156 = vunpack.c.l.b16 %v237
  %v1157 = vunpack.c.l.b16 %v238
  %v1158 = vunpack.c.l.b16 %v239
  %v1159 = vunpack.c.l.b16 %v240
  %v1160 = vunpack.c.l.b16 %v241
  %v1161 = vunpack.c.l.b16 %v242
  %v1162 = vunpack.c.l.b16 %v243
  %v1163 = vunpack.c.l.b16 %v244
  %v1164 = vunpack.c.l.b16 %v245
  %v1165 = vunpack.c.l.b16 %v246
  %v1166 = vunpack.c.l.b16 %v247
  %v1167 = vunpack.c.l.b16 %v248
  %v1168 = vunpack.c.l.b16 %v249
  %v1169 = vunpack.c.l.b16 %v250
  %v1170 = vunpack.c.l.b16 %v251
  %v1171 = vunpack.c.l.b16 %v252
  %v1172 = vunpack.c.l.b16 %v253
  %v1173 = vunpack.c.l.b16 %v254
  %v1174 = vunpack.c.l.b16 %v255
  %v1175 = vunpack.c.l.b16 %v256
  %v1176 = vunpack.c.l.b16 %v257
  %v1177 = vunpack.c.l.b16 %v258
  %v1178 = vunpack.c.l.b16 %v259
  %v1179 = vunpack.c.l.b16 %v260
  %v1180 = vunpack.c.l.b16 %v261
  %v1181 = vunpack.c.l.b16 %v262
  %v1182 = vunpack.c.l.b16 %v263
  %v1183 = vunpack.c.l.b16 %v264
  %v1184 = vunpack.c.l.b16 %v265
  %v1185 = vunpack.c.l.b16 %v266
  %v1186 = vunpack.c.l.b16 %v267
  %v1187 = vunpack.c.l.b16 %v268
  %v1188 = vunpack.c.l.b16 %v269
  %v1189 = vunpack.c.l.b16 %v270
  %v1190 = vunpack.c.l.b16 %v271
  %v1191 = vunpack.c.l.b16 %v272
  %v1192 = vunpack.c.l.b16 %v273
  %v1193 = vunpack.c.l.b16 %v274
  %v1194 = vunpack.c.l.b16 %v275
  %v1195 = vunpack.c.l.b16 %v276
  %v1196 = vunpack.c.l.b16 %v277
  %v1197 = vunpack.c.l.b16 %v278
  %v1198 = vunpack.c.l.b16 %v279
  %v1199 = vunpack.c.l.b16 %v280
  %v1200 = vunpack.c.l.b16 %v281
  %v1201 = vunpack.c.l.b16 %v282
  %v1202 = vunpack.c.l.b16 %v283
  %v1203 = vunpack.c.l.b16 %v284
  %v1204 = vunpack.c.l.b16 %v285
  %v1205 = vunpack.c.l.b16 %v286
  %v1206 = vunpack.c.l.b16 %v287
  %v1207 = vunpack.c.l.b16 %v288
  %v1208 = vunpack.c.l.b16 %v289
  %v1209 = vunpack.c.l.b16 %v290
  %v1210 = vunpack.c.l.b16 %v291
  %v1211 = vunpack.c.l.b16 %v292
  %v1212 = vunpack.c.l.b16 %v293
  %v1213 = vunpack.c.l.b16 %v294
  %v1214 = vunpack.c.l.b16 %v295
  %v1215 = vunpack.c.l.b16 %v296
  %v1216 = vunpack.c.l.b16 %v297
  %v1217 = vunpack.c.l.b16 %v298
  %v1218 = vunpack.c.l.b16 %v299
  %v1219 = vunpack.c.l.b16 %v300
  %v1220 = vunpack.c.l.b16 %v301
  %v1221 = vunpack.c.l.b16 %v302
  %v1222 = vunpack.c.l.b16 %v303
  %v1223 = vunpack.c.l.b16 %v304
  %v1224 = vunpack.c.l.b16 %v305
  %v1225 = vunpack.c.l.b16 %v306
  %v1226 = vunpack.c.l.b16 %v307
  %v1227 = vunpack.c.l.b16 %v308
  %v1228 = vunpack.c.l.b16 %v309
  %v1229 = vunpack.c.l.b16 %v310
  %v1230 = vunpack.c.l.b16 %v311
  %v1231 = vunpack.c.l.b16 %v312
  %v1232 = vunpack.c.l.b16 %v313
  %v1233 = vunpack.c.l.b16 %v314
  %v1234 = vunpack.c.l.b16 %v315
  %v1235 = vunpack.c.l.b16 %v316
  %v1236 = vunpack.c.l.b16 %v317
  %v1237 = vunpack.c.l.b16 %v318
  %v1238 = vunpack.c.l.b16 %v319
  %v1239 = vunpack.c.l.b16 %v320
  %v1240 = vunpack.c.l.b16 %v321
  %v1241 = vunpack.c.l.b16 %v322
  %v1242 = vpack.c.b16 %v1047, %v1046
  %v1243 = vpack.c.b16 %v1049, %v1048
  %v1244 = vpack.c.b16 %v1051, %v1050
  %v1245 = vpack.c.b16 %v1053, %v1052
  %v1246 = vpack.c.b16 %v1055, %v1054
  %v1247 = vpack.c.b16 %v1057, %v1056
  %v1248 = vpack.c.b16 %v1059, %v1058
  %v1249 = vpack.c.b16 %v1061, %v1060
  %v1250 = vpack.c.b16 %v1063, %v1062
  %v1251 = vpack.c.b16 %v1065, %v1064
  %v1252 = vpack.c.b16 %v1067, %v1066
  %v1253 = vpack.c.b16 %v1069, %v1068
  %v1254 = vpack.c.b16 %v1071, %v1070
  %v1255 = vpack.c.b16 %v1073, %v1072
  %v1256 = vpack.c.b16 %v1075, %v1074
  %v1257 = vpack.c.b16 %v1077, %v1076
  %v1258 = vpack.c.b16 %v1079, %v1078
  %v1259 = vpack.c.b16 %v1081, %v1080
  %v1260 = vpack.c.b16 %v1083, %v1082
  %v1261 = vpack.c.b16 %v1085, %v1084
  %v1262 = vpack.c.b16 %v1087, %v1086
  %v1263 = vpack.c.b16 %v1089, %v1088
  %v1264 = vpack.c.b16 %v1091, %v1090
  %v1265 = vpack.c.b16 %v1093, %v1092
  %v1266 = vpack.c.b16 %v1095, %v1094
  %v1267 = vpack.c.b16 %v1097, %v1096
  %v1268 = vpack.c.b16 %v1099, %v1098
  %v1269 = vpack.c.b16 %v1101, %v1100
  %v1270 = vpack.c.b16 %v1103, %v1102
  %v1271 = vpack.c.b16 %v1105, %v1104
  %v1272 = vpack.c.b16 %v1107, %v1106
  %v1273 = vpack.c.b16 %v1109, %v1108
  %v1274 = vpack.c.b16 %v1111, %v1110
  %v1275 = vpack.c.b16 %v1113, %v1112
  %v1276 = vpack.c.b16 %v1115, %v1114
  %v1277 = vpack.c.b16 %v1117, %v1116
  %v1278 = vpack.c.b16 %v1119, %v1118
  %v1279 = vpack.c.b16 %v1121, %v1120
  %v1280 = vpack.c.b16 %v1123, %v1122
  %v1281 = vpack.c.b16 %v1125, %v1124
  %v1282 = vpack.c.b16 %v1127, %v1126
  %v1283 = vpack.c.b16 %v1129, %v1128
  %v1284 = vpack.c.b16 %v1131, %v1130
  %v1285 = vpack.c.b16 %v1133, %v1132
  %v1286 = vpack.c.b16 %v1135, %v1134
  %v1287 = vpack.c.b16 %v1137, %v1136
  %v1288 = vpack.c.b16 %v1139, %v1138
  %v1289 = vpack.c.b16 %v1141, %v1140
  %v1290 = vpack.c.b16 %v1143, %v1142
  %v1291 = vpack.c.b16 %v1145, %v1144
  %v1292 = vpack.c.b16 %v1147, %v1146
  %v1293 = vpack.c.b16 %v1149, %v1148
  %v1294 = vpack.c.b16 %v1151, %v1150
  %v1295 = vpack.c.b16 %v1153, %v1152
  %v1296 = vpack.c.b16 %v1155, %v1154
  %v1297 = vpack.c.b16 %v1157, %v1156
  %v1298 = vpack.c.b16 %v1159, %v1158
  %v1299 = vpack.c.b16 %v1161, %v1160
  %v1300 = vpack.c.b16 %v1163, %v1162
  %v1301 = vpack.c.b16 %v1165, %v1164
  %v1302 = vpack.c.b16 %v1167, %v1166
  %v1303 = vpack.c.b16 %v1169, %v1168
  %v1304 = vpack.c.b16 %v1171, %v1170
  %v1305 = vpack.c.b16 %v1173, %v1172
  %v1306 = vpack.c.b16 %v1175, %v1174
  %v1307 = vpack.c.b16 %v1177, %v1176
  %v1308 = vpack.c.b16 %v1179, %v1178
  %v1309 = vpack.c.b16 %v1181, %v1180
  %v1310 = vpack.c.b16 %v1183, %v1182
  %v1311 = vpack.c.b16 %v1185, %v1184
  %v1312 = vpack.c.b16 %v1187, %v1186
  %v1313 = vpack.c.b16 %v1189, %v1188
  %v1314 = vpack.c.b16 %v1191, %v1190
  %v1315 = vpack.c.b16 %v1193, %v1192
  %v1316 = vpack.c.b16 %v1195, %v1194
  %v1317 = vpack.c.b16 %v1197, %v1196
  %v1318 = vpack.c.b16 %v1199, %v1198
  %v1319 = vpack.c.b16 %v1201, %v1200
  %v1320 = vpack.c.b16 %v1203, %v1202
  %v1321 = vpack.c.b16 %v1205, %v1204
  %v1322 = vpack.c.b16 %v1207, %v1206
  %v1323 = vpack.c.b16 %v1209, %v1208
  %v1324 = vpack.c.b16 %v1211, %v1210
  %v1325 = vpack.c.b16 %v1213, %v1212
  %v1326 = vpack.c.b16 %v1215, %v1214
  %v1327 = vpack.c.b16 %v1217, %v1216
  %v1328 = vpack.c.b16 %v1219, %v1218
  %v1329 = vpack.c.b16 %v1221, %v1220
  %v1330 = vpack.c.b16 %v1223, %v1222
  %v1331 = vpack.c.b16 %v1225, %v1224
  %v1332 = vpack.c.b16 %v1227, %v1226
  %v1333 = vpack.c.b16 %v1229, %v1228
  %v1334 = vpack.c.b16 %v1231, %v1230
  %v1335 = vpack.c.b16 %v1233, %v1232
  %v1336 = vpack.c.b16 %v1235, %v1234
  %v1337 = vpack.c.b16 %v1237, %v1236
  %v1338 = vpack.c.b16 %v1239, %v1238
  %v1339 = vpack.c.b16 %v1241, %v1240
  %vm1438 = vcmask 261120
  %v1440 = vsel %vm1438, %v662, 0
  %v1443 = vsel %vm1438, %v675, 0
  %v1446 = vsel %vm1438, %v688, 0
  %v1449 = vsel %vm1438, %v701, 0
  %v1452 = vsel %vm1438, %v714, 0
  %v1455 = vsel %vm1438, %v727, 0
  %v1458 = vsel %vm1438, %v740, 0
  %v1461 = vsel %vm1438, %v753, 0
  %1463 = vmatprep.subr.bf16.mxu0 0
  %1464 = vmatpush1.bf16.msra.mxu0 %v1242
  %1465 = vmatprep.subr.bf16.mxu0 0
  %1466 = vmatpush1.bf16.msra.mxu0 %v1243
  %1467 = vmatprep.subr.bf16.mxu0 0
  %1468 = vmatpush1.bf16.msra.mxu0 %v1244
  %1469 = vmatprep.subr.bf16.mxu0 0
  %1470 = vmatpush1.bf16.msra.mxu0 %v1245
  %1471 = vmatprep.subr.bf16.mxu0 0
  %1472 = vmatpush1.bf16.msra.mxu0 %v1246
  %1473 = vmatprep.subr.bf16.mxu0 0
  %1474 = vmatpush1.bf16.msra.mxu0 %v1247
  %1475 = vmatprep.subr.bf16.mxu0 0
  %1476 = vmatpush1.bf16.msra.mxu0 %v1248
  %1477 = vmatprep.subr.bf16.mxu0 0
  %1478 = vmatpush1.bf16.msra.mxu0 %v1249
  %1479 = vmatprep.subr.bf16.mxu0 0
  %1480 = vmatpush1.bf16.msra.mxu0 %v1250
  %1481 = vmatprep.subr.bf16.mxu0 0
  %1482 = vmatpush1.bf16.msra.mxu0 %v1251
  %1483 = vmatprep.subr.bf16.mxu0 0
  %1484 = vmatpush1.bf16.msra.mxu0 %v1252
  %1485 = vmatprep.subr.bf16.mxu0 0
  %1486 = vmatpush1.bf16.msra.mxu0 %v1253
  %1487 = vmatprep.subr.bf16.mxu0 0
  %1488 = vmatpush1.bf16.msra.mxu0 %v1254
  %1489 = vmatprep.subr.bf16.mxu0 0
  %1490 = vmatpush1.bf16.msra.mxu0 %v1255
  %1491 = vmatprep.subr.bf16.mxu0 0
  %1492 = vmatpush1.bf16.msra.mxu0 %v1256
  %1493 = vmatprep.subr.bf16.mxu0 0
  %1494 = vmatpush1.bf16.msra.mxu0 %v1257
  %1495 = vmatprep.mubr.bf16.mxu0 %v651
  %1496 = vmatmul.mubr.bf16.gmra.mrb[0].mxu0 %v650
  %v1497 = vpop.f32.mrb[0].mxu0
  %v1498 = vadd.f32 %v328, %v1497
  %v1499 = vpop.f32.mrb[0].mxu0
  %v1500 = vpop.f32.mrb[0].mxu0
  %v1501 = vadd.f32 %v328, %v1500
  %v1502 = vpop.f32.mrb[0].mxu0
  %1503 = vmatprep.mubr.bf16.mxu0 %v664
  %1504 = vmatmul.mubr.bf16.gmra.mrb[0].mxu0 %v663
  %v1505 = vpop.f32.mrb[0].mxu0
  %v1506 = vadd.f32 %v328, %v1505
  %v1507 = vpop.f32.mrb[0].mxu0
  %v1508 = vpop.f32.mrb[0].mxu0
  %v1509 = vadd.f32 %v328, %v1508
  %v1510 = vpop.f32.mrb[0].mxu0
  %1511 = vmatprep.mubr.bf16.mxu0 %v677
  %1512 = vmatmul.mubr.bf16.gmra.mrb[0].mxu0 %v676
  %v1513 = vpop.f32.mrb[0].mxu0
  %v1514 = vadd.f32 %v328, %v1513
  %v1515 = vpop.f32.mrb[0].mxu0
  %v1516 = vpop.f32.mrb[0].mxu0
  %v1517 = vadd.f32 %v328, %v1516
  %v1518 = vpop.f32.mrb[0].mxu0
  %1519 = vmatprep.mubr.bf16.mxu0 %v690
  %1520 = vmatmul.mubr.bf16.gmra.mrb[0].mxu0 %v689
  %v1521 = vpop.f32.mrb[0].mxu0
  %v1522 = vadd.f32 %v328, %v1521
  %v1523 = vpop.f32.mrb[0].mxu0
  %v1524 = vpop.f32.mrb[0].mxu0
  %v1525 = vadd.f32 %v328, %v1524
  %v1526 = vpop.f32.mrb[0].mxu0
  %1527 = vmatprep.mubr.bf16.mxu0 %v703
  %1528 = vmatmul.mubr.bf16.gmra.mrb[0].mxu0 %v702
  %v1529 = vpop.f32.mrb[0].mxu0
  %v1530 = vadd.f32 %v328, %v1529
  %v1531 = vpop.f32.mrb[0].mxu0
  %v1532 = vpop.f32.mrb[0].mxu0
  %v1533 = vadd.f32 %v328, %v1532
  %v1534 = vpop.f32.mrb[0].mxu0
  %1535 = vmatprep.mubr.bf16.mxu0 %v716
  %1536 = vmatmul.mubr.bf16.gmra.mrb[0].mxu0 %v715
  %v1537 = vpop.f32.mrb[0].mxu0
  %v1538 = vadd.f32 %v328, %v1537
  %v1539 = vpop.f32.mrb[0].mxu0
  %v1540 = vpop.f32.mrb[0].mxu0
  %v1541 = vadd.f32 %v328, %v1540
  %v1542 = vpop.f32.mrb[0].mxu0
  %1543 = vmatprep.mubr.bf16.mxu0 %v729
  %1544 = vmatmul.mubr.bf16.gmra.mrb[0].mxu0 %v728
  %v1545 = vpop.f32.mrb[0].mxu0
  %v1546 = vadd.f32 %v328, %v1545
  %v1547 = vpop.f32.mrb[0].mxu0
  %v1548 = vpop.f32.mrb[0].mxu0
  %v1549 = vadd.f32 %v328, %v1548
  %v1550 = vpop.f32.mrb[0].mxu0
  %1551 = vmatprep.mubr.bf16.mxu0 %v742
  %1552 = vmatmul.mubr.bf16.gmra.mrb[0].mxu0 %v741
  %v1553 = vpop.f32.mrb[0].mxu0
  %v1554 = vadd.f32 %v328, %v1553
  %v1555 = vpop.f32.mrb[0].mxu0
  %v1556 = vpop.f32.mrb[0].mxu0
  %v1557 = vadd.f32 %v328, %v1556
  %v1558 = vpop.f32.mrb[0].mxu0
  %1559 = vdwg.mxu0
  %1560 = vmatprep.subr.bf16.mxu0 0
  %1561 = vmatpush1.bf16.msra.mxu0 %v1258
  %1562 = vmatprep.subr.bf16.mxu0 0
  %1563 = vmatpush1.bf16.msra.mxu0 %v1259
  %1564 = vmatprep.subr.bf16.mxu0 0
  %1565 = vmatpush1.bf16.msra.mxu0 %v1260
  %1566 = vmatprep.subr.bf16.mxu0 0
  %1567 = vmatpush1.bf16.msra.mxu0 %v1261
  %1568 = vmatprep.subr.bf16.mxu0 0
  %1569 = vmatpush1.bf16.msra.mxu0 %v1262
  %1570 = vmatprep.subr.bf16.mxu0 0
  %1571 = vmatpush1.bf16.msra.mxu0 %v1263
  %1572 = vmatprep.subr.bf16.mxu0 0
  %1573 = vmatpush1.bf16.msra.mxu0 %v1264
  %1574 = vmatprep.subr.bf16.mxu0 0
  %1575 = vmatpush1.bf16.msra.mxu0 %v1265
  %1576 = vmatprep.subr.bf16.mxu0 0
  %1577 = vmatpush1.bf16.msra.mxu0 %v1266
  %1578 = vmatprep.subr.bf16.mxu0 0
  %1579 = vmatpush1.bf16.msra.mxu0 %v1267
  %1580 = vmatprep.subr.bf16.mxu0 0
  %1581 = vmatpush1.bf16.msra.mxu0 %v1268
  %1582 = vmatprep.subr.bf16.mxu0 0
  %1583 = vmatpush1.bf16.msra.mxu0 %v1269
  %1584 = vmatprep.subr.bf16.mxu0 0
  %1585 = vmatpush1.bf16.msra.mxu0 %v1270
  %1586 = vmatprep.subr.bf16.mxu0 0
  %1587 = vmatpush1.bf16.msra.mxu0 %v1271
  %1588 = vmatprep.subr.bf16.mxu0 0
  %1589 = vmatpush1.bf16.msra.mxu0 %v1272
  %1590 = vmatprep.subr.bf16.mxu0 0
  %1591 = vmatpush1.bf16.msra.mxu0 %v1273
  %1592 = vmatprep.mubr.bf16.mxu0 %v653
  %1593 = vmatmul.mubr.bf16.gmra.mrb[0].mxu0 %v652
  %v1594 = vpop.f32.mrb[0].mxu0
  %v1595 = vadd.f32 %v1498, %v1594
  %v1596 = vpop.f32.mrb[0].mxu0
  %v1597 = vpop.f32.mrb[0].mxu0
  %v1598 = vadd.f32 %v1501, %v1597
  %v1599 = vpop.f32.mrb[0].mxu0
  %1600 = vmatprep.mubr.bf16.mxu0 %v666
  %1601 = vmatmul.mubr.bf16.gmra.mrb[0].mxu0 %v665
  %v1602 = vpop.f32.mrb[0].mxu0
  %v1603 = vadd.f32 %v1506, %v1602
  %v1604 = vpop.f32.mrb[0].mxu0
  %v1605 = vpop.f32.mrb[0].mxu0
  %v1606 = vadd.f32 %v1509, %v1605
  %v1607 = vpop.f32.mrb[0].mxu0
  %1608 = vmatprep.mubr.bf16.mxu0 %v679
  %1609 = vmatmul.mubr.bf16.gmra.mrb[0].mxu0 %v678
  %v1610 = vpop.f32.mrb[0].mxu0
  %v1611 = vadd.f32 %v1514, %v1610
  %v1612 = vpop.f32.mrb[0].mxu0
  %v1613 = vpop.f32.mrb[0].mxu0
  %v1614 = vadd.f32 %v1517, %v1613
  %v1615 = vpop.f32.mrb[0].mxu0
  %1616 = vmatprep.mubr.bf16.mxu0 %v692
  %1617 = vmatmul.mubr.bf16.gmra.mrb[0].mxu0 %v691
  %v1618 = vpop.f32.mrb[0].mxu0
  %v1619 = vadd.f32 %v1522, %v1618
  %v1620 = vpop.f32.mrb[0].mxu0
  %v1621 = vpop.f32.mrb[0].mxu0
  %v1622 = vadd.f32 %v1525, %v1621
  %v1623 = vpop.f32.mrb[0].mxu0
  %1624 = vmatprep.mubr.bf16.mxu0 %v705
  %1625 = vmatmul.mubr.bf16.gmra.mrb[0].mxu0 %v704
  %v1626 = vpop.f32.mrb[0].mxu0
  %v1627 = vadd.f32 %v1530, %v1626
  %v1628 = vpop.f32.mrb[0].mxu0
  %v1629 = vpop.f32.mrb[0].mxu0
  %v1630 = vadd.f32 %v1533, %v1629
  %v1631 = vpop.f32.mrb[0].mxu0
  %1632 = vmatprep.mubr.bf16.mxu0 %v718
  %1633 = vmatmul.mubr.bf16.gmra.mrb[0].mxu0 %v717
  %v1634 = vpop.f32.mrb[0].mxu0
  %v1635 = vadd.f32 %v1538, %v1634
  %v1636 = vpop.f32.mrb[0].mxu0
  %v1637 = vpop.f32.mrb[0].mxu0
  %v1638 = vadd.f32 %v1541, %v1637
  %v1639 = vpop.f32.mrb[0].mxu0
  %1640 = vmatprep.mubr.bf16.mxu0 %v731
  %1641 = vmatmul.mubr.bf16.gmra.mrb[0].mxu0 %v730
  %v1642 = vpop.f32.mrb[0].mxu0
  %v1643 = vadd.f32 %v1546, %v1642
  %v1644 = vpop.f32.mrb[0].mxu0
  %v1645 = vpop.f32.mrb[0].mxu0
  %v1646 = vadd.f32 %v1549, %v1645
  %v1647 = vpop.f32.mrb[0].mxu0
  %1648 = vmatprep.mubr.bf16.mxu0 %v744
  %1649 = vmatmul.mubr.bf16.gmra.mrb[0].mxu0 %v743
  %v1650 = vpop.f32.mrb[0].mxu0
  %v1651 = vadd.f32 %v1554, %v1650
  %v1652 = vpop.f32.mrb[0].mxu0
  %v1653 = vpop.f32.mrb[0].mxu0
  %v1654 = vadd.f32 %v1557, %v1653
  %v1655 = vpop.f32.mrb[0].mxu0
  %1656 = vdwg.mxu0
  %1657 = vmatprep.subr.bf16.mxu0 0
  %1658 = vmatpush1.bf16.msra.mxu0 %v1274
  %1659 = vmatprep.subr.bf16.mxu0 0
  %1660 = vmatpush1.bf16.msra.mxu0 %v1275
  %1661 = vmatprep.subr.bf16.mxu0 0
  %1662 = vmatpush1.bf16.msra.mxu0 %v1276
  %1663 = vmatprep.subr.bf16.mxu0 0
  %1664 = vmatpush1.bf16.msra.mxu0 %v1277
  %1665 = vmatprep.subr.bf16.mxu0 0
  %1666 = vmatpush1.bf16.msra.mxu0 %v1278
  %1667 = vmatprep.subr.bf16.mxu0 0
  %1668 = vmatpush1.bf16.msra.mxu0 %v1279
  %1669 = vmatprep.subr.bf16.mxu0 0
  %1670 = vmatpush1.bf16.msra.mxu0 %v1280
  %1671 = vmatprep.subr.bf16.mxu0 0
  %1672 = vmatpush1.bf16.msra.mxu0 %v1281
  %1673 = vmatprep.subr.bf16.mxu0 0
  %1674 = vmatpush1.bf16.msra.mxu0 %v1282
  %1675 = vmatprep.subr.bf16.mxu0 0
  %1676 = vmatpush1.bf16.msra.mxu0 %v1283
  %1677 = vmatprep.subr.bf16.mxu0 0
  %1678 = vmatpush1.bf16.msra.mxu0 %v1284
  %1679 = vmatprep.subr.bf16.mxu0 0
  %1680 = vmatpush1.bf16.msra.mxu0 %v1285
  %1681 = vmatprep.subr.bf16.mxu0 0
  %1682 = vmatpush1.bf16.msra.mxu0 %v1286
  %1683 = vmatprep.subr.bf16.mxu0 0
  %1684 = vmatpush1.bf16.msra.mxu0 %v1287
  %1685 = vmatprep.subr.bf16.mxu0 0
  %1686 = vmatpush1.bf16.msra.mxu0 %v1288
  %1687 = vmatprep.subr.bf16.mxu0 0
  %1688 = vmatpush1.bf16.msra.mxu0 %v1289
  %1689 = vmatprep.mubr.bf16.mxu0 %v655
  %1690 = vmatmul.mubr.bf16.gmra.mrb[0].mxu0 %v654
  %v1691 = vpop.f32.mrb[0].mxu0
  %v1692 = vadd.f32 %v1595, %v1691
  %v1693 = vpop.f32.mrb[0].mxu0
  %v1694 = vpop.f32.mrb[0].mxu0
  %v1695 = vadd.f32 %v1598, %v1694
  %v1696 = vpop.f32.mrb[0].mxu0
  %1697 = vmatprep.mubr.bf16.mxu0 %v668
  %1698 = vmatmul.mubr.bf16.gmra.mrb[0].mxu0 %v667
  %v1699 = vpop.f32.mrb[0].mxu0
  %v1700 = vadd.f32 %v1603, %v1699
  %v1701 = vpop.f32.mrb[0].mxu0
  %v1702 = vpop.f32.mrb[0].mxu0
  %v1703 = vadd.f32 %v1606, %v1702
  %v1704 = vpop.f32.mrb[0].mxu0
  %1705 = vmatprep.mubr.bf16.mxu0 %v681
  %1706 = vmatmul.mubr.bf16.gmra.mrb[0].mxu0 %v680
  %v1707 = vpop.f32.mrb[0].mxu0
  %v1708 = vadd.f32 %v1611, %v1707
  %v1709 = vpop.f32.mrb[0].mxu0
  %v1710 = vpop.f32.mrb[0].mxu0
  %v1711 = vadd.f32 %v1614, %v1710
  %v1712 = vpop.f32.mrb[0].mxu0
  %1713 = vmatprep.mubr.bf16.mxu0 %v694
  %1714 = vmatmul.mubr.bf16.gmra.mrb[0].mxu0 %v693
  %v1715 = vpop.f32.mrb[0].mxu0
  %v1716 = vadd.f32 %v1619, %v1715
  %v1717 = vpop.f32.mrb[0].mxu0
  %v1718 = vpop.f32.mrb[0].mxu0
  %v1719 = vadd.f32 %v1622, %v1718
  %v1720 = vpop.f32.mrb[0].mxu0
  %1721 = vmatprep.mubr.bf16.mxu0 %v707
  %1722 = vmatmul.mubr.bf16.gmra.mrb[0].mxu0 %v706
  %v1723 = vpop.f32.mrb[0].mxu0
  %v1724 = vadd.f32 %v1627, %v1723
  %v1725 = vpop.f32.mrb[0].mxu0
  %v1726 = vpop.f32.mrb[0].mxu0
  %v1727 = vadd.f32 %v1630, %v1726
  %v1728 = vpop.f32.mrb[0].mxu0
  %1729 = vmatprep.mubr.bf16.mxu0 %v720
  %1730 = vmatmul.mubr.bf16.gmra.mrb[0].mxu0 %v719
  %v1731 = vpop.f32.mrb[0].mxu0
  %v1732 = vadd.f32 %v1635, %v1731
  %v1733 = vpop.f32.mrb[0].mxu0
  %v1734 = vpop.f32.mrb[0].mxu0
  %v1735 = vadd.f32 %v1638, %v1734
  %v1736 = vpop.f32.mrb[0].mxu0
  %1737 = vmatprep.mubr.bf16.mxu0 %v733
  %1738 = vmatmul.mubr.bf16.gmra.mrb[0].mxu0 %v732
  %v1739 = vpop.f32.mrb[0].mxu0
  %v1740 = vadd.f32 %v1643, %v1739
  %v1741 = vpop.f32.mrb[0].mxu0
  %v1742 = vpop.f32.mrb[0].mxu0
  %v1743 = vadd.f32 %v1646, %v1742
  %v1744 = vpop.f32.mrb[0].mxu0
  %1745 = vmatprep.mubr.bf16.mxu0 %v746
  %1746 = vmatmul.mubr.bf16.gmra.mrb[0].mxu0 %v745
  %v1747 = vpop.f32.mrb[0].mxu0
  %v1748 = vadd.f32 %v1651, %v1747
  %v1749 = vpop.f32.mrb[0].mxu0
  %v1750 = vpop.f32.mrb[0].mxu0
  %v1751 = vadd.f32 %v1654, %v1750
  %v1752 = vpop.f32.mrb[0].mxu0
  %1753 = vdwg.mxu0
  %1754 = vmatprep.subr.bf16.mxu0 0
  %1755 = vmatpush1.bf16.msra.mxu0 %v1290
  %1756 = vmatprep.subr.bf16.mxu0 0
  %1757 = vmatpush1.bf16.msra.mxu0 %v1291
  %1758 = vmatprep.subr.bf16.mxu0 0
  %1759 = vmatpush1.bf16.msra.mxu0 %v1292
  %1760 = vmatprep.subr.bf16.mxu0 0
  %1761 = vmatpush1.bf16.msra.mxu0 %v1293
  %1762 = vmatprep.subr.bf16.mxu0 0
  %1763 = vmatpush1.bf16.msra.mxu0 %v1294
  %1764 = vmatprep.subr.bf16.mxu0 0
  %1765 = vmatpush1.bf16.msra.mxu0 %v1295
  %1766 = vmatprep.subr.bf16.mxu0 0
  %1767 = vmatpush1.bf16.msra.mxu0 %v1296
  %1768 = vmatprep.subr.bf16.mxu0 0
  %1769 = vmatpush1.bf16.msra.mxu0 %v1297
  %1770 = vmatprep.subr.bf16.mxu0 0
  %1771 = vmatpush1.bf16.msra.mxu0 %v1298
  %1772 = vmatprep.subr.bf16.mxu0 0
  %1773 = vmatpush1.bf16.msra.mxu0 %v1299
  %1774 = vmatprep.subr.bf16.mxu0 0
  %1775 = vmatpush1.bf16.msra.mxu0 %v1300
  %1776 = vmatprep.subr.bf16.mxu0 0
  %1777 = vmatpush1.bf16.msra.mxu0 %v1301
  %1778 = vmatprep.subr.bf16.mxu0 0
  %1779 = vmatpush1.bf16.msra.mxu0 %v1302
  %1780 = vmatprep.subr.bf16.mxu0 0
  %1781 = vmatpush1.bf16.msra.mxu0 %v1303
  %1782 = vmatprep.subr.bf16.mxu0 0
  %1783 = vmatpush1.bf16.msra.mxu0 %v1304
  %1784 = vmatprep.subr.bf16.mxu0 0
  %1785 = vmatpush1.bf16.msra.mxu0 %v1305
  %1786 = vmatprep.mubr.bf16.mxu0 %v657
  %1787 = vmatmul.mubr.bf16.gmra.mrb[0].mxu0 %v656
  %v1788 = vpop.f32.mrb[0].mxu0
  %v1789 = vadd.f32 %v1692, %v1788
  %v1790 = vpop.f32.mrb[0].mxu0
  %v1791 = vpop.f32.mrb[0].mxu0
  %v1792 = vadd.f32 %v1695, %v1791
  %v1793 = vpop.f32.mrb[0].mxu0
  %1794 = vmatprep.mubr.bf16.mxu0 %v670
  %1795 = vmatmul.mubr.bf16.gmra.mrb[0].mxu0 %v669
  %v1796 = vpop.f32.mrb[0].mxu0
  %v1797 = vadd.f32 %v1700, %v1796
  %v1798 = vpop.f32.mrb[0].mxu0
  %v1799 = vpop.f32.mrb[0].mxu0
  %v1800 = vadd.f32 %v1703, %v1799
  %v1801 = vpop.f32.mrb[0].mxu0
  %1802 = vmatprep.mubr.bf16.mxu0 %v683
  %1803 = vmatmul.mubr.bf16.gmra.mrb[0].mxu0 %v682
  %v1804 = vpop.f32.mrb[0].mxu0
  %v1805 = vadd.f32 %v1708, %v1804
  %v1806 = vpop.f32.mrb[0].mxu0
  %v1807 = vpop.f32.mrb[0].mxu0
  %v1808 = vadd.f32 %v1711, %v1807
  %v1809 = vpop.f32.mrb[0].mxu0
  %1810 = vmatprep.mubr.bf16.mxu0 %v696
  %1811 = vmatmul.mubr.bf16.gmra.mrb[0].mxu0 %v695
  %v1812 = vpop.f32.mrb[0].mxu0
  %v1813 = vadd.f32 %v1716, %v1812
  %v1814 = vpop.f32.mrb[0].mxu0
  %v1815 = vpop.f32.mrb[0].mxu0
  %v1816 = vadd.f32 %v1719, %v1815
  %v1817 = vpop.f32.mrb[0].mxu0
  %1818 = vmatprep.mubr.bf16.mxu0 %v709
  %1819 = vmatmul.mubr.bf16.gmra.mrb[0].mxu0 %v708
  %v1820 = vpop.f32.mrb[0].mxu0
  %v1821 = vadd.f32 %v1724, %v1820
  %v1822 = vpop.f32.mrb[0].mxu0
  %v1823 = vpop.f32.mrb[0].mxu0
  %v1824 = vadd.f32 %v1727, %v1823
  %v1825 = vpop.f32.mrb[0].mxu0
  %1826 = vmatprep.mubr.bf16.mxu0 %v722
  %1827 = vmatmul.mubr.bf16.gmra.mrb[0].mxu0 %v721
  %v1828 = vpop.f32.mrb[0].mxu0
  %v1829 = vadd.f32 %v1732, %v1828
  %v1830 = vpop.f32.mrb[0].mxu0
  %v1831 = vpop.f32.mrb[0].mxu0
  %v1832 = vadd.f32 %v1735, %v1831
  %v1833 = vpop.f32.mrb[0].mxu0
  %1834 = vmatprep.mubr.bf16.mxu0 %v735
  %1835 = vmatmul.mubr.bf16.gmra.mrb[0].mxu0 %v734
  %v1836 = vpop.f32.mrb[0].mxu0
  %v1837 = vadd.f32 %v1740, %v1836
  %v1838 = vpop.f32.mrb[0].mxu0
  %v1839 = vpop.f32.mrb[0].mxu0
  %v1840 = vadd.f32 %v1743, %v1839
  %v1841 = vpop.f32.mrb[0].mxu0
  %1842 = vmatprep.mubr.bf16.mxu0 %v748
  %1843 = vmatmul.mubr.bf16.gmra.mrb[0].mxu0 %v747
  %v1844 = vpop.f32.mrb[0].mxu0
  %v1845 = vadd.f32 %v1748, %v1844
  %v1846 = vpop.f32.mrb[0].mxu0
  %v1847 = vpop.f32.mrb[0].mxu0
  %v1848 = vadd.f32 %v1751, %v1847
  %v1849 = vpop.f32.mrb[0].mxu0
  %1850 = vdwg.mxu0
  %1851 = vmatprep.subr.bf16.mxu0 0
  %1852 = vmatpush1.bf16.msra.mxu0 %v1306
  %1853 = vmatprep.subr.bf16.mxu0 0
  %1854 = vmatpush1.bf16.msra.mxu0 %v1307
  %1855 = vmatprep.subr.bf16.mxu0 0
  %1856 = vmatpush1.bf16.msra.mxu0 %v1308
  %1857 = vmatprep.subr.bf16.mxu0 0
  %1858 = vmatpush1.bf16.msra.mxu0 %v1309
  %1859 = vmatprep.subr.bf16.mxu0 0
  %1860 = vmatpush1.bf16.msra.mxu0 %v1310
  %1861 = vmatprep.subr.bf16.mxu0 0
  %1862 = vmatpush1.bf16.msra.mxu0 %v1311
  %1863 = vmatprep.subr.bf16.mxu0 0
  %1864 = vmatpush1.bf16.msra.mxu0 %v1312
  %1865 = vmatprep.subr.bf16.mxu0 0
  %1866 = vmatpush1.bf16.msra.mxu0 %v1313
  %1867 = vmatprep.subr.bf16.mxu0 0
  %1868 = vmatpush1.bf16.msra.mxu0 %v1314
  %1869 = vmatprep.subr.bf16.mxu0 0
  %1870 = vmatpush1.bf16.msra.mxu0 %v1315
  %1871 = vmatprep.subr.bf16.mxu0 0
  %1872 = vmatpush1.bf16.msra.mxu0 %v1316
  %1873 = vmatprep.subr.bf16.mxu0 0
  %1874 = vmatpush1.bf16.msra.mxu0 %v1317
  %1875 = vmatprep.subr.bf16.mxu0 0
  %1876 = vmatpush1.bf16.msra.mxu0 %v1318
  %1877 = vmatprep.subr.bf16.mxu0 0
  %1878 = vmatpush1.bf16.msra.mxu0 %v1319
  %1879 = vmatprep.subr.bf16.mxu0 0
  %1880 = vmatpush1.bf16.msra.mxu0 %v1320
  %1881 = vmatprep.subr.bf16.mxu0 0
  %1882 = vmatpush1.bf16.msra.mxu0 %v1321
  %1883 = vmatprep.mubr.bf16.mxu0 %v659
  %1884 = vmatmul.mubr.bf16.gmra.mrb[0].mxu0 %v658
  %v1885 = vpop.f32.mrb[0].mxu0
  %v1886 = vadd.f32 %v1789, %v1885
  %v1887 = vpop.f32.mrb[0].mxu0
  %v1888 = vpop.f32.mrb[0].mxu0
  %v1889 = vadd.f32 %v1792, %v1888
  %v1890 = vpop.f32.mrb[0].mxu0
  %1891 = vmatprep.mubr.bf16.mxu0 %v672
  %1892 = vmatmul.mubr.bf16.gmra.mrb[0].mxu0 %v671
  %v1893 = vpop.f32.mrb[0].mxu0
  %v1894 = vadd.f32 %v1797, %v1893
  %v1895 = vpop.f32.mrb[0].mxu0
  %v1896 = vpop.f32.mrb[0].mxu0
  %v1897 = vadd.f32 %v1800, %v1896
  %v1898 = vpop.f32.mrb[0].mxu0
  %1899 = vmatprep.mubr.bf16.mxu0 %v685
  %1900 = vmatmul.mubr.bf16.gmra.mrb[0].mxu0 %v684
  %v1901 = vpop.f32.mrb[0].mxu0
  %v1902 = vadd.f32 %v1805, %v1901
  %v1903 = vpop.f32.mrb[0].mxu0
  %v1904 = vpop.f32.mrb[0].mxu0
  %v1905 = vadd.f32 %v1808, %v1904
  %v1906 = vpop.f32.mrb[0].mxu0
  %1907 = vmatprep.mubr.bf16.mxu0 %v698
  %1908 = vmatmul.mubr.bf16.gmra.mrb[0].mxu0 %v697
  %v1909 = vpop.f32.mrb[0].mxu0
  %v1910 = vadd.f32 %v1813, %v1909
  %v1911 = vpop.f32.mrb[0].mxu0
  %v1912 = vpop.f32.mrb[0].mxu0
  %v1913 = vadd.f32 %v1816, %v1912
  %v1914 = vpop.f32.mrb[0].mxu0
  %1915 = vmatprep.mubr.bf16.mxu0 %v711
  %1916 = vmatmul.mubr.bf16.gmra.mrb[0].mxu0 %v710
  %v1917 = vpop.f32.mrb[0].mxu0
  %v1918 = vadd.f32 %v1821, %v1917
  %v1919 = vpop.f32.mrb[0].mxu0
  %v1920 = vpop.f32.mrb[0].mxu0
  %v1921 = vadd.f32 %v1824, %v1920
  %v1922 = vpop.f32.mrb[0].mxu0
  %1923 = vmatprep.mubr.bf16.mxu0 %v724
  %1924 = vmatmul.mubr.bf16.gmra.mrb[0].mxu0 %v723
  %v1925 = vpop.f32.mrb[0].mxu0
  %v1926 = vadd.f32 %v1829, %v1925
  %v1927 = vpop.f32.mrb[0].mxu0
  %v1928 = vpop.f32.mrb[0].mxu0
  %v1929 = vadd.f32 %v1832, %v1928
  %v1930 = vpop.f32.mrb[0].mxu0
  %1931 = vmatprep.mubr.bf16.mxu0 %v737
  %1932 = vmatmul.mubr.bf16.gmra.mrb[0].mxu0 %v736
  %v1933 = vpop.f32.mrb[0].mxu0
  %v1934 = vadd.f32 %v1837, %v1933
  %v1935 = vpop.f32.mrb[0].mxu0
  %v1936 = vpop.f32.mrb[0].mxu0
  %v1937 = vadd.f32 %v1840, %v1936
  %v1938 = vpop.f32.mrb[0].mxu0
  %1939 = vmatprep.mubr.bf16.mxu0 %v750
  %1940 = vmatmul.mubr.bf16.gmra.mrb[0].mxu0 %v749
  %v1941 = vpop.f32.mrb[0].mxu0
  %v1942 = vadd.f32 %v1845, %v1941
  %v1943 = vpop.f32.mrb[0].mxu0
  %v1944 = vpop.f32.mrb[0].mxu0
  %v1945 = vadd.f32 %v1848, %v1944
  %v1946 = vpop.f32.mrb[0].mxu0
  %1947 = vdwg.mxu0
  %1948 = vmatprep.subr.bf16.mxu0 0
  %1949 = vmatpush1.bf16.msra.mxu0 %v1322
  %1950 = vmatprep.subr.bf16.mxu0 0
  %1951 = vmatpush1.bf16.msra.mxu0 %v1323
  %1952 = vmatprep.subr.bf16.mxu0 0
  %1953 = vmatpush1.bf16.msra.mxu0 %v1324
  %1954 = vmatprep.subr.bf16.mxu0 0
  %1955 = vmatpush1.bf16.msra.mxu0 %v1325
  %1956 = vmatprep.subr.bf16.mxu0 0
  %1957 = vmatpush1.bf16.msra.mxu0 %v1326
  %1958 = vmatprep.subr.bf16.mxu0 0
  %1959 = vmatpush1.bf16.msra.mxu0 %v1327
  %1960 = vmatprep.subr.bf16.mxu0 0
  %1961 = vmatpush1.bf16.msra.mxu0 %v1328
  %1962 = vmatprep.subr.bf16.mxu0 0
  %1963 = vmatpush1.bf16.msra.mxu0 %v1329
  %1964 = vmatprep.subr.bf16.mxu0 0
  %1965 = vmatpush1.bf16.msra.mxu0 %v1330
  %1966 = vmatprep.subr.bf16.mxu0 0
  %1967 = vmatpush1.bf16.msra.mxu0 %v1331
  %1968 = vmatprep.subr.bf16.mxu0 0
  %1969 = vmatpush1.bf16.msra.mxu0 %v1332
  %1970 = vmatprep.subr.bf16.mxu0 0
  %1971 = vmatpush1.bf16.msra.mxu0 %v1333
  %1972 = vmatprep.subr.bf16.mxu0 0
  %1973 = vmatpush1.bf16.msra.mxu0 %v1334
  %1974 = vmatprep.subr.bf16.mxu0 0
  %1975 = vmatpush1.bf16.msra.mxu0 %v1335
  %1976 = vmatprep.subr.bf16.mxu0 0
  %1977 = vmatpush1.bf16.msra.mxu0 %v1336
  %1978 = vmatprep.subr.bf16.mxu0 0
  %1979 = vmatpush1.bf16.msra.mxu0 %v1337
  %1980 = vmatprep.mubr.bf16.mxu0 %v661
  %1981 = vmatmul.mubr.bf16.gmra.mrb[0].mxu0 %v660
  %v1982 = vpop.f32.mrb[0].mxu0
  %v1983 = vadd.f32 %v1886, %v1982
  %v1984 = vpop.f32.mrb[0].mxu0
  %v1985 = vpop.f32.mrb[0].mxu0
  %v1986 = vadd.f32 %v1889, %v1985
  %v1987 = vpop.f32.mrb[0].mxu0
  %1988 = vmatprep.mubr.bf16.mxu0 %v674
  %1989 = vmatmul.mubr.bf16.gmra.mrb[0].mxu0 %v673
  %v1990 = vpop.f32.mrb[0].mxu0
  %v1991 = vadd.f32 %v1894, %v1990
  %v1992 = vpop.f32.mrb[0].mxu0
  %v1993 = vpop.f32.mrb[0].mxu0
  %v1994 = vadd.f32 %v1897, %v1993
  %v1995 = vpop.f32.mrb[0].mxu0
  %1996 = vmatprep.mubr.bf16.mxu0 %v687
  %1997 = vmatmul.mubr.bf16.gmra.mrb[0].mxu0 %v686
  %v1998 = vpop.f32.mrb[0].mxu0
  %v1999 = vadd.f32 %v1902, %v1998
  %v2000 = vpop.f32.mrb[0].mxu0
  %v2001 = vpop.f32.mrb[0].mxu0
  %v2002 = vadd.f32 %v1905, %v2001
  %v2003 = vpop.f32.mrb[0].mxu0
  %2004 = vmatprep.mubr.bf16.mxu0 %v700
  %2005 = vmatmul.mubr.bf16.gmra.mrb[0].mxu0 %v699
  %v2006 = vpop.f32.mrb[0].mxu0
  %v2007 = vadd.f32 %v1910, %v2006
  %v2008 = vpop.f32.mrb[0].mxu0
  %v2009 = vpop.f32.mrb[0].mxu0
  %v2010 = vadd.f32 %v1913, %v2009
  %v2011 = vpop.f32.mrb[0].mxu0
  %2012 = vmatprep.mubr.bf16.mxu0 %v713
  %2013 = vmatmul.mubr.bf16.gmra.mrb[0].mxu0 %v712
  %v2014 = vpop.f32.mrb[0].mxu0
  %v2015 = vadd.f32 %v1918, %v2014
  %v2016 = vpop.f32.mrb[0].mxu0
  %v2017 = vpop.f32.mrb[0].mxu0
  %v2018 = vadd.f32 %v1921, %v2017
  %v2019 = vpop.f32.mrb[0].mxu0
  %2020 = vmatprep.mubr.bf16.mxu0 %v726
  %2021 = vmatmul.mubr.bf16.gmra.mrb[0].mxu0 %v725
  %v2022 = vpop.f32.mrb[0].mxu0
  %v2023 = vadd.f32 %v1926, %v2022
  %v2024 = vpop.f32.mrb[0].mxu0
  %v2025 = vpop.f32.mrb[0].mxu0
  %v2026 = vadd.f32 %v1929, %v2025
  %v2027 = vpop.f32.mrb[0].mxu0
  %2028 = vmatprep.mubr.bf16.mxu0 %v739
  %2029 = vmatmul.mubr.bf16.gmra.mrb[0].mxu0 %v738
  %v2030 = vpop.f32.mrb[0].mxu0
  %v2031 = vadd.f32 %v1934, %v2030
  %v2032 = vpop.f32.mrb[0].mxu0
  %v2033 = vpop.f32.mrb[0].mxu0
  %v2034 = vadd.f32 %v1937, %v2033
  %v2035 = vpop.f32.mrb[0].mxu0
  %2036 = vmatprep.mubr.bf16.mxu0 %v752
  %2037 = vmatmul.mubr.bf16.gmra.mrb[0].mxu0 %v751
  %v2038 = vpop.f32.mrb[0].mxu0
  %v2039 = vadd.f32 %v1942, %v2038
  %v2040 = vpop.f32.mrb[0].mxu0
  %v2041 = vpop.f32.mrb[0].mxu0
  %v2042 = vadd.f32 %v1945, %v2041
  %v2043 = vpop.f32.mrb[0].mxu0
  %2044 = vdwg.mxu0
  %2045 = vmatprep.subr.bf16.mxu0 0
  %2046 = vmatpush1.bf16.msra.mxu0 %v1338
  %2047 = vmatprep.subr.bf16.mxu0 0
  %2048 = vmatpush1.bf16.msra.mxu0 %v1339
  %2049 = vmatprep.subr.bf16.mxu0 0
  %2050 = vmatpush1.bf16.msra.mxu0 0
  %2051 = vmatprep.subr.bf16.mxu0 0
  %2052 = vmatpush1.bf16.msra.mxu0 0
  %2053 = vmatprep.subr.bf16.mxu0 0
  %2054 = vmatpush1.bf16.msra.mxu0 0
  %2055 = vmatprep.subr.bf16.mxu0 0
  %2056 = vmatpush1.bf16.msra.mxu0 0
  %2057 = vmatprep.subr.bf16.mxu0 0
  %2058 = vmatpush1.bf16.msra.mxu0 0
  %2059 = vmatprep.subr.bf16.mxu0 0
  %2060 = vmatpush1.bf16.msra.mxu0 0
  %2061 = vmatprep.subr.bf16.mxu0 0
  %2062 = vmatpush1.bf16.msra.mxu0 0
  %2063 = vmatprep.subr.bf16.mxu0 0
  %2064 = vmatpush1.bf16.msra.mxu0 0
  %2065 = vmatprep.subr.bf16.mxu0 0
  %2066 = vmatpush1.bf16.msra.mxu0 0
  %2067 = vmatprep.subr.bf16.mxu0 0
  %2068 = vmatpush1.bf16.msra.mxu0 0
  %2069 = vmatprep.subr.bf16.mxu0 0
  %2070 = vmatpush1.bf16.msra.mxu0 0
  %2071 = vmatprep.subr.bf16.mxu0 0
  %2072 = vmatpush1.bf16.msra.mxu0 0
  %2073 = vmatprep.subr.bf16.mxu0 0
  %2074 = vmatpush1.bf16.msra.mxu0 0
  %2075 = vmatprep.subr.bf16.mxu0 0
  %2076 = vmatpush1.bf16.msra.mxu0 0
  %2077 = vmatprep.mubr.bf16.mxu0 0
  %2078 = vmatmul.mubr.bf16.gmra.mrb[0].mxu0 %v1440
  %v2079 = vpop.f32.mrb[0].mxu0
  %v2080 = vadd.f32 %v1983, %v2079
  %v2081 = vpop.f32.mrb[0].mxu0
  %v2082 = vpop.f32.mrb[0].mxu0
  %v2083 = vadd.f32 %v1986, %v2082
  %v2084 = vpop.f32.mrb[0].mxu0
  %2085 = vmatprep.mubr.bf16.mxu0 0
  %2086 = vmatmul.mubr.bf16.gmra.mrb[0].mxu0 %v1443
  %v2087 = vpop.f32.mrb[0].mxu0
  %v2088 = vadd.f32 %v1991, %v2087
  %v2089 = vpop.f32.mrb[0].mxu0
  %v2090 = vpop.f32.mrb[0].mxu0
  %v2091 = vadd.f32 %v1994, %v2090
  %v2092 = vpop.f32.mrb[0].mxu0
  %2093 = vmatprep.mubr.bf16.mxu0 0
  %2094 = vmatmul.mubr.bf16.gmra.mrb[0].mxu0 %v1446
  %v2095 = vpop.f32.mrb[0].mxu0
  %v2096 = vadd.f32 %v1999, %v2095
  %v2097 = vpop.f32.mrb[0].mxu0
  %v2098 = vpop.f32.mrb[0].mxu0
  %v2099 = vadd.f32 %v2002, %v2098
  %v2100 = vpop.f32.mrb[0].mxu0
  %2101 = vmatprep.mubr.bf16.mxu0 0
  %2102 = vmatmul.mubr.bf16.gmra.mrb[0].mxu0 %v1449
  %v2103 = vpop.f32.mrb[0].mxu0
  %v2104 = vadd.f32 %v2007, %v2103
  %v2105 = vpop.f32.mrb[0].mxu0
  %v2106 = vpop.f32.mrb[0].mxu0
  %v2107 = vadd.f32 %v2010, %v2106
  %v2108 = vpop.f32.mrb[0].mxu0
  %2109 = vmatprep.mubr.bf16.mxu0 0
  %2110 = vmatmul.mubr.bf16.gmra.mrb[0].mxu0 %v1452
  %v2111 = vpop.f32.mrb[0].mxu0
  %v2112 = vadd.f32 %v2015, %v2111
  %v2113 = vpop.f32.mrb[0].mxu0
  %v2114 = vpop.f32.mrb[0].mxu0
  %v2115 = vadd.f32 %v2018, %v2114
  %v2116 = vpop.f32.mrb[0].mxu0
  %2117 = vmatprep.mubr.bf16.mxu0 0
  %2118 = vmatmul.mubr.bf16.gmra.mrb[0].mxu0 %v1455
  %v2119 = vpop.f32.mrb[0].mxu0
  %v2120 = vadd.f32 %v2023, %v2119
  %v2121 = vpop.f32.mrb[0].mxu0
  %v2122 = vpop.f32.mrb[0].mxu0
  %v2123 = vadd.f32 %v2026, %v2122
  %v2124 = vpop.f32.mrb[0].mxu0
  %2125 = vmatprep.mubr.bf16.mxu0 0
  %2126 = vmatmul.mubr.bf16.gmra.mrb[0].mxu0 %v1458
  %v2127 = vpop.f32.mrb[0].mxu0
  %v2128 = vadd.f32 %v2031, %v2127
  %v2129 = vpop.f32.mrb[0].mxu0
  %v2130 = vpop.f32.mrb[0].mxu0
  %v2131 = vadd.f32 %v2034, %v2130
  %v2132 = vpop.f32.mrb[0].mxu0
  %2133 = vmatprep.mubr.bf16.mxu0 0
  %2134 = vmatmul.mubr.bf16.gmra.mrb[0].mxu0 %v1461
  %v2135 = vpop.f32.mrb[0].mxu0
  %v2136 = vadd.f32 %v2039, %v2135
  %v2137 = vpop.f32.mrb[0].mxu0
  %v2138 = vpop.f32.mrb[0].mxu0
  %v2139 = vadd.f32 %v2042, %v2138
  %v2140 = vpop.f32.mrb[0].mxu0
  %2141 = vdwg.mxu0
  %v2142 = vmax.f32 %v2080, 0.0
  %v2143 = vmax.f32 %v2083, 0.0
  %v2144 = vmax.f32 %v2088, 0.0
  %v2145 = vmax.f32 %v2091, 0.0
  %v2146 = vmax.f32 %v2096, 0.0
  %v2147 = vmax.f32 %v2099, 0.0
  %v2148 = vmax.f32 %v2104, 0.0
  %v2149 = vmax.f32 %v2107, 0.0
  %v2150 = vmax.f32 %v2112, 0.0
  %v2151 = vmax.f32 %v2115, 0.0
  %v2152 = vmax.f32 %v2120, 0.0
  %v2153 = vmax.f32 %v2123, 0.0
  %v2154 = vmax.f32 %v2128, 0.0
  %v2155 = vmax.f32 %v2131, 0.0
  %v2156 = vmax.f32 %v2136, 0.0
  %v2157 = vmax.f32 %v2139, 0.0
  %v2158 = vpack.c.bf16 %v2143, %v2142
  %v2159 = vpack.c.bf16 %v2145, %v2144
  %v2160 = vpack.c.bf16 %v2147, %v2146
  %v2161 = vpack.c.bf16 %v2149, %v2148
  %v2162 = vpack.c.bf16 %v2151, %v2150
  %v2163 = vpack.c.bf16 %v2153, %v2152
  %v2164 = vpack.c.bf16 %v2155, %v2154
  %v2165 = vpack.c.bf16 %v2157, %v2156
  %v2174 = vunpack.c.l.b16 %v2158
  %v2175 = vunpack.c.h.b16 %v2158
  %v2176 = vunpack.c.l.b16 %v2159
  %v2177 = vunpack.c.h.b16 %v2159
  %v2178 = vunpack.c.l.b16 %v2160
  %v2179 = vunpack.c.h.b16 %v2160
  %v2180 = vunpack.c.l.b16 %v2161
  %v2181 = vunpack.c.h.b16 %v2161
  %v2182 = vunpack.c.l.b16 %v2162
  %v2183 = vunpack.c.h.b16 %v2162
  %v2184 = vunpack.c.l.b16 %v2163
  %v2185 = vunpack.c.h.b16 %v2163
  %v2186 = vunpack.c.l.b16 %v2164
  %v2187 = vunpack.c.h.b16 %v2164
  %v2188 = vunpack.c.l.b16 %v2165
  %v2189 = vunpack.c.h.b16 %v2165
  %v2190 = vpack.c.b16 %v2174, %v2174
  %v2191 = vpack.c.b16 %v2175, %v2175
  %v2192 = vpack.c.b16 %v2176, %v2176
  %v2193 = vpack.c.b16 %v2177, %v2177
  %v2194 = vpack.c.b16 %v2178, %v2178
  %v2195 = vpack.c.b16 %v2179, %v2179
  %v2196 = vpack.c.b16 %v2180, %v2180
  %v2197 = vpack.c.b16 %v2181, %v2181
  %v2198 = vpack.c.b16 %v2182, %v2182
  %v2199 = vpack.c.b16 %v2183, %v2183
  %v2200 = vpack.c.b16 %v2184, %v2184
  %v2201 = vpack.c.b16 %v2185, %v2185
  %v2202 = vpack.c.b16 %v2186, %v2186
  %v2203 = vpack.c.b16 %v2187, %v2187
  %v2204 = vpack.c.b16 %v2188, %v2188
  %v2205 = vpack.c.b16 %v2189, %v2189
  %vm2222 = vcmask 519168
  %2223 = vst.msk [vmem:[%s3] sm:$0xf] %vm2222, %v2190
  %2224 = vst.msk [vmem:[%s3 + $0x4] sm:$0xf] %vm2222, %v2191
  %2225 = vst.msk [vmem:[%s3 + $0x8] sm:$0xf] %vm2222, %v2192
  %2226 = vst.msk [vmem:[%s3 + $0xc] sm:$0xf] %vm2222, %v2193
  %2227 = vst.msk [vmem:[%s3 + $0x10] sm:$0xf] %vm2222, %v2194
  %2228 = vst.msk [vmem:[%s3 + $0x14] sm:$0xf] %vm2222, %v2195
  %2229 = vst.msk [vmem:[%s3 + $0x18] sm:$0xf] %vm2222, %v2196
  %2230 = vst.msk [vmem:[%s3 + $0x1c] sm:$0xf] %vm2222, %v2197
  %2231 = vst.msk [vmem:[%s3 + $0x20] sm:$0xf] %vm2222, %v2198
  %2232 = vst.msk [vmem:[%s3 + $0x24] sm:$0xf] %vm2222, %v2199
  %2233 = vst.msk [vmem:[%s3 + $0x28] sm:$0xf] %vm2222, %v2200
  %2234 = vst.msk [vmem:[%s3 + $0x2c] sm:$0xf] %vm2222, %v2201
  %2235 = vst.msk [vmem:[%s3 + $0x30] sm:$0xf] %vm2222, %v2202
  %2236 = vst.msk [vmem:[%s3 + $0x34] sm:$0xf] %vm2222, %v2203
  %2237 = vst.msk [vmem:[%s3 + $0x38] sm:$0xf] %vm2222, %v2204
  %2238 = vst.msk [vmem:[%s3 + $0x3c] sm:$0xf] %vm2222, %v2205
  // Predicated region
  $region14: #{encoder_forward.7} parent=0 // pred_check
    _
  $region15: #{encoder_forward.7} parent=0 // pred_check_branch
    %2240 = sbr.rel (0) target = $region17
  $region16: #{encoder_forward.7} parent=0 // pred_region
    _
  $region17: #{encoder_forward.7} parent=0 // pred_fallthru
    _
  // Predicated region
  $region18: #{encoder_forward.7} parent=0 // pred_check
    _
  $region19: #{encoder_forward.7} parent=0 // pred_check_branch
    %2242 = sbr.rel (0) target = $region21
  $region20: #{encoder_forward.7} parent=0 // pred_region
    _
  $region21: #{encoder_forward.7} parent=0 // pred_fallthru
    _

// kernel: encoder_forward.8
$region0: #{encoder_forward.8}
  #allocation0 [shape = 'u32[]', space=smem, size = 0x4, offset = 0x4, fixed_abs, tag = 'smem constant byte address 0x4 - core index']
  #allocation1 [shape = 'u32[144,128]{1,0:T(1,128)}', space=vmem, size = 0x12000, scoped, tag = 'internal scratch']
  %s0 = inlined_call_operand.vmem [shape: bf16[32,3136], index: 0, kind: input, shape index: {}]
  %s1 = inlined_call_operand.vmem [shape: bf16[3136,32], index: 1, kind: input, shape index: {}]
  %s2 = inlined_call_operand.vmem [shape: f32[1,32], index: 2, kind: input, shape index: {}]
  %s3 = inlined_call_operand.vmem [shape: f32[32,32], index: 3, kind: output, shape index: {}]
  %s4 = sld [smem:[#allocation0]]
  $region22: #{encoder_forward.8} parent=0
    _
  %s6 = ssub.s32 1, %s4
  %s7 = scalar_select 0, %s6, %s4
  // Predicated region
  $region2: #{encoder_forward.8} parent=0 // pred_check
    _
  $region3: #{encoder_forward.8} parent=0 // pred_check_branch
    %9 = sbr.rel (0) target = $region5
  $region4: #{encoder_forward.8} parent=0 // pred_region
    _
  $region5: #{encoder_forward.8} parent=0 // pred_fallthru
    _
  // Predicated region
  $region6: #{encoder_forward.8} parent=0 // pred_check
    _
  $region7: #{encoder_forward.8} parent=0 // pred_check_branch
    %11 = sbr.rel (0) target = $region9
  $region8: #{encoder_forward.8} parent=0 // pred_region
    _
  $region9: #{encoder_forward.8} parent=0 // pred_fallthru
    _
  // Predicated region
  $region10: #{encoder_forward.8} parent=0 // pred_check
    _
  $region11: #{encoder_forward.8} parent=0 // pred_check_branch
    %13 = sbr.rel (0) target = $region13
  $region12: #{encoder_forward.8} parent=0 // pred_region
    _
  $region13: #{encoder_forward.8} parent=0 // pred_fallthru
    _
  %v15 = vld [vmem:[%s0] sm:$0xff]
  %v16 = vld [vmem:[%s0 + $0x8] sm:$0xff]
  %v17 = vld [vmem:[%s0 + $0x10] sm:$0xff]
  %v18 = vld [vmem:[%s0 + $0x18] sm:$0xff]
  %v19 = vld [vmem:[%s0 + $0x20] sm:$0xff]
  %v20 = vld [vmem:[%s0 + $0x28] sm:$0xff]
  %v21 = vld [vmem:[%s0 + $0x30] sm:$0xff]
  %v22 = vld [vmem:[%s0 + $0x38] sm:$0xff]
  %v23 = vld [vmem:[%s0 + $0x40] sm:$0xff]
  %v24 = vld [vmem:[%s0 + $0x48] sm:$0xff]
  %v25 = vld [vmem:[%s0 + $0x50] sm:$0xff]
  %v26 = vld [vmem:[%s0 + $0x58] sm:$0xff]
  %v27 = vld [vmem:[%s0 + $0x60] sm:$0xf]
  %v28 = vld [vmem:[%s0 + $0x64] sm:$0xff]
  %v29 = vld [vmem:[%s0 + $0x6c] sm:$0xff]
  %v30 = vld [vmem:[%s0 + $0x74] sm:$0xff]
  %v31 = vld [vmem:[%s0 + $0x7c] sm:$0xff]
  %v32 = vld [vmem:[%s0 + $0x84] sm:$0xff]
  %v33 = vld [vmem:[%s0 + $0x8c] sm:$0xff]
  %v34 = vld [vmem:[%s0 + $0x94] sm:$0xff]
  %v35 = vld [vmem:[%s0 + $0x9c] sm:$0xff]
  %v36 = vld [vmem:[%s0 + $0xa4] sm:$0xff]
  %v37 = vld [vmem:[%s0 + $0xac] sm:$0xff]
  %v38 = vld [vmem:[%s0 + $0xb4] sm:$0xff]
  %v39 = vld [vmem:[%s0 + $0xbc] sm:$0xff]
  %v40 = vld [vmem:[%s0 + $0xc4] sm:$0xf]
  %v41 = vld [vmem:[%s0 + $0xc8] sm:$0xff]
  %v42 = vld [vmem:[%s0 + $0xd0] sm:$0xff]
  %v43 = vld [vmem:[%s0 + $0xd8] sm:$0xff]
  %v44 = vld [vmem:[%s0 + $0xe0] sm:$0xff]
  %v45 = vld [vmem:[%s0 + $0xe8] sm:$0xff]
  %v46 = vld [vmem:[%s0 + $0xf0] sm:$0xff]
  %v47 = vld [vmem:[%s0 + $0xf8] sm:$0xff]
  %v48 = vld [vmem:[%s0 + $0x100] sm:$0xff]
  %v49 = vld [vmem:[%s0 + $0x108] sm:$0xff]
  %v50 = vld [vmem:[%s0 + $0x110] sm:$0xff]
  %v51 = vld [vmem:[%s0 + $0x118] sm:$0xff]
  %v52 = vld [vmem:[%s0 + $0x120] sm:$0xff]
  %v53 = vld [vmem:[%s0 + $0x128] sm:$0xf]
  %v54 = vld [vmem:[%s0 + $0x12c] sm:$0xff]
  %v55 = vld [vmem:[%s0 + $0x134] sm:$0xff]
  %v56 = vld [vmem:[%s0 + $0x13c] sm:$0xff]
  %v57 = vld [vmem:[%s0 + $0x144] sm:$0xff]
  %v58 = vld [vmem:[%s0 + $0x14c] sm:$0xff]
  %v59 = vld [vmem:[%s0 + $0x154] sm:$0xff]
  %v60 = vld [vmem:[%s0 + $0x15c] sm:$0xff]
  %v61 = vld [vmem:[%s0 + $0x164] sm:$0xff]
  %v62 = vld [vmem:[%s0 + $0x16c] sm:$0xff]
  %v63 = vld [vmem:[%s0 + $0x174] sm:$0xff]
  %v64 = vld [vmem:[%s0 + $0x17c] sm:$0xff]
  %v65 = vld [vmem:[%s0 + $0x184] sm:$0xff]
  %v66 = vld [vmem:[%s0 + $0x18c] sm:$0xf]
  %v67 = vld [vmem:[%s1] sm:$0xf]
  %v68 = vld [vmem:[%s1 + $0x4] sm:$0xf]
  %v69 = vld [vmem:[%s1 + $0x8] sm:$0xf]
  %v70 = vld [vmem:[%s1 + $0xc] sm:$0xf]
  %v71 = vld [vmem:[%s1 + $0x10] sm:$0xf]
  %v72 = vld [vmem:[%s1 + $0x14] sm:$0xf]
  %v73 = vld [vmem:[%s1 + $0x18] sm:$0xf]
  %v74 = vld [vmem:[%s1 + $0x1c] sm:$0xf]
  %v75 = vld [vmem:[%s1 + $0x20] sm:$0xf]
  %v76 = vld [vmem:[%s1 + $0x24] sm:$0xf]
  %v77 = vld [vmem:[%s1 + $0x28] sm:$0xf]
  %v78 = vld [vmem:[%s1 + $0x2c] sm:$0xf]
  %v79 = vld [vmem:[%s1 + $0x30] sm:$0xf]
  %v80 = vld [vmem:[%s1 + $0x34] sm:$0xf]
  %v81 = vld [vmem:[%s1 + $0x38] sm:$0xf]
  %v82 = vld [vmem:[%s1 + $0x3c] sm:$0xf]
  %v83 = vld [vmem:[%s1 + $0x40] sm:$0xf]
  %v84 = vld [vmem:[%s1 + $0x44] sm:$0xf]
  %v85 = vld [vmem:[%s1 + $0x48] sm:$0xf]
  %v86 = vld [vmem:[%s1 + $0x4c] sm:$0xf]
  %v87 = vld [vmem:[%s1 + $0x50] sm:$0xf]
  %v88 = vld [vmem:[%s1 + $0x54] sm:$0xf]
  %v89 = vld [vmem:[%s1 + $0x58] sm:$0xf]
  %v90 = vld [vmem:[%s1 + $0x5c] sm:$0xf]
  %v91 = vld [vmem:[%s1 + $0x60] sm:$0xf]
  %v92 = vld [vmem:[%s1 + $0x64] sm:$0xf]
  %v93 = vld [vmem:[%s1 + $0x68] sm:$0xf]
  %v94 = vld [vmem:[%s1 + $0x6c] sm:$0xf]
  %v95 = vld [vmem:[%s1 + $0x70] sm:$0xf]
  %v96 = vld [vmem:[%s1 + $0x74] sm:$0xf]
  %v97 = vld [vmem:[%s1 + $0x78] sm:$0xf]
  %v98 = vld [vmem:[%s1 + $0x7c] sm:$0xf]
  %v99 = vld [vmem:[%s1 + $0x80] sm:$0xf]
  %v100 = vld [vmem:[%s1 + $0x84] sm:$0xf]
  %v101 = vld [vmem:[%s1 + $0x88] sm:$0xf]
  %v102 = vld [vmem:[%s1 + $0x8c] sm:$0xf]
  %v103 = vld [vmem:[%s1 + $0x90] sm:$0xf]
  %v104 = vld [vmem:[%s1 + $0x94] sm:$0xf]
  %v105 = vld [vmem:[%s1 + $0x98] sm:$0xf]
  %v106 = vld [vmem:[%s1 + $0x9c] sm:$0xf]
  %v107 = vld [vmem:[%s1 + $0xa0] sm:$0xf]
  %v108 = vld [vmem:[%s1 + $0xa4] sm:$0xf]
  %v109 = vld [vmem:[%s1 + $0xa8] sm:$0xf]
  %v110 = vld [vmem:[%s1 + $0xac] sm:$0xf]
  %v111 = vld [vmem:[%s1 + $0xb0] sm:$0xf]
  %v112 = vld [vmem:[%s1 + $0xb4] sm:$0xf]
  %v113 = vld [vmem:[%s1 + $0xb8] sm:$0xf]
  %v114 = vld [vmem:[%s1 + $0xbc] sm:$0xf]
  %v115 = vld [vmem:[%s1 + $0xc0] sm:$0xf]
  %v116 = vld [vmem:[%s1 + $0xc4] sm:$0xf]
  %v117 = vld [vmem:[%s1 + $0xc8] sm:$0xf]
  %v118 = vld [vmem:[%s1 + $0xcc] sm:$0xf]
  %v119 = vld [vmem:[%s1 + $0xd0] sm:$0xf]
  %v120 = vld [vmem:[%s1 + $0xd4] sm:$0xf]
  %v121 = vld [vmem:[%s1 + $0xd8] sm:$0xf]
  %v122 = vld [vmem:[%s1 + $0xdc] sm:$0xf]
  %v123 = vld [vmem:[%s1 + $0xe0] sm:$0xf]
  %v124 = vld [vmem:[%s1 + $0xe4] sm:$0xf]
  %v125 = vld [vmem:[%s1 + $0xe8] sm:$0xf]
  %v126 = vld [vmem:[%s1 + $0xec] sm:$0xf]
  %v127 = vld [vmem:[%s1 + $0xf0] sm:$0xf]
  %v128 = vld [vmem:[%s1 + $0xf4] sm:$0xf]
  %v129 = vld [vmem:[%s1 + $0xf8] sm:$0xf]
  %v130 = vld [vmem:[%s1 + $0xfc] sm:$0xf]
  %v131 = vld [vmem:[%s1 + $0x100] sm:$0xf]
  %v132 = vld [vmem:[%s1 + $0x104] sm:$0xf]
  %v133 = vld [vmem:[%s1 + $0x108] sm:$0xf]
  %v134 = vld [vmem:[%s1 + $0x10c] sm:$0xf]
  %v135 = vld [vmem:[%s1 + $0x110] sm:$0xf]
  %v136 = vld [vmem:[%s1 + $0x114] sm:$0xf]
  %v137 = vld [vmem:[%s1 + $0x118] sm:$0xf]
  %v138 = vld [vmem:[%s1 + $0x11c] sm:$0xf]
  %v139 = vld [vmem:[%s1 + $0x120] sm:$0xf]
  %v140 = vld [vmem:[%s1 + $0x124] sm:$0xf]
  %v141 = vld [vmem:[%s1 + $0x128] sm:$0xf]
  %v142 = vld [vmem:[%s1 + $0x12c] sm:$0xf]
  %v143 = vld [vmem:[%s1 + $0x130] sm:$0xf]
  %v144 = vld [vmem:[%s1 + $0x134] sm:$0xf]
  %v145 = vld [vmem:[%s1 + $0x138] sm:$0xf]
  %v146 = vld [vmem:[%s1 + $0x13c] sm:$0xf]
  %v147 = vld [vmem:[%s1 + $0x140] sm:$0xf]
  %v148 = vld [vmem:[%s1 + $0x144] sm:$0xf]
  %v149 = vld [vmem:[%s1 + $0x148] sm:$0xf]
  %v150 = vld [vmem:[%s1 + $0x14c] sm:$0xf]
  %v151 = vld [vmem:[%s1 + $0x150] sm:$0xf]
  %v152 = vld [vmem:[%s1 + $0x154] sm:$0xf]
  %v153 = vld [vmem:[%s1 + $0x158] sm:$0xf]
  %v154 = vld [vmem:[%s1 + $0x15c] sm:$0xf]
  %v155 = vld [vmem:[%s1 + $0x160] sm:$0xf]
  %v156 = vld [vmem:[%s1 + $0x164] sm:$0xf]
  %v157 = vld [vmem:[%s1 + $0x168] sm:$0xf]
  %v158 = vld [vmem:[%s1 + $0x16c] sm:$0xf]
  %v159 = vld [vmem:[%s1 + $0x170] sm:$0xf]
  %v160 = vld [vmem:[%s1 + $0x174] sm:$0xf]
  %v161 = vld [vmem:[%s1 + $0x178] sm:$0xf]
  %v162 = vld [vmem:[%s1 + $0x17c] sm:$0xf]
  %v163 = vld [vmem:[%s1 + $0x180] sm:$0xf]
  %v164 = vld [vmem:[%s1 + $0x184] sm:$0xf]
  %v165 = vld [vmem:[%s1 + $0x188] sm:$0xf]
  %v166 = vld [vmem:[%s1 + $0x18c] sm:$0xf]
  %v167 = vld [vmem:[%s1 + $0x190] sm:$0xf]
  %v168 = vld [vmem:[%s1 + $0x194] sm:$0xf]
  %v169 = vld [vmem:[%s1 + $0x198] sm:$0xf]
  %v170 = vld [vmem:[%s1 + $0x19c] sm:$0xf]
  %v171 = vld [vmem:[%s1 + $0x1a0] sm:$0xf]
  %v172 = vld [vmem:[%s1 + $0x1a4] sm:$0xf]
  %v173 = vld [vmem:[%s1 + $0x1a8] sm:$0xf]
  %v174 = vld [vmem:[%s1 + $0x1ac] sm:$0xf]
  %v175 = vld [vmem:[%s1 + $0x1b0] sm:$0xf]
  %v176 = vld [vmem:[%s1 + $0x1b4] sm:$0xf]
  %v177 = vld [vmem:[%s1 + $0x1b8] sm:$0xf]
  %v178 = vld [vmem:[%s1 + $0x1bc] sm:$0xf]
  %v179 = vld [vmem:[%s1 + $0x1c0] sm:$0xf]
  %v180 = vld [vmem:[%s1 + $0x1c4] sm:$0xf]
  %v181 = vld [vmem:[%s1 + $0x1c8] sm:$0xf]
  %v182 = vld [vmem:[%s1 + $0x1cc] sm:$0xf]
  %v183 = vld [vmem:[%s1 + $0x1d0] sm:$0xf]
  %v184 = vld [vmem:[%s1 + $0x1d4] sm:$0xf]
  %v185 = vld [vmem:[%s1 + $0x1d8] sm:$0xf]
  %v186 = vld [vmem:[%s1 + $0x1dc] sm:$0xf]
  %v187 = vld [vmem:[%s1 + $0x1e0] sm:$0xf]
  %v188 = vld [vmem:[%s1 + $0x1e4] sm:$0xf]
  %v189 = vld [vmem:[%s1 + $0x1e8] sm:$0xf]
  %v190 = vld [vmem:[%s1 + $0x1ec] sm:$0xf]
  %v191 = vld [vmem:[%s1 + $0x1f0] sm:$0xf]
  %v192 = vld [vmem:[%s1 + $0x1f4] sm:$0xf]
  %v193 = vld [vmem:[%s1 + $0x1f8] sm:$0xf]
  %v194 = vld [vmem:[%s1 + $0x1fc] sm:$0xf]
  %v195 = vld [vmem:[%s1 + $0x200] sm:$0xf]
  %v196 = vld [vmem:[%s1 + $0x204] sm:$0xf]
  %v197 = vld [vmem:[%s1 + $0x208] sm:$0xf]
  %v198 = vld [vmem:[%s1 + $0x20c] sm:$0xf]
  %v199 = vld [vmem:[%s1 + $0x210] sm:$0xf]
  %v200 = vld [vmem:[%s1 + $0x214] sm:$0xf]
  %v201 = vld [vmem:[%s1 + $0x218] sm:$0xf]
  %v202 = vld [vmem:[%s1 + $0x21c] sm:$0xf]
  %v203 = vld [vmem:[%s1 + $0x220] sm:$0xf]
  %v204 = vld [vmem:[%s1 + $0x224] sm:$0xf]
  %v205 = vld [vmem:[%s1 + $0x228] sm:$0xf]
  %v206 = vld [vmem:[%s1 + $0x22c] sm:$0xf]
  %v207 = vld [vmem:[%s1 + $0x230] sm:$0xf]
  %v208 = vld [vmem:[%s1 + $0x234] sm:$0xf]
  %v209 = vld [vmem:[%s1 + $0x238] sm:$0xf]
  %v210 = vld [vmem:[%s1 + $0x23c] sm:$0xf]
  %v211 = vld [vmem:[%s1 + $0x240] sm:$0xf]
  %v212 = vld [vmem:[%s1 + $0x244] sm:$0xf]
  %v213 = vld [vmem:[%s1 + $0x248] sm:$0xf]
  %v214 = vld [vmem:[%s1 + $0x24c] sm:$0xf]
  %v215 = vld [vmem:[%s1 + $0x250] sm:$0xf]
  %v216 = vld [vmem:[%s1 + $0x254] sm:$0xf]
  %v217 = vld [vmem:[%s1 + $0x258] sm:$0xf]
  %v218 = vld [vmem:[%s1 + $0x25c] sm:$0xf]
  %v219 = vld [vmem:[%s1 + $0x260] sm:$0xf]
  %v220 = vld [vmem:[%s1 + $0x264] sm:$0xf]
  %v221 = vld [vmem:[%s1 + $0x268] sm:$0xf]
  %v222 = vld [vmem:[%s1 + $0x26c] sm:$0xf]
  %v223 = vld [vmem:[%s1 + $0x270] sm:$0xf]
  %v224 = vld [vmem:[%s1 + $0x274] sm:$0xf]
  %v225 = vld [vmem:[%s1 + $0x278] sm:$0xf]
  %v226 = vld [vmem:[%s1 + $0x27c] sm:$0xf]
  %v227 = vld [vmem:[%s1 + $0x280] sm:$0xf]
  %v228 = vld [vmem:[%s1 + $0x284] sm:$0xf]
  %v229 = vld [vmem:[%s1 + $0x288] sm:$0xf]
  %v230 = vld [vmem:[%s1 + $0x28c] sm:$0xf]
  %v231 = vld [vmem:[%s1 + $0x290] sm:$0xf]
  %v232 = vld [vmem:[%s1 + $0x294] sm:$0xf]
  %v233 = vld [vmem:[%s1 + $0x298] sm:$0xf]
  %v234 = vld [vmem:[%s1 + $0x29c] sm:$0xf]
  %v235 = vld [vmem:[%s1 + $0x2a0] sm:$0xf]
  %v236 = vld [vmem:[%s1 + $0x2a4] sm:$0xf]
  %v237 = vld [vmem:[%s1 + $0x2a8] sm:$0xf]
  %v238 = vld [vmem:[%s1 + $0x2ac] sm:$0xf]
  %v239 = vld [vmem:[%s1 + $0x2b0] sm:$0xf]
  %v240 = vld [vmem:[%s1 + $0x2b4] sm:$0xf]
  %v241 = vld [vmem:[%s1 + $0x2b8] sm:$0xf]
  %v242 = vld [vmem:[%s1 + $0x2bc] sm:$0xf]
  %v243 = vld [vmem:[%s1 + $0x2c0] sm:$0xf]
  %v244 = vld [vmem:[%s1 + $0x2c4] sm:$0xf]
  %v245 = vld [vmem:[%s1 + $0x2c8] sm:$0xf]
  %v246 = vld [vmem:[%s1 + $0x2cc] sm:$0xf]
  %v247 = vld [vmem:[%s1 + $0x2d0] sm:$0xf]
  %v248 = vld [vmem:[%s1 + $0x2d4] sm:$0xf]
  %v249 = vld [vmem:[%s1 + $0x2d8] sm:$0xf]
  %v250 = vld [vmem:[%s1 + $0x2dc] sm:$0xf]
  %v251 = vld [vmem:[%s1 + $0x2e0] sm:$0xf]
  %v252 = vld [vmem:[%s1 + $0x2e4] sm:$0xf]
  %v253 = vld [vmem:[%s1 + $0x2e8] sm:$0xf]
  %v254 = vld [vmem:[%s1 + $0x2ec] sm:$0xf]
  %v255 = vld [vmem:[%s1 + $0x2f0] sm:$0xf]
  %v256 = vld [vmem:[%s1 + $0x2f4] sm:$0xf]
  %v257 = vld [vmem:[%s1 + $0x2f8] sm:$0xf]
  %v258 = vld [vmem:[%s1 + $0x2fc] sm:$0xf]
  %v259 = vld [vmem:[%s1 + $0x300] sm:$0xf]
  %v260 = vld [vmem:[%s1 + $0x304] sm:$0xf]
  %v261 = vld [vmem:[%s1 + $0x308] sm:$0xf]
  %v262 = vld [vmem:[%s1 + $0x30c] sm:$0xf]
  %v263 = vld [vmem:[%s1 + $0x310] sm:$0xf]
  %v264 = vld [vmem:[%s1 + $0x314] sm:$0xf]
  %v265 = vld [vmem:[%s1 + $0x318] sm:$0xf]
  %v266 = vld [vmem:[%s1 + $0x31c] sm:$0xf]
  %v267 = vld [vmem:[%s1 + $0x320] sm:$0xf]
  %v268 = vld [vmem:[%s1 + $0x324] sm:$0xf]
  %v269 = vld [vmem:[%s1 + $0x328] sm:$0xf]
  %v270 = vld [vmem:[%s1 + $0x32c] sm:$0xf]
  %v271 = vld [vmem:[%s1 + $0x330] sm:$0xf]
  %v272 = vld [vmem:[%s1 + $0x334] sm:$0xf]
  %v273 = vld [vmem:[%s1 + $0x338] sm:$0xf]
  %v274 = vld [vmem:[%s1 + $0x33c] sm:$0xf]
  %v275 = vld [vmem:[%s1 + $0x340] sm:$0xf]
  %v276 = vld [vmem:[%s1 + $0x344] sm:$0xf]
  %v277 = vld [vmem:[%s1 + $0x348] sm:$0xf]
  %v278 = vld [vmem:[%s1 + $0x34c] sm:$0xf]
  %v279 = vld [vmem:[%s1 + $0x350] sm:$0xf]
  %v280 = vld [vmem:[%s1 + $0x354] sm:$0xf]
  %v281 = vld [vmem:[%s1 + $0x358] sm:$0xf]
  %v282 = vld [vmem:[%s1 + $0x35c] sm:$0xf]
  %v283 = vld [vmem:[%s1 + $0x360] sm:$0xf]
  %v284 = vld [vmem:[%s1 + $0x364] sm:$0xf]
  %v285 = vld [vmem:[%s1 + $0x368] sm:$0xf]
  %v286 = vld [vmem:[%s1 + $0x36c] sm:$0xf]
  %v287 = vld [vmem:[%s1 + $0x370] sm:$0xf]
  %v288 = vld [vmem:[%s1 + $0x374] sm:$0xf]
  %v289 = vld [vmem:[%s1 + $0x378] sm:$0xf]
  %v290 = vld [vmem:[%s1 + $0x37c] sm:$0xf]
  %v291 = vld [vmem:[%s1 + $0x380] sm:$0xf]
  %v292 = vld [vmem:[%s1 + $0x384] sm:$0xf]
  %v293 = vld [vmem:[%s1 + $0x388] sm:$0xf]
  %v294 = vld [vmem:[%s1 + $0x38c] sm:$0xf]
  %v295 = vld [vmem:[%s1 + $0x390] sm:$0xf]
  %v296 = vld [vmem:[%s1 + $0x394] sm:$0xf]
  %v297 = vld [vmem:[%s1 + $0x398] sm:$0xf]
  %v298 = vld [vmem:[%s1 + $0x39c] sm:$0xf]
  %v299 = vld [vmem:[%s1 + $0x3a0] sm:$0xf]
  %v300 = vld [vmem:[%s1 + $0x3a4] sm:$0xf]
  %v301 = vld [vmem:[%s1 + $0x3a8] sm:$0xf]
  %v302 = vld [vmem:[%s1 + $0x3ac] sm:$0xf]
  %v303 = vld [vmem:[%s1 + $0x3b0] sm:$0xf]
  %v304 = vld [vmem:[%s1 + $0x3b4] sm:$0xf]
  %v305 = vld [vmem:[%s1 + $0x3b8] sm:$0xf]
  %v306 = vld [vmem:[%s1 + $0x3bc] sm:$0xf]
  %v307 = vld [vmem:[%s1 + $0x3c0] sm:$0xf]
  %v308 = vld [vmem:[%s1 + $0x3c4] sm:$0xf]
  %v309 = vld [vmem:[%s1 + $0x3c8] sm:$0xf]
  %v310 = vld [vmem:[%s1 + $0x3cc] sm:$0xf]
  %v311 = vld [vmem:[%s1 + $0x3d0] sm:$0xf]
  %v312 = vld [vmem:[%s1 + $0x3d4] sm:$0xf]
  %v313 = vld [vmem:[%s1 + $0x3d8] sm:$0xf]
  %v314 = vld [vmem:[%s1 + $0x3dc] sm:$0xf]
  %v315 = vld [vmem:[%s1 + $0x3e0] sm:$0xf]
  %v316 = vld [vmem:[%s1 + $0x3e4] sm:$0xf]
  %v317 = vld [vmem:[%s1 + $0x3e8] sm:$0xf]
  %v318 = vld [vmem:[%s1 + $0x3ec] sm:$0xf]
  %v319 = vld [vmem:[%s1 + $0x3f0] sm:$0xf]
  %v320 = vld [vmem:[%s1 + $0x3f4] sm:$0xf]
  %v321 = vld [vmem:[%s1 + $0x3f8] sm:$0xf]
  %v322 = vld [vmem:[%s1 + $0x3fc] sm:$0xf]
  %v323 = vld [vmem:[%s1 + $0x400] sm:$0xf]
  %v324 = vld [vmem:[%s1 + $0x404] sm:$0xf]
  %v325 = vld [vmem:[%s1 + $0x408] sm:$0xf]
  %v326 = vld [vmem:[%s1 + $0x40c] sm:$0xf]
  %v327 = vld [vmem:[%s1 + $0x410] sm:$0xf]
  %v328 = vld [vmem:[%s1 + $0x414] sm:$0xf]
  %v329 = vld [vmem:[%s1 + $0x418] sm:$0xf]
  %v330 = vld [vmem:[%s1 + $0x41c] sm:$0xf]
  %v331 = vld [vmem:[%s1 + $0x420] sm:$0xf]
  %v332 = vld [vmem:[%s1 + $0x424] sm:$0xf]
  %v333 = vld [vmem:[%s1 + $0x428] sm:$0xf]
  %v334 = vld [vmem:[%s1 + $0x42c] sm:$0xf]
  %v335 = vld [vmem:[%s1 + $0x430] sm:$0xf]
  %v336 = vld [vmem:[%s1 + $0x434] sm:$0xf]
  %v337 = vld [vmem:[%s1 + $0x438] sm:$0xf]
  %v338 = vld [vmem:[%s1 + $0x43c] sm:$0xf]
  %v339 = vld [vmem:[%s1 + $0x440] sm:$0xf]
  %v340 = vld [vmem:[%s1 + $0x444] sm:$0xf]
  %v341 = vld [vmem:[%s1 + $0x448] sm:$0xf]
  %v342 = vld [vmem:[%s1 + $0x44c] sm:$0xf]
  %v343 = vld [vmem:[%s1 + $0x450] sm:$0xf]
  %v344 = vld [vmem:[%s1 + $0x454] sm:$0xf]
  %v345 = vld [vmem:[%s1 + $0x458] sm:$0xf]
  %v346 = vld [vmem:[%s1 + $0x45c] sm:$0xf]
  %v347 = vld [vmem:[%s1 + $0x460] sm:$0xf]
  %v348 = vld [vmem:[%s1 + $0x464] sm:$0xf]
  %v349 = vld [vmem:[%s1 + $0x468] sm:$0xf]
  %v350 = vld [vmem:[%s1 + $0x46c] sm:$0xf]
  %v351 = vld [vmem:[%s1 + $0x470] sm:$0xf]
  %v352 = vld [vmem:[%s1 + $0x474] sm:$0xf]
  %v353 = vld [vmem:[%s1 + $0x478] sm:$0xf]
  %v354 = vld [vmem:[%s1 + $0x47c] sm:$0xf]
  %v355 = vld [vmem:[%s1 + $0x480] sm:$0xf]
  %v356 = vld [vmem:[%s1 + $0x484] sm:$0xf]
  %v357 = vld [vmem:[%s1 + $0x488] sm:$0xf]
  %v358 = vld [vmem:[%s1 + $0x48c] sm:$0xf]
  %v359 = vld [vmem:[%s1 + $0x490] sm:$0xf]
  %v360 = vld [vmem:[%s1 + $0x494] sm:$0xf]
  %v361 = vld [vmem:[%s1 + $0x498] sm:$0xf]
  %v362 = vld [vmem:[%s1 + $0x49c] sm:$0xf]
  %v363 = vld [vmem:[%s1 + $0x4a0] sm:$0xf]
  %v364 = vld [vmem:[%s1 + $0x4a4] sm:$0xf]
  %v365 = vld [vmem:[%s1 + $0x4a8] sm:$0xf]
  %v366 = vld [vmem:[%s1 + $0x4ac] sm:$0xf]
  %v367 = vld [vmem:[%s1 + $0x4b0] sm:$0xf]
  %v368 = vld [vmem:[%s1 + $0x4b4] sm:$0xf]
  %v369 = vld [vmem:[%s1 + $0x4b8] sm:$0xf]
  %v370 = vld [vmem:[%s1 + $0x4bc] sm:$0xf]
  %v371 = vld [vmem:[%s1 + $0x4c0] sm:$0xf]
  %v372 = vld [vmem:[%s1 + $0x4c4] sm:$0xf]
  %v373 = vld [vmem:[%s1 + $0x4c8] sm:$0xf]
  %v374 = vld [vmem:[%s1 + $0x4cc] sm:$0xf]
  %v375 = vld [vmem:[%s1 + $0x4d0] sm:$0xf]
  %v376 = vld [vmem:[%s1 + $0x4d4] sm:$0xf]
  %v377 = vld [vmem:[%s1 + $0x4d8] sm:$0xf]
  %v378 = vld [vmem:[%s1 + $0x4dc] sm:$0xf]
  %v379 = vld [vmem:[%s1 + $0x4e0] sm:$0xf]
  %v380 = vld [vmem:[%s1 + $0x4e4] sm:$0xf]
  %v381 = vld [vmem:[%s1 + $0x4e8] sm:$0xf]
  %v382 = vld [vmem:[%s1 + $0x4ec] sm:$0xf]
  %v383 = vld [vmem:[%s1 + $0x4f0] sm:$0xf]
  %v384 = vld [vmem:[%s1 + $0x4f4] sm:$0xf]
  %v385 = vld [vmem:[%s1 + $0x4f8] sm:$0xf]
  %v386 = vld [vmem:[%s1 + $0x4fc] sm:$0xf]
  %v387 = vld [vmem:[%s1 + $0x500] sm:$0xf]
  %v388 = vld [vmem:[%s1 + $0x504] sm:$0xf]
  %v389 = vld [vmem:[%s1 + $0x508] sm:$0xf]
  %v390 = vld [vmem:[%s1 + $0x50c] sm:$0xf]
  %v391 = vld [vmem:[%s1 + $0x510] sm:$0xf]
  %v392 = vld [vmem:[%s1 + $0x514] sm:$0xf]
  %v393 = vld [vmem:[%s1 + $0x518] sm:$0xf]
  %v394 = vld [vmem:[%s1 + $0x51c] sm:$0xf]
  %v395 = vld [vmem:[%s1 + $0x520] sm:$0xf]
  %v396 = vld [vmem:[%s1 + $0x524] sm:$0xf]
  %v397 = vld [vmem:[%s1 + $0x528] sm:$0xf]
  %v398 = vld [vmem:[%s1 + $0x52c] sm:$0xf]
  %v399 = vld [vmem:[%s1 + $0x530] sm:$0xf]
  %v400 = vld [vmem:[%s1 + $0x534] sm:$0xf]
  %v401 = vld [vmem:[%s1 + $0x538] sm:$0xf]
  %v402 = vld [vmem:[%s1 + $0x53c] sm:$0xf]
  %v403 = vld [vmem:[%s1 + $0x540] sm:$0xf]
  %v404 = vld [vmem:[%s1 + $0x544] sm:$0xf]
  %v405 = vld [vmem:[%s1 + $0x548] sm:$0xf]
  %v406 = vld [vmem:[%s1 + $0x54c] sm:$0xf]
  %v407 = vld [vmem:[%s1 + $0x550] sm:$0xf]
  %v408 = vld [vmem:[%s1 + $0x554] sm:$0xf]
  %v409 = vld [vmem:[%s1 + $0x558] sm:$0xf]
  %v410 = vld [vmem:[%s1 + $0x55c] sm:$0xf]
  %v411 = vld [vmem:[%s1 + $0x560] sm:$0xf]
  %v412 = vld [vmem:[%s1 + $0x564] sm:$0xf]
  %v413 = vld [vmem:[%s1 + $0x568] sm:$0xf]
  %v414 = vld [vmem:[%s1 + $0x56c] sm:$0xf]
  %v415 = vld [vmem:[%s1 + $0x570] sm:$0xf]
  %v416 = vld [vmem:[%s1 + $0x574] sm:$0xf]
  %v417 = vld [vmem:[%s1 + $0x578] sm:$0xf]
  %v418 = vld [vmem:[%s1 + $0x57c] sm:$0xf]
  %v419 = vld [vmem:[%s1 + $0x580] sm:$0xf]
  %v420 = vld [vmem:[%s1 + $0x584] sm:$0xf]
  %v421 = vld [vmem:[%s1 + $0x588] sm:$0xf]
  %v422 = vld [vmem:[%s1 + $0x58c] sm:$0xf]
  %v423 = vld [vmem:[%s1 + $0x590] sm:$0xf]
  %v424 = vld [vmem:[%s1 + $0x594] sm:$0xf]
  %v425 = vld [vmem:[%s1 + $0x598] sm:$0xf]
  %v426 = vld [vmem:[%s1 + $0x59c] sm:$0xf]
  %v427 = vld [vmem:[%s1 + $0x5a0] sm:$0xf]
  %v428 = vld [vmem:[%s1 + $0x5a4] sm:$0xf]
  %v429 = vld [vmem:[%s1 + $0x5a8] sm:$0xf]
  %v430 = vld [vmem:[%s1 + $0x5ac] sm:$0xf]
  %v431 = vld [vmem:[%s1 + $0x5b0] sm:$0xf]
  %v432 = vld [vmem:[%s1 + $0x5b4] sm:$0xf]
  %v433 = vld [vmem:[%s1 + $0x5b8] sm:$0xf]
  %v434 = vld [vmem:[%s1 + $0x5bc] sm:$0xf]
  %v435 = vld [vmem:[%s1 + $0x5c0] sm:$0xf]
  %v436 = vld [vmem:[%s1 + $0x5c4] sm:$0xf]
  %v437 = vld [vmem:[%s1 + $0x5c8] sm:$0xf]
  %v438 = vld [vmem:[%s1 + $0x5cc] sm:$0xf]
  %v439 = vld [vmem:[%s1 + $0x5d0] sm:$0xf]
  %v440 = vld [vmem:[%s1 + $0x5d4] sm:$0xf]
  %v441 = vld [vmem:[%s1 + $0x5d8] sm:$0xf]
  %v442 = vld [vmem:[%s1 + $0x5dc] sm:$0xf]
  %v443 = vld [vmem:[%s1 + $0x5e0] sm:$0xf]
  %v444 = vld [vmem:[%s1 + $0x5e4] sm:$0xf]
  %v445 = vld [vmem:[%s1 + $0x5e8] sm:$0xf]
  %v446 = vld [vmem:[%s1 + $0x5ec] sm:$0xf]
  %v447 = vld [vmem:[%s1 + $0x5f0] sm:$0xf]
  %v448 = vld [vmem:[%s1 + $0x5f4] sm:$0xf]
  %v449 = vld [vmem:[%s1 + $0x5f8] sm:$0xf]
  %v450 = vld [vmem:[%s1 + $0x5fc] sm:$0xf]
  %v451 = vld [vmem:[%s1 + $0x600] sm:$0xf]
  %v452 = vld [vmem:[%s1 + $0x604] sm:$0xf]
  %v453 = vld [vmem:[%s1 + $0x608] sm:$0xf]
  %v454 = vld [vmem:[%s1 + $0x60c] sm:$0xf]
  %v455 = vld [vmem:[%s1 + $0x610] sm:$0xf]
  %v456 = vld [vmem:[%s1 + $0x614] sm:$0xf]
  %v457 = vld [vmem:[%s1 + $0x618] sm:$0xf]
  %v458 = vld [vmem:[%s1 + $0x61c] sm:$0xf]
  %v459 = vld [vmem:[%s2] sm:$0x1]
  %v461 = vlaneseq
  %v462 = vshrl.u32 %v461, 7
  %v463 = vsub.s32 0, %v462
  %v464 = vrot.slane %v459, %v463
  %v518 = vunpack.c.l.b16 %v15
  %v519 = vunpack.c.h.b16 %v15
  %v520 = vunpack.c.l.b16 %v16
  %v521 = vunpack.c.h.b16 %v16
  %v522 = vunpack.c.l.b16 %v17
  %v523 = vunpack.c.h.b16 %v17
  %v524 = vunpack.c.l.b16 %v18
  %v525 = vunpack.c.h.b16 %v18
  %v526 = vunpack.c.l.b16 %v19
  %v527 = vunpack.c.h.b16 %v19
  %v528 = vunpack.c.l.b16 %v20
  %v529 = vunpack.c.h.b16 %v20
  %v530 = vunpack.c.l.b16 %v21
  %v531 = vunpack.c.h.b16 %v21
  %v532 = vunpack.c.l.b16 %v22
  %v533 = vunpack.c.h.b16 %v22
  %v534 = vunpack.c.l.b16 %v23
  %v535 = vunpack.c.h.b16 %v23
  %v536 = vunpack.c.l.b16 %v24
  %v537 = vunpack.c.h.b16 %v24
  %v538 = vunpack.c.l.b16 %v25
  %v539 = vunpack.c.h.b16 %v25
  %v540 = vunpack.c.l.b16 %v26
  %v541 = vunpack.c.h.b16 %v26
  %v542 = vunpack.c.l.b16 %v27
  %v543 = vunpack.c.l.b16 %v28
  %v544 = vunpack.c.h.b16 %v28
  %v545 = vunpack.c.l.b16 %v29
  %v546 = vunpack.c.h.b16 %v29
  %v547 = vunpack.c.l.b16 %v30
  %v548 = vunpack.c.h.b16 %v30
  %v549 = vunpack.c.l.b16 %v31
  %v550 = vunpack.c.h.b16 %v31
  %v551 = vunpack.c.l.b16 %v32
  %v552 = vunpack.c.h.b16 %v32
  %v553 = vunpack.c.l.b16 %v33
  %v554 = vunpack.c.h.b16 %v33
  %v555 = vunpack.c.l.b16 %v34
  %v556 = vunpack.c.h.b16 %v34
  %v557 = vunpack.c.l.b16 %v35
  %v558 = vunpack.c.h.b16 %v35
  %v559 = vunpack.c.l.b16 %v36
  %v560 = vunpack.c.h.b16 %v36
  %v561 = vunpack.c.l.b16 %v37
  %v562 = vunpack.c.h.b16 %v37
  %v563 = vunpack.c.l.b16 %v38
  %v564 = vunpack.c.h.b16 %v38
  %v565 = vunpack.c.l.b16 %v39
  %v566 = vunpack.c.h.b16 %v39
  %v567 = vunpack.c.l.b16 %v40
  %v568 = vunpack.c.l.b16 %v41
  %v569 = vunpack.c.h.b16 %v41
  %v570 = vunpack.c.l.b16 %v42
  %v571 = vunpack.c.h.b16 %v42
  %v572 = vunpack.c.l.b16 %v43
  %v573 = vunpack.c.h.b16 %v43
  %v574 = vunpack.c.l.b16 %v44
  %v575 = vunpack.c.h.b16 %v44
  %v576 = vunpack.c.l.b16 %v45
  %v577 = vunpack.c.h.b16 %v45
  %v578 = vunpack.c.l.b16 %v46
  %v579 = vunpack.c.h.b16 %v46
  %v580 = vunpack.c.l.b16 %v47
  %v581 = vunpack.c.h.b16 %v47
  %v582 = vunpack.c.l.b16 %v48
  %v583 = vunpack.c.h.b16 %v48
  %v584 = vunpack.c.l.b16 %v49
  %v585 = vunpack.c.h.b16 %v49
  %v586 = vunpack.c.l.b16 %v50
  %v587 = vunpack.c.h.b16 %v50
  %v588 = vunpack.c.l.b16 %v51
  %v589 = vunpack.c.h.b16 %v51
  %v590 = vunpack.c.l.b16 %v52
  %v591 = vunpack.c.h.b16 %v52
  %v592 = vunpack.c.l.b16 %v53
  %v593 = vunpack.c.l.b16 %v54
  %v594 = vunpack.c.h.b16 %v54
  %v595 = vunpack.c.l.b16 %v55
  %v596 = vunpack.c.h.b16 %v55
  %v597 = vunpack.c.l.b16 %v56
  %v598 = vunpack.c.h.b16 %v56
  %v599 = vunpack.c.l.b16 %v57
  %v600 = vunpack.c.h.b16 %v57
  %v601 = vunpack.c.l.b16 %v58
  %v602 = vunpack.c.h.b16 %v58
  %v603 = vunpack.c.l.b16 %v59
  %v604 = vunpack.c.h.b16 %v59
  %v605 = vunpack.c.l.b16 %v60
  %v606 = vunpack.c.h.b16 %v60
  %v607 = vunpack.c.l.b16 %v61
  %v608 = vunpack.c.h.b16 %v61
  %v609 = vunpack.c.l.b16 %v62
  %v610 = vunpack.c.h.b16 %v62
  %v611 = vunpack.c.l.b16 %v63
  %v612 = vunpack.c.h.b16 %v63
  %v613 = vunpack.c.l.b16 %v64
  %v614 = vunpack.c.h.b16 %v64
  %v615 = vunpack.c.l.b16 %v65
  %v616 = vunpack.c.h.b16 %v65
  %v617 = vunpack.c.l.b16 %v66
  %v618 = vpack.c.b16 %v543, %v518
  %v619 = vpack.c.b16 %v544, %v519
  %v620 = vpack.c.b16 %v545, %v520
  %v621 = vpack.c.b16 %v546, %v521
  %v622 = vpack.c.b16 %v547, %v522
  %v623 = vpack.c.b16 %v548, %v523
  %v624 = vpack.c.b16 %v549, %v524
  %v625 = vpack.c.b16 %v550, %v525
  %v626 = vpack.c.b16 %v551, %v526
  %v627 = vpack.c.b16 %v552, %v527
  %v628 = vpack.c.b16 %v553, %v528
  %v629 = vpack.c.b16 %v554, %v529
  %v630 = vpack.c.b16 %v555, %v530
  %v631 = vpack.c.b16 %v556, %v531
  %v632 = vpack.c.b16 %v557, %v532
  %v633 = vpack.c.b16 %v558, %v533
  %v634 = vpack.c.b16 %v559, %v534
  %v635 = vpack.c.b16 %v560, %v535
  %v636 = vpack.c.b16 %v561, %v536
  %v637 = vpack.c.b16 %v562, %v537
  %v638 = vpack.c.b16 %v563, %v538
  %v639 = vpack.c.b16 %v564, %v539
  %v640 = vpack.c.b16 %v565, %v540
  %v641 = vpack.c.b16 %v566, %v541
  %v642 = vpack.c.b16 %v567, %v542
  %v643 = vpack.c.b16 %v593, %v568
  %v644 = vpack.c.b16 %v594, %v569
  %v645 = vpack.c.b16 %v595, %v570
  %v646 = vpack.c.b16 %v596, %v571
  %v647 = vpack.c.b16 %v597, %v572
  %v648 = vpack.c.b16 %v598, %v573
  %v649 = vpack.c.b16 %v599, %v574
  %v650 = vpack.c.b16 %v600, %v575
  %v651 = vpack.c.b16 %v601, %v576
  %v652 = vpack.c.b16 %v602, %v577
  %v653 = vpack.c.b16 %v603, %v578
  %v654 = vpack.c.b16 %v604, %v579
  %v655 = vpack.c.b16 %v605, %v580
  %v656 = vpack.c.b16 %v606, %v581
  %v657 = vpack.c.b16 %v607, %v582
  %v658 = vpack.c.b16 %v608, %v583
  %v659 = vpack.c.b16 %v609, %v584
  %v660 = vpack.c.b16 %v610, %v585
  %v661 = vpack.c.b16 %v611, %v586
  %v662 = vpack.c.b16 %v612, %v587
  %v663 = vpack.c.b16 %v613, %v588
  %v664 = vpack.c.b16 %v614, %v589
  %v665 = vpack.c.b16 %v615, %v590
  %v666 = vpack.c.b16 %v616, %v591
  %v667 = vpack.c.b16 %v617, %v592
  %v1108 = vunpack.c.l.b16 %v67
  %v1109 = vunpack.c.l.b16 %v68
  %v1110 = vunpack.c.l.b16 %v69
  %v1111 = vunpack.c.l.b16 %v70
  %v1112 = vunpack.c.l.b16 %v71
  %v1113 = vunpack.c.l.b16 %v72
  %v1114 = vunpack.c.l.b16 %v73
  %v1115 = vunpack.c.l.b16 %v74
  %v1116 = vunpack.c.l.b16 %v75
  %v1117 = vunpack.c.l.b16 %v76
  %v1118 = vunpack.c.l.b16 %v77
  %v1119 = vunpack.c.l.b16 %v78
  %v1120 = vunpack.c.l.b16 %v79
  %v1121 = vunpack.c.l.b16 %v80
  %v1122 = vunpack.c.l.b16 %v81
  %v1123 = vunpack.c.l.b16 %v82
  %v1124 = vunpack.c.l.b16 %v83
  %v1125 = vunpack.c.l.b16 %v84
  %v1126 = vunpack.c.l.b16 %v85
  %v1127 = vunpack.c.l.b16 %v86
  %v1128 = vunpack.c.l.b16 %v87
  %v1129 = vunpack.c.l.b16 %v88
  %v1130 = vunpack.c.l.b16 %v89
  %v1131 = vunpack.c.l.b16 %v90
  %v1132 = vunpack.c.l.b16 %v91
  %v1133 = vunpack.c.l.b16 %v92
  %v1134 = vunpack.c.l.b16 %v93
  %v1135 = vunpack.c.l.b16 %v94
  %v1136 = vunpack.c.l.b16 %v95
  %v1137 = vunpack.c.l.b16 %v96
  %v1138 = vunpack.c.l.b16 %v97
  %v1139 = vunpack.c.l.b16 %v98
  %v1140 = vunpack.c.l.b16 %v99
  %v1141 = vunpack.c.l.b16 %v100
  %v1142 = vunpack.c.l.b16 %v101
  %v1143 = vunpack.c.l.b16 %v102
  %v1144 = vunpack.c.l.b16 %v103
  %v1145 = vunpack.c.l.b16 %v104
  %v1146 = vunpack.c.l.b16 %v105
  %v1147 = vunpack.c.l.b16 %v106
  %v1148 = vunpack.c.l.b16 %v107
  %v1149 = vunpack.c.l.b16 %v108
  %v1150 = vunpack.c.l.b16 %v109
  %v1151 = vunpack.c.l.b16 %v110
  %v1152 = vunpack.c.l.b16 %v111
  %v1153 = vunpack.c.l.b16 %v112
  %v1154 = vunpack.c.l.b16 %v113
  %v1155 = vunpack.c.l.b16 %v114
  %v1156 = vunpack.c.l.b16 %v115
  %v1157 = vunpack.c.l.b16 %v116
  %v1158 = vunpack.c.l.b16 %v117
  %v1159 = vunpack.c.l.b16 %v118
  %v1160 = vunpack.c.l.b16 %v119
  %v1161 = vunpack.c.l.b16 %v120
  %v1162 = vunpack.c.l.b16 %v121
  %v1163 = vunpack.c.l.b16 %v122
  %v1164 = vunpack.c.l.b16 %v123
  %v1165 = vunpack.c.l.b16 %v124
  %v1166 = vunpack.c.l.b16 %v125
  %v1167 = vunpack.c.l.b16 %v126
  %v1168 = vunpack.c.l.b16 %v127
  %v1169 = vunpack.c.l.b16 %v128
  %v1170 = vunpack.c.l.b16 %v129
  %v1171 = vunpack.c.l.b16 %v130
  %v1172 = vunpack.c.l.b16 %v131
  %v1173 = vunpack.c.l.b16 %v132
  %v1174 = vunpack.c.l.b16 %v133
  %v1175 = vunpack.c.l.b16 %v134
  %v1176 = vunpack.c.l.b16 %v135
  %v1177 = vunpack.c.l.b16 %v136
  %v1178 = vunpack.c.l.b16 %v137
  %v1179 = vunpack.c.l.b16 %v138
  %v1180 = vunpack.c.l.b16 %v139
  %v1181 = vunpack.c.l.b16 %v140
  %v1182 = vunpack.c.l.b16 %v141
  %v1183 = vunpack.c.l.b16 %v142
  %v1184 = vunpack.c.l.b16 %v143
  %v1185 = vunpack.c.l.b16 %v144
  %v1186 = vunpack.c.l.b16 %v145
  %v1187 = vunpack.c.l.b16 %v146
  %v1188 = vunpack.c.l.b16 %v147
  %v1189 = vunpack.c.l.b16 %v148
  %v1190 = vunpack.c.l.b16 %v149
  %v1191 = vunpack.c.l.b16 %v150
  %v1192 = vunpack.c.l.b16 %v151
  %v1193 = vunpack.c.l.b16 %v152
  %v1194 = vunpack.c.l.b16 %v153
  %v1195 = vunpack.c.l.b16 %v154
  %v1196 = vunpack.c.l.b16 %v155
  %v1197 = vunpack.c.l.b16 %v156
  %v1198 = vunpack.c.l.b16 %v157
  %v1199 = vunpack.c.l.b16 %v158
  %v1200 = vunpack.c.l.b16 %v159
  %v1201 = vunpack.c.l.b16 %v160
  %v1202 = vunpack.c.l.b16 %v161
  %v1203 = vunpack.c.l.b16 %v162
  %v1204 = vunpack.c.l.b16 %v163
  %v1205 = vunpack.c.l.b16 %v164
  %v1206 = vunpack.c.l.b16 %v165
  %v1207 = vunpack.c.l.b16 %v166
  %v1208 = vunpack.c.l.b16 %v167
  %v1209 = vunpack.c.l.b16 %v168
  %v1210 = vunpack.c.l.b16 %v169
  %v1211 = vunpack.c.l.b16 %v170
  %v1212 = vunpack.c.l.b16 %v171
  %v1213 = vunpack.c.l.b16 %v172
  %v1214 = vunpack.c.l.b16 %v173
  %v1215 = vunpack.c.l.b16 %v174
  %v1216 = vunpack.c.l.b16 %v175
  %v1217 = vunpack.c.l.b16 %v176
  %v1218 = vunpack.c.l.b16 %v177
  %v1219 = vunpack.c.l.b16 %v178
  %v1220 = vunpack.c.l.b16 %v179
  %v1221 = vunpack.c.l.b16 %v180
  %v1222 = vunpack.c.l.b16 %v181
  %v1223 = vunpack.c.l.b16 %v182
  %v1224 = vunpack.c.l.b16 %v183
  %v1225 = vunpack.c.l.b16 %v184
  %v1226 = vunpack.c.l.b16 %v185
  %v1227 = vunpack.c.l.b16 %v186
  %v1228 = vunpack.c.l.b16 %v187
  %v1229 = vunpack.c.l.b16 %v188
  %v1230 = vunpack.c.l.b16 %v189
  %v1231 = vunpack.c.l.b16 %v190
  %v1232 = vunpack.c.l.b16 %v191
  %v1233 = vunpack.c.l.b16 %v192
  %v1234 = vunpack.c.l.b16 %v193
  %v1235 = vunpack.c.l.b16 %v194
  %v1236 = vunpack.c.l.b16 %v195
  %v1237 = vunpack.c.l.b16 %v196
  %v1238 = vunpack.c.l.b16 %v197
  %v1239 = vunpack.c.l.b16 %v198
  %v1240 = vunpack.c.l.b16 %v199
  %v1241 = vunpack.c.l.b16 %v200
  %v1242 = vunpack.c.l.b16 %v201
  %v1243 = vunpack.c.l.b16 %v202
  %v1244 = vunpack.c.l.b16 %v203
  %v1245 = vunpack.c.l.b16 %v204
  %v1246 = vunpack.c.l.b16 %v205
  %v1247 = vunpack.c.l.b16 %v206
  %v1248 = vunpack.c.l.b16 %v207
  %v1249 = vunpack.c.l.b16 %v208
  %v1250 = vunpack.c.l.b16 %v209
  %v1251 = vunpack.c.l.b16 %v210
  %v1252 = vunpack.c.l.b16 %v211
  %v1253 = vunpack.c.l.b16 %v212
  %v1254 = vunpack.c.l.b16 %v213
  %v1255 = vunpack.c.l.b16 %v214
  %v1256 = vunpack.c.l.b16 %v215
  %v1257 = vunpack.c.l.b16 %v216
  %v1258 = vunpack.c.l.b16 %v217
  %v1259 = vunpack.c.l.b16 %v218
  %v1260 = vunpack.c.l.b16 %v219
  %v1261 = vunpack.c.l.b16 %v220
  %v1262 = vunpack.c.l.b16 %v221
  %v1263 = vunpack.c.l.b16 %v222
  %v1264 = vunpack.c.l.b16 %v223
  %v1265 = vunpack.c.l.b16 %v224
  %v1266 = vunpack.c.l.b16 %v225
  %v1267 = vunpack.c.l.b16 %v226
  %v1268 = vunpack.c.l.b16 %v227
  %v1269 = vunpack.c.l.b16 %v228
  %v1270 = vunpack.c.l.b16 %v229
  %v1271 = vunpack.c.l.b16 %v230
  %v1272 = vunpack.c.l.b16 %v231
  %v1273 = vunpack.c.l.b16 %v232
  %v1274 = vunpack.c.l.b16 %v233
  %v1275 = vunpack.c.l.b16 %v234
  %v1276 = vunpack.c.l.b16 %v235
  %v1277 = vunpack.c.l.b16 %v236
  %v1278 = vunpack.c.l.b16 %v237
  %v1279 = vunpack.c.l.b16 %v238
  %v1280 = vunpack.c.l.b16 %v239
  %v1281 = vunpack.c.l.b16 %v240
  %v1282 = vunpack.c.l.b16 %v241
  %v1283 = vunpack.c.l.b16 %v242
  %v1284 = vunpack.c.l.b16 %v243
  %v1285 = vunpack.c.l.b16 %v244
  %v1286 = vunpack.c.l.b16 %v245
  %v1287 = vunpack.c.l.b16 %v246
  %v1288 = vunpack.c.l.b16 %v247
  %v1289 = vunpack.c.l.b16 %v248
  %v1290 = vunpack.c.l.b16 %v249
  %v1291 = vunpack.c.l.b16 %v250
  %v1292 = vunpack.c.l.b16 %v251
  %v1293 = vunpack.c.l.b16 %v252
  %v1294 = vunpack.c.l.b16 %v253
  %v1295 = vunpack.c.l.b16 %v254
  %v1296 = vunpack.c.l.b16 %v255
  %v1297 = vunpack.c.l.b16 %v256
  %v1298 = vunpack.c.l.b16 %v257
  %v1299 = vunpack.c.l.b16 %v258
  %v1300 = vunpack.c.l.b16 %v259
  %v1301 = vunpack.c.l.b16 %v260
  %v1302 = vunpack.c.l.b16 %v261
  %v1303 = vunpack.c.l.b16 %v262
  %v1304 = vunpack.c.l.b16 %v263
  %v1305 = vunpack.c.l.b16 %v264
  %v1306 = vunpack.c.l.b16 %v265
  %v1307 = vunpack.c.l.b16 %v266
  %v1308 = vunpack.c.l.b16 %v267
  %v1309 = vunpack.c.l.b16 %v268
  %v1310 = vunpack.c.l.b16 %v269
  %v1311 = vunpack.c.l.b16 %v270
  %v1312 = vunpack.c.l.b16 %v271
  %v1313 = vunpack.c.l.b16 %v272
  %v1314 = vunpack.c.l.b16 %v273
  %v1315 = vunpack.c.l.b16 %v274
  %v1316 = vunpack.c.l.b16 %v275
  %v1317 = vunpack.c.l.b16 %v276
  %v1318 = vunpack.c.l.b16 %v277
  %v1319 = vunpack.c.l.b16 %v278
  %v1320 = vunpack.c.l.b16 %v279
  %v1321 = vunpack.c.l.b16 %v280
  %v1322 = vunpack.c.l.b16 %v281
  %v1323 = vunpack.c.l.b16 %v282
  %v1324 = vunpack.c.l.b16 %v283
  %v1325 = vunpack.c.l.b16 %v284
  %v1326 = vunpack.c.l.b16 %v285
  %v1327 = vunpack.c.l.b16 %v286
  %v1328 = vunpack.c.l.b16 %v287
  %v1329 = vunpack.c.l.b16 %v288
  %v1330 = vunpack.c.l.b16 %v289
  %v1331 = vunpack.c.l.b16 %v290
  %v1332 = vunpack.c.l.b16 %v291
  %v1333 = vunpack.c.l.b16 %v292
  %v1334 = vunpack.c.l.b16 %v293
  %v1335 = vunpack.c.l.b16 %v294
  %v1336 = vunpack.c.l.b16 %v295
  %v1337 = vunpack.c.l.b16 %v296
  %v1338 = vunpack.c.l.b16 %v297
  %v1339 = vunpack.c.l.b16 %v298
  %v1340 = vunpack.c.l.b16 %v299
  %v1341 = vunpack.c.l.b16 %v300
  %v1342 = vunpack.c.l.b16 %v301
  %v1343 = vunpack.c.l.b16 %v302
  %v1344 = vunpack.c.l.b16 %v303
  %v1345 = vunpack.c.l.b16 %v304
  %v1346 = vunpack.c.l.b16 %v305
  %v1347 = vunpack.c.l.b16 %v306
  %v1348 = vunpack.c.l.b16 %v307
  %v1349 = vunpack.c.l.b16 %v308
  %v1350 = vunpack.c.l.b16 %v309
  %v1351 = vunpack.c.l.b16 %v310
  %v1352 = vunpack.c.l.b16 %v311
  %v1353 = vunpack.c.l.b16 %v312
  %v1354 = vunpack.c.l.b16 %v313
  %v1355 = vunpack.c.l.b16 %v314
  %v1356 = vunpack.c.l.b16 %v315
  %v1357 = vunpack.c.l.b16 %v316
  %v1358 = vunpack.c.l.b16 %v317
  %v1359 = vunpack.c.l.b16 %v318
  %v1360 = vunpack.c.l.b16 %v319
  %v1361 = vunpack.c.l.b16 %v320
  %v1362 = vunpack.c.l.b16 %v321
  %v1363 = vunpack.c.l.b16 %v322
  %v1364 = vunpack.c.l.b16 %v323
  %v1365 = vunpack.c.l.b16 %v324
  %v1366 = vunpack.c.l.b16 %v325
  %v1367 = vunpack.c.l.b16 %v326
  %v1368 = vunpack.c.l.b16 %v327
  %v1369 = vunpack.c.l.b16 %v328
  %v1370 = vunpack.c.l.b16 %v329
  %v1371 = vunpack.c.l.b16 %v330
  %v1372 = vunpack.c.l.b16 %v331
  %v1373 = vunpack.c.l.b16 %v332
  %v1374 = vunpack.c.l.b16 %v333
  %v1375 = vunpack.c.l.b16 %v334
  %v1376 = vunpack.c.l.b16 %v335
  %v1377 = vunpack.c.l.b16 %v336
  %v1378 = vunpack.c.l.b16 %v337
  %v1379 = vunpack.c.l.b16 %v338
  %v1380 = vunpack.c.l.b16 %v339
  %v1381 = vunpack.c.l.b16 %v340
  %v1382 = vunpack.c.l.b16 %v341
  %v1383 = vunpack.c.l.b16 %v342
  %v1384 = vunpack.c.l.b16 %v343
  %v1385 = vunpack.c.l.b16 %v344
  %v1386 = vunpack.c.l.b16 %v345
  %v1387 = vunpack.c.l.b16 %v346
  %v1388 = vunpack.c.l.b16 %v347
  %v1389 = vunpack.c.l.b16 %v348
  %v1390 = vunpack.c.l.b16 %v349
  %v1391 = vunpack.c.l.b16 %v350
  %v1392 = vunpack.c.l.b16 %v351
  %v1393 = vunpack.c.l.b16 %v352
  %v1394 = vunpack.c.l.b16 %v353
  %v1395 = vunpack.c.l.b16 %v354
  %v1396 = vunpack.c.l.b16 %v355
  %v1397 = vunpack.c.l.b16 %v356
  %v1398 = vunpack.c.l.b16 %v357
  %v1399 = vunpack.c.l.b16 %v358
  %v1400 = vunpack.c.l.b16 %v359
  %v1401 = vunpack.c.l.b16 %v360
  %v1402 = vunpack.c.l.b16 %v361
  %v1403 = vunpack.c.l.b16 %v362
  %v1404 = vunpack.c.l.b16 %v363
  %v1405 = vunpack.c.l.b16 %v364
  %v1406 = vunpack.c.l.b16 %v365
  %v1407 = vunpack.c.l.b16 %v366
  %v1408 = vunpack.c.l.b16 %v367
  %v1409 = vunpack.c.l.b16 %v368
  %v1410 = vunpack.c.l.b16 %v369
  %v1411 = vunpack.c.l.b16 %v370
  %v1412 = vunpack.c.l.b16 %v371
  %v1413 = vunpack.c.l.b16 %v372
  %v1414 = vunpack.c.l.b16 %v373
  %v1415 = vunpack.c.l.b16 %v374
  %v1416 = vunpack.c.l.b16 %v375
  %v1417 = vunpack.c.l.b16 %v376
  %v1418 = vunpack.c.l.b16 %v377
  %v1419 = vunpack.c.l.b16 %v378
  %v1420 = vunpack.c.l.b16 %v379
  %v1421 = vunpack.c.l.b16 %v380
  %v1422 = vunpack.c.l.b16 %v381
  %v1423 = vunpack.c.l.b16 %v382
  %v1424 = vunpack.c.l.b16 %v383
  %v1425 = vunpack.c.l.b16 %v384
  %v1426 = vunpack.c.l.b16 %v385
  %v1427 = vunpack.c.l.b16 %v386
  %v1428 = vunpack.c.l.b16 %v387
  %v1429 = vunpack.c.l.b16 %v388
  %v1430 = vunpack.c.l.b16 %v389
  %v1431 = vunpack.c.l.b16 %v390
  %v1432 = vunpack.c.l.b16 %v391
  %v1433 = vunpack.c.l.b16 %v392
  %v1434 = vunpack.c.l.b16 %v393
  %v1435 = vunpack.c.l.b16 %v394
  %v1436 = vunpack.c.l.b16 %v395
  %v1437 = vunpack.c.l.b16 %v396
  %v1438 = vunpack.c.l.b16 %v397
  %v1439 = vunpack.c.l.b16 %v398
  %v1440 = vunpack.c.l.b16 %v399
  %v1441 = vunpack.c.l.b16 %v400
  %v1442 = vunpack.c.l.b16 %v401
  %v1443 = vunpack.c.l.b16 %v402
  %v1444 = vunpack.c.l.b16 %v403
  %v1445 = vunpack.c.l.b16 %v404
  %v1446 = vunpack.c.l.b16 %v405
  %v1447 = vunpack.c.l.b16 %v406
  %v1448 = vunpack.c.l.b16 %v407
  %v1449 = vunpack.c.l.b16 %v408
  %v1450 = vunpack.c.l.b16 %v409
  %v1451 = vunpack.c.l.b16 %v410
  %v1452 = vunpack.c.l.b16 %v411
  %v1453 = vunpack.c.l.b16 %v412
  %v1454 = vunpack.c.l.b16 %v413
  %v1455 = vunpack.c.l.b16 %v414
  %v1456 = vunpack.c.l.b16 %v415
  %v1457 = vunpack.c.l.b16 %v416
  %v1458 = vunpack.c.l.b16 %v417
  %v1459 = vunpack.c.l.b16 %v418
  %v1460 = vunpack.c.l.b16 %v419
  %v1461 = vunpack.c.l.b16 %v420
  %v1462 = vunpack.c.l.b16 %v421
  %v1463 = vunpack.c.l.b16 %v422
  %v1464 = vunpack.c.l.b16 %v423
  %v1465 = vunpack.c.l.b16 %v424
  %v1466 = vunpack.c.l.b16 %v425
  %v1467 = vunpack.c.l.b16 %v426
  %v1468 = vunpack.c.l.b16 %v427
  %v1469 = vunpack.c.l.b16 %v428
  %v1470 = vunpack.c.l.b16 %v429
  %v1471 = vunpack.c.l.b16 %v430
  %v1472 = vunpack.c.l.b16 %v431
  %v1473 = vunpack.c.l.b16 %v432
  %v1474 = vunpack.c.l.b16 %v433
  %v1475 = vunpack.c.l.b16 %v434
  %v1476 = vunpack.c.l.b16 %v435
  %v1477 = vunpack.c.l.b16 %v436
  %v1478 = vunpack.c.l.b16 %v437
  %v1479 = vunpack.c.l.b16 %v438
  %v1480 = vunpack.c.l.b16 %v439
  %v1481 = vunpack.c.l.b16 %v440
  %v1482 = vunpack.c.l.b16 %v441
  %v1483 = vunpack.c.l.b16 %v442
  %v1484 = vunpack.c.l.b16 %v443
  %v1485 = vunpack.c.l.b16 %v444
  %v1486 = vunpack.c.l.b16 %v445
  %v1487 = vunpack.c.l.b16 %v446
  %v1488 = vunpack.c.l.b16 %v447
  %v1489 = vunpack.c.l.b16 %v448
  %v1490 = vunpack.c.l.b16 %v449
  %v1491 = vunpack.c.l.b16 %v450
  %v1492 = vunpack.c.l.b16 %v451
  %v1493 = vunpack.c.l.b16 %v452
  %v1494 = vunpack.c.l.b16 %v453
  %v1495 = vunpack.c.l.b16 %v454
  %v1496 = vunpack.c.l.b16 %v455
  %v1497 = vunpack.c.l.b16 %v456
  %v1498 = vunpack.c.l.b16 %v457
  %v1499 = vunpack.c.l.b16 %v458
  %v1500 = vpack.c.b16 %v1109, %v1108
  %v1501 = vpack.c.b16 %v1111, %v1110
  %v1502 = vpack.c.b16 %v1113, %v1112
  %v1503 = vpack.c.b16 %v1115, %v1114
  %v1504 = vpack.c.b16 %v1117, %v1116
  %v1505 = vpack.c.b16 %v1119, %v1118
  %v1506 = vpack.c.b16 %v1121, %v1120
  %v1507 = vpack.c.b16 %v1123, %v1122
  %v1508 = vpack.c.b16 %v1125, %v1124
  %v1509 = vpack.c.b16 %v1127, %v1126
  %v1510 = vpack.c.b16 %v1129, %v1128
  %v1511 = vpack.c.b16 %v1131, %v1130
  %v1512 = vpack.c.b16 %v1133, %v1132
  %v1513 = vpack.c.b16 %v1135, %v1134
  %v1514 = vpack.c.b16 %v1137, %v1136
  %v1515 = vpack.c.b16 %v1139, %v1138
  %v1516 = vpack.c.b16 %v1141, %v1140
  %v1517 = vpack.c.b16 %v1143, %v1142
  %v1518 = vpack.c.b16 %v1145, %v1144
  %v1519 = vpack.c.b16 %v1147, %v1146
  %v1520 = vpack.c.b16 %v1149, %v1148
  %v1521 = vpack.c.b16 %v1151, %v1150
  %v1522 = vpack.c.b16 %v1153, %v1152
  %v1523 = vpack.c.b16 %v1155, %v1154
  %v1524 = vpack.c.b16 %v1157, %v1156
  %v1525 = vpack.c.b16 %v1159, %v1158
  %v1526 = vpack.c.b16 %v1161, %v1160
  %v1527 = vpack.c.b16 %v1163, %v1162
  %v1528 = vpack.c.b16 %v1165, %v1164
  %v1529 = vpack.c.b16 %v1167, %v1166
  %v1530 = vpack.c.b16 %v1169, %v1168
  %v1531 = vpack.c.b16 %v1171, %v1170
  %v1532 = vpack.c.b16 %v1173, %v1172
  %v1533 = vpack.c.b16 %v1175, %v1174
  %v1534 = vpack.c.b16 %v1177, %v1176
  %v1535 = vpack.c.b16 %v1179, %v1178
  %v1536 = vpack.c.b16 %v1181, %v1180
  %v1537 = vpack.c.b16 %v1183, %v1182
  %v1538 = vpack.c.b16 %v1185, %v1184
  %v1539 = vpack.c.b16 %v1187, %v1186
  %v1540 = vpack.c.b16 %v1189, %v1188
  %v1541 = vpack.c.b16 %v1191, %v1190
  %v1542 = vpack.c.b16 %v1193, %v1192
  %v1543 = vpack.c.b16 %v1195, %v1194
  %v1544 = vpack.c.b16 %v1197, %v1196
  %v1545 = vpack.c.b16 %v1199, %v1198
  %v1546 = vpack.c.b16 %v1201, %v1200
  %v1547 = vpack.c.b16 %v1203, %v1202
  %v1548 = vpack.c.b16 %v1205, %v1204
  %v1549 = vpack.c.b16 %v1207, %v1206
  %v1550 = vpack.c.b16 %v1209, %v1208
  %v1551 = vpack.c.b16 %v1211, %v1210
  %v1552 = vpack.c.b16 %v1213, %v1212
  %v1553 = vpack.c.b16 %v1215, %v1214
  %v1554 = vpack.c.b16 %v1217, %v1216
  %v1555 = vpack.c.b16 %v1219, %v1218
  %v1556 = vpack.c.b16 %v1221, %v1220
  %v1557 = vpack.c.b16 %v1223, %v1222
  %v1558 = vpack.c.b16 %v1225, %v1224
  %v1559 = vpack.c.b16 %v1227, %v1226
  %v1560 = vpack.c.b16 %v1229, %v1228
  %v1561 = vpack.c.b16 %v1231, %v1230
  %v1562 = vpack.c.b16 %v1233, %v1232
  %v1563 = vpack.c.b16 %v1235, %v1234
  %v1564 = vpack.c.b16 %v1237, %v1236
  %v1565 = vpack.c.b16 %v1239, %v1238
  %v1566 = vpack.c.b16 %v1241, %v1240
  %v1567 = vpack.c.b16 %v1243, %v1242
  %v1568 = vpack.c.b16 %v1245, %v1244
  %v1569 = vpack.c.b16 %v1247, %v1246
  %v1570 = vpack.c.b16 %v1249, %v1248
  %v1571 = vpack.c.b16 %v1251, %v1250
  %v1572 = vpack.c.b16 %v1253, %v1252
  %v1573 = vpack.c.b16 %v1255, %v1254
  %v1574 = vpack.c.b16 %v1257, %v1256
  %v1575 = vpack.c.b16 %v1259, %v1258
  %v1576 = vpack.c.b16 %v1261, %v1260
  %v1577 = vpack.c.b16 %v1263, %v1262
  %v1578 = vpack.c.b16 %v1265, %v1264
  %v1579 = vpack.c.b16 %v1267, %v1266
  %v1580 = vpack.c.b16 %v1269, %v1268
  %v1581 = vpack.c.b16 %v1271, %v1270
  %v1582 = vpack.c.b16 %v1273, %v1272
  %v1583 = vpack.c.b16 %v1275, %v1274
  %v1584 = vpack.c.b16 %v1277, %v1276
  %v1585 = vpack.c.b16 %v1279, %v1278
  %v1586 = vpack.c.b16 %v1281, %v1280
  %v1587 = vpack.c.b16 %v1283, %v1282
  %v1588 = vpack.c.b16 %v1285, %v1284
  %v1589 = vpack.c.b16 %v1287, %v1286
  %v1590 = vpack.c.b16 %v1289, %v1288
  %v1591 = vpack.c.b16 %v1291, %v1290
  %v1592 = vpack.c.b16 %v1293, %v1292
  %v1593 = vpack.c.b16 %v1295, %v1294
  %v1594 = vpack.c.b16 %v1297, %v1296
  %v1595 = vpack.c.b16 %v1299, %v1298
  %v1596 = vpack.c.b16 %v1301, %v1300
  %v1597 = vpack.c.b16 %v1303, %v1302
  %v1598 = vpack.c.b16 %v1305, %v1304
  %v1599 = vpack.c.b16 %v1307, %v1306
  %v1600 = vpack.c.b16 %v1309, %v1308
  %v1601 = vpack.c.b16 %v1311, %v1310
  %v1602 = vpack.c.b16 %v1313, %v1312
  %v1603 = vpack.c.b16 %v1315, %v1314
  %v1604 = vpack.c.b16 %v1317, %v1316
  %v1605 = vpack.c.b16 %v1319, %v1318
  %v1606 = vpack.c.b16 %v1321, %v1320
  %v1607 = vpack.c.b16 %v1323, %v1322
  %v1608 = vpack.c.b16 %v1325, %v1324
  %v1609 = vpack.c.b16 %v1327, %v1326
  %v1610 = vpack.c.b16 %v1329, %v1328
  %v1611 = vpack.c.b16 %v1331, %v1330
  %v1612 = vpack.c.b16 %v1333, %v1332
  %v1613 = vpack.c.b16 %v1335, %v1334
  %v1614 = vpack.c.b16 %v1337, %v1336
  %v1615 = vpack.c.b16 %v1339, %v1338
  %v1616 = vpack.c.b16 %v1341, %v1340
  %v1617 = vpack.c.b16 %v1343, %v1342
  %v1618 = vpack.c.b16 %v1345, %v1344
  %v1619 = vpack.c.b16 %v1347, %v1346
  %v1620 = vpack.c.b16 %v1349, %v1348
  %v1621 = vpack.c.b16 %v1351, %v1350
  %v1622 = vpack.c.b16 %v1353, %v1352
  %v1623 = vpack.c.b16 %v1355, %v1354
  %v1624 = vpack.c.b16 %v1357, %v1356
  %v1625 = vpack.c.b16 %v1359, %v1358
  %v1626 = vpack.c.b16 %v1361, %v1360
  %v1627 = vpack.c.b16 %v1363, %v1362
  %v1628 = vpack.c.b16 %v1365, %v1364
  %v1629 = vpack.c.b16 %v1367, %v1366
  %v1630 = vpack.c.b16 %v1369, %v1368
  %v1631 = vpack.c.b16 %v1371, %v1370
  %v1632 = vpack.c.b16 %v1373, %v1372
  %v1633 = vpack.c.b16 %v1375, %v1374
  %v1634 = vpack.c.b16 %v1377, %v1376
  %v1635 = vpack.c.b16 %v1379, %v1378
  %v1636 = vpack.c.b16 %v1381, %v1380
  %v1637 = vpack.c.b16 %v1383, %v1382
  %v1638 = vpack.c.b16 %v1385, %v1384
  %v1639 = vpack.c.b16 %v1387, %v1386
  %v1640 = vpack.c.b16 %v1389, %v1388
  %v1641 = vpack.c.b16 %v1391, %v1390
  %v1642 = vpack.c.b16 %v1393, %v1392
  %v1643 = vpack.c.b16 %v1395, %v1394
  %v1644 = vpack.c.b16 %v1397, %v1396
  %v1645 = vpack.c.b16 %v1399, %v1398
  %v1646 = vpack.c.b16 %v1401, %v1400
  %v1647 = vpack.c.b16 %v1403, %v1402
  %v1648 = vpack.c.b16 %v1405, %v1404
  %v1649 = vpack.c.b16 %v1407, %v1406
  %v1650 = vpack.c.b16 %v1409, %v1408
  %v1651 = vpack.c.b16 %v1411, %v1410
  %v1652 = vpack.c.b16 %v1413, %v1412
  %v1653 = vpack.c.b16 %v1415, %v1414
  %v1654 = vpack.c.b16 %v1417, %v1416
  %v1655 = vpack.c.b16 %v1419, %v1418
  %v1656 = vpack.c.b16 %v1421, %v1420
  %v1657 = vpack.c.b16 %v1423, %v1422
  %v1658 = vpack.c.b16 %v1425, %v1424
  %v1659 = vpack.c.b16 %v1427, %v1426
  %v1660 = vpack.c.b16 %v1429, %v1428
  %v1661 = vpack.c.b16 %v1431, %v1430
  %v1662 = vpack.c.b16 %v1433, %v1432
  %v1663 = vpack.c.b16 %v1435, %v1434
  %v1664 = vpack.c.b16 %v1437, %v1436
  %v1665 = vpack.c.b16 %v1439, %v1438
  %v1666 = vpack.c.b16 %v1441, %v1440
  %v1667 = vpack.c.b16 %v1443, %v1442
  %v1668 = vpack.c.b16 %v1445, %v1444
  %v1669 = vpack.c.b16 %v1447, %v1446
  %v1670 = vpack.c.b16 %v1449, %v1448
  %v1671 = vpack.c.b16 %v1451, %v1450
  %v1672 = vpack.c.b16 %v1453, %v1452
  %v1673 = vpack.c.b16 %v1455, %v1454
  %v1674 = vpack.c.b16 %v1457, %v1456
  %v1675 = vpack.c.b16 %v1459, %v1458
  %v1676 = vpack.c.b16 %v1461, %v1460
  %v1677 = vpack.c.b16 %v1463, %v1462
  %v1678 = vpack.c.b16 %v1465, %v1464
  %v1679 = vpack.c.b16 %v1467, %v1466
  %v1680 = vpack.c.b16 %v1469, %v1468
  %v1681 = vpack.c.b16 %v1471, %v1470
  %v1682 = vpack.c.b16 %v1473, %v1472
  %v1683 = vpack.c.b16 %v1475, %v1474
  %v1684 = vpack.c.b16 %v1477, %v1476
  %v1685 = vpack.c.b16 %v1479, %v1478
  %v1686 = vpack.c.b16 %v1481, %v1480
  %v1687 = vpack.c.b16 %v1483, %v1482
  %v1688 = vpack.c.b16 %v1485, %v1484
  %v1689 = vpack.c.b16 %v1487, %v1486
  %v1690 = vpack.c.b16 %v1489, %v1488
  %v1691 = vpack.c.b16 %v1491, %v1490
  %v1692 = vpack.c.b16 %v1493, %v1492
  %v1693 = vpack.c.b16 %v1495, %v1494
  %v1694 = vpack.c.b16 %v1497, %v1496
  %v1695 = vpack.c.b16 %v1499, %v1498
  %vm1892 = vcmask 523264
  %v1894 = vsel %vm1892, %v642, 0
  %v1897 = vsel %vm1892, %v667, 0
  %1899 = vmatprep.subr.bf16.mxu0 0
  %1900 = vmatpush1.bf16.msra.mxu0 %v1500
  %1901 = vmatprep.subr.bf16.mxu0 0
  %1902 = vmatpush1.bf16.msra.mxu0 %v1501
  %1903 = vmatprep.subr.bf16.mxu0 0
  %1904 = vmatpush1.bf16.msra.mxu0 %v1502
  %1905 = vmatprep.subr.bf16.mxu0 0
  %1906 = vmatpush1.bf16.msra.mxu0 %v1503
  %1907 = vmatprep.subr.bf16.mxu0 0
  %1908 = vmatpush1.bf16.msra.mxu0 %v1504
  %1909 = vmatprep.subr.bf16.mxu0 0
  %1910 = vmatpush1.bf16.msra.mxu0 %v1505
  %1911 = vmatprep.subr.bf16.mxu0 0
  %1912 = vmatpush1.bf16.msra.mxu0 %v1506
  %1913 = vmatprep.subr.bf16.mxu0 0
  %1914 = vmatpush1.bf16.msra.mxu0 %v1507
  %1915 = vmatprep.subr.bf16.mxu0 0
  %1916 = vmatpush1.bf16.msra.mxu0 %v1508
  %1917 = vmatprep.subr.bf16.mxu0 0
  %1918 = vmatpush1.bf16.msra.mxu0 %v1509
  %1919 = vmatprep.subr.bf16.mxu0 0
  %1920 = vmatpush1.bf16.msra.mxu0 %v1510
  %1921 = vmatprep.subr.bf16.mxu0 0
  %1922 = vmatpush1.bf16.msra.mxu0 %v1511
  %1923 = vmatprep.subr.bf16.mxu0 0
  %1924 = vmatpush1.bf16.msra.mxu0 %v1512
  %1925 = vmatprep.subr.bf16.mxu0 0
  %1926 = vmatpush1.bf16.msra.mxu0 %v1513
  %1927 = vmatprep.subr.bf16.mxu0 0
  %1928 = vmatpush1.bf16.msra.mxu0 %v1514
  %1929 = vmatprep.subr.bf16.mxu0 0
  %1930 = vmatpush1.bf16.msra.mxu0 %v1515
  %1931 = vmatprep.mubr.bf16.mxu0 %v619
  %1932 = vmatmul.mubr.bf16.gmra.mrb[0].mxu0 %v618
  %v1933 = vpop.f32.mrb[0].mxu0
  %v1934 = vadd.f32 %v464, %v1933
  %v1935 = vpop.f32.mrb[0].mxu0
  %v1936 = vpop.f32.mrb[0].mxu0
  %v1937 = vadd.f32 %v464, %v1936
  %v1938 = vpop.f32.mrb[0].mxu0
  %1939 = vmatprep.mubr.bf16.mxu0 %v644
  %1940 = vmatmul.mubr.bf16.gmra.mrb[0].mxu0 %v643
  %v1941 = vpop.f32.mrb[0].mxu0
  %v1942 = vadd.f32 %v464, %v1941
  %v1943 = vpop.f32.mrb[0].mxu0
  %v1944 = vpop.f32.mrb[0].mxu0
  %v1945 = vadd.f32 %v464, %v1944
  %v1946 = vpop.f32.mrb[0].mxu0
  %1947 = vdwg.mxu0
  %1948 = vmatprep.subr.bf16.mxu0 0
  %1949 = vmatpush1.bf16.msra.mxu0 %v1516
  %1950 = vmatprep.subr.bf16.mxu0 0
  %1951 = vmatpush1.bf16.msra.mxu0 %v1517
  %1952 = vmatprep.subr.bf16.mxu0 0
  %1953 = vmatpush1.bf16.msra.mxu0 %v1518
  %1954 = vmatprep.subr.bf16.mxu0 0
  %1955 = vmatpush1.bf16.msra.mxu0 %v1519
  %1956 = vmatprep.subr.bf16.mxu0 0
  %1957 = vmatpush1.bf16.msra.mxu0 %v1520
  %1958 = vmatprep.subr.bf16.mxu0 0
  %1959 = vmatpush1.bf16.msra.mxu0 %v1521
  %1960 = vmatprep.subr.bf16.mxu0 0
  %1961 = vmatpush1.bf16.msra.mxu0 %v1522
  %1962 = vmatprep.subr.bf16.mxu0 0
  %1963 = vmatpush1.bf16.msra.mxu0 %v1523
  %1964 = vmatprep.subr.bf16.mxu0 0
  %1965 = vmatpush1.bf16.msra.mxu0 %v1524
  %1966 = vmatprep.subr.bf16.mxu0 0
  %1967 = vmatpush1.bf16.msra.mxu0 %v1525
  %1968 = vmatprep.subr.bf16.mxu0 0
  %1969 = vmatpush1.bf16.msra.mxu0 %v1526
  %1970 = vmatprep.subr.bf16.mxu0 0
  %1971 = vmatpush1.bf16.msra.mxu0 %v1527
  %1972 = vmatprep.subr.bf16.mxu0 0
  %1973 = vmatpush1.bf16.msra.mxu0 %v1528
  %1974 = vmatprep.subr.bf16.mxu0 0
  %1975 = vmatpush1.bf16.msra.mxu0 %v1529
  %1976 = vmatprep.subr.bf16.mxu0 0
  %1977 = vmatpush1.bf16.msra.mxu0 %v1530
  %1978 = vmatprep.subr.bf16.mxu0 0
  %1979 = vmatpush1.bf16.msra.mxu0 %v1531
  %1980 = vmatprep.mubr.bf16.mxu0 %v621
  %1981 = vmatmul.mubr.bf16.gmra.mrb[0].mxu0 %v620
  %v1982 = vpop.f32.mrb[0].mxu0
  %v1983 = vadd.f32 %v1934, %v1982
  %v1984 = vpop.f32.mrb[0].mxu0
  %v1985 = vpop.f32.mrb[0].mxu0
  %v1986 = vadd.f32 %v1937, %v1985
  %v1987 = vpop.f32.mrb[0].mxu0
  %1988 = vmatprep.mubr.bf16.mxu0 %v646
  %1989 = vmatmul.mubr.bf16.gmra.mrb[0].mxu0 %v645
  %v1990 = vpop.f32.mrb[0].mxu0
  %v1991 = vadd.f32 %v1942, %v1990
  %v1992 = vpop.f32.mrb[0].mxu0
  %v1993 = vpop.f32.mrb[0].mxu0
  %v1994 = vadd.f32 %v1945, %v1993
  %v1995 = vpop.f32.mrb[0].mxu0
  %1996 = vdwg.mxu0
  %1997 = vmatprep.subr.bf16.mxu0 0
  %1998 = vmatpush1.bf16.msra.mxu0 %v1532
  %1999 = vmatprep.subr.bf16.mxu0 0
  %2000 = vmatpush1.bf16.msra.mxu0 %v1533
  %2001 = vmatprep.subr.bf16.mxu0 0
  %2002 = vmatpush1.bf16.msra.mxu0 %v1534
  %2003 = vmatprep.subr.bf16.mxu0 0
  %2004 = vmatpush1.bf16.msra.mxu0 %v1535
  %2005 = vmatprep.subr.bf16.mxu0 0
  %2006 = vmatpush1.bf16.msra.mxu0 %v1536
  %2007 = vmatprep.subr.bf16.mxu0 0
  %2008 = vmatpush1.bf16.msra.mxu0 %v1537
  %2009 = vmatprep.subr.bf16.mxu0 0
  %2010 = vmatpush1.bf16.msra.mxu0 %v1538
  %2011 = vmatprep.subr.bf16.mxu0 0
  %2012 = vmatpush1.bf16.msra.mxu0 %v1539
  %2013 = vmatprep.subr.bf16.mxu0 0
  %2014 = vmatpush1.bf16.msra.mxu0 %v1540
  %2015 = vmatprep.subr.bf16.mxu0 0
  %2016 = vmatpush1.bf16.msra.mxu0 %v1541
  %2017 = vmatprep.subr.bf16.mxu0 0
  %2018 = vmatpush1.bf16.msra.mxu0 %v1542
  %2019 = vmatprep.subr.bf16.mxu0 0
  %2020 = vmatpush1.bf16.msra.mxu0 %v1543
  %2021 = vmatprep.subr.bf16.mxu0 0
  %2022 = vmatpush1.bf16.msra.mxu0 %v1544
  %2023 = vmatprep.subr.bf16.mxu0 0
  %2024 = vmatpush1.bf16.msra.mxu0 %v1545
  %2025 = vmatprep.subr.bf16.mxu0 0
  %2026 = vmatpush1.bf16.msra.mxu0 %v1546
  %2027 = vmatprep.subr.bf16.mxu0 0
  %2028 = vmatpush1.bf16.msra.mxu0 %v1547
  %2029 = vmatprep.mubr.bf16.mxu0 %v623
  %2030 = vmatmul.mubr.bf16.gmra.mrb[0].mxu0 %v622
  %v2031 = vpop.f32.mrb[0].mxu0
  %v2032 = vadd.f32 %v1983, %v2031
  %v2033 = vpop.f32.mrb[0].mxu0
  %v2034 = vpop.f32.mrb[0].mxu0
  %v2035 = vadd.f32 %v1986, %v2034
  %v2036 = vpop.f32.mrb[0].mxu0
  %2037 = vmatprep.mubr.bf16.mxu0 %v648
  %2038 = vmatmul.mubr.bf16.gmra.mrb[0].mxu0 %v647
  %v2039 = vpop.f32.mrb[0].mxu0
  %v2040 = vadd.f32 %v1991, %v2039
  %v2041 = vpop.f32.mrb[0].mxu0
  %v2042 = vpop.f32.mrb[0].mxu0
  %v2043 = vadd.f32 %v1994, %v2042
  %v2044 = vpop.f32.mrb[0].mxu0
  %2045 = vdwg.mxu0
  %2046 = vmatprep.subr.bf16.mxu0 0
  %2047 = vmatpush1.bf16.msra.mxu0 %v1548
  %2048 = vmatprep.subr.bf16.mxu0 0
  %2049 = vmatpush1.bf16.msra.mxu0 %v1549
  %2050 = vmatprep.subr.bf16.mxu0 0
  %2051 = vmatpush1.bf16.msra.mxu0 %v1550
  %2052 = vmatprep.subr.bf16.mxu0 0
  %2053 = vmatpush1.bf16.msra.mxu0 %v1551
  %2054 = vmatprep.subr.bf16.mxu0 0
  %2055 = vmatpush1.bf16.msra.mxu0 %v1552
  %2056 = vmatprep.subr.bf16.mxu0 0
  %2057 = vmatpush1.bf16.msra.mxu0 %v1553
  %2058 = vmatprep.subr.bf16.mxu0 0
  %2059 = vmatpush1.bf16.msra.mxu0 %v1554
  %2060 = vmatprep.subr.bf16.mxu0 0
  %2061 = vmatpush1.bf16.msra.mxu0 %v1555
  %2062 = vmatprep.subr.bf16.mxu0 0
  %2063 = vmatpush1.bf16.msra.mxu0 %v1556
  %2064 = vmatprep.subr.bf16.mxu0 0
  %2065 = vmatpush1.bf16.msra.mxu0 %v1557
  %2066 = vmatprep.subr.bf16.mxu0 0
  %2067 = vmatpush1.bf16.msra.mxu0 %v1558
  %2068 = vmatprep.subr.bf16.mxu0 0
  %2069 = vmatpush1.bf16.msra.mxu0 %v1559
  %2070 = vmatprep.subr.bf16.mxu0 0
  %2071 = vmatpush1.bf16.msra.mxu0 %v1560
  %2072 = vmatprep.subr.bf16.mxu0 0
  %2073 = vmatpush1.bf16.msra.mxu0 %v1561
  %2074 = vmatprep.subr.bf16.mxu0 0
  %2075 = vmatpush1.bf16.msra.mxu0 %v1562
  %2076 = vmatprep.subr.bf16.mxu0 0
  %2077 = vmatpush1.bf16.msra.mxu0 %v1563
  %2078 = vmatprep.mubr.bf16.mxu0 %v625
  %2079 = vmatmul.mubr.bf16.gmra.mrb[0].mxu0 %v624
  %v2080 = vpop.f32.mrb[0].mxu0
  %v2081 = vadd.f32 %v2032, %v2080
  %v2082 = vpop.f32.mrb[0].mxu0
  %v2083 = vpop.f32.mrb[0].mxu0
  %v2084 = vadd.f32 %v2035, %v2083
  %v2085 = vpop.f32.mrb[0].mxu0
  %2086 = vmatprep.mubr.bf16.mxu0 %v650
  %2087 = vmatmul.mubr.bf16.gmra.mrb[0].mxu0 %v649
  %v2088 = vpop.f32.mrb[0].mxu0
  %v2089 = vadd.f32 %v2040, %v2088
  %v2090 = vpop.f32.mrb[0].mxu0
  %v2091 = vpop.f32.mrb[0].mxu0
  %v2092 = vadd.f32 %v2043, %v2091
  %v2093 = vpop.f32.mrb[0].mxu0
  %2094 = vdwg.mxu0
  %2095 = vmatprep.subr.bf16.mxu0 0
  %2096 = vmatpush1.bf16.msra.mxu0 %v1564
  %2097 = vmatprep.subr.bf16.mxu0 0
  %2098 = vmatpush1.bf16.msra.mxu0 %v1565
  %2099 = vmatprep.subr.bf16.mxu0 0
  %2100 = vmatpush1.bf16.msra.mxu0 %v1566
  %2101 = vmatprep.subr.bf16.mxu0 0
  %2102 = vmatpush1.bf16.msra.mxu0 %v1567
  %2103 = vmatprep.subr.bf16.mxu0 0
  %2104 = vmatpush1.bf16.msra.mxu0 %v1568
  %2105 = vmatprep.subr.bf16.mxu0 0
  %2106 = vmatpush1.bf16.msra.mxu0 %v1569
  %2107 = vmatprep.subr.bf16.mxu0 0
  %2108 = vmatpush1.bf16.msra.mxu0 %v1570
  %2109 = vmatprep.subr.bf16.mxu0 0
  %2110 = vmatpush1.bf16.msra.mxu0 %v1571
  %2111 = vmatprep.subr.bf16.mxu0 0
  %2112 = vmatpush1.bf16.msra.mxu0 %v1572
  %2113 = vmatprep.subr.bf16.mxu0 0
  %2114 = vmatpush1.bf16.msra.mxu0 %v1573
  %2115 = vmatprep.subr.bf16.mxu0 0
  %2116 = vmatpush1.bf16.msra.mxu0 %v1574
  %2117 = vmatprep.subr.bf16.mxu0 0
  %2118 = vmatpush1.bf16.msra.mxu0 %v1575
  %2119 = vmatprep.subr.bf16.mxu0 0
  %2120 = vmatpush1.bf16.msra.mxu0 %v1576
  %2121 = vmatprep.subr.bf16.mxu0 0
  %2122 = vmatpush1.bf16.msra.mxu0 %v1577
  %2123 = vmatprep.subr.bf16.mxu0 0
  %2124 = vmatpush1.bf16.msra.mxu0 %v1578
  %2125 = vmatprep.subr.bf16.mxu0 0
  %2126 = vmatpush1.bf16.msra.mxu0 %v1579
  %2127 = vmatprep.mubr.bf16.mxu0 %v627
  %2128 = vmatmul.mubr.bf16.gmra.mrb[0].mxu0 %v626
  %v2129 = vpop.f32.mrb[0].mxu0
  %v2130 = vadd.f32 %v2081, %v2129
  %v2131 = vpop.f32.mrb[0].mxu0
  %v2132 = vpop.f32.mrb[0].mxu0
  %v2133 = vadd.f32 %v2084, %v2132
  %v2134 = vpop.f32.mrb[0].mxu0
  %2135 = vmatprep.mubr.bf16.mxu0 %v652
  %2136 = vmatmul.mubr.bf16.gmra.mrb[0].mxu0 %v651
  %v2137 = vpop.f32.mrb[0].mxu0
  %v2138 = vadd.f32 %v2089, %v2137
  %v2139 = vpop.f32.mrb[0].mxu0
  %v2140 = vpop.f32.mrb[0].mxu0
  %v2141 = vadd.f32 %v2092, %v2140
  %v2142 = vpop.f32.mrb[0].mxu0
  %2143 = vdwg.mxu0
  %2144 = vmatprep.subr.bf16.mxu0 0
  %2145 = vmatpush1.bf16.msra.mxu0 %v1580
  %2146 = vmatprep.subr.bf16.mxu0 0
  %2147 = vmatpush1.bf16.msra.mxu0 %v1581
  %2148 = vmatprep.subr.bf16.mxu0 0
  %2149 = vmatpush1.bf16.msra.mxu0 %v1582
  %2150 = vmatprep.subr.bf16.mxu0 0
  %2151 = vmatpush1.bf16.msra.mxu0 %v1583
  %2152 = vmatprep.subr.bf16.mxu0 0
  %2153 = vmatpush1.bf16.msra.mxu0 %v1584
  %2154 = vmatprep.subr.bf16.mxu0 0
  %2155 = vmatpush1.bf16.msra.mxu0 %v1585
  %2156 = vmatprep.subr.bf16.mxu0 0
  %2157 = vmatpush1.bf16.msra.mxu0 %v1586
  %2158 = vmatprep.subr.bf16.mxu0 0
  %2159 = vmatpush1.bf16.msra.mxu0 %v1587
  %2160 = vmatprep.subr.bf16.mxu0 0
  %2161 = vmatpush1.bf16.msra.mxu0 %v1588
  %2162 = vmatprep.subr.bf16.mxu0 0
  %2163 = vmatpush1.bf16.msra.mxu0 %v1589
  %2164 = vmatprep.subr.bf16.mxu0 0
  %2165 = vmatpush1.bf16.msra.mxu0 %v1590
  %2166 = vmatprep.subr.bf16.mxu0 0
  %2167 = vmatpush1.bf16.msra.mxu0 %v1591
  %2168 = vmatprep.subr.bf16.mxu0 0
  %2169 = vmatpush1.bf16.msra.mxu0 %v1592
  %2170 = vmatprep.subr.bf16.mxu0 0
  %2171 = vmatpush1.bf16.msra.mxu0 %v1593
  %2172 = vmatprep.subr.bf16.mxu0 0
  %2173 = vmatpush1.bf16.msra.mxu0 %v1594
  %2174 = vmatprep.subr.bf16.mxu0 0
  %2175 = vmatpush1.bf16.msra.mxu0 %v1595
  %2176 = vmatprep.mubr.bf16.mxu0 %v629
  %2177 = vmatmul.mubr.bf16.gmra.mrb[0].mxu0 %v628
  %v2178 = vpop.f32.mrb[0].mxu0
  %v2179 = vadd.f32 %v2130, %v2178
  %v2180 = vpop.f32.mrb[0].mxu0
  %v2181 = vpop.f32.mrb[0].mxu0
  %v2182 = vadd.f32 %v2133, %v2181
  %v2183 = vpop.f32.mrb[0].mxu0
  %2184 = vmatprep.mubr.bf16.mxu0 %v654
  %2185 = vmatmul.mubr.bf16.gmra.mrb[0].mxu0 %v653
  %v2186 = vpop.f32.mrb[0].mxu0
  %v2187 = vadd.f32 %v2138, %v2186
  %v2188 = vpop.f32.mrb[0].mxu0
  %v2189 = vpop.f32.mrb[0].mxu0
  %v2190 = vadd.f32 %v2141, %v2189
  %v2191 = vpop.f32.mrb[0].mxu0
  %2192 = vdwg.mxu0
  %2193 = vmatprep.subr.bf16.mxu0 0
  %2194 = vmatpush1.bf16.msra.mxu0 %v1596
  %2195 = vmatprep.subr.bf16.mxu0 0
  %2196 = vmatpush1.bf16.msra.mxu0 %v1597
  %2197 = vmatprep.subr.bf16.mxu0 0
  %2198 = vmatpush1.bf16.msra.mxu0 %v1598
  %2199 = vmatprep.subr.bf16.mxu0 0
  %2200 = vmatpush1.bf16.msra.mxu0 %v1599
  %2201 = vmatprep.subr.bf16.mxu0 0
  %2202 = vmatpush1.bf16.msra.mxu0 %v1600
  %2203 = vmatprep.subr.bf16.mxu0 0
  %2204 = vmatpush1.bf16.msra.mxu0 %v1601
  %2205 = vmatprep.subr.bf16.mxu0 0
  %2206 = vmatpush1.bf16.msra.mxu0 %v1602
  %2207 = vmatprep.subr.bf16.mxu0 0
  %2208 = vmatpush1.bf16.msra.mxu0 %v1603
  %2209 = vmatprep.subr.bf16.mxu0 0
  %2210 = vmatpush1.bf16.msra.mxu0 %v1604
  %2211 = vmatprep.subr.bf16.mxu0 0
  %2212 = vmatpush1.bf16.msra.mxu0 %v1605
  %2213 = vmatprep.subr.bf16.mxu0 0
  %2214 = vmatpush1.bf16.msra.mxu0 %v1606
  %2215 = vmatprep.subr.bf16.mxu0 0
  %2216 = vmatpush1.bf16.msra.mxu0 %v1607
  %2217 = vmatprep.subr.bf16.mxu0 0
  %2218 = vmatpush1.bf16.msra.mxu0 %v1608
  %2219 = vmatprep.subr.bf16.mxu0 0
  %2220 = vmatpush1.bf16.msra.mxu0 %v1609
  %2221 = vmatprep.subr.bf16.mxu0 0
  %2222 = vmatpush1.bf16.msra.mxu0 %v1610
  %2223 = vmatprep.subr.bf16.mxu0 0
  %2224 = vmatpush1.bf16.msra.mxu0 %v1611
  %2225 = vmatprep.mubr.bf16.mxu0 %v631
  %2226 = vmatmul.mubr.bf16.gmra.mrb[0].mxu0 %v630
  %v2227 = vpop.f32.mrb[0].mxu0
  %v2228 = vadd.f32 %v2179, %v2227
  %v2229 = vpop.f32.mrb[0].mxu0
  %v2230 = vpop.f32.mrb[0].mxu0
  %v2231 = vadd.f32 %v2182, %v2230
  %v2232 = vpop.f32.mrb[0].mxu0
  %2233 = vmatprep.mubr.bf16.mxu0 %v656
  %2234 = vmatmul.mubr.bf16.gmra.mrb[0].mxu0 %v655
  %v2235 = vpop.f32.mrb[0].mxu0
  %v2236 = vadd.f32 %v2187, %v2235
  %v2237 = vpop.f32.mrb[0].mxu0
  %v2238 = vpop.f32.mrb[0].mxu0
  %v2239 = vadd.f32 %v2190, %v2238
  %v2240 = vpop.f32.mrb[0].mxu0
  %2241 = vdwg.mxu0
  %2242 = vmatprep.subr.bf16.mxu0 0
  %2243 = vmatpush1.bf16.msra.mxu0 %v1612
  %2244 = vmatprep.subr.bf16.mxu0 0
  %2245 = vmatpush1.bf16.msra.mxu0 %v1613
  %2246 = vmatprep.subr.bf16.mxu0 0
  %2247 = vmatpush1.bf16.msra.mxu0 %v1614
  %2248 = vmatprep.subr.bf16.mxu0 0
  %2249 = vmatpush1.bf16.msra.mxu0 %v1615
  %2250 = vmatprep.subr.bf16.mxu0 0
  %2251 = vmatpush1.bf16.msra.mxu0 %v1616
  %2252 = vmatprep.subr.bf16.mxu0 0
  %2253 = vmatpush1.bf16.msra.mxu0 %v1617
  %2254 = vmatprep.subr.bf16.mxu0 0
  %2255 = vmatpush1.bf16.msra.mxu0 %v1618
  %2256 = vmatprep.subr.bf16.mxu0 0
  %2257 = vmatpush1.bf16.msra.mxu0 %v1619
  %2258 = vmatprep.subr.bf16.mxu0 0
  %2259 = vmatpush1.bf16.msra.mxu0 %v1620
  %2260 = vmatprep.subr.bf16.mxu0 0
  %2261 = vmatpush1.bf16.msra.mxu0 %v1621
  %2262 = vmatprep.subr.bf16.mxu0 0
  %2263 = vmatpush1.bf16.msra.mxu0 %v1622
  %2264 = vmatprep.subr.bf16.mxu0 0
  %2265 = vmatpush1.bf16.msra.mxu0 %v1623
  %2266 = vmatprep.subr.bf16.mxu0 0
  %2267 = vmatpush1.bf16.msra.mxu0 %v1624
  %2268 = vmatprep.subr.bf16.mxu0 0
  %2269 = vmatpush1.bf16.msra.mxu0 %v1625
  %2270 = vmatprep.subr.bf16.mxu0 0
  %2271 = vmatpush1.bf16.msra.mxu0 %v1626
  %2272 = vmatprep.subr.bf16.mxu0 0
  %2273 = vmatpush1.bf16.msra.mxu0 %v1627
  %2274 = vmatprep.mubr.bf16.mxu0 %v633
  %2275 = vmatmul.mubr.bf16.gmra.mrb[0].mxu0 %v632
  %v2276 = vpop.f32.mrb[0].mxu0
  %v2277 = vadd.f32 %v2228, %v2276
  %v2278 = vpop.f32.mrb[0].mxu0
  %v2279 = vpop.f32.mrb[0].mxu0
  %v2280 = vadd.f32 %v2231, %v2279
  %v2281 = vpop.f32.mrb[0].mxu0
  %2282 = vmatprep.mubr.bf16.mxu0 %v658
  %2283 = vmatmul.mubr.bf16.gmra.mrb[0].mxu0 %v657
  %v2284 = vpop.f32.mrb[0].mxu0
  %v2285 = vadd.f32 %v2236, %v2284
  %v2286 = vpop.f32.mrb[0].mxu0
  %v2287 = vpop.f32.mrb[0].mxu0
  %v2288 = vadd.f32 %v2239, %v2287
  %v2289 = vpop.f32.mrb[0].mxu0
  %2290 = vdwg.mxu0
  %2291 = vmatprep.subr.bf16.mxu0 0
  %2292 = vmatpush1.bf16.msra.mxu0 %v1628
  %2293 = vmatprep.subr.bf16.mxu0 0
  %2294 = vmatpush1.bf16.msra.mxu0 %v1629
  %2295 = vmatprep.subr.bf16.mxu0 0
  %2296 = vmatpush1.bf16.msra.mxu0 %v1630
  %2297 = vmatprep.subr.bf16.mxu0 0
  %2298 = vmatpush1.bf16.msra.mxu0 %v1631
  %2299 = vmatprep.subr.bf16.mxu0 0
  %2300 = vmatpush1.bf16.msra.mxu0 %v1632
  %2301 = vmatprep.subr.bf16.mxu0 0
  %2302 = vmatpush1.bf16.msra.mxu0 %v1633
  %2303 = vmatprep.subr.bf16.mxu0 0
  %2304 = vmatpush1.bf16.msra.mxu0 %v1634
  %2305 = vmatprep.subr.bf16.mxu0 0
  %2306 = vmatpush1.bf16.msra.mxu0 %v1635
  %2307 = vmatprep.subr.bf16.mxu0 0
  %2308 = vmatpush1.bf16.msra.mxu0 %v1636
  %2309 = vmatprep.subr.bf16.mxu0 0
  %2310 = vmatpush1.bf16.msra.mxu0 %v1637
  %2311 = vmatprep.subr.bf16.mxu0 0
  %2312 = vmatpush1.bf16.msra.mxu0 %v1638
  %2313 = vmatprep.subr.bf16.mxu0 0
  %2314 = vmatpush1.bf16.msra.mxu0 %v1639
  %2315 = vmatprep.subr.bf16.mxu0 0
  %2316 = vmatpush1.bf16.msra.mxu0 %v1640
  %2317 = vmatprep.subr.bf16.mxu0 0
  %2318 = vmatpush1.bf16.msra.mxu0 %v1641
  %2319 = vmatprep.subr.bf16.mxu0 0
  %2320 = vmatpush1.bf16.msra.mxu0 %v1642
  %2321 = vmatprep.subr.bf16.mxu0 0
  %2322 = vmatpush1.bf16.msra.mxu0 %v1643
  %2323 = vmatprep.mubr.bf16.mxu0 %v635
  %2324 = vmatmul.mubr.bf16.gmra.mrb[0].mxu0 %v634
  %v2325 = vpop.f32.mrb[0].mxu0
  %v2326 = vadd.f32 %v2277, %v2325
  %v2327 = vpop.f32.mrb[0].mxu0
  %v2328 = vpop.f32.mrb[0].mxu0
  %v2329 = vadd.f32 %v2280, %v2328
  %v2330 = vpop.f32.mrb[0].mxu0
  %2331 = vmatprep.mubr.bf16.mxu0 %v660
  %2332 = vmatmul.mubr.bf16.gmra.mrb[0].mxu0 %v659
  %v2333 = vpop.f32.mrb[0].mxu0
  %v2334 = vadd.f32 %v2285, %v2333
  %v2335 = vpop.f32.mrb[0].mxu0
  %v2336 = vpop.f32.mrb[0].mxu0
  %v2337 = vadd.f32 %v2288, %v2336
  %v2338 = vpop.f32.mrb[0].mxu0
  %2339 = vdwg.mxu0
  %2340 = vmatprep.subr.bf16.mxu0 0
  %2341 = vmatpush1.bf16.msra.mxu0 %v1644
  %2342 = vmatprep.subr.bf16.mxu0 0
  %2343 = vmatpush1.bf16.msra.mxu0 %v1645
  %2344 = vmatprep.subr.bf16.mxu0 0
  %2345 = vmatpush1.bf16.msra.mxu0 %v1646
  %2346 = vmatprep.subr.bf16.mxu0 0
  %2347 = vmatpush1.bf16.msra.mxu0 %v1647
  %2348 = vmatprep.subr.bf16.mxu0 0
  %2349 = vmatpush1.bf16.msra.mxu0 %v1648
  %2350 = vmatprep.subr.bf16.mxu0 0
  %2351 = vmatpush1.bf16.msra.mxu0 %v1649
  %2352 = vmatprep.subr.bf16.mxu0 0
  %2353 = vmatpush1.bf16.msra.mxu0 %v1650
  %2354 = vmatprep.subr.bf16.mxu0 0
  %2355 = vmatpush1.bf16.msra.mxu0 %v1651
  %2356 = vmatprep.subr.bf16.mxu0 0
  %2357 = vmatpush1.bf16.msra.mxu0 %v1652
  %2358 = vmatprep.subr.bf16.mxu0 0
  %2359 = vmatpush1.bf16.msra.mxu0 %v1653
  %2360 = vmatprep.subr.bf16.mxu0 0
  %2361 = vmatpush1.bf16.msra.mxu0 %v1654
  %2362 = vmatprep.subr.bf16.mxu0 0
  %2363 = vmatpush1.bf16.msra.mxu0 %v1655
  %2364 = vmatprep.subr.bf16.mxu0 0
  %2365 = vmatpush1.bf16.msra.mxu0 %v1656
  %2366 = vmatprep.subr.bf16.mxu0 0
  %2367 = vmatpush1.bf16.msra.mxu0 %v1657
  %2368 = vmatprep.subr.bf16.mxu0 0
  %2369 = vmatpush1.bf16.msra.mxu0 %v1658
  %2370 = vmatprep.subr.bf16.mxu0 0
  %2371 = vmatpush1.bf16.msra.mxu0 %v1659
  %2372 = vmatprep.mubr.bf16.mxu0 %v637
  %2373 = vmatmul.mubr.bf16.gmra.mrb[0].mxu0 %v636
  %v2374 = vpop.f32.mrb[0].mxu0
  %v2375 = vadd.f32 %v2326, %v2374
  %v2376 = vpop.f32.mrb[0].mxu0
  %v2377 = vpop.f32.mrb[0].mxu0
  %v2378 = vadd.f32 %v2329, %v2377
  %v2379 = vpop.f32.mrb[0].mxu0
  %2380 = vmatprep.mubr.bf16.mxu0 %v662
  %2381 = vmatmul.mubr.bf16.gmra.mrb[0].mxu0 %v661
  %v2382 = vpop.f32.mrb[0].mxu0
  %v2383 = vadd.f32 %v2334, %v2382
  %v2384 = vpop.f32.mrb[0].mxu0
  %v2385 = vpop.f32.mrb[0].mxu0
  %v2386 = vadd.f32 %v2337, %v2385
  %v2387 = vpop.f32.mrb[0].mxu0
  %2388 = vdwg.mxu0
  %2389 = vmatprep.subr.bf16.mxu0 0
  %2390 = vmatpush1.bf16.msra.mxu0 %v1660
  %2391 = vmatprep.subr.bf16.mxu0 0
  %2392 = vmatpush1.bf16.msra.mxu0 %v1661
  %2393 = vmatprep.subr.bf16.mxu0 0
  %2394 = vmatpush1.bf16.msra.mxu0 %v1662
  %2395 = vmatprep.subr.bf16.mxu0 0
  %2396 = vmatpush1.bf16.msra.mxu0 %v1663
  %2397 = vmatprep.subr.bf16.mxu0 0
  %2398 = vmatpush1.bf16.msra.mxu0 %v1664
  %2399 = vmatprep.subr.bf16.mxu0 0
  %2400 = vmatpush1.bf16.msra.mxu0 %v1665
  %2401 = vmatprep.subr.bf16.mxu0 0
  %2402 = vmatpush1.bf16.msra.mxu0 %v1666
  %2403 = vmatprep.subr.bf16.mxu0 0
  %2404 = vmatpush1.bf16.msra.mxu0 %v1667
  %2405 = vmatprep.subr.bf16.mxu0 0
  %2406 = vmatpush1.bf16.msra.mxu0 %v1668
  %2407 = vmatprep.subr.bf16.mxu0 0
  %2408 = vmatpush1.bf16.msra.mxu0 %v1669
  %2409 = vmatprep.subr.bf16.mxu0 0
  %2410 = vmatpush1.bf16.msra.mxu0 %v1670
  %2411 = vmatprep.subr.bf16.mxu0 0
  %2412 = vmatpush1.bf16.msra.mxu0 %v1671
  %2413 = vmatprep.subr.bf16.mxu0 0
  %2414 = vmatpush1.bf16.msra.mxu0 %v1672
  %2415 = vmatprep.subr.bf16.mxu0 0
  %2416 = vmatpush1.bf16.msra.mxu0 %v1673
  %2417 = vmatprep.subr.bf16.mxu0 0
  %2418 = vmatpush1.bf16.msra.mxu0 %v1674
  %2419 = vmatprep.subr.bf16.mxu0 0
  %2420 = vmatpush1.bf16.msra.mxu0 %v1675
  %2421 = vmatprep.mubr.bf16.mxu0 %v639
  %2422 = vmatmul.mubr.bf16.gmra.mrb[0].mxu0 %v638
  %v2423 = vpop.f32.mrb[0].mxu0
  %v2424 = vadd.f32 %v2375, %v2423
  %v2425 = vpop.f32.mrb[0].mxu0
  %v2426 = vpop.f32.mrb[0].mxu0
  %v2427 = vadd.f32 %v2378, %v2426
  %v2428 = vpop.f32.mrb[0].mxu0
  %2429 = vmatprep.mubr.bf16.mxu0 %v664
  %2430 = vmatmul.mubr.bf16.gmra.mrb[0].mxu0 %v663
  %v2431 = vpop.f32.mrb[0].mxu0
  %v2432 = vadd.f32 %v2383, %v2431
  %v2433 = vpop.f32.mrb[0].mxu0
  %v2434 = vpop.f32.mrb[0].mxu0
  %v2435 = vadd.f32 %v2386, %v2434
  %v2436 = vpop.f32.mrb[0].mxu0
  %2437 = vdwg.mxu0
  %2438 = vmatprep.subr.bf16.mxu0 0
  %2439 = vmatpush1.bf16.msra.mxu0 %v1676
  %2440 = vmatprep.subr.bf16.mxu0 0
  %2441 = vmatpush1.bf16.msra.mxu0 %v1677
  %2442 = vmatprep.subr.bf16.mxu0 0
  %2443 = vmatpush1.bf16.msra.mxu0 %v1678
  %2444 = vmatprep.subr.bf16.mxu0 0
  %2445 = vmatpush1.bf16.msra.mxu0 %v1679
  %2446 = vmatprep.subr.bf16.mxu0 0
  %2447 = vmatpush1.bf16.msra.mxu0 %v1680
  %2448 = vmatprep.subr.bf16.mxu0 0
  %2449 = vmatpush1.bf16.msra.mxu0 %v1681
  %2450 = vmatprep.subr.bf16.mxu0 0
  %2451 = vmatpush1.bf16.msra.mxu0 %v1682
  %2452 = vmatprep.subr.bf16.mxu0 0
  %2453 = vmatpush1.bf16.msra.mxu0 %v1683
  %2454 = vmatprep.subr.bf16.mxu0 0
  %2455 = vmatpush1.bf16.msra.mxu0 %v1684
  %2456 = vmatprep.subr.bf16.mxu0 0
  %2457 = vmatpush1.bf16.msra.mxu0 %v1685
  %2458 = vmatprep.subr.bf16.mxu0 0
  %2459 = vmatpush1.bf16.msra.mxu0 %v1686
  %2460 = vmatprep.subr.bf16.mxu0 0
  %2461 = vmatpush1.bf16.msra.mxu0 %v1687
  %2462 = vmatprep.subr.bf16.mxu0 0
  %2463 = vmatpush1.bf16.msra.mxu0 %v1688
  %2464 = vmatprep.subr.bf16.mxu0 0
  %2465 = vmatpush1.bf16.msra.mxu0 %v1689
  %2466 = vmatprep.subr.bf16.mxu0 0
  %2467 = vmatpush1.bf16.msra.mxu0 %v1690
  %2468 = vmatprep.subr.bf16.mxu0 0
  %2469 = vmatpush1.bf16.msra.mxu0 %v1691
  %2470 = vmatprep.mubr.bf16.mxu0 %v641
  %2471 = vmatmul.mubr.bf16.gmra.mrb[0].mxu0 %v640
  %v2472 = vpop.f32.mrb[0].mxu0
  %v2473 = vadd.f32 %v2424, %v2472
  %v2474 = vpop.f32.mrb[0].mxu0
  %v2475 = vpop.f32.mrb[0].mxu0
  %v2476 = vadd.f32 %v2427, %v2475
  %v2477 = vpop.f32.mrb[0].mxu0
  %2478 = vmatprep.mubr.bf16.mxu0 %v666
  %2479 = vmatmul.mubr.bf16.gmra.mrb[0].mxu0 %v665
  %v2480 = vpop.f32.mrb[0].mxu0
  %v2481 = vadd.f32 %v2432, %v2480
  %v2482 = vpop.f32.mrb[0].mxu0
  %v2483 = vpop.f32.mrb[0].mxu0
  %v2484 = vadd.f32 %v2435, %v2483
  %v2485 = vpop.f32.mrb[0].mxu0
  %2486 = vdwg.mxu0
  %2487 = vmatprep.subr.bf16.mxu0 0
  %2488 = vmatpush1.bf16.msra.mxu0 %v1692
  %2489 = vmatprep.subr.bf16.mxu0 0
  %2490 = vmatpush1.bf16.msra.mxu0 %v1693
  %2491 = vmatprep.subr.bf16.mxu0 0
  %2492 = vmatpush1.bf16.msra.mxu0 %v1694
  %2493 = vmatprep.subr.bf16.mxu0 0
  %2494 = vmatpush1.bf16.msra.mxu0 %v1695
  %2495 = vmatprep.subr.bf16.mxu0 0
  %2496 = vmatpush1.bf16.msra.mxu0 0
  %2497 = vmatprep.subr.bf16.mxu0 0
  %2498 = vmatpush1.bf16.msra.mxu0 0
  %2499 = vmatprep.subr.bf16.mxu0 0
  %2500 = vmatpush1.bf16.msra.mxu0 0
  %2501 = vmatprep.subr.bf16.mxu0 0
  %2502 = vmatpush1.bf16.msra.mxu0 0
  %2503 = vmatprep.subr.bf16.mxu0 0
  %2504 = vmatpush1.bf16.msra.mxu0 0
  %2505 = vmatprep.subr.bf16.mxu0 0
  %2506 = vmatpush1.bf16.msra.mxu0 0
  %2507 = vmatprep.subr.bf16.mxu0 0
  %2508 = vmatpush1.bf16.msra.mxu0 0
  %2509 = vmatprep.subr.bf16.mxu0 0
  %2510 = vmatpush1.bf16.msra.mxu0 0
  %2511 = vmatprep.subr.bf16.mxu0 0
  %2512 = vmatpush1.bf16.msra.mxu0 0
  %2513 = vmatprep.subr.bf16.mxu0 0
  %2514 = vmatpush1.bf16.msra.mxu0 0
  %2515 = vmatprep.subr.bf16.mxu0 0
  %2516 = vmatpush1.bf16.msra.mxu0 0
  %2517 = vmatprep.subr.bf16.mxu0 0
  %2518 = vmatpush1.bf16.msra.mxu0 0
  %2519 = vmatprep.mubr.bf16.mxu0 0
  %2520 = vmatmul.mubr.bf16.gmra.mrb[0].mxu0 %v1894
  %v2521 = vpop.f32.mrb[0].mxu0
  %v2522 = vadd.f32 %v2473, %v2521
  %v2523 = vpop.f32.mrb[0].mxu0
  %v2524 = vpop.f32.mrb[0].mxu0
  %v2525 = vadd.f32 %v2476, %v2524
  %v2526 = vpop.f32.mrb[0].mxu0
  %2527 = vmatprep.mubr.bf16.mxu0 0
  %2528 = vmatmul.mubr.bf16.gmra.mrb[0].mxu0 %v1897
  %v2529 = vpop.f32.mrb[0].mxu0
  %v2530 = vadd.f32 %v2481, %v2529
  %v2531 = vpop.f32.mrb[0].mxu0
  %v2532 = vpop.f32.mrb[0].mxu0
  %v2533 = vadd.f32 %v2484, %v2532
  %v2534 = vpop.f32.mrb[0].mxu0
  %2535 = vdwg.mxu0
  %v2536 = vmax.f32 %v2522, 0.0
  %v2537 = vmax.f32 %v2525, 0.0
  %v2538 = vmax.f32 %v2530, 0.0
  %v2539 = vmax.f32 %v2533, 0.0
  %vm2540 = vcmask 261120
  %2541 = vst.msk [vmem:[%s3] sm:$0xff] %vm2540, %v2536
  %2542 = vst.msk [vmem:[%s3 + $0x8] sm:$0xff] %vm2540, %v2537
  %2543 = vst.msk [vmem:[%s3 + $0x10] sm:$0xff] %vm2540, %v2538
  %2544 = vst.msk [vmem:[%s3 + $0x18] sm:$0xff] %vm2540, %v2539
  // Predicated region
  $region14: #{encoder_forward.8} parent=0 // pred_check
    _
  $region15: #{encoder_forward.8} parent=0 // pred_check_branch
    %2546 = sbr.rel (0) target = $region17
  $region16: #{encoder_forward.8} parent=0 // pred_region
    _
  $region17: #{encoder_forward.8} parent=0 // pred_fallthru
    _
  // Predicated region
  $region18: #{encoder_forward.8} parent=0 // pred_check
    _
  $region19: #{encoder_forward.8} parent=0 // pred_check_branch
    %2548 = sbr.rel (0) target = $region21
  $region20: #{encoder_forward.8} parent=0 // pred_region
    _
  $region21: #{encoder_forward.8} parent=0 // pred_fallthru
    _

// kernel: encoder_forward.10
$region0: #{encoder_forward.10}
  #allocation0 [shape = 'u32[]', space=smem, size = 0x4, offset = 0x4, fixed_abs, tag = 'smem constant byte address 0x4 - core index']
  #allocation1 [shape = 'u32[144,128]{1,0:T(1,128)}', space=vmem, size = 0x12000, scoped, tag = 'internal scratch']
  %s0 = inlined_call_operand.vmem [shape: f32[2,16,32], index: 0, kind: input, shape index: {}]
  %s1 = inlined_call_operand.vmem [shape: bf16[32,32], index: 1, kind: input, shape index: {}]
  %s2 = inlined_call_operand.vmem [shape: f32[1,32], index: 2, kind: input, shape index: {}]
  %s3 = inlined_call_operand.vmem [shape: bf16[32,32], index: 3, kind: input, shape index: {}]
  %s4 = inlined_call_operand.vmem [shape: f32[1,32], index: 4, kind: input, shape index: {}]
  %s5 = inlined_call_operand.vmem [shape: bf16[32,32], index: 5, kind: input, shape index: {}]
  %s6 = inlined_call_operand.vmem [shape: f32[1,32], index: 6, kind: input, shape index: {}]
  %s7 = inlined_call_operand.vmem [shape: bf16[4,8,32], index: 7, kind: input, shape index: {}]
  %s8 = inlined_call_operand.vmem [shape: f32[1,32], index: 8, kind: input, shape index: {}]
  %s9 = inlined_call_operand.vmem [shape: bf16[32,128], index: 9, kind: input, shape index: {}]
  %s10 = inlined_call_operand.vmem [shape: f32[1,128], index: 10, kind: input, shape index: {}]
  %s11 = inlined_call_operand.vmem [shape: bf16[128,32], index: 11, kind: input, shape index: {}]
  %s12 = inlined_call_operand.vmem [shape: f32[1,32], index: 12, kind: input, shape index: {}]
  %s13 = inlined_call_operand.vmem [shape: f32[1,32], index: 13, kind: input, shape index: {}]
  %s14 = inlined_call_operand.vmem [shape: f32[1,32], index: 14, kind: input, shape index: {}]
  %s15 = inlined_call_operand.vmem [shape: f32[1,32], index: 15, kind: input, shape index: {}]
  %s16 = inlined_call_operand.vmem [shape: f32[1,32], index: 16, kind: input, shape index: {}]
  %s17 = inlined_call_operand.vmem [shape: f32[2,16,32], index: 17, kind: output, shape index: {}]
  %s18 = sld [smem:[#allocation0]]
  $region101: #{encoder_forward.10} parent=0
    _
  %s20 = ssub.s32 1, %s18
  %s21 = scalar_select 0, %s20, %s18
  loop: start=0, step=1, limit=4
  $region2: #{encoder_forward.10} parent=0 // loop_pre_header
    _
  $region3: #{encoder_forward.10} parent=0 // loop_header
    %s23 = sphi 0, %s27
    %p24 = scmp.ge.s32.totalorder %s23, 4
    %s33 = sphi 0, %s35
    %s36 = sphi 0, %s33
    %s37 = sphi 0, %s36
    %s53 = sphi 0, %s37
    %s57 = sphi 0, %s57
    %s59 = sphi 0, %s57
    %s60 = sphi 0, %s59
    %s74 = sphi 0, %s60
    %s78 = sphi 0, %s78
    %s80 = sphi 0, %s78
    %s81 = sphi 0, %s80
    %s95 = sphi 0, %s81
    %s99 = sphi 0, %s99
    %s101 = sphi 0, %s99
    %s102 = sphi 0, %s101
    %s116 = sphi 0, %s102
    %s120 = sphi 0, %s120
    %s122 = sphi 0, %s120
    %s123 = sphi 0, %s122
    %s137 = sphi 0, %s123
    %s141 = sphi 0, %s141
    %s143 = sphi 0, %s141
    %s144 = sphi 0, %s143
    %s158 = sphi 0, %s144
    %s162 = sphi 0, %s162
    %s164 = sphi 0, %s162
    %s165 = sphi 0, %s164
    %s179 = sphi 0, %s165
    %s183 = sphi 0, %s183
    %s185 = sphi 0, %s183
    %s186 = sphi 0, %s185
    %s200 = sphi 0, %s186
    %s204 = sphi 0, %s204
    %s206 = sphi 0, %s204
    %s207 = sphi 0, %s206
    %s221 = sphi 0, %s207
    %s225 = sphi 0, %s225
    %s227 = sphi 0, %s225
    %s228 = sphi 0, %s227
    %s242 = sphi 0, %s228
    %s246 = sphi 0, %s246
    %s248 = sphi 0, %s246
    %s249 = sphi 0, %s248
    %s263 = sphi 0, %s249
    %s267 = sphi 0, %s267
    %s269 = sphi 0, %s267
    %s270 = sphi 0, %s269
    %s284 = sphi 0, %s270
    %s288 = sphi 0, %s288
    %s290 = sphi 0, %s288
    %s291 = sphi 0, %s290
    %s305 = sphi 0, %s291
    %s309 = sphi 0, %s309
    %s311 = sphi 0, %s309
    %s312 = sphi 0, %s311
    %s326 = sphi 0, %s312
    %s330 = sphi 0, %s330
    %s332 = sphi 0, %s330
    %s333 = sphi 0, %s332
    %s347 = sphi 0, %s333
    %s351 = sphi 0, %s351
    %s353 = sphi 0, %s351
    %s354 = sphi 0, %s353
    %s368 = sphi 0, %s354
    %s372 = sphi 0, %s372
    %s374 = sphi 0, %s372
    %s375 = sphi 0, %s374
    %s389 = sphi 0, %s375
    %s395 = sphi 0, %s397
    %s398 = sphi 0, %s395
    %s399 = sphi 0, %s398
    %s415 = sphi 0, %s399
  $region4: #{encoder_forward.10} parent=0 // loop_header_branch
    %26 = sbr.rel (%p24) target = $region8
  $region5: #{encoder_forward.10} parent=0 // loop_body
    %s28 = ssub.s32 %s23, 1
    %s29 = ssub.s32 %s23, 2
    %s30 = sadd.s32 %s23, 1
    %s31 = ssub.s32 %s23, %s30
    %p32 = scmp.eq.s32.totalorder %s31, 0
    %s34 = sadd.s32 %s33, 1
    %s35 = scalar_select %p32, %s33, %s34
    %p38 = pneg %p32
    %p39 = scmp.eq.s32.totalorder %s23, 1
    %p40 = por %p38, %p39
    %p41 = scmp.ne.s32.totalorder %s33, %s36
    %p42 = scmp.eq.s32.totalorder %s23, 0
    %p43 = por %p41, %p42
    %p44 = scmp.ne.s32.totalorder %s33, %s36
    %p45 = scmp.eq.s32.totalorder %s28, 1
    %p46 = por %p44, %p45
    %p47 = scmp.ne.s32.totalorder %s36, %s37
    %p48 = scmp.eq.s32.totalorder %s28, 0
    %p49 = por %p47, %p48
    %p50 = scmp.ne.s32.totalorder %s36, %s37
    %p51 = scmp.eq.s32.totalorder %s29, 1
    %p52 = por %p50, %p51
    %p54 = scmp.ne.s32.totalorder %s37, %s53
    %p55 = scmp.eq.s32.totalorder %s29, 0
    %p56 = por %p54, %p55
    %s58 = sadd.s32 %s57, 1
    %p61 = scmp.eq.s32.totalorder %s23, 1
    %p62 = scmp.ne.s32.totalorder %s57, %s59
    %p63 = scmp.eq.s32.totalorder %s23, 0
    %p64 = por %p62, %p63
    %p65 = scmp.ne.s32.totalorder %s57, %s59
    %p66 = scmp.eq.s32.totalorder %s28, 1
    %p67 = por %p65, %p66
    %p68 = scmp.ne.s32.totalorder %s59, %s60
    %p69 = scmp.eq.s32.totalorder %s28, 0
    %p70 = por %p68, %p69
    %p71 = scmp.ne.s32.totalorder %s59, %s60
    %p72 = scmp.eq.s32.totalorder %s29, 1
    %p73 = por %p71, %p72
    %p75 = scmp.ne.s32.totalorder %s60, %s74
    %p76 = scmp.eq.s32.totalorder %s29, 0
    %p77 = por %p75, %p76
    %s79 = sadd.s32 %s78, 1
    %p82 = scmp.eq.s32.totalorder %s23, 1
    %p83 = scmp.ne.s32.totalorder %s78, %s80
    %p84 = scmp.eq.s32.totalorder %s23, 0
    %p85 = por %p83, %p84
    %p86 = scmp.ne.s32.totalorder %s78, %s80
    %p87 = scmp.eq.s32.totalorder %s28, 1
    %p88 = por %p86, %p87
    %p89 = scmp.ne.s32.totalorder %s80, %s81
    %p90 = scmp.eq.s32.totalorder %s28, 0
    %p91 = por %p89, %p90
    %p92 = scmp.ne.s32.totalorder %s80, %s81
    %p93 = scmp.eq.s32.totalorder %s29, 1
    %p94 = por %p92, %p93
    %p96 = scmp.ne.s32.totalorder %s81, %s95
    %p97 = scmp.eq.s32.totalorder %s29, 0
    %p98 = por %p96, %p97
    %s100 = sadd.s32 %s99, 1
    %p103 = scmp.eq.s32.totalorder %s23, 1
    %p104 = scmp.ne.s32.totalorder %s99, %s101
    %p105 = scmp.eq.s32.totalorder %s23, 0
    %p106 = por %p104, %p105
    %p107 = scmp.ne.s32.totalorder %s99, %s101
    %p108 = scmp.eq.s32.totalorder %s28, 1
    %p109 = por %p107, %p108
    %p110 = scmp.ne.s32.totalorder %s101, %s102
    %p111 = scmp.eq.s32.totalorder %s28, 0
    %p112 = por %p110, %p111
    %p113 = scmp.ne.s32.totalorder %s101, %s102
    %p114 = scmp.eq.s32.totalorder %s29, 1
    %p115 = por %p113, %p114
    %p117 = scmp.ne.s32.totalorder %s102, %s116
    %p118 = scmp.eq.s32.totalorder %s29, 0
    %p119 = por %p117, %p118
    %s121 = sadd.s32 %s120, 1
    %p124 = scmp.eq.s32.totalorder %s23, 1
    %p125 = scmp.ne.s32.totalorder %s120, %s122
    %p126 = scmp.eq.s32.totalorder %s23, 0
    %p127 = por %p125, %p126
    %p128 = scmp.ne.s32.totalorder %s120, %s122
    %p129 = scmp.eq.s32.totalorder %s28, 1
    %p130 = por %p128, %p129
    %p131 = scmp.ne.s32.totalorder %s122, %s123
    %p132 = scmp.eq.s32.totalorder %s28, 0
    %p133 = por %p131, %p132
    %p134 = scmp.ne.s32.totalorder %s122, %s123
    %p135 = scmp.eq.s32.totalorder %s29, 1
    %p136 = por %p134, %p135
    %p138 = scmp.ne.s32.totalorder %s123, %s137
    %p139 = scmp.eq.s32.totalorder %s29, 0
    %p140 = por %p138, %p139
    %s142 = sadd.s32 %s141, 1
    %p145 = scmp.eq.s32.totalorder %s23, 1
    %p146 = scmp.ne.s32.totalorder %s141, %s143
    %p147 = scmp.eq.s32.totalorder %s23, 0
    %p148 = por %p146, %p147
    %p149 = scmp.ne.s32.totalorder %s141, %s143
    %p150 = scmp.eq.s32.totalorder %s28, 1
    %p151 = por %p149, %p150
    %p152 = scmp.ne.s32.totalorder %s143, %s144
    %p153 = scmp.eq.s32.totalorder %s28, 0
    %p154 = por %p152, %p153
    %p155 = scmp.ne.s32.totalorder %s143, %s144
    %p156 = scmp.eq.s32.totalorder %s29, 1
    %p157 = por %p155, %p156
    %p159 = scmp.ne.s32.totalorder %s144, %s158
    %p160 = scmp.eq.s32.totalorder %s29, 0
    %p161 = por %p159, %p160
    %s163 = sadd.s32 %s162, 1
    %p166 = scmp.eq.s32.totalorder %s23, 1
    %p167 = scmp.ne.s32.totalorder %s162, %s164
    %p168 = scmp.eq.s32.totalorder %s23, 0
    %p169 = por %p167, %p168
    %p170 = scmp.ne.s32.totalorder %s162, %s164
    %p171 = scmp.eq.s32.totalorder %s28, 1
    %p172 = por %p170, %p171
    %p173 = scmp.ne.s32.totalorder %s164, %s165
    %p174 = scmp.eq.s32.totalorder %s28, 0
    %p175 = por %p173, %p174
    %p176 = scmp.ne.s32.totalorder %s164, %s165
    %p177 = scmp.eq.s32.totalorder %s29, 1
    %p178 = por %p176, %p177
    %p180 = scmp.ne.s32.totalorder %s165, %s179
    %p181 = scmp.eq.s32.totalorder %s29, 0
    %p182 = por %p180, %p181
    %s184 = sadd.s32 %s183, 1
    %p187 = scmp.eq.s32.totalorder %s23, 1
    %p188 = scmp.ne.s32.totalorder %s183, %s185
    %p189 = scmp.eq.s32.totalorder %s23, 0
    %p190 = por %p188, %p189
    %p191 = scmp.ne.s32.totalorder %s183, %s185
    %p192 = scmp.eq.s32.totalorder %s28, 1
    %p193 = por %p191, %p192
    %p194 = scmp.ne.s32.totalorder %s185, %s186
    %p195 = scmp.eq.s32.totalorder %s28, 0
    %p196 = por %p194, %p195
    %p197 = scmp.ne.s32.totalorder %s185, %s186
    %p198 = scmp.eq.s32.totalorder %s29, 1
    %p199 = por %p197, %p198
    %p201 = scmp.ne.s32.totalorder %s186, %s200
    %p202 = scmp.eq.s32.totalorder %s29, 0
    %p203 = por %p201, %p202
    %s205 = sadd.s32 %s204, 1
    %p208 = scmp.eq.s32.totalorder %s23, 1
    %p209 = scmp.ne.s32.totalorder %s204, %s206
    %p210 = scmp.eq.s32.totalorder %s23, 0
    %p211 = por %p209, %p210
    %p212 = scmp.ne.s32.totalorder %s204, %s206
    %p213 = scmp.eq.s32.totalorder %s28, 1
    %p214 = por %p212, %p213
    %p215 = scmp.ne.s32.totalorder %s206, %s207
    %p216 = scmp.eq.s32.totalorder %s28, 0
    %p217 = por %p215, %p216
    %p218 = scmp.ne.s32.totalorder %s206, %s207
    %p219 = scmp.eq.s32.totalorder %s29, 1
    %p220 = por %p218, %p219
    %p222 = scmp.ne.s32.totalorder %s207, %s221
    %p223 = scmp.eq.s32.totalorder %s29, 0
    %p224 = por %p222, %p223
    %s226 = sadd.s32 %s225, 1
    %p229 = scmp.eq.s32.totalorder %s23, 1
    %p230 = scmp.ne.s32.totalorder %s225, %s227
    %p231 = scmp.eq.s32.totalorder %s23, 0
    %p232 = por %p230, %p231
    %p233 = scmp.ne.s32.totalorder %s225, %s227
    %p234 = scmp.eq.s32.totalorder %s28, 1
    %p235 = por %p233, %p234
    %p236 = scmp.ne.s32.totalorder %s227, %s228
    %p237 = scmp.eq.s32.totalorder %s28, 0
    %p238 = por %p236, %p237
    %p239 = scmp.ne.s32.totalorder %s227, %s228
    %p240 = scmp.eq.s32.totalorder %s29, 1
    %p241 = por %p239, %p240
    %p243 = scmp.ne.s32.totalorder %s228, %s242
    %p244 = scmp.eq.s32.totalorder %s29, 0
    %p245 = por %p243, %p244
    %s247 = sadd.s32 %s246, 1
    %p250 = scmp.eq.s32.totalorder %s23, 1
    %p251 = scmp.ne.s32.totalorder %s246, %s248
    %p252 = scmp.eq.s32.totalorder %s23, 0
    %p253 = por %p251, %p252
    %p254 = scmp.ne.s32.totalorder %s246, %s248
    %p255 = scmp.eq.s32.totalorder %s28, 1
    %p256 = por %p254, %p255
    %p257 = scmp.ne.s32.totalorder %s248, %s249
    %p258 = scmp.eq.s32.totalorder %s28, 0
    %p259 = por %p257, %p258
    %p260 = scmp.ne.s32.totalorder %s248, %s249
    %p261 = scmp.eq.s32.totalorder %s29, 1
    %p262 = por %p260, %p261
    %p264 = scmp.ne.s32.totalorder %s249, %s263
    %p265 = scmp.eq.s32.totalorder %s29, 0
    %p266 = por %p264, %p265
    %s268 = sadd.s32 %s267, 1
    %p271 = scmp.eq.s32.totalorder %s23, 1
    %p272 = scmp.ne.s32.totalorder %s267, %s269
    %p273 = scmp.eq.s32.totalorder %s23, 0
    %p274 = por %p272, %p273
    %p275 = scmp.ne.s32.totalorder %s267, %s269
    %p276 = scmp.eq.s32.totalorder %s28, 1
    %p277 = por %p275, %p276
    %p278 = scmp.ne.s32.totalorder %s269, %s270
    %p279 = scmp.eq.s32.totalorder %s28, 0
    %p280 = por %p278, %p279
    %p281 = scmp.ne.s32.totalorder %s269, %s270
    %p282 = scmp.eq.s32.totalorder %s29, 1
    %p283 = por %p281, %p282
    %p285 = scmp.ne.s32.totalorder %s270, %s284
    %p286 = scmp.eq.s32.totalorder %s29, 0
    %p287 = por %p285, %p286
    %s289 = sadd.s32 %s288, 1
    %p292 = scmp.eq.s32.totalorder %s23, 1
    %p293 = scmp.ne.s32.totalorder %s288, %s290
    %p294 = scmp.eq.s32.totalorder %s23, 0
    %p295 = por %p293, %p294
    %p296 = scmp.ne.s32.totalorder %s288, %s290
    %p297 = scmp.eq.s32.totalorder %s28, 1
    %p298 = por %p296, %p297
    %p299 = scmp.ne.s32.totalorder %s290, %s291
    %p300 = scmp.eq.s32.totalorder %s28, 0
    %p301 = por %p299, %p300
    %p302 = scmp.ne.s32.totalorder %s290, %s291
    %p303 = scmp.eq.s32.totalorder %s29, 1
    %p304 = por %p302, %p303
    %p306 = scmp.ne.s32.totalorder %s291, %s305
    %p307 = scmp.eq.s32.totalorder %s29, 0
    %p308 = por %p306, %p307
    %s310 = sadd.s32 %s309, 1
    %p313 = scmp.eq.s32.totalorder %s23, 1
    %p314 = scmp.ne.s32.totalorder %s309, %s311
    %p315 = scmp.eq.s32.totalorder %s23, 0
    %p316 = por %p314, %p315
    %p317 = scmp.ne.s32.totalorder %s309, %s311
    %p318 = scmp.eq.s32.totalorder %s28, 1
    %p319 = por %p317, %p318
    %p320 = scmp.ne.s32.totalorder %s311, %s312
    %p321 = scmp.eq.s32.totalorder %s28, 0
    %p322 = por %p320, %p321
    %p323 = scmp.ne.s32.totalorder %s311, %s312
    %p324 = scmp.eq.s32.totalorder %s29, 1
    %p325 = por %p323, %p324
    %p327 = scmp.ne.s32.totalorder %s312, %s326
    %p328 = scmp.eq.s32.totalorder %s29, 0
    %p329 = por %p327, %p328
    %s331 = sadd.s32 %s330, 1
    %p334 = scmp.eq.s32.totalorder %s23, 1
    %p335 = scmp.ne.s32.totalorder %s330, %s332
    %p336 = scmp.eq.s32.totalorder %s23, 0
    %p337 = por %p335, %p336
    %p338 = scmp.ne.s32.totalorder %s330, %s332
    %p339 = scmp.eq.s32.totalorder %s28, 1
    %p340 = por %p338, %p339
    %p341 = scmp.ne.s32.totalorder %s332, %s333
    %p342 = scmp.eq.s32.totalorder %s28, 0
    %p343 = por %p341, %p342
    %p344 = scmp.ne.s32.totalorder %s332, %s333
    %p345 = scmp.eq.s32.totalorder %s29, 1
    %p346 = por %p344, %p345
    %p348 = scmp.ne.s32.totalorder %s333, %s347
    %p349 = scmp.eq.s32.totalorder %s29, 0
    %p350 = por %p348, %p349
    %s352 = sadd.s32 %s351, 1
    %p355 = scmp.eq.s32.totalorder %s23, 1
    %p356 = scmp.ne.s32.totalorder %s351, %s353
    %p357 = scmp.eq.s32.totalorder %s23, 0
    %p358 = por %p356, %p357
    %p359 = scmp.ne.s32.totalorder %s351, %s353
    %p360 = scmp.eq.s32.totalorder %s28, 1
    %p361 = por %p359, %p360
    %p362 = scmp.ne.s32.totalorder %s353, %s354
    %p363 = scmp.eq.s32.totalorder %s28, 0
    %p364 = por %p362, %p363
    %p365 = scmp.ne.s32.totalorder %s353, %s354
    %p366 = scmp.eq.s32.totalorder %s29, 1
    %p367 = por %p365, %p366
    %p369 = scmp.ne.s32.totalorder %s354, %s368
    %p370 = scmp.eq.s32.totalorder %s29, 0
    %p371 = por %p369, %p370
    %s373 = sadd.s32 %s372, 1
    %p376 = scmp.eq.s32.totalorder %s23, 1
    %p377 = scmp.ne.s32.totalorder %s372, %s374
    %p378 = scmp.eq.s32.totalorder %s23, 0
    %p379 = por %p377, %p378
    %p380 = scmp.ne.s32.totalorder %s372, %s374
    %p381 = scmp.eq.s32.totalorder %s28, 1
    %p382 = por %p380, %p381
    %p383 = scmp.ne.s32.totalorder %s374, %s375
    %p384 = scmp.eq.s32.totalorder %s28, 0
    %p385 = por %p383, %p384
    %p386 = scmp.ne.s32.totalorder %s374, %s375
    %p387 = scmp.eq.s32.totalorder %s29, 1
    %p388 = por %p386, %p387
    %p390 = scmp.ne.s32.totalorder %s375, %s389
    %p391 = scmp.eq.s32.totalorder %s29, 0
    %p392 = por %p390, %p391
    %s393 = ssub.s32 %s23, %s30
    %p394 = scmp.eq.s32.totalorder %s393, 0
    %s396 = sadd.s32 %s395, 1
    %s397 = scalar_select %p394, %s395, %s396
    %p400 = pneg %p394
    %p401 = scmp.eq.s32.totalorder %s23, 1
    %p402 = por %p400, %p401
    %p403 = scmp.ne.s32.totalorder %s395, %s398
    %p404 = scmp.eq.s32.totalorder %s23, 0
    %p405 = por %p403, %p404
    %p406 = scmp.ne.s32.totalorder %s395, %s398
    %p407 = scmp.eq.s32.totalorder %s28, 1
    %p408 = por %p406, %p407
    %p409 = scmp.ne.s32.totalorder %s398, %s399
    %p410 = scmp.eq.s32.totalorder %s28, 0
    %p411 = por %p409, %p410
    %p412 = scmp.ne.s32.totalorder %s398, %s399
    %p413 = scmp.eq.s32.totalorder %s29, 1
    %p414 = por %p412, %p413
    %p416 = scmp.ne.s32.totalorder %s399, %s415
    %p417 = scmp.eq.s32.totalorder %s29, 0
    %p418 = por %p416, %p417
    %p419 = scmp.le.s32.totalorder 1, %s23
    %p420 = scmp.lt.s32.totalorder %s23, 3
    %p421 = pnand %p419, %p420
    %p422 = pneg %p421
    // Predicated region
    $region9: #{encoder_forward.10} parent=5 // pred_check
      _
    $region10: #{encoder_forward.10} parent=5 // pred_check_branch
      %424 = sbr.rel (%p421) target = $region12
    $region11: #{encoder_forward.10} parent=5 // pred_region
      %s425 = ssub.s32 %s23, 1
      // Predicated region
      $region13: #{encoder_forward.10} parent=11 // pred_check
        %p426 = pneg %p70
      $region14: #{encoder_forward.10} parent=11 // pred_check_branch
        %428 = sbr.rel (%p426) target = $region16
      $region15: #{encoder_forward.10} parent=11 // pred_region
        _
      $region16: #{encoder_forward.10} parent=11 // pred_fallthru
        _
      // Predicated region
      $region17: #{encoder_forward.10} parent=11 // pred_check
        %p429 = pneg %p91
      $region18: #{encoder_forward.10} parent=11 // pred_check_branch
        %431 = sbr.rel (%p429) target = $region20
      $region19: #{encoder_forward.10} parent=11 // pred_region
        _
      $region20: #{encoder_forward.10} parent=11 // pred_fallthru
        _
      // Predicated region
      $region21: #{encoder_forward.10} parent=11 // pred_check
        %p432 = pneg %p112
      $region22: #{encoder_forward.10} parent=11 // pred_check_branch
        %434 = sbr.rel (%p432) target = $region24
      $region23: #{encoder_forward.10} parent=11 // pred_region
        _
      $region24: #{encoder_forward.10} parent=11 // pred_fallthru
        _
      // Predicated region
      $region25: #{encoder_forward.10} parent=11 // pred_check
        %p435 = pneg %p133
      $region26: #{encoder_forward.10} parent=11 // pred_check_branch
        %437 = sbr.rel (%p435) target = $region28
      $region27: #{encoder_forward.10} parent=11 // pred_region
        _
      $region28: #{encoder_forward.10} parent=11 // pred_fallthru
        _
      // Predicated region
      $region29: #{encoder_forward.10} parent=11 // pred_check
        %p438 = pneg %p154
      $region30: #{encoder_forward.10} parent=11 // pred_check_branch
        %440 = sbr.rel (%p438) target = $region32
      $region31: #{encoder_forward.10} parent=11 // pred_region
        _
      $region32: #{encoder_forward.10} parent=11 // pred_fallthru
        _
      // Predicated region
      $region33: #{encoder_forward.10} parent=11 // pred_check
        %p441 = pneg %p175
      $region34: #{encoder_forward.10} parent=11 // pred_check_branch
        %443 = sbr.rel (%p441) target = $region36
      $region35: #{encoder_forward.10} parent=11 // pred_region
        _
      $region36: #{encoder_forward.10} parent=11 // pred_fallthru
        _
      // Predicated region
      $region37: #{encoder_forward.10} parent=11 // pred_check
        %p444 = pneg %p196
      $region38: #{encoder_forward.10} parent=11 // pred_check_branch
        %446 = sbr.rel (%p444) target = $region40
      $region39: #{encoder_forward.10} parent=11 // pred_region
        _
      $region40: #{encoder_forward.10} parent=11 // pred_fallthru
        _
      // Predicated region
      $region41: #{encoder_forward.10} parent=11 // pred_check
        %p447 = pneg %p217
      $region42: #{encoder_forward.10} parent=11 // pred_check_branch
        %449 = sbr.rel (%p447) target = $region44
      $region43: #{encoder_forward.10} parent=11 // pred_region
        _
      $region44: #{encoder_forward.10} parent=11 // pred_fallthru
        _
      // Predicated region
      $region45: #{encoder_forward.10} parent=11 // pred_check
        %p450 = pneg %p238
      $region46: #{encoder_forward.10} parent=11 // pred_check_branch
        %452 = sbr.rel (%p450) target = $region48
      $region47: #{encoder_forward.10} parent=11 // pred_region
        _
      $region48: #{encoder_forward.10} parent=11 // pred_fallthru
        _
      // Predicated region
      $region49: #{encoder_forward.10} parent=11 // pred_check
        %p453 = pneg %p259
      $region50: #{encoder_forward.10} parent=11 // pred_check_branch
        %455 = sbr.rel (%p453) target = $region52
      $region51: #{encoder_forward.10} parent=11 // pred_region
        _
      $region52: #{encoder_forward.10} parent=11 // pred_fallthru
        _
      // Predicated region
      $region53: #{encoder_forward.10} parent=11 // pred_check
        %p456 = pneg %p280
      $region54: #{encoder_forward.10} parent=11 // pred_check_branch
        %458 = sbr.rel (%p456) target = $region56
      $region55: #{encoder_forward.10} parent=11 // pred_region
        _
      $region56: #{encoder_forward.10} parent=11 // pred_fallthru
        _
      // Predicated region
      $region57: #{encoder_forward.10} parent=11 // pred_check
        %p459 = pneg %p301
      $region58: #{encoder_forward.10} parent=11 // pred_check_branch
        %461 = sbr.rel (%p459) target = $region60
      $region59: #{encoder_forward.10} parent=11 // pred_region
        _
      $region60: #{encoder_forward.10} parent=11 // pred_fallthru
        _
      // Predicated region
      $region61: #{encoder_forward.10} parent=11 // pred_check
        %p462 = pneg %p322
      $region62: #{encoder_forward.10} parent=11 // pred_check_branch
        %464 = sbr.rel (%p462) target = $region64
      $region63: #{encoder_forward.10} parent=11 // pred_region
        _
      $region64: #{encoder_forward.10} parent=11 // pred_fallthru
        _
      // Predicated region
      $region65: #{encoder_forward.10} parent=11 // pred_check
        %p465 = pneg %p343
      $region66: #{encoder_forward.10} parent=11 // pred_check_branch
        %467 = sbr.rel (%p465) target = $region68
      $region67: #{encoder_forward.10} parent=11 // pred_region
        _
      $region68: #{encoder_forward.10} parent=11 // pred_fallthru
        _
      // Predicated region
      $region69: #{encoder_forward.10} parent=11 // pred_check
        %p468 = pneg %p364
      $region70: #{encoder_forward.10} parent=11 // pred_check_branch
        %470 = sbr.rel (%p468) target = $region72
      $region71: #{encoder_forward.10} parent=11 // pred_region
        _
      $region72: #{encoder_forward.10} parent=11 // pred_fallthru
        _
      // Predicated region
      $region73: #{encoder_forward.10} parent=11 // pred_check
        %p471 = pneg %p385
      $region74: #{encoder_forward.10} parent=11 // pred_check_branch
        %473 = sbr.rel (%p471) target = $region76
      $region75: #{encoder_forward.10} parent=11 // pred_region
        _
      $region76: #{encoder_forward.10} parent=11 // pred_fallthru
        _
    $region12: #{encoder_forward.10} parent=5 // pred_fallthru
      _
    %p474 = scmp.lt.s32.totalorder %s23, 2
    // Predicated region
    $region77: #{encoder_forward.10} parent=5 // pred_check
      %p475 = pneg %p474
    $region78: #{encoder_forward.10} parent=5 // pred_check_branch
      %477 = sbr.rel (%p475) target = $region80
    $region79: #{encoder_forward.10} parent=5 // pred_region
      // Predicated region
      $region81: #{encoder_forward.10} parent=79 // pred_check
        %p478 = pneg %p43
      $region82: #{encoder_forward.10} parent=79 // pred_check_branch
        %480 = sbr.rel (%p478) target = $region84
      $region83: #{encoder_forward.10} parent=79 // pred_region
        %p481 = scmp.lt.s32.totalorder %s23, 1
        %s482 = scalar_select %p481, %s23, 1
        %s483 = smul.addr %s482, 2
        %s484 = smul.addr %s483, 8
        %s485 = scalar_lea.vmem %s0, %s484
      $region84: #{encoder_forward.10} parent=79 // pred_fallthru
        _
    $region80: #{encoder_forward.10} parent=5 // pred_fallthru
      _
    %p486 = scmp.le.s32.totalorder 1, %s23
    %p487 = scmp.lt.s32.totalorder %s23, 3
    %p488 = pnand %p486, %p487
    %p489 = pneg %p488
    // Predicated region
    $region85: #{encoder_forward.10} parent=5 // pred_check
      _
    $region86: #{encoder_forward.10} parent=5 // pred_check_branch
      %491 = sbr.rel (%p488) target = $region88
    $region87: #{encoder_forward.10} parent=5 // pred_region
      %s492 = ssub.s32 %s23, 1
      %p493 = scmp.lt.s32.totalorder %s28, 1
      %s494 = scalar_select %p493, %s28, 1
      %s495 = smul.addr %s494, 2
      %s496 = smul.addr %s495, 8
      %s497 = scalar_lea.vmem %s0, %s496
      %p498 = pneg %p49
      %p499 = pneg %p46
      %p500 = pneg %p70
      %p501 = pneg %p67
      %p502 = pneg %p91
      %p503 = pneg %p88
      %p504 = pneg %p112
      %p505 = pneg %p109
      %p506 = pneg %p133
      %p507 = pneg %p130
      %p508 = pneg %p154
      %p509 = pneg %p151
      %p510 = pneg %p175
      %p511 = pneg %p172
      %p512 = pneg %p196
      %p513 = pneg %p193
      %p514 = pneg %p217
      %p515 = pneg %p214
      %p516 = pneg %p238
      %p517 = pneg %p235
      %p518 = pneg %p259
      %p519 = pneg %p256
      %p520 = pneg %p280
      %p521 = pneg %p277
      %p522 = pneg %p301
      %p523 = pneg %p298
      %p524 = pneg %p322
      %p525 = pneg %p319
      %p526 = pneg %p343
      %p527 = pneg %p340
      %p528 = pneg %p364
      %p529 = pneg %p361
      %p530 = pneg %p385
      %p531 = pneg %p382
      %p532 = pneg %p411
      %p533 = pneg %p408
      %p534 = scmp.lt.s32.totalorder %s28, 1
      %s535 = scalar_select %p534, %s28, 1
      %s536 = smul.addr %s535, 2
      %s537 = smul.addr %s536, 8
      %s538 = scalar_lea.vmem %s17, %s537
      %p539 = scmp.lt.s32.totalorder %s28, 1
      %s540 = scalar_select %p539, %s28, 1
      %s541 = smul.addr %s540, 2
      %s542 = smul.addr %s541, 8
      %s543 = scalar_lea.vmem %s0, %s542
      %p544 = scmp.lt.s32.totalorder %s28, 1
      %s545 = scalar_select %p544, %s28, 1
      %s546 = smul.addr %s545, 2
      %s547 = smul.addr %s546, 8
      %s548 = scalar_lea.vmem %s17, %s547
      %v550 = vld [vmem:[%s543] sm:$0xff]
      %v551 = vld [vmem:[%s543 + $0x8] sm:$0xff]
      %v552 = vpack.c.bf16 %v551, %v550
      %v553 = vld [vmem:[%s1] sm:$0xf]
      %v554 = vld [vmem:[%s1 + $0x4] sm:$0xf]
      %v555 = vld [vmem:[%s1 + $0x8] sm:$0xf]
      %v556 = vld [vmem:[%s1 + $0xc] sm:$0xf]
      %v557 = vld [vmem:[%s2] sm:$0x1]
      %v559 = vlaneseq
      %v560 = vshrl.u32 %v559, 7
      %v561 = vsub.s32 0, %v560
      %v562 = vrot.slane %v557, %v561
      %v568 = vunpack.c.l.b16 %v553
      %v569 = vunpack.c.l.b16 %v554
      %v570 = vunpack.c.l.b16 %v555
      %v571 = vunpack.c.l.b16 %v556
      %v572 = vpack.c.b16 %v569, %v568
      %v573 = vpack.c.b16 %v571, %v570
      %vm576 = vcmask 261120
      %v578 = vsel %vm576, %v552, 0
      %580 = vmatprep.subr.bf16.mxu0 0
      %581 = vmatpush1.bf16.msra.mxu0 %v572
      %582 = vmatprep.subr.bf16.mxu0 0
      %583 = vmatpush1.bf16.msra.mxu0 %v573
      %584 = vmatprep.subr.bf16.mxu0 0
      %585 = vmatpush1.bf16.msra.mxu0 0
      %586 = vmatprep.subr.bf16.mxu0 0
      %587 = vmatpush1.bf16.msra.mxu0 0
      %588 = vmatprep.subr.bf16.mxu0 0
      %589 = vmatpush1.bf16.msra.mxu0 0
      %590 = vmatprep.subr.bf16.mxu0 0
      %591 = vmatpush1.bf16.msra.mxu0 0
      %592 = vmatprep.subr.bf16.mxu0 0
      %593 = vmatpush1.bf16.msra.mxu0 0
      %594 = vmatprep.subr.bf16.mxu0 0
      %595 = vmatpush1.bf16.msra.mxu0 0
      %596 = vmatprep.subr.bf16.mxu0 0
      %597 = vmatpush1.bf16.msra.mxu0 0
      %598 = vmatprep.subr.bf16.mxu0 0
      %599 = vmatpush1.bf16.msra.mxu0 0
      %600 = vmatprep.subr.bf16.mxu0 0
      %601 = vmatpush1.bf16.msra.mxu0 0
      %602 = vmatprep.subr.bf16.mxu0 0
      %603 = vmatpush1.bf16.msra.mxu0 0
      %604 = vmatprep.subr.bf16.mxu0 0
      %605 = vmatpush1.bf16.msra.mxu0 0
      %606 = vmatprep.subr.bf16.mxu0 0
      %607 = vmatpush1.bf16.msra.mxu0 0
      %608 = vmatprep.subr.bf16.mxu0 0
      %609 = vmatpush1.bf16.msra.mxu0 0
      %610 = vmatprep.subr.bf16.mxu0 0
      %611 = vmatpush1.bf16.msra.mxu0 0
      %612 = vmatprep.mubr.bf16.mxu0 0
      %613 = vmatmul.mubr.bf16.gmra.mrb[0].mxu0 %v578
      %v614 = vpop.f32.mrb[0].mxu0
      %v615 = vadd.f32 %v562, %v614
      %v616 = vpop.f32.mrb[0].mxu0
      %v617 = vpop.f32.mrb[0].mxu0
      %v618 = vadd.f32 %v562, %v617
      %v619 = vpop.f32.mrb[0].mxu0
      %620 = vdwg.mxu0
      %v621 = vpack.c.bf16 %v618, %v615
      %v622 = vld [vmem:[%s3] sm:$0xf]
      %v623 = vld [vmem:[%s3 + $0x4] sm:$0xf]
      %v624 = vld [vmem:[%s3 + $0x8] sm:$0xf]
      %v625 = vld [vmem:[%s3 + $0xc] sm:$0xf]
      %v626 = vld [vmem:[%s4] sm:$0x1]
      %v628 = vlaneseq
      %v629 = vshrl.u32 %v628, 7
      %v630 = vsub.s32 0, %v629
      %v631 = vrot.slane %v626, %v630
      %v637 = vunpack.c.l.b16 %v622
      %v638 = vunpack.c.l.b16 %v623
      %v639 = vunpack.c.l.b16 %v624
      %v640 = vunpack.c.l.b16 %v625
      %v641 = vpack.c.b16 %v638, %v637
      %v642 = vpack.c.b16 %v640, %v639
      %645 = vmatprep.subr.bf16.mxu0 0
      %646 = vmatpush1.bf16.msra.mxu0 %v641
      %647 = vmatprep.subr.bf16.mxu0 0
      %648 = vmatpush1.bf16.msra.mxu0 %v642
      %649 = vmatprep.subr.bf16.mxu0 0
      %650 = vmatpush1.bf16.msra.mxu0 0
      %651 = vmatprep.subr.bf16.mxu0 0
      %652 = vmatpush1.bf16.msra.mxu0 0
      %653 = vmatprep.subr.bf16.mxu0 0
      %654 = vmatpush1.bf16.msra.mxu0 0
      %655 = vmatprep.subr.bf16.mxu0 0
      %656 = vmatpush1.bf16.msra.mxu0 0
      %657 = vmatprep.subr.bf16.mxu0 0
      %658 = vmatpush1.bf16.msra.mxu0 0
      %659 = vmatprep.subr.bf16.mxu0 0
      %660 = vmatpush1.bf16.msra.mxu0 0
      %661 = vmatprep.subr.bf16.mxu0 0
      %662 = vmatpush1.bf16.msra.mxu0 0
      %663 = vmatprep.subr.bf16.mxu0 0
      %664 = vmatpush1.bf16.msra.mxu0 0
      %665 = vmatprep.subr.bf16.mxu0 0
      %666 = vmatpush1.bf16.msra.mxu0 0
      %667 = vmatprep.subr.bf16.mxu0 0
      %668 = vmatpush1.bf16.msra.mxu0 0
      %669 = vmatprep.subr.bf16.mxu0 0
      %670 = vmatpush1.bf16.msra.mxu0 0
      %671 = vmatprep.subr.bf16.mxu0 0
      %672 = vmatpush1.bf16.msra.mxu0 0
      %673 = vmatprep.subr.bf16.mxu0 0
      %674 = vmatpush1.bf16.msra.mxu0 0
      %675 = vmatprep.subr.bf16.mxu0 0
      %676 = vmatpush1.bf16.msra.mxu0 0
      %677 = vmatprep.mubr.bf16.mxu0 0
      %678 = vmatmul.mubr.bf16.gmra.mrb[0].mxu0 %v578
      %v679 = vpop.f32.mrb[0].mxu0
      %v680 = vadd.f32 %v631, %v679
      %v681 = vpop.f32.mrb[0].mxu0
      %v682 = vpop.f32.mrb[0].mxu0
      %v683 = vadd.f32 %v631, %v682
      %v684 = vpop.f32.mrb[0].mxu0
      %685 = vdwg.mxu0
      %v686 = vpack.c.bf16 %v683, %v680
      %v687 = vld [vmem:[%s5] sm:$0xf]
      %v688 = vld [vmem:[%s5 + $0x4] sm:$0xf]
      %v689 = vld [vmem:[%s5 + $0x8] sm:$0xf]
      %v690 = vld [vmem:[%s5 + $0xc] sm:$0xf]
      %v691 = vld [vmem:[%s6] sm:$0x1]
      %v693 = vlaneseq
      %v694 = vshrl.u32 %v693, 7
      %v695 = vsub.s32 0, %v694
      %v696 = vrot.slane %v691, %v695
      %v702 = vunpack.c.l.b16 %v687
      %v703 = vunpack.c.l.b16 %v688
      %v704 = vunpack.c.l.b16 %v689
      %v705 = vunpack.c.l.b16 %v690
      %v706 = vpack.c.b16 %v703, %v702
      %v707 = vpack.c.b16 %v705, %v704
      %710 = vmatprep.subr.bf16.mxu0 0
      %711 = vmatpush1.bf16.msra.mxu0 %v706
      %712 = vmatprep.subr.bf16.mxu0 0
      %713 = vmatpush1.bf16.msra.mxu0 %v707
      %714 = vmatprep.subr.bf16.mxu0 0
      %715 = vmatpush1.bf16.msra.mxu0 0
      %716 = vmatprep.subr.bf16.mxu0 0
      %717 = vmatpush1.bf16.msra.mxu0 0
      %718 = vmatprep.subr.bf16.mxu0 0
      %719 = vmatpush1.bf16.msra.mxu0 0
      %720 = vmatprep.subr.bf16.mxu0 0
      %721 = vmatpush1.bf16.msra.mxu0 0
      %722 = vmatprep.subr.bf16.mxu0 0
      %723 = vmatpush1.bf16.msra.mxu0 0
      %724 = vmatprep.subr.bf16.mxu0 0
      %725 = vmatpush1.bf16.msra.mxu0 0
      %726 = vmatprep.subr.bf16.mxu0 0
      %727 = vmatpush1.bf16.msra.mxu0 0
      %728 = vmatprep.subr.bf16.mxu0 0
      %729 = vmatpush1.bf16.msra.mxu0 0
      %730 = vmatprep.subr.bf16.mxu0 0
      %731 = vmatpush1.bf16.msra.mxu0 0
      %732 = vmatprep.subr.bf16.mxu0 0
      %733 = vmatpush1.bf16.msra.mxu0 0
      %734 = vmatprep.subr.bf16.mxu0 0
      %735 = vmatpush1.bf16.msra.mxu0 0
      %736 = vmatprep.subr.bf16.mxu0 0
      %737 = vmatpush1.bf16.msra.mxu0 0
      %738 = vmatprep.subr.bf16.mxu0 0
      %739 = vmatpush1.bf16.msra.mxu0 0
      %740 = vmatprep.subr.bf16.mxu0 0
      %741 = vmatpush1.bf16.msra.mxu0 0
      %742 = vmatprep.mubr.bf16.mxu0 0
      %743 = vmatmul.mubr.bf16.gmra.mrb[0].mxu0 %v578
      %v744 = vpop.f32.mrb[0].mxu0
      %v745 = vadd.f32 %v696, %v744
      %v746 = vpop.f32.mrb[0].mxu0
      %v747 = vpop.f32.mrb[0].mxu0
      %v748 = vadd.f32 %v696, %v747
      %v749 = vpop.f32.mrb[0].mxu0
      %750 = vdwg.mxu0
      %v751 = vpack.c.bf16 %v748, %v745
      %vm752 = vcmask 64512
      %v754 = vsel %vm752, %v621, 0
      %v757 = vsel %vm752, %v686, 0
      %759 = vmatprep.subr.bf16.mxu0 0
      %760 = vmatpush1.bf16.xpose.msra.mxu0 %v757
      %761 = vmatprep.subr.bf16.mxu0 0
      %762 = vmatpush1.bf16.xpose.msra.mxu0 0
      %763 = vmatprep.subr.bf16.mxu0 0
      %764 = vmatpush1.bf16.xpose.msra.mxu0 0
      %765 = vmatprep.subr.bf16.mxu0 0
      %766 = vmatpush1.bf16.xpose.msra.mxu0 0
      %767 = vmatprep.subr.bf16.mxu0 0
      %768 = vmatpush1.bf16.xpose.msra.mxu0 0
      %769 = vmatprep.subr.bf16.mxu0 0
      %770 = vmatpush1.bf16.xpose.msra.mxu0 0
      %771 = vmatprep.subr.bf16.mxu0 0
      %772 = vmatpush1.bf16.xpose.msra.mxu0 0
      %773 = vmatprep.subr.bf16.mxu0 0
      %774 = vmatpush1.bf16.xpose.msra.mxu0 0
      %775 = vmatprep.subr.bf16.mxu0 0
      %776 = vmatpush1.bf16.xpose.msra.mxu0 0
      %777 = vmatprep.subr.bf16.mxu0 0
      %778 = vmatpush1.bf16.xpose.msra.mxu0 0
      %779 = vmatprep.subr.bf16.mxu0 0
      %780 = vmatpush1.bf16.xpose.msra.mxu0 0
      %781 = vmatprep.subr.bf16.mxu0 0
      %782 = vmatpush1.bf16.xpose.msra.mxu0 0
      %783 = vmatprep.subr.bf16.mxu0 0
      %784 = vmatpush1.bf16.xpose.msra.mxu0 0
      %785 = vmatprep.subr.bf16.mxu0 0
      %786 = vmatpush1.bf16.xpose.msra.mxu0 0
      %787 = vmatprep.subr.bf16.mxu0 0
      %788 = vmatpush1.bf16.xpose.msra.mxu0 0
      %789 = vmatprep.subr.bf16.mxu0 0
      %790 = vmatpush1.bf16.xpose.msra.mxu0 0
      %791 = vmatprep.mubr.bf16.mxu0 0
      %792 = vmatmul.mubr.bf16.gmra.mrb[0].mxu0 %v754
      %v793 = vpop.f32.mrb[0].mxu0
      %v794 = vadd.f32 0.0, %v793
      %v795 = vpop.f32.mrb[0].mxu0
      %v796 = vpop.f32.mrb[0].mxu0
      %v797 = vadd.f32 0.0, %v796
      %v798 = vpop.f32.mrb[0].mxu0
      %799 = vdwg.mxu0
      %vm800 = vcmask 130048
      %v801 = vsel %vm800, %v794, -inf
      %802 = vmax.xlane.f32.xlu0 %v801
      %v803 = vpop.xlane.xlu0 %802
      %v804 = vsel %vm800, %v797, -inf
      %805 = vmax.xlane.f32.xlu0 %v804
      %v806 = vpop.xlane.xlu0 %805
      %v807 = vsub.f32 %v794, %v803
      %v808 = vsub.f32 %v797, %v806
      %v809 = vmul.f32 %v807, 1.442695
      %v810 = vpow.pop %v809
      %v811 = vmul.f32 %v808, 1.442695
      %v812 = vpow.pop %v811
      %v813 = vsel %vm800, %v810, 0.0
      %814 = vadd.xlane.f32.xlu0 %v813
      %v815 = vpop.xlane.xlu0 %814
      %v816 = vsel %vm800, %v812, 0.0
      %817 = vadd.xlane.f32.xlu0 %v816
      %v818 = vpop.xlane.xlu0 %817
      %v819 = vrcp.pop %v815
      %v820 = vrcp.pop %v818
      %v821 = vmul.f32 %v810, %v819
      %v822 = vmul.f32 %v812, %v820
      %v823 = vpack.c.bf16 %v822, %v821
      %v825 = vsel %vm800, %v823, 0
      %827 = vmatprep.subr.bf16.mxu0 0
      %828 = vmatpush1.bf16.msra.mxu0 %v751
      %829 = vmatprep.subr.bf16.mxu0 0
      %830 = vmatpush1.bf16.msra.mxu0 0
      %831 = vmatprep.subr.bf16.mxu0 0
      %832 = vmatpush1.bf16.msra.mxu0 0
      %833 = vmatprep.subr.bf16.mxu0 0
      %834 = vmatpush1.bf16.msra.mxu0 0
      %835 = vmatprep.subr.bf16.mxu0 0
      %836 = vmatpush1.bf16.msra.mxu0 0
      %837 = vmatprep.subr.bf16.mxu0 0
      %838 = vmatpush1.bf16.msra.mxu0 0
      %839 = vmatprep.subr.bf16.mxu0 0
      %840 = vmatpush1.bf16.msra.mxu0 0
      %841 = vmatprep.subr.bf16.mxu0 0
      %842 = vmatpush1.bf16.msra.mxu0 0
      %843 = vmatprep.subr.bf16.mxu0 0
      %844 = vmatpush1.bf16.msra.mxu0 0
      %845 = vmatprep.subr.bf16.mxu0 0
      %846 = vmatpush1.bf16.msra.mxu0 0
      %847 = vmatprep.subr.bf16.mxu0 0
      %848 = vmatpush1.bf16.msra.mxu0 0
      %849 = vmatprep.subr.bf16.mxu0 0
      %850 = vmatpush1.bf16.msra.mxu0 0
      %851 = vmatprep.subr.bf16.mxu0 0
      %852 = vmatpush1.bf16.msra.mxu0 0
      %853 = vmatprep.subr.bf16.mxu0 0
      %854 = vmatpush1.bf16.msra.mxu0 0
      %855 = vmatprep.subr.bf16.mxu0 0
      %856 = vmatpush1.bf16.msra.mxu0 0
      %857 = vmatprep.subr.bf16.mxu0 0
      %858 = vmatpush1.bf16.msra.mxu0 0
      %859 = vmatprep.mubr.bf16.mxu0 0
      %860 = vmatmul.mubr.bf16.gmra.mrb[0].mxu0 %v825
      %v861 = vpop.f32.mrb[0].mxu0
      %v862 = vadd.f32 0.0, %v861
      %v863 = vpop.f32.mrb[0].mxu0
      %v864 = vpop.f32.mrb[0].mxu0
      %v865 = vadd.f32 0.0, %v864
      %v866 = vpop.f32.mrb[0].mxu0
      %867 = vdwg.mxu0
      %v868 = vpack.c.bf16 %v865, %v862
      %v869 = vld [vmem:[%s7] sm:$0xf]
      %871 = vrot.lane.b32.xlu0 %v621, 120
      %v872 = vpop.permute.xlu0 %871
      %874 = vrot.lane.b32.xlu0 %v686, 120
      %v875 = vpop.permute.xlu0 %874
      %v877 = vsel %vm752, %v872, 0
      %v880 = vsel %vm752, %v875, 0
      %882 = vmatprep.subr.bf16.mxu0 0
      %883 = vmatpush1.bf16.xpose.msra.mxu0 %v880
      %884 = vmatprep.subr.bf16.mxu0 0
      %885 = vmatpush1.bf16.xpose.msra.mxu0 0
      %886 = vmatprep.subr.bf16.mxu0 0
      %887 = vmatpush1.bf16.xpose.msra.mxu0 0
      %888 = vmatprep.subr.bf16.mxu0 0
      %889 = vmatpush1.bf16.xpose.msra.mxu0 0
      %890 = vmatprep.subr.bf16.mxu0 0
      %891 = vmatpush1.bf16.xpose.msra.mxu0 0
      %892 = vmatprep.subr.bf16.mxu0 0
      %893 = vmatpush1.bf16.xpose.msra.mxu0 0
      %894 = vmatprep.subr.bf16.mxu0 0
      %895 = vmatpush1.bf16.xpose.msra.mxu0 0
      %896 = vmatprep.subr.bf16.mxu0 0
      %897 = vmatpush1.bf16.xpose.msra.mxu0 0
      %898 = vmatprep.subr.bf16.mxu0 0
      %899 = vmatpush1.bf16.xpose.msra.mxu0 0
      %900 = vmatprep.subr.bf16.mxu0 0
      %901 = vmatpush1.bf16.xpose.msra.mxu0 0
      %902 = vmatprep.subr.bf16.mxu0 0
      %903 = vmatpush1.bf16.xpose.msra.mxu0 0
      %904 = vmatprep.subr.bf16.mxu0 0
      %905 = vmatpush1.bf16.xpose.msra.mxu0 0
      %906 = vmatprep.subr.bf16.mxu0 0
      %907 = vmatpush1.bf16.xpose.msra.mxu0 0
      %908 = vmatprep.subr.bf16.mxu0 0
      %909 = vmatpush1.bf16.xpose.msra.mxu0 0
      %910 = vmatprep.subr.bf16.mxu0 0
      %911 = vmatpush1.bf16.xpose.msra.mxu0 0
      %912 = vmatprep.subr.bf16.mxu0 0
      %913 = vmatpush1.bf16.xpose.msra.mxu0 0
      %914 = vmatprep.mubr.bf16.mxu0 0
      %915 = vmatmul.mubr.bf16.gmra.mrb[0].mxu0 %v877
      %v916 = vpop.f32.mrb[0].mxu0
      %v917 = vadd.f32 0.0, %v916
      %v918 = vpop.f32.mrb[0].mxu0
      %v919 = vpop.f32.mrb[0].mxu0
      %v920 = vadd.f32 0.0, %v919
      %v921 = vpop.f32.mrb[0].mxu0
      %922 = vdwg.mxu0
      %v923 = vsel %vm800, %v917, -inf
      %924 = vmax.xlane.f32.xlu0 %v923
      %v925 = vpop.xlane.xlu0 %924
      %v926 = vsel %vm800, %v920, -inf
      %927 = vmax.xlane.f32.xlu0 %v926
      %v928 = vpop.xlane.xlu0 %927
      %v929 = vsub.f32 %v917, %v925
      %v930 = vsub.f32 %v920, %v928
      %v931 = vmul.f32 %v929, 1.442695
      %v932 = vpow.pop %v931
      %v933 = vmul.f32 %v930, 1.442695
      %v934 = vpow.pop %v933
      %v935 = vsel %vm800, %v932, 0.0
      %936 = vadd.xlane.f32.xlu0 %v935
      %v937 = vpop.xlane.xlu0 %936
      %v938 = vsel %vm800, %v934, 0.0
      %939 = vadd.xlane.f32.xlu0 %v938
      %v940 = vpop.xlane.xlu0 %939
      %v941 = vrcp.pop %v937
      %v942 = vrcp.pop %v940
      %v943 = vmul.f32 %v932, %v941
      %v944 = vmul.f32 %v934, %v942
      %v945 = vpack.c.bf16 %v944, %v943
      %947 = vrot.lane.b32.xlu0 %v751, 120
      %v948 = vpop.permute.xlu0 %947
      %v951 = vsel %vm800, %v945, 0
      %953 = vmatprep.subr.bf16.mxu0 0
      %954 = vmatpush1.bf16.msra.mxu0 %v948
      %955 = vmatprep.subr.bf16.mxu0 0
      %956 = vmatpush1.bf16.msra.mxu0 0
      %957 = vmatprep.subr.bf16.mxu0 0
      %958 = vmatpush1.bf16.msra.mxu0 0
      %959 = vmatprep.subr.bf16.mxu0 0
      %960 = vmatpush1.bf16.msra.mxu0 0
      %961 = vmatprep.subr.bf16.mxu0 0
      %962 = vmatpush1.bf16.msra.mxu0 0
      %963 = vmatprep.subr.bf16.mxu0 0
      %964 = vmatpush1.bf16.msra.mxu0 0
      %965 = vmatprep.subr.bf16.mxu0 0
      %966 = vmatpush1.bf16.msra.mxu0 0
      %967 = vmatprep.subr.bf16.mxu0 0
      %968 = vmatpush1.bf16.msra.mxu0 0
      %969 = vmatprep.subr.bf16.mxu0 0
      %970 = vmatpush1.bf16.msra.mxu0 0
      %971 = vmatprep.subr.bf16.mxu0 0
      %972 = vmatpush1.bf16.msra.mxu0 0
      %973 = vmatprep.subr.bf16.mxu0 0
      %974 = vmatpush1.bf16.msra.mxu0 0
      %975 = vmatprep.subr.bf16.mxu0 0
      %976 = vmatpush1.bf16.msra.mxu0 0
      %977 = vmatprep.subr.bf16.mxu0 0
      %978 = vmatpush1.bf16.msra.mxu0 0
      %979 = vmatprep.subr.bf16.mxu0 0
      %980 = vmatpush1.bf16.msra.mxu0 0
      %981 = vmatprep.subr.bf16.mxu0 0
      %982 = vmatpush1.bf16.msra.mxu0 0
      %983 = vmatprep.subr.bf16.mxu0 0
      %984 = vmatpush1.bf16.msra.mxu0 0
      %985 = vmatprep.mubr.bf16.mxu0 0
      %986 = vmatmul.mubr.bf16.gmra.mrb[0].mxu0 %v951
      %v987 = vpop.f32.mrb[0].mxu0
      %v988 = vadd.f32 0.0, %v987
      %v989 = vpop.f32.mrb[0].mxu0
      %v990 = vpop.f32.mrb[0].mxu0
      %v991 = vadd.f32 0.0, %v990
      %v992 = vpop.f32.mrb[0].mxu0
      %993 = vdwg.mxu0
      %v994 = vpack.c.bf16 %v991, %v988
      %s995 = scalar_lea.vmem %s7, 4
      %v996 = vld [vmem:[%s995] sm:$0xf]
      %v998 = vsel %vm752, %v994, 0
      %vm1000 = vcmask 1043456
      %v1002 = vsel %vm1000, %v996, 0
      %1004 = vmatprep.subr.bf16.mxu0 0
      %1005 = vmatpush1.bf16.msra.mxu0 %v1002
      %1006 = vmatprep.subr.bf16.mxu0 0
      %1007 = vmatpush1.bf16.msra.mxu0 0
      %1008 = vmatprep.subr.bf16.mxu0 0
      %1009 = vmatpush1.bf16.msra.mxu0 0
      %1010 = vmatprep.subr.bf16.mxu0 0
      %1011 = vmatpush1.bf16.msra.mxu0 0
      %1012 = vmatprep.subr.bf16.mxu0 0
      %1013 = vmatpush1.bf16.msra.mxu0 0
      %1014 = vmatprep.subr.bf16.mxu0 0
      %1015 = vmatpush1.bf16.msra.mxu0 0
      %1016 = vmatprep.subr.bf16.mxu0 0
      %1017 = vmatpush1.bf16.msra.mxu0 0
      %1018 = vmatprep.subr.bf16.mxu0 0
      %1019 = vmatpush1.bf16.msra.mxu0 0
      %1020 = vmatprep.subr.bf16.mxu0 0
      %1021 = vmatpush1.bf16.msra.mxu0 0
      %1022 = vmatprep.subr.bf16.mxu0 0
      %1023 = vmatpush1.bf16.msra.mxu0 0
      %1024 = vmatprep.subr.bf16.mxu0 0
      %1025 = vmatpush1.bf16.msra.mxu0 0
      %1026 = vmatprep.subr.bf16.mxu0 0
      %1027 = vmatpush1.bf16.msra.mxu0 0
      %1028 = vmatprep.subr.bf16.mxu0 0
      %1029 = vmatpush1.bf16.msra.mxu0 0
      %1030 = vmatprep.subr.bf16.mxu0 0
      %1031 = vmatpush1.bf16.msra.mxu0 0
      %1032 = vmatprep.subr.bf16.mxu0 0
      %1033 = vmatpush1.bf16.msra.mxu0 0
      %1034 = vmatprep.subr.bf16.mxu0 0
      %1035 = vmatpush1.bf16.msra.mxu0 0
      %1036 = vmatprep.mubr.bf16.mxu0 0
      %1037 = vmatmul.mubr.bf16.gmra.mrb[0].mxu0 %v998
      %v1038 = vpop.f32.mrb[0].mxu0
      %v1039 = vadd.f32 0.0, %v1038
      %v1040 = vpop.f32.mrb[0].mxu0
      %v1041 = vpop.f32.mrb[0].mxu0
      %v1042 = vadd.f32 0.0, %v1041
      %v1043 = vpop.f32.mrb[0].mxu0
      %1044 = vdwg.mxu0
      %v1046 = vsel %vm752, %v868, 0
      %v1049 = vsel %vm1000, %v869, 0
      %1051 = vmatprep.subr.bf16.mxu0 0
      %1052 = vmatpush1.bf16.msra.mxu0 %v1049
      %1053 = vmatprep.subr.bf16.mxu0 0
      %1054 = vmatpush1.bf16.msra.mxu0 0
      %1055 = vmatprep.subr.bf16.mxu0 0
      %1056 = vmatpush1.bf16.msra.mxu0 0
      %1057 = vmatprep.subr.bf16.mxu0 0
      %1058 = vmatpush1.bf16.msra.mxu0 0
      %1059 = vmatprep.subr.bf16.mxu0 0
      %1060 = vmatpush1.bf16.msra.mxu0 0
      %1061 = vmatprep.subr.bf16.mxu0 0
      %1062 = vmatpush1.bf16.msra.mxu0 0
      %1063 = vmatprep.subr.bf16.mxu0 0
      %1064 = vmatpush1.bf16.msra.mxu0 0
      %1065 = vmatprep.subr.bf16.mxu0 0
      %1066 = vmatpush1.bf16.msra.mxu0 0
      %1067 = vmatprep.subr.bf16.mxu0 0
      %1068 = vmatpush1.bf16.msra.mxu0 0
      %1069 = vmatprep.subr.bf16.mxu0 0
      %1070 = vmatpush1.bf16.msra.mxu0 0
      %1071 = vmatprep.subr.bf16.mxu0 0
      %1072 = vmatpush1.bf16.msra.mxu0 0
      %1073 = vmatprep.subr.bf16.mxu0 0
      %1074 = vmatpush1.bf16.msra.mxu0 0
      %1075 = vmatprep.subr.bf16.mxu0 0
      %1076 = vmatpush1.bf16.msra.mxu0 0
      %1077 = vmatprep.subr.bf16.mxu0 0
      %1078 = vmatpush1.bf16.msra.mxu0 0
      %1079 = vmatprep.subr.bf16.mxu0 0
      %1080 = vmatpush1.bf16.msra.mxu0 0
      %1081 = vmatprep.subr.bf16.mxu0 0
      %1082 = vmatpush1.bf16.msra.mxu0 0
      %1083 = vmatprep.mubr.bf16.mxu0 0
      %1084 = vmatmul.mubr.bf16.gmra.mrb[0].mxu0 %v1046
      %v1085 = vpop.f32.mrb[0].mxu0
      %v1086 = vadd.f32 %v1039, %v1085
      %v1087 = vpop.f32.mrb[0].mxu0
      %v1088 = vpop.f32.mrb[0].mxu0
      %v1089 = vadd.f32 %v1042, %v1088
      %v1090 = vpop.f32.mrb[0].mxu0
      %1091 = vdwg.mxu0
      %1092 = vrot.lane.b32.xlu0 %v621, 112
      %v1093 = vpop.permute.xlu0 %1092
      %1094 = vrot.lane.b32.xlu0 %v686, 112
      %v1095 = vpop.permute.xlu0 %1094
      %v1097 = vsel %vm752, %v1093, 0
      %v1100 = vsel %vm752, %v1095, 0
      %1102 = vmatprep.subr.bf16.mxu0 0
      %1103 = vmatpush1.bf16.xpose.msra.mxu0 %v1100
      %1104 = vmatprep.subr.bf16.mxu0 0
      %1105 = vmatpush1.bf16.xpose.msra.mxu0 0
      %1106 = vmatprep.subr.bf16.mxu0 0
      %1107 = vmatpush1.bf16.xpose.msra.mxu0 0
      %1108 = vmatprep.subr.bf16.mxu0 0
      %1109 = vmatpush1.bf16.xpose.msra.mxu0 0
      %1110 = vmatprep.subr.bf16.mxu0 0
      %1111 = vmatpush1.bf16.xpose.msra.mxu0 0
      %1112 = vmatprep.subr.bf16.mxu0 0
      %1113 = vmatpush1.bf16.xpose.msra.mxu0 0
      %1114 = vmatprep.subr.bf16.mxu0 0
      %1115 = vmatpush1.bf16.xpose.msra.mxu0 0
      %1116 = vmatprep.subr.bf16.mxu0 0
      %1117 = vmatpush1.bf16.xpose.msra.mxu0 0
      %1118 = vmatprep.subr.bf16.mxu0 0
      %1119 = vmatpush1.bf16.xpose.msra.mxu0 0
      %1120 = vmatprep.subr.bf16.mxu0 0
      %1121 = vmatpush1.bf16.xpose.msra.mxu0 0
      %1122 = vmatprep.subr.bf16.mxu0 0
      %1123 = vmatpush1.bf16.xpose.msra.mxu0 0
      %1124 = vmatprep.subr.bf16.mxu0 0
      %1125 = vmatpush1.bf16.xpose.msra.mxu0 0
      %1126 = vmatprep.subr.bf16.mxu0 0
      %1127 = vmatpush1.bf16.xpose.msra.mxu0 0
      %1128 = vmatprep.subr.bf16.mxu0 0
      %1129 = vmatpush1.bf16.xpose.msra.mxu0 0
      %1130 = vmatprep.subr.bf16.mxu0 0
      %1131 = vmatpush1.bf16.xpose.msra.mxu0 0
      %1132 = vmatprep.subr.bf16.mxu0 0
      %1133 = vmatpush1.bf16.xpose.msra.mxu0 0
      %1134 = vmatprep.mubr.bf16.mxu0 0
      %1135 = vmatmul.mubr.bf16.gmra.mrb[0].mxu0 %v1097
      %v1136 = vpop.f32.mrb[0].mxu0
      %v1137 = vadd.f32 0.0, %v1136
      %v1138 = vpop.f32.mrb[0].mxu0
      %v1139 = vpop.f32.mrb[0].mxu0
      %v1140 = vadd.f32 0.0, %v1139
      %v1141 = vpop.f32.mrb[0].mxu0
      %1142 = vdwg.mxu0
      %v1143 = vsel %vm800, %v1137, -inf
      %1144 = vmax.xlane.f32.xlu0 %v1143
      %v1145 = vpop.xlane.xlu0 %1144
      %v1146 = vsel %vm800, %v1140, -inf
      %1147 = vmax.xlane.f32.xlu0 %v1146
      %v1148 = vpop.xlane.xlu0 %1147
      %v1149 = vsub.f32 %v1137, %v1145
      %v1150 = vsub.f32 %v1140, %v1148
      %v1151 = vmul.f32 %v1149, 1.442695
      %v1152 = vpow.pop %v1151
      %v1153 = vmul.f32 %v1150, 1.442695
      %v1154 = vpow.pop %v1153
      %v1155 = vsel %vm800, %v1152, 0.0
      %1156 = vadd.xlane.f32.xlu0 %v1155
      %v1157 = vpop.xlane.xlu0 %1156
      %v1158 = vsel %vm800, %v1154, 0.0
      %1159 = vadd.xlane.f32.xlu0 %v1158
      %v1160 = vpop.xlane.xlu0 %1159
      %v1161 = vrcp.pop %v1157
      %v1162 = vrcp.pop %v1160
      %v1163 = vmul.f32 %v1152, %v1161
      %v1164 = vmul.f32 %v1154, %v1162
      %v1165 = vpack.c.bf16 %v1164, %v1163
      %1166 = vrot.lane.b32.xlu0 %v751, 112
      %v1167 = vpop.permute.xlu0 %1166
      %v1170 = vsel %vm800, %v1165, 0
      %1172 = vmatprep.subr.bf16.mxu0 0
      %1173 = vmatpush1.bf16.msra.mxu0 %v1167
      %1174 = vmatprep.subr.bf16.mxu0 0
      %1175 = vmatpush1.bf16.msra.mxu0 0
      %1176 = vmatprep.subr.bf16.mxu0 0
      %1177 = vmatpush1.bf16.msra.mxu0 0
      %1178 = vmatprep.subr.bf16.mxu0 0
      %1179 = vmatpush1.bf16.msra.mxu0 0
      %1180 = vmatprep.subr.bf16.mxu0 0
      %1181 = vmatpush1.bf16.msra.mxu0 0
      %1182 = vmatprep.subr.bf16.mxu0 0
      %1183 = vmatpush1.bf16.msra.mxu0 0
      %1184 = vmatprep.subr.bf16.mxu0 0
      %1185 = vmatpush1.bf16.msra.mxu0 0
      %1186 = vmatprep.subr.bf16.mxu0 0
      %1187 = vmatpush1.bf16.msra.mxu0 0
      %1188 = vmatprep.subr.bf16.mxu0 0
      %1189 = vmatpush1.bf16.msra.mxu0 0
      %1190 = vmatprep.subr.bf16.mxu0 0
      %1191 = vmatpush1.bf16.msra.mxu0 0
      %1192 = vmatprep.subr.bf16.mxu0 0
      %1193 = vmatpush1.bf16.msra.mxu0 0
      %1194 = vmatprep.subr.bf16.mxu0 0
      %1195 = vmatpush1.bf16.msra.mxu0 0
      %1196 = vmatprep.subr.bf16.mxu0 0
      %1197 = vmatpush1.bf16.msra.mxu0 0
      %1198 = vmatprep.subr.bf16.mxu0 0
      %1199 = vmatpush1.bf16.msra.mxu0 0
      %1200 = vmatprep.subr.bf16.mxu0 0
      %1201 = vmatpush1.bf16.msra.mxu0 0
      %1202 = vmatprep.subr.bf16.mxu0 0
      %1203 = vmatpush1.bf16.msra.mxu0 0
      %1204 = vmatprep.mubr.bf16.mxu0 0
      %1205 = vmatmul.mubr.bf16.gmra.mrb[0].mxu0 %v1170
      %v1206 = vpop.f32.mrb[0].mxu0
      %v1207 = vadd.f32 0.0, %v1206
      %v1208 = vpop.f32.mrb[0].mxu0
      %v1209 = vpop.f32.mrb[0].mxu0
      %v1210 = vadd.f32 0.0, %v1209
      %v1211 = vpop.f32.mrb[0].mxu0
      %1212 = vdwg.mxu0
      %v1213 = vpack.c.bf16 %v1210, %v1207
      %s1214 = scalar_lea.vmem %s7, 8
      %v1215 = vld [vmem:[%s1214] sm:$0xf]
      %v1217 = vsel %vm752, %v1213, 0
      %v1220 = vsel %vm1000, %v1215, 0
      %1222 = vmatprep.subr.bf16.mxu0 0
      %1223 = vmatpush1.bf16.msra.mxu0 %v1220
      %1224 = vmatprep.subr.bf16.mxu0 0
      %1225 = vmatpush1.bf16.msra.mxu0 0
      %1226 = vmatprep.subr.bf16.mxu0 0
      %1227 = vmatpush1.bf16.msra.mxu0 0
      %1228 = vmatprep.subr.bf16.mxu0 0
      %1229 = vmatpush1.bf16.msra.mxu0 0
      %1230 = vmatprep.subr.bf16.mxu0 0
      %1231 = vmatpush1.bf16.msra.mxu0 0
      %1232 = vmatprep.subr.bf16.mxu0 0
      %1233 = vmatpush1.bf16.msra.mxu0 0
      %1234 = vmatprep.subr.bf16.mxu0 0
      %1235 = vmatpush1.bf16.msra.mxu0 0
      %1236 = vmatprep.subr.bf16.mxu0 0
      %1237 = vmatpush1.bf16.msra.mxu0 0
      %1238 = vmatprep.subr.bf16.mxu0 0
      %1239 = vmatpush1.bf16.msra.mxu0 0
      %1240 = vmatprep.subr.bf16.mxu0 0
      %1241 = vmatpush1.bf16.msra.mxu0 0
      %1242 = vmatprep.subr.bf16.mxu0 0
      %1243 = vmatpush1.bf16.msra.mxu0 0
      %1244 = vmatprep.subr.bf16.mxu0 0
      %1245 = vmatpush1.bf16.msra.mxu0 0
      %1246 = vmatprep.subr.bf16.mxu0 0
      %1247 = vmatpush1.bf16.msra.mxu0 0
      %1248 = vmatprep.subr.bf16.mxu0 0
      %1249 = vmatpush1.bf16.msra.mxu0 0
      %1250 = vmatprep.subr.bf16.mxu0 0
      %1251 = vmatpush1.bf16.msra.mxu0 0
      %1252 = vmatprep.subr.bf16.mxu0 0
      %1253 = vmatpush1.bf16.msra.mxu0 0
      %1254 = vmatprep.mubr.bf16.mxu0 0
      %1255 = vmatmul.mubr.bf16.gmra.mrb[0].mxu0 %v1217
      %v1256 = vpop.f32.mrb[0].mxu0
      %v1257 = vadd.f32 0.0, %v1256
      %v1258 = vpop.f32.mrb[0].mxu0
      %v1259 = vpop.f32.mrb[0].mxu0
      %v1260 = vadd.f32 0.0, %v1259
      %v1261 = vpop.f32.mrb[0].mxu0
      %1262 = vdwg.mxu0
      %v1263 = vadd.f32 %v1086, %v1257
      %v1264 = vadd.f32 %v1089, %v1260
      %1265 = vrot.lane.b32.xlu0 %v621, 104
      %v1266 = vpop.permute.xlu0 %1265
      %1267 = vrot.lane.b32.xlu0 %v686, 104
      %v1268 = vpop.permute.xlu0 %1267
      %v1270 = vsel %vm752, %v1266, 0
      %v1273 = vsel %vm752, %v1268, 0
      %1275 = vmatprep.subr.bf16.mxu0 0
      %1276 = vmatpush1.bf16.xpose.msra.mxu0 %v1273
      %1277 = vmatprep.subr.bf16.mxu0 0
      %1278 = vmatpush1.bf16.xpose.msra.mxu0 0
      %1279 = vmatprep.subr.bf16.mxu0 0
      %1280 = vmatpush1.bf16.xpose.msra.mxu0 0
      %1281 = vmatprep.subr.bf16.mxu0 0
      %1282 = vmatpush1.bf16.xpose.msra.mxu0 0
      %1283 = vmatprep.subr.bf16.mxu0 0
      %1284 = vmatpush1.bf16.xpose.msra.mxu0 0
      %1285 = vmatprep.subr.bf16.mxu0 0
      %1286 = vmatpush1.bf16.xpose.msra.mxu0 0
      %1287 = vmatprep.subr.bf16.mxu0 0
      %1288 = vmatpush1.bf16.xpose.msra.mxu0 0
      %1289 = vmatprep.subr.bf16.mxu0 0
      %1290 = vmatpush1.bf16.xpose.msra.mxu0 0
      %1291 = vmatprep.subr.bf16.mxu0 0
      %1292 = vmatpush1.bf16.xpose.msra.mxu0 0
      %1293 = vmatprep.subr.bf16.mxu0 0
      %1294 = vmatpush1.bf16.xpose.msra.mxu0 0
      %1295 = vmatprep.subr.bf16.mxu0 0
      %1296 = vmatpush1.bf16.xpose.msra.mxu0 0
      %1297 = vmatprep.subr.bf16.mxu0 0
      %1298 = vmatpush1.bf16.xpose.msra.mxu0 0
      %1299 = vmatprep.subr.bf16.mxu0 0
      %1300 = vmatpush1.bf16.xpose.msra.mxu0 0
      %1301 = vmatprep.subr.bf16.mxu0 0
      %1302 = vmatpush1.bf16.xpose.msra.mxu0 0
      %1303 = vmatprep.subr.bf16.mxu0 0
      %1304 = vmatpush1.bf16.xpose.msra.mxu0 0
      %1305 = vmatprep.subr.bf16.mxu0 0
      %1306 = vmatpush1.bf16.xpose.msra.mxu0 0
      %1307 = vmatprep.mubr.bf16.mxu0 0
      %1308 = vmatmul.mubr.bf16.gmra.mrb[0].mxu0 %v1270
      %v1309 = vpop.f32.mrb[0].mxu0
      %v1310 = vadd.f32 0.0, %v1309
      %v1311 = vpop.f32.mrb[0].mxu0
      %v1312 = vpop.f32.mrb[0].mxu0
      %v1313 = vadd.f32 0.0, %v1312
      %v1314 = vpop.f32.mrb[0].mxu0
      %1315 = vdwg.mxu0
      %v1316 = vsel %vm800, %v1310, -inf
      %1317 = vmax.xlane.f32.xlu0 %v1316
      %v1318 = vpop.xlane.xlu0 %1317
      %v1319 = vsel %vm800, %v1313, -inf
      %1320 = vmax.xlane.f32.xlu0 %v1319
      %v1321 = vpop.xlane.xlu0 %1320
      %v1322 = vsub.f32 %v1310, %v1318
      %v1323 = vsub.f32 %v1313, %v1321
      %v1324 = vmul.f32 %v1322, 1.442695
      %v1325 = vpow.pop %v1324
      %v1326 = vmul.f32 %v1323, 1.442695
      %v1327 = vpow.pop %v1326
      %v1328 = vsel %vm800, %v1325, 0.0
      %1329 = vadd.xlane.f32.xlu0 %v1328
      %v1330 = vpop.xlane.xlu0 %1329
      %v1331 = vsel %vm800, %v1327, 0.0
      %1332 = vadd.xlane.f32.xlu0 %v1331
      %v1333 = vpop.xlane.xlu0 %1332
      %v1334 = vrcp.pop %v1330
      %v1335 = vrcp.pop %v1333
      %v1336 = vmul.f32 %v1325, %v1334
      %v1337 = vmul.f32 %v1327, %v1335
      %v1338 = vpack.c.bf16 %v1337, %v1336
      %1339 = vrot.lane.b32.xlu0 %v751, 104
      %v1340 = vpop.permute.xlu0 %1339
      %v1343 = vsel %vm800, %v1338, 0
      %1345 = vmatprep.subr.bf16.mxu0 0
      %1346 = vmatpush1.bf16.msra.mxu0 %v1340
      %1347 = vmatprep.subr.bf16.mxu0 0
      %1348 = vmatpush1.bf16.msra.mxu0 0
      %1349 = vmatprep.subr.bf16.mxu0 0
      %1350 = vmatpush1.bf16.msra.mxu0 0
      %1351 = vmatprep.subr.bf16.mxu0 0
      %1352 = vmatpush1.bf16.msra.mxu0 0
      %1353 = vmatprep.subr.bf16.mxu0 0
      %1354 = vmatpush1.bf16.msra.mxu0 0
      %1355 = vmatprep.subr.bf16.mxu0 0
      %1356 = vmatpush1.bf16.msra.mxu0 0
      %1357 = vmatprep.subr.bf16.mxu0 0
      %1358 = vmatpush1.bf16.msra.mxu0 0
      %1359 = vmatprep.subr.bf16.mxu0 0
      %1360 = vmatpush1.bf16.msra.mxu0 0
      %1361 = vmatprep.subr.bf16.mxu0 0
      %1362 = vmatpush1.bf16.msra.mxu0 0
      %1363 = vmatprep.subr.bf16.mxu0 0
      %1364 = vmatpush1.bf16.msra.mxu0 0
      %1365 = vmatprep.subr.bf16.mxu0 0
      %1366 = vmatpush1.bf16.msra.mxu0 0
      %1367 = vmatprep.subr.bf16.mxu0 0
      %1368 = vmatpush1.bf16.msra.mxu0 0
      %1369 = vmatprep.subr.bf16.mxu0 0
      %1370 = vmatpush1.bf16.msra.mxu0 0
      %1371 = vmatprep.subr.bf16.mxu0 0
      %1372 = vmatpush1.bf16.msra.mxu0 0
      %1373 = vmatprep.subr.bf16.mxu0 0
      %1374 = vmatpush1.bf16.msra.mxu0 0
      %1375 = vmatprep.subr.bf16.mxu0 0
      %1376 = vmatpush1.bf16.msra.mxu0 0
      %1377 = vmatprep.mubr.bf16.mxu0 0
      %1378 = vmatmul.mubr.bf16.gmra.mrb[0].mxu0 %v1343
      %v1379 = vpop.f32.mrb[0].mxu0
      %v1380 = vadd.f32 0.0, %v1379
      %v1381 = vpop.f32.mrb[0].mxu0
      %v1382 = vpop.f32.mrb[0].mxu0
      %v1383 = vadd.f32 0.0, %v1382
      %v1384 = vpop.f32.mrb[0].mxu0
      %1385 = vdwg.mxu0
      %v1386 = vpack.c.bf16 %v1383, %v1380
      %s1387 = scalar_lea.vmem %s7, 12
      %v1388 = vld [vmem:[%s1387] sm:$0xf]
      %v1390 = vsel %vm752, %v1386, 0
      %v1393 = vsel %vm1000, %v1388, 0
      %1395 = vmatprep.subr.bf16.mxu0 0
      %1396 = vmatpush1.bf16.msra.mxu0 %v1393
      %1397 = vmatprep.subr.bf16.mxu0 0
      %1398 = vmatpush1.bf16.msra.mxu0 0
      %1399 = vmatprep.subr.bf16.mxu0 0
      %1400 = vmatpush1.bf16.msra.mxu0 0
      %1401 = vmatprep.subr.bf16.mxu0 0
      %1402 = vmatpush1.bf16.msra.mxu0 0
      %1403 = vmatprep.subr.bf16.mxu0 0
      %1404 = vmatpush1.bf16.msra.mxu0 0
      %1405 = vmatprep.subr.bf16.mxu0 0
      %1406 = vmatpush1.bf16.msra.mxu0 0
      %1407 = vmatprep.subr.bf16.mxu0 0
      %1408 = vmatpush1.bf16.msra.mxu0 0
      %1409 = vmatprep.subr.bf16.mxu0 0
      %1410 = vmatpush1.bf16.msra.mxu0 0
      %1411 = vmatprep.subr.bf16.mxu0 0
      %1412 = vmatpush1.bf16.msra.mxu0 0
      %1413 = vmatprep.subr.bf16.mxu0 0
      %1414 = vmatpush1.bf16.msra.mxu0 0
      %1415 = vmatprep.subr.bf16.mxu0 0
      %1416 = vmatpush1.bf16.msra.mxu0 0
      %1417 = vmatprep.subr.bf16.mxu0 0
      %1418 = vmatpush1.bf16.msra.mxu0 0
      %1419 = vmatprep.subr.bf16.mxu0 0
      %1420 = vmatpush1.bf16.msra.mxu0 0
      %1421 = vmatprep.subr.bf16.mxu0 0
      %1422 = vmatpush1.bf16.msra.mxu0 0
      %1423 = vmatprep.subr.bf16.mxu0 0
      %1424 = vmatpush1.bf16.msra.mxu0 0
      %1425 = vmatprep.subr.bf16.mxu0 0
      %1426 = vmatpush1.bf16.msra.mxu0 0
      %1427 = vmatprep.mubr.bf16.mxu0 0
      %1428 = vmatmul.mubr.bf16.gmra.mrb[0].mxu0 %v1390
      %v1429 = vpop.f32.mrb[0].mxu0
      %v1430 = vadd.f32 0.0, %v1429
      %v1431 = vpop.f32.mrb[0].mxu0
      %v1432 = vpop.f32.mrb[0].mxu0
      %v1433 = vadd.f32 0.0, %v1432
      %v1434 = vpop.f32.mrb[0].mxu0
      %1435 = vdwg.mxu0
      %v1436 = vadd.f32 %v1263, %v1430
      %v1437 = vadd.f32 %v1264, %v1433
      %v1438 = vld [vmem:[%s8] sm:$0x1]
      %v1440 = vlaneseq
      %v1441 = vshrl.u32 %v1440, 7
      %v1442 = vsub.s32 0, %v1441
      %v1443 = vrot.slane %v1438, %v1442
      %v1445 = vadd.f32 %v1436, %v1443
      %v1446 = vadd.f32 %v1437, %v1443
      %v1447 = vadd.f32 %v550, %v1445
      %v1448 = vadd.f32 %v551, %v1446
      %v1449 = vld [vmem:[%s13] sm:$0x1]
      %v1450 = vld [vmem:[%s14] sm:$0x1]
      %v1451 = vsel %vm576, %v1447, 0.0
      %1452 = vadd.xlane.f32.xlu0 %v1451
      %v1453 = vpop.xlane.xlu0 %1452
      %v1454 = vsel %vm576, %v1448, 0.0
      %1455 = vadd.xlane.f32.xlu0 %v1454
      %v1456 = vpop.xlane.xlu0 %1455
      %v1457 = vrcp.pop 32.0
      %v1458 = vmul.f32 %v1453, %v1457
      %v1459 = vmul.f32 %v1456, %v1457
      %v1460 = vsub.f32 %v1447, %v1458
      %v1461 = vsub.f32 %v1448, %v1459
      %v1462 = vmul.f32 %v1460, %v1460
      %v1463 = vmul.f32 %v1461, %v1461
      %v1464 = vsel %vm576, %v1462, 0.0
      %1465 = vadd.xlane.f32.xlu0 %v1464
      %v1466 = vpop.xlane.xlu0 %1465
      %v1467 = vsel %vm576, %v1463, 0.0
      %1468 = vadd.xlane.f32.xlu0 %v1467
      %v1469 = vpop.xlane.xlu0 %1468
      %v1470 = vmul.f32 %v1466, %v1457
      %v1471 = vmul.f32 %v1469, %v1457
      %v1472 = vadd.f32 %v1470, 1e-05
      %v1473 = vadd.f32 %v1471, 1e-05
      %v1474 = vrsqrt.pop %v1472
      %v1475 = vrsqrt.pop %v1473
      %v1476 = vmul.f32 %v1460, %v1474
      %v1477 = vmul.f32 %v1461, %v1475
      %v1479 = vlaneseq
      %v1480 = vshrl.u32 %v1479, 7
      %v1481 = vsub.s32 0, %v1480
      %v1482 = vrot.slane %v1449, %v1481
      %v1484 = vmul.f32 %v1476, %v1482
      %v1485 = vmul.f32 %v1477, %v1482
      %v1487 = vlaneseq
      %v1488 = vshrl.u32 %v1487, 7
      %v1489 = vsub.s32 0, %v1488
      %v1490 = vrot.slane %v1450, %v1489
      %v1492 = vadd.f32 %v1484, %v1490
      %v1493 = vadd.f32 %v1485, %v1490
      %v1494 = vpack.c.bf16 %v1493, %v1492
      %v1495 = vld [vmem:[%s9] sm:$0xf]
      %v1496 = vld [vmem:[%s9 + $0x4] sm:$0xf]
      %v1497 = vld [vmem:[%s9 + $0x8] sm:$0xf]
      %v1498 = vld [vmem:[%s9 + $0xc] sm:$0xf]
      %v1499 = vld [vmem:[%s10] sm:$0x1]
      %v1501 = vlaneseq
      %v1502 = vshrl.u32 %v1501, 7
      %v1503 = vsub.s32 0, %v1502
      %v1504 = vrot.slane %v1499, %v1503
      %v1510 = vunpack.c.l.b16 %v1495
      %v1511 = vunpack.c.l.b16 %v1496
      %v1512 = vunpack.c.l.b16 %v1497
      %v1513 = vunpack.c.l.b16 %v1498
      %v1514 = vpack.c.b16 %v1511, %v1510
      %v1515 = vpack.c.b16 %v1513, %v1512
      %v1519 = vsel %vm576, %v1494, 0
      %1521 = vmatprep.subr.bf16.mxu0 0
      %1522 = vmatpush1.bf16.msra.mxu0 %v1514
      %1523 = vmatprep.subr.bf16.mxu0 0
      %1524 = vmatpush1.bf16.msra.mxu0 %v1515
      %1525 = vmatprep.subr.bf16.mxu0 0
      %1526 = vmatpush1.bf16.msra.mxu0 0
      %1527 = vmatprep.subr.bf16.mxu0 0
      %1528 = vmatpush1.bf16.msra.mxu0 0
      %1529 = vmatprep.subr.bf16.mxu0 0
      %1530 = vmatpush1.bf16.msra.mxu0 0
      %1531 = vmatprep.subr.bf16.mxu0 0
      %1532 = vmatpush1.bf16.msra.mxu0 0
      %1533 = vmatprep.subr.bf16.mxu0 0
      %1534 = vmatpush1.bf16.msra.mxu0 0
      %1535 = vmatprep.subr.bf16.mxu0 0
      %1536 = vmatpush1.bf16.msra.mxu0 0
      %1537 = vmatprep.subr.bf16.mxu0 0
      %1538 = vmatpush1.bf16.msra.mxu0 0
      %1539 = vmatprep.subr.bf16.mxu0 0
      %1540 = vmatpush1.bf16.msra.mxu0 0
      %1541 = vmatprep.subr.bf16.mxu0 0
      %1542 = vmatpush1.bf16.msra.mxu0 0
      %1543 = vmatprep.subr.bf16.mxu0 0
      %1544 = vmatpush1.bf16.msra.mxu0 0
      %1545 = vmatprep.subr.bf16.mxu0 0
      %1546 = vmatpush1.bf16.msra.mxu0 0
      %1547 = vmatprep.subr.bf16.mxu0 0
      %1548 = vmatpush1.bf16.msra.mxu0 0
      %1549 = vmatprep.subr.bf16.mxu0 0
      %1550 = vmatpush1.bf16.msra.mxu0 0
      %1551 = vmatprep.subr.bf16.mxu0 0
      %1552 = vmatpush1.bf16.msra.mxu0 0
      %1553 = vmatprep.mubr.bf16.mxu0 0
      %1554 = vmatmul.mubr.bf16.gmra.mrb[0].mxu0 %v1519
      %v1555 = vpop.f32.mrb[0].mxu0
      %v1556 = vadd.f32 %v1504, %v1555
      %v1557 = vpop.f32.mrb[0].mxu0
      %v1558 = vpop.f32.mrb[0].mxu0
      %v1559 = vadd.f32 %v1504, %v1558
      %v1560 = vpop.f32.mrb[0].mxu0
      %1561 = vdwg.mxu0
      %v1562 = vmax.f32 %v1556, 0.0
      %v1563 = vmax.f32 %v1559, 0.0
      %v1564 = vpack.c.bf16 %v1563, %v1562
      %v1565 = vld [vmem:[%s11] sm:$0xf]
      %v1566 = vld [vmem:[%s11 + $0x4] sm:$0xf]
      %v1567 = vld [vmem:[%s11 + $0x8] sm:$0xf]
      %v1568 = vld [vmem:[%s11 + $0xc] sm:$0xf]
      %v1569 = vld [vmem:[%s11 + $0x10] sm:$0xf]
      %v1570 = vld [vmem:[%s11 + $0x14] sm:$0xf]
      %v1571 = vld [vmem:[%s11 + $0x18] sm:$0xf]
      %v1572 = vld [vmem:[%s11 + $0x1c] sm:$0xf]
      %v1573 = vld [vmem:[%s11 + $0x20] sm:$0xf]
      %v1574 = vld [vmem:[%s11 + $0x24] sm:$0xf]
      %v1575 = vld [vmem:[%s11 + $0x28] sm:$0xf]
      %v1576 = vld [vmem:[%s11 + $0x2c] sm:$0xf]
      %v1577 = vld [vmem:[%s11 + $0x30] sm:$0xf]
      %v1578 = vld [vmem:[%s11 + $0x34] sm:$0xf]
      %v1579 = vld [vmem:[%s11 + $0x38] sm:$0xf]
      %v1580 = vld [vmem:[%s11 + $0x3c] sm:$0xf]
      %v1581 = vld [vmem:[%s12] sm:$0x1]
      %v1583 = vlaneseq
      %v1584 = vshrl.u32 %v1583, 7
      %v1585 = vsub.s32 0, %v1584
      %v1586 = vrot.slane %v1581, %v1585
      %v1604 = vunpack.c.l.b16 %v1565
      %v1605 = vunpack.c.l.b16 %v1566
      %v1606 = vunpack.c.l.b16 %v1567
      %v1607 = vunpack.c.l.b16 %v1568
      %v1608 = vunpack.c.l.b16 %v1569
      %v1609 = vunpack.c.l.b16 %v1570
      %v1610 = vunpack.c.l.b16 %v1571
      %v1611 = vunpack.c.l.b16 %v1572
      %v1612 = vunpack.c.l.b16 %v1573
      %v1613 = vunpack.c.l.b16 %v1574
      %v1614 = vunpack.c.l.b16 %v1575
      %v1615 = vunpack.c.l.b16 %v1576
      %v1616 = vunpack.c.l.b16 %v1577
      %v1617 = vunpack.c.l.b16 %v1578
      %v1618 = vunpack.c.l.b16 %v1579
      %v1619 = vunpack.c.l.b16 %v1580
      %v1620 = vpack.c.b16 %v1605, %v1604
      %v1621 = vpack.c.b16 %v1607, %v1606
      %v1622 = vpack.c.b16 %v1609, %v1608
      %v1623 = vpack.c.b16 %v1611, %v1610
      %v1624 = vpack.c.b16 %v1613, %v1612
      %v1625 = vpack.c.b16 %v1615, %v1614
      %v1626 = vpack.c.b16 %v1617, %v1616
      %v1627 = vpack.c.b16 %v1619, %v1618
      %1636 = vmatprep.subr.bf16.mxu0 0
      %1637 = vmatpush1.bf16.msra.mxu0 %v1620
      %1638 = vmatprep.subr.bf16.mxu0 0
      %1639 = vmatpush1.bf16.msra.mxu0 %v1621
      %1640 = vmatprep.subr.bf16.mxu0 0
      %1641 = vmatpush1.bf16.msra.mxu0 %v1622
      %1642 = vmatprep.subr.bf16.mxu0 0
      %1643 = vmatpush1.bf16.msra.mxu0 %v1623
      %1644 = vmatprep.subr.bf16.mxu0 0
      %1645 = vmatpush1.bf16.msra.mxu0 %v1624
      %1646 = vmatprep.subr.bf16.mxu0 0
      %1647 = vmatpush1.bf16.msra.mxu0 %v1625
      %1648 = vmatprep.subr.bf16.mxu0 0
      %1649 = vmatpush1.bf16.msra.mxu0 %v1626
      %1650 = vmatprep.subr.bf16.mxu0 0
      %1651 = vmatpush1.bf16.msra.mxu0 %v1627
      %1652 = vmatprep.subr.bf16.mxu0 0
      %1653 = vmatpush1.bf16.msra.mxu0 0
      %1654 = vmatprep.subr.bf16.mxu0 0
      %1655 = vmatpush1.bf16.msra.mxu0 0
      %1656 = vmatprep.subr.bf16.mxu0 0
      %1657 = vmatpush1.bf16.msra.mxu0 0
      %1658 = vmatprep.subr.bf16.mxu0 0
      %1659 = vmatpush1.bf16.msra.mxu0 0
      %1660 = vmatprep.subr.bf16.mxu0 0
      %1661 = vmatpush1.bf16.msra.mxu0 0
      %1662 = vmatprep.subr.bf16.mxu0 0
      %1663 = vmatpush1.bf16.msra.mxu0 0
      %1664 = vmatprep.subr.bf16.mxu0 0
      %1665 = vmatpush1.bf16.msra.mxu0 0
      %1666 = vmatprep.subr.bf16.mxu0 0
      %1667 = vmatpush1.bf16.msra.mxu0 0
      %1668 = vmatprep.mubr.bf16.mxu0 0
      %1669 = vmatmul.mubr.bf16.gmra.mrb[0].mxu0 %v1564
      %v1670 = vpop.f32.mrb[0].mxu0
      %v1671 = vadd.f32 %v1586, %v1670
      %v1672 = vpop.f32.mrb[0].mxu0
      %v1673 = vpop.f32.mrb[0].mxu0
      %v1674 = vadd.f32 %v1586, %v1673
      %v1675 = vpop.f32.mrb[0].mxu0
      %1676 = vdwg.mxu0
      %v1677 = vadd.f32 %v1492, %v1671
      %v1678 = vadd.f32 %v1493, %v1674
      %v1679 = vld [vmem:[%s15] sm:$0x1]
      %v1680 = vld [vmem:[%s16] sm:$0x1]
      %v1681 = vsel %vm576, %v1677, 0.0
      %1682 = vadd.xlane.f32.xlu0 %v1681
      %v1683 = vpop.xlane.xlu0 %1682
      %v1684 = vsel %vm576, %v1678, 0.0
      %1685 = vadd.xlane.f32.xlu0 %v1684
      %v1686 = vpop.xlane.xlu0 %1685
      %v1687 = vmul.f32 %v1683, %v1457
      %v1688 = vmul.f32 %v1686, %v1457
      %v1689 = vsub.f32 %v1677, %v1687
      %v1690 = vsub.f32 %v1678, %v1688
      %v1691 = vmul.f32 %v1689, %v1689
      %v1692 = vmul.f32 %v1690, %v1690
      %v1693 = vsel %vm576, %v1691, 0.0
      %1694 = vadd.xlane.f32.xlu0 %v1693
      %v1695 = vpop.xlane.xlu0 %1694
      %v1696 = vsel %vm576, %v1692, 0.0
      %1697 = vadd.xlane.f32.xlu0 %v1696
      %v1698 = vpop.xlane.xlu0 %1697
      %v1699 = vmul.f32 %v1695, %v1457
      %v1700 = vmul.f32 %v1698, %v1457
      %v1701 = vadd.f32 %v1699, 1e-05
      %v1702 = vadd.f32 %v1700, 1e-05
      %v1703 = vrsqrt.pop %v1701
      %v1704 = vrsqrt.pop %v1702
      %v1705 = vmul.f32 %v1689, %v1703
      %v1706 = vmul.f32 %v1690, %v1704
      %v1708 = vlaneseq
      %v1709 = vshrl.u32 %v1708, 7
      %v1710 = vsub.s32 0, %v1709
      %v1711 = vrot.slane %v1679, %v1710
      %v1713 = vmul.f32 %v1705, %v1711
      %v1714 = vmul.f32 %v1706, %v1711
      %v1716 = vlaneseq
      %v1717 = vshrl.u32 %v1716, 7
      %v1718 = vsub.s32 0, %v1717
      %v1719 = vrot.slane %v1680, %v1718
      %v1721 = vadd.f32 %v1713, %v1719
      %v1722 = vadd.f32 %v1714, %v1719
      %1723 = vst.msk [vmem:[%s548] sm:$0xff] %vm576, %v1721
      %1724 = vst.msk [vmem:[%s548 + $0x8] sm:$0xff] %vm576, %v1722
      %p1725 = scmp.lt.s32.totalorder %s28, 1
      %s1726 = scalar_select %p1725, %s28, 1
      %s1727 = smul.addr %s1726, 2
      %s1728 = smul.addr %s1727, 8
      %s1729 = scalar_lea.vmem %s17, %s1728
      // Predicated region
      $region89: #{encoder_forward.10} parent=87 // pred_check
        %p1730 = pneg %p408
      $region90: #{encoder_forward.10} parent=87 // pred_check_branch
        %1732 = sbr.rel (%p1730) target = $region92
      $region91: #{encoder_forward.10} parent=87 // pred_region
        _
      $region92: #{encoder_forward.10} parent=87 // pred_fallthru
        _
    $region88: #{encoder_forward.10} parent=5 // pred_fallthru
      _
    %p1733 = scmp.le.s32.totalorder 2, %s23
    // Predicated region
    $region93: #{encoder_forward.10} parent=5 // pred_check
      %p1734 = pneg %p1733
    $region94: #{encoder_forward.10} parent=5 // pred_check_branch
      %1736 = sbr.rel (%p1734) target = $region96
    $region95: #{encoder_forward.10} parent=5 // pred_region
      %s1737 = ssub.s32 %s23, 2
      // Predicated region
      $region97: #{encoder_forward.10} parent=95 // pred_check
        %p1738 = pneg %p414
      $region98: #{encoder_forward.10} parent=95 // pred_check_branch
        %1740 = sbr.rel (%p1738) target = $region100
      $region99: #{encoder_forward.10} parent=95 // pred_region
        %p1741 = scmp.lt.s32.totalorder %s29, 1
        %s1742 = scalar_select %p1741, %s29, 1
        %s1743 = smul.addr %s1742, 2
        %s1744 = smul.addr %s1743, 8
        %s1745 = scalar_lea.vmem %s17, %s1744
      $region100: #{encoder_forward.10} parent=95 // pred_fallthru
        _
    $region96: #{encoder_forward.10} parent=5 // pred_fallthru
      _
  $region6: #{encoder_forward.10} parent=0 // loop_footer
    %s27 = sadd.s32 1, %s23
  $region7: #{encoder_forward.10} parent=0 // loop_footer_branch
    %22 = sbr.rel target = $region3
  $region8: #{encoder_forward.10} parent=0 // loop_exit
    _

// kernel: encoder_forward.9
$region0: #{encoder_forward.9}
  #allocation0 [shape = 'u32[]', space=smem, size = 0x4, offset = 0x4, fixed_abs, tag = 'smem constant byte address 0x4 - core index']
  #allocation1 [shape = 'u32[144,128]{1,0:T(1,128)}', space=vmem, size = 0x12000, scoped, tag = 'internal scratch']
  %s0 = inlined_call_operand.vmem [shape: f32[2,16,32], index: 0, kind: input, shape index: {}]
  %s1 = inlined_call_operand.vmem [shape: f32[16,32], index: 1, kind: input, shape index: {}]
  %s2 = inlined_call_operand.vmem [shape: bf16[32,32], index: 2, kind: input, shape index: {}]
  %s3 = inlined_call_operand.vmem [shape: f32[1,32], index: 3, kind: input, shape index: {}]
  %s4 = inlined_call_operand.vmem [shape: bf16[32,32], index: 4, kind: input, shape index: {}]
  %s5 = inlined_call_operand.vmem [shape: f32[1,32], index: 5, kind: input, shape index: {}]
  %s6 = inlined_call_operand.vmem [shape: bf16[32,32], index: 6, kind: input, shape index: {}]
  %s7 = inlined_call_operand.vmem [shape: f32[1,32], index: 7, kind: input, shape index: {}]
  %s8 = inlined_call_operand.vmem [shape: bf16[4,8,32], index: 8, kind: input, shape index: {}]
  %s9 = inlined_call_operand.vmem [shape: f32[1,32], index: 9, kind: input, shape index: {}]
  %s10 = inlined_call_operand.vmem [shape: bf16[32,128], index: 10, kind: input, shape index: {}]
  %s11 = inlined_call_operand.vmem [shape: f32[1,128], index: 11, kind: input, shape index: {}]
  %s12 = inlined_call_operand.vmem [shape: bf16[128,32], index: 12, kind: input, shape index: {}]
  %s13 = inlined_call_operand.vmem [shape: f32[1,32], index: 13, kind: input, shape index: {}]
  %s14 = inlined_call_operand.vmem [shape: f32[1,32], index: 14, kind: input, shape index: {}]
  %s15 = inlined_call_operand.vmem [shape: f32[1,32], index: 15, kind: input, shape index: {}]
  %s16 = inlined_call_operand.vmem [shape: f32[1,32], index: 16, kind: input, shape index: {}]
  %s17 = inlined_call_operand.vmem [shape: f32[1,32], index: 17, kind: input, shape index: {}]
  %s18 = inlined_call_operand.vmem [shape: f32[2,16,32], index: 18, kind: output, shape index: {}]
  %s19 = sld [smem:[#allocation0]]
  $region105: #{encoder_forward.9} parent=0
    _
  %s21 = ssub.s32 1, %s19
  %s22 = scalar_select 0, %s21, %s19
  loop: start=0, step=1, limit=4
  $region2: #{encoder_forward.9} parent=0 // loop_pre_header
    _
  $region3: #{encoder_forward.9} parent=0 // loop_header
    %s24 = sphi 0, %s28
    %p25 = scmp.ge.s32.totalorder %s24, 4
    %s34 = sphi 0, %s36
    %s37 = sphi 0, %s34
    %s38 = sphi 0, %s37
    %s54 = sphi 0, %s38
    %s58 = sphi 0, %s58
    %s60 = sphi 0, %s58
    %s61 = sphi 0, %s60
    %s75 = sphi 0, %s61
    %s79 = sphi 0, %s79
    %s81 = sphi 0, %s79
    %s82 = sphi 0, %s81
    %s96 = sphi 0, %s82
    %s100 = sphi 0, %s100
    %s102 = sphi 0, %s100
    %s103 = sphi 0, %s102
    %s117 = sphi 0, %s103
    %s121 = sphi 0, %s121
    %s123 = sphi 0, %s121
    %s124 = sphi 0, %s123
    %s138 = sphi 0, %s124
    %s142 = sphi 0, %s142
    %s144 = sphi 0, %s142
    %s145 = sphi 0, %s144
    %s159 = sphi 0, %s145
    %s163 = sphi 0, %s163
    %s165 = sphi 0, %s163
    %s166 = sphi 0, %s165
    %s180 = sphi 0, %s166
    %s184 = sphi 0, %s184
    %s186 = sphi 0, %s184
    %s187 = sphi 0, %s186
    %s201 = sphi 0, %s187
    %s205 = sphi 0, %s205
    %s207 = sphi 0, %s205
    %s208 = sphi 0, %s207
    %s222 = sphi 0, %s208
    %s226 = sphi 0, %s226
    %s228 = sphi 0, %s226
    %s229 = sphi 0, %s228
    %s243 = sphi 0, %s229
    %s247 = sphi 0, %s247
    %s249 = sphi 0, %s247
    %s250 = sphi 0, %s249
    %s264 = sphi 0, %s250
    %s268 = sphi 0, %s268
    %s270 = sphi 0, %s268
    %s271 = sphi 0, %s270
    %s285 = sphi 0, %s271
    %s289 = sphi 0, %s289
    %s291 = sphi 0, %s289
    %s292 = sphi 0, %s291
    %s306 = sphi 0, %s292
    %s310 = sphi 0, %s310
    %s312 = sphi 0, %s310
    %s313 = sphi 0, %s312
    %s327 = sphi 0, %s313
    %s331 = sphi 0, %s331
    %s333 = sphi 0, %s331
    %s334 = sphi 0, %s333
    %s348 = sphi 0, %s334
    %s352 = sphi 0, %s352
    %s354 = sphi 0, %s352
    %s355 = sphi 0, %s354
    %s369 = sphi 0, %s355
    %s373 = sphi 0, %s373
    %s375 = sphi 0, %s373
    %s376 = sphi 0, %s375
    %s390 = sphi 0, %s376
    %s394 = sphi 0, %s394
    %s396 = sphi 0, %s394
    %s397 = sphi 0, %s396
    %s411 = sphi 0, %s397
    %s417 = sphi 0, %s419
    %s420 = sphi 0, %s417
    %s421 = sphi 0, %s420
    %s437 = sphi 0, %s421
  $region4: #{encoder_forward.9} parent=0 // loop_header_branch
    %27 = sbr.rel (%p25) target = $region8
  $region5: #{encoder_forward.9} parent=0 // loop_body
    %s29 = ssub.s32 %s24, 1
    %s30 = ssub.s32 %s24, 2
    %s31 = sadd.s32 %s24, 1
    %s32 = ssub.s32 %s24, %s31
    %p33 = scmp.eq.s32.totalorder %s32, 0
    %s35 = sadd.s32 %s34, 1
    %s36 = scalar_select %p33, %s34, %s35
    %p39 = pneg %p33
    %p40 = scmp.eq.s32.totalorder %s24, 1
    %p41 = por %p39, %p40
    %p42 = scmp.ne.s32.totalorder %s34, %s37
    %p43 = scmp.eq.s32.totalorder %s24, 0
    %p44 = por %p42, %p43
    %p45 = scmp.ne.s32.totalorder %s34, %s37
    %p46 = scmp.eq.s32.totalorder %s29, 1
    %p47 = por %p45, %p46
    %p48 = scmp.ne.s32.totalorder %s37, %s38
    %p49 = scmp.eq.s32.totalorder %s29, 0
    %p50 = por %p48, %p49
    %p51 = scmp.ne.s32.totalorder %s37, %s38
    %p52 = scmp.eq.s32.totalorder %s30, 1
    %p53 = por %p51, %p52
    %p55 = scmp.ne.s32.totalorder %s38, %s54
    %p56 = scmp.eq.s32.totalorder %s30, 0
    %p57 = por %p55, %p56
    %s59 = sadd.s32 %s58, 1
    %p62 = scmp.eq.s32.totalorder %s24, 1
    %p63 = scmp.ne.s32.totalorder %s58, %s60
    %p64 = scmp.eq.s32.totalorder %s24, 0
    %p65 = por %p63, %p64
    %p66 = scmp.ne.s32.totalorder %s58, %s60
    %p67 = scmp.eq.s32.totalorder %s29, 1
    %p68 = por %p66, %p67
    %p69 = scmp.ne.s32.totalorder %s60, %s61
    %p70 = scmp.eq.s32.totalorder %s29, 0
    %p71 = por %p69, %p70
    %p72 = scmp.ne.s32.totalorder %s60, %s61
    %p73 = scmp.eq.s32.totalorder %s30, 1
    %p74 = por %p72, %p73
    %p76 = scmp.ne.s32.totalorder %s61, %s75
    %p77 = scmp.eq.s32.totalorder %s30, 0
    %p78 = por %p76, %p77
    %s80 = sadd.s32 %s79, 1
    %p83 = scmp.eq.s32.totalorder %s24, 1
    %p84 = scmp.ne.s32.totalorder %s79, %s81
    %p85 = scmp.eq.s32.totalorder %s24, 0
    %p86 = por %p84, %p85
    %p87 = scmp.ne.s32.totalorder %s79, %s81
    %p88 = scmp.eq.s32.totalorder %s29, 1
    %p89 = por %p87, %p88
    %p90 = scmp.ne.s32.totalorder %s81, %s82
    %p91 = scmp.eq.s32.totalorder %s29, 0
    %p92 = por %p90, %p91
    %p93 = scmp.ne.s32.totalorder %s81, %s82
    %p94 = scmp.eq.s32.totalorder %s30, 1
    %p95 = por %p93, %p94
    %p97 = scmp.ne.s32.totalorder %s82, %s96
    %p98 = scmp.eq.s32.totalorder %s30, 0
    %p99 = por %p97, %p98
    %s101 = sadd.s32 %s100, 1
    %p104 = scmp.eq.s32.totalorder %s24, 1
    %p105 = scmp.ne.s32.totalorder %s100, %s102
    %p106 = scmp.eq.s32.totalorder %s24, 0
    %p107 = por %p105, %p106
    %p108 = scmp.ne.s32.totalorder %s100, %s102
    %p109 = scmp.eq.s32.totalorder %s29, 1
    %p110 = por %p108, %p109
    %p111 = scmp.ne.s32.totalorder %s102, %s103
    %p112 = scmp.eq.s32.totalorder %s29, 0
    %p113 = por %p111, %p112
    %p114 = scmp.ne.s32.totalorder %s102, %s103
    %p115 = scmp.eq.s32.totalorder %s30, 1
    %p116 = por %p114, %p115
    %p118 = scmp.ne.s32.totalorder %s103, %s117
    %p119 = scmp.eq.s32.totalorder %s30, 0
    %p120 = por %p118, %p119
    %s122 = sadd.s32 %s121, 1
    %p125 = scmp.eq.s32.totalorder %s24, 1
    %p126 = scmp.ne.s32.totalorder %s121, %s123
    %p127 = scmp.eq.s32.totalorder %s24, 0
    %p128 = por %p126, %p127
    %p129 = scmp.ne.s32.totalorder %s121, %s123
    %p130 = scmp.eq.s32.totalorder %s29, 1
    %p131 = por %p129, %p130
    %p132 = scmp.ne.s32.totalorder %s123, %s124
    %p133 = scmp.eq.s32.totalorder %s29, 0
    %p134 = por %p132, %p133
    %p135 = scmp.ne.s32.totalorder %s123, %s124
    %p136 = scmp.eq.s32.totalorder %s30, 1
    %p137 = por %p135, %p136
    %p139 = scmp.ne.s32.totalorder %s124, %s138
    %p140 = scmp.eq.s32.totalorder %s30, 0
    %p141 = por %p139, %p140
    %s143 = sadd.s32 %s142, 1
    %p146 = scmp.eq.s32.totalorder %s24, 1
    %p147 = scmp.ne.s32.totalorder %s142, %s144
    %p148 = scmp.eq.s32.totalorder %s24, 0
    %p149 = por %p147, %p148
    %p150 = scmp.ne.s32.totalorder %s142, %s144
    %p151 = scmp.eq.s32.totalorder %s29, 1
    %p152 = por %p150, %p151
    %p153 = scmp.ne.s32.totalorder %s144, %s145
    %p154 = scmp.eq.s32.totalorder %s29, 0
    %p155 = por %p153, %p154
    %p156 = scmp.ne.s32.totalorder %s144, %s145
    %p157 = scmp.eq.s32.totalorder %s30, 1
    %p158 = por %p156, %p157
    %p160 = scmp.ne.s32.totalorder %s145, %s159
    %p161 = scmp.eq.s32.totalorder %s30, 0
    %p162 = por %p160, %p161
    %s164 = sadd.s32 %s163, 1
    %p167 = scmp.eq.s32.totalorder %s24, 1
    %p168 = scmp.ne.s32.totalorder %s163, %s165
    %p169 = scmp.eq.s32.totalorder %s24, 0
    %p170 = por %p168, %p169
    %p171 = scmp.ne.s32.totalorder %s163, %s165
    %p172 = scmp.eq.s32.totalorder %s29, 1
    %p173 = por %p171, %p172
    %p174 = scmp.ne.s32.totalorder %s165, %s166
    %p175 = scmp.eq.s32.totalorder %s29, 0
    %p176 = por %p174, %p175
    %p177 = scmp.ne.s32.totalorder %s165, %s166
    %p178 = scmp.eq.s32.totalorder %s30, 1
    %p179 = por %p177, %p178
    %p181 = scmp.ne.s32.totalorder %s166, %s180
    %p182 = scmp.eq.s32.totalorder %s30, 0
    %p183 = por %p181, %p182
    %s185 = sadd.s32 %s184, 1
    %p188 = scmp.eq.s32.totalorder %s24, 1
    %p189 = scmp.ne.s32.totalorder %s184, %s186
    %p190 = scmp.eq.s32.totalorder %s24, 0
    %p191 = por %p189, %p190
    %p192 = scmp.ne.s32.totalorder %s184, %s186
    %p193 = scmp.eq.s32.totalorder %s29, 1
    %p194 = por %p192, %p193
    %p195 = scmp.ne.s32.totalorder %s186, %s187
    %p196 = scmp.eq.s32.totalorder %s29, 0
    %p197 = por %p195, %p196
    %p198 = scmp.ne.s32.totalorder %s186, %s187
    %p199 = scmp.eq.s32.totalorder %s30, 1
    %p200 = por %p198, %p199
    %p202 = scmp.ne.s32.totalorder %s187, %s201
    %p203 = scmp.eq.s32.totalorder %s30, 0
    %p204 = por %p202, %p203
    %s206 = sadd.s32 %s205, 1
    %p209 = scmp.eq.s32.totalorder %s24, 1
    %p210 = scmp.ne.s32.totalorder %s205, %s207
    %p211 = scmp.eq.s32.totalorder %s24, 0
    %p212 = por %p210, %p211
    %p213 = scmp.ne.s32.totalorder %s205, %s207
    %p214 = scmp.eq.s32.totalorder %s29, 1
    %p215 = por %p213, %p214
    %p216 = scmp.ne.s32.totalorder %s207, %s208
    %p217 = scmp.eq.s32.totalorder %s29, 0
    %p218 = por %p216, %p217
    %p219 = scmp.ne.s32.totalorder %s207, %s208
    %p220 = scmp.eq.s32.totalorder %s30, 1
    %p221 = por %p219, %p220
    %p223 = scmp.ne.s32.totalorder %s208, %s222
    %p224 = scmp.eq.s32.totalorder %s30, 0
    %p225 = por %p223, %p224
    %s227 = sadd.s32 %s226, 1
    %p230 = scmp.eq.s32.totalorder %s24, 1
    %p231 = scmp.ne.s32.totalorder %s226, %s228
    %p232 = scmp.eq.s32.totalorder %s24, 0
    %p233 = por %p231, %p232
    %p234 = scmp.ne.s32.totalorder %s226, %s228
    %p235 = scmp.eq.s32.totalorder %s29, 1
    %p236 = por %p234, %p235
    %p237 = scmp.ne.s32.totalorder %s228, %s229
    %p238 = scmp.eq.s32.totalorder %s29, 0
    %p239 = por %p237, %p238
    %p240 = scmp.ne.s32.totalorder %s228, %s229
    %p241 = scmp.eq.s32.totalorder %s30, 1
    %p242 = por %p240, %p241
    %p244 = scmp.ne.s32.totalorder %s229, %s243
    %p245 = scmp.eq.s32.totalorder %s30, 0
    %p246 = por %p244, %p245
    %s248 = sadd.s32 %s247, 1
    %p251 = scmp.eq.s32.totalorder %s24, 1
    %p252 = scmp.ne.s32.totalorder %s247, %s249
    %p253 = scmp.eq.s32.totalorder %s24, 0
    %p254 = por %p252, %p253
    %p255 = scmp.ne.s32.totalorder %s247, %s249
    %p256 = scmp.eq.s32.totalorder %s29, 1
    %p257 = por %p255, %p256
    %p258 = scmp.ne.s32.totalorder %s249, %s250
    %p259 = scmp.eq.s32.totalorder %s29, 0
    %p260 = por %p258, %p259
    %p261 = scmp.ne.s32.totalorder %s249, %s250
    %p262 = scmp.eq.s32.totalorder %s30, 1
    %p263 = por %p261, %p262
    %p265 = scmp.ne.s32.totalorder %s250, %s264
    %p266 = scmp.eq.s32.totalorder %s30, 0
    %p267 = por %p265, %p266
    %s269 = sadd.s32 %s268, 1
    %p272 = scmp.eq.s32.totalorder %s24, 1
    %p273 = scmp.ne.s32.totalorder %s268, %s270
    %p274 = scmp.eq.s32.totalorder %s24, 0
    %p275 = por %p273, %p274
    %p276 = scmp.ne.s32.totalorder %s268, %s270
    %p277 = scmp.eq.s32.totalorder %s29, 1
    %p278 = por %p276, %p277
    %p279 = scmp.ne.s32.totalorder %s270, %s271
    %p280 = scmp.eq.s32.totalorder %s29, 0
    %p281 = por %p279, %p280
    %p282 = scmp.ne.s32.totalorder %s270, %s271
    %p283 = scmp.eq.s32.totalorder %s30, 1
    %p284 = por %p282, %p283
    %p286 = scmp.ne.s32.totalorder %s271, %s285
    %p287 = scmp.eq.s32.totalorder %s30, 0
    %p288 = por %p286, %p287
    %s290 = sadd.s32 %s289, 1
    %p293 = scmp.eq.s32.totalorder %s24, 1
    %p294 = scmp.ne.s32.totalorder %s289, %s291
    %p295 = scmp.eq.s32.totalorder %s24, 0
    %p296 = por %p294, %p295
    %p297 = scmp.ne.s32.totalorder %s289, %s291
    %p298 = scmp.eq.s32.totalorder %s29, 1
    %p299 = por %p297, %p298
    %p300 = scmp.ne.s32.totalorder %s291, %s292
    %p301 = scmp.eq.s32.totalorder %s29, 0
    %p302 = por %p300, %p301
    %p303 = scmp.ne.s32.totalorder %s291, %s292
    %p304 = scmp.eq.s32.totalorder %s30, 1
    %p305 = por %p303, %p304
    %p307 = scmp.ne.s32.totalorder %s292, %s306
    %p308 = scmp.eq.s32.totalorder %s30, 0
    %p309 = por %p307, %p308
    %s311 = sadd.s32 %s310, 1
    %p314 = scmp.eq.s32.totalorder %s24, 1
    %p315 = scmp.ne.s32.totalorder %s310, %s312
    %p316 = scmp.eq.s32.totalorder %s24, 0
    %p317 = por %p315, %p316
    %p318 = scmp.ne.s32.totalorder %s310, %s312
    %p319 = scmp.eq.s32.totalorder %s29, 1
    %p320 = por %p318, %p319
    %p321 = scmp.ne.s32.totalorder %s312, %s313
    %p322 = scmp.eq.s32.totalorder %s29, 0
    %p323 = por %p321, %p322
    %p324 = scmp.ne.s32.totalorder %s312, %s313
    %p325 = scmp.eq.s32.totalorder %s30, 1
    %p326 = por %p324, %p325
    %p328 = scmp.ne.s32.totalorder %s313, %s327
    %p329 = scmp.eq.s32.totalorder %s30, 0
    %p330 = por %p328, %p329
    %s332 = sadd.s32 %s331, 1
    %p335 = scmp.eq.s32.totalorder %s24, 1
    %p336 = scmp.ne.s32.totalorder %s331, %s333
    %p337 = scmp.eq.s32.totalorder %s24, 0
    %p338 = por %p336, %p337
    %p339 = scmp.ne.s32.totalorder %s331, %s333
    %p340 = scmp.eq.s32.totalorder %s29, 1
    %p341 = por %p339, %p340
    %p342 = scmp.ne.s32.totalorder %s333, %s334
    %p343 = scmp.eq.s32.totalorder %s29, 0
    %p344 = por %p342, %p343
    %p345 = scmp.ne.s32.totalorder %s333, %s334
    %p346 = scmp.eq.s32.totalorder %s30, 1
    %p347 = por %p345, %p346
    %p349 = scmp.ne.s32.totalorder %s334, %s348
    %p350 = scmp.eq.s32.totalorder %s30, 0
    %p351 = por %p349, %p350
    %s353 = sadd.s32 %s352, 1
    %p356 = scmp.eq.s32.totalorder %s24, 1
    %p357 = scmp.ne.s32.totalorder %s352, %s354
    %p358 = scmp.eq.s32.totalorder %s24, 0
    %p359 = por %p357, %p358
    %p360 = scmp.ne.s32.totalorder %s352, %s354
    %p361 = scmp.eq.s32.totalorder %s29, 1
    %p362 = por %p360, %p361
    %p363 = scmp.ne.s32.totalorder %s354, %s355
    %p364 = scmp.eq.s32.totalorder %s29, 0
    %p365 = por %p363, %p364
    %p366 = scmp.ne.s32.totalorder %s354, %s355
    %p367 = scmp.eq.s32.totalorder %s30, 1
    %p368 = por %p366, %p367
    %p370 = scmp.ne.s32.totalorder %s355, %s369
    %p371 = scmp.eq.s32.totalorder %s30, 0
    %p372 = por %p370, %p371
    %s374 = sadd.s32 %s373, 1
    %p377 = scmp.eq.s32.totalorder %s24, 1
    %p378 = scmp.ne.s32.totalorder %s373, %s375
    %p379 = scmp.eq.s32.totalorder %s24, 0
    %p380 = por %p378, %p379
    %p381 = scmp.ne.s32.totalorder %s373, %s375
    %p382 = scmp.eq.s32.totalorder %s29, 1
    %p383 = por %p381, %p382
    %p384 = scmp.ne.s32.totalorder %s375, %s376
    %p385 = scmp.eq.s32.totalorder %s29, 0
    %p386 = por %p384, %p385
    %p387 = scmp.ne.s32.totalorder %s375, %s376
    %p388 = scmp.eq.s32.totalorder %s30, 1
    %p389 = por %p387, %p388
    %p391 = scmp.ne.s32.totalorder %s376, %s390
    %p392 = scmp.eq.s32.totalorder %s30, 0
    %p393 = por %p391, %p392
    %s395 = sadd.s32 %s394, 1
    %p398 = scmp.eq.s32.totalorder %s24, 1
    %p399 = scmp.ne.s32.totalorder %s394, %s396
    %p400 = scmp.eq.s32.totalorder %s24, 0
    %p401 = por %p399, %p400
    %p402 = scmp.ne.s32.totalorder %s394, %s396
    %p403 = scmp.eq.s32.totalorder %s29, 1
    %p404 = por %p402, %p403
    %p405 = scmp.ne.s32.totalorder %s396, %s397
    %p406 = scmp.eq.s32.totalorder %s29, 0
    %p407 = por %p405, %p406
    %p408 = scmp.ne.s32.totalorder %s396, %s397
    %p409 = scmp.eq.s32.totalorder %s30, 1
    %p410 = por %p408, %p409
    %p412 = scmp.ne.s32.totalorder %s397, %s411
    %p413 = scmp.eq.s32.totalorder %s30, 0
    %p414 = por %p412, %p413
    %s415 = ssub.s32 %s24, %s31
    %p416 = scmp.eq.s32.totalorder %s415, 0
    %s418 = sadd.s32 %s417, 1
    %s419 = scalar_select %p416, %s417, %s418
    %p422 = pneg %p416
    %p423 = scmp.eq.s32.totalorder %s24, 1
    %p424 = por %p422, %p423
    %p425 = scmp.ne.s32.totalorder %s417, %s420
    %p426 = scmp.eq.s32.totalorder %s24, 0
    %p427 = por %p425, %p426
    %p428 = scmp.ne.s32.totalorder %s417, %s420
    %p429 = scmp.eq.s32.totalorder %s29, 1
    %p430 = por %p428, %p429
    %p431 = scmp.ne.s32.totalorder %s420, %s421
    %p432 = scmp.eq.s32.totalorder %s29, 0
    %p433 = por %p431, %p432
    %p434 = scmp.ne.s32.totalorder %s420, %s421
    %p435 = scmp.eq.s32.totalorder %s30, 1
    %p436 = por %p434, %p435
    %p438 = scmp.ne.s32.totalorder %s421, %s437
    %p439 = scmp.eq.s32.totalorder %s30, 0
    %p440 = por %p438, %p439
    %p441 = scmp.le.s32.totalorder 1, %s24
    %p442 = scmp.lt.s32.totalorder %s24, 3
    %p443 = pnand %p441, %p442
    %p444 = pneg %p443
    // Predicated region
    $region9: #{encoder_forward.9} parent=5 // pred_check
      _
    $region10: #{encoder_forward.9} parent=5 // pred_check_branch
      %446 = sbr.rel (%p443) target = $region12
    $region11: #{encoder_forward.9} parent=5 // pred_region
      %s447 = ssub.s32 %s24, 1
      // Predicated region
      $region13: #{encoder_forward.9} parent=11 // pred_check
        %p448 = pneg %p71
      $region14: #{encoder_forward.9} parent=11 // pred_check_branch
        %450 = sbr.rel (%p448) target = $region16
      $region15: #{encoder_forward.9} parent=11 // pred_region
        _
      $region16: #{encoder_forward.9} parent=11 // pred_fallthru
        _
      // Predicated region
      $region17: #{encoder_forward.9} parent=11 // pred_check
        %p451 = pneg %p92
      $region18: #{encoder_forward.9} parent=11 // pred_check_branch
        %453 = sbr.rel (%p451) target = $region20
      $region19: #{encoder_forward.9} parent=11 // pred_region
        _
      $region20: #{encoder_forward.9} parent=11 // pred_fallthru
        _
      // Predicated region
      $region21: #{encoder_forward.9} parent=11 // pred_check
        %p454 = pneg %p113
      $region22: #{encoder_forward.9} parent=11 // pred_check_branch
        %456 = sbr.rel (%p454) target = $region24
      $region23: #{encoder_forward.9} parent=11 // pred_region
        _
      $region24: #{encoder_forward.9} parent=11 // pred_fallthru
        _
      // Predicated region
      $region25: #{encoder_forward.9} parent=11 // pred_check
        %p457 = pneg %p134
      $region26: #{encoder_forward.9} parent=11 // pred_check_branch
        %459 = sbr.rel (%p457) target = $region28
      $region27: #{encoder_forward.9} parent=11 // pred_region
        _
      $region28: #{encoder_forward.9} parent=11 // pred_fallthru
        _
      // Predicated region
      $region29: #{encoder_forward.9} parent=11 // pred_check
        %p460 = pneg %p155
      $region30: #{encoder_forward.9} parent=11 // pred_check_branch
        %462 = sbr.rel (%p460) target = $region32
      $region31: #{encoder_forward.9} parent=11 // pred_region
        _
      $region32: #{encoder_forward.9} parent=11 // pred_fallthru
        _
      // Predicated region
      $region33: #{encoder_forward.9} parent=11 // pred_check
        %p463 = pneg %p176
      $region34: #{encoder_forward.9} parent=11 // pred_check_branch
        %465 = sbr.rel (%p463) target = $region36
      $region35: #{encoder_forward.9} parent=11 // pred_region
        _
      $region36: #{encoder_forward.9} parent=11 // pred_fallthru
        _
      // Predicated region
      $region37: #{encoder_forward.9} parent=11 // pred_check
        %p466 = pneg %p197
      $region38: #{encoder_forward.9} parent=11 // pred_check_branch
        %468 = sbr.rel (%p466) target = $region40
      $region39: #{encoder_forward.9} parent=11 // pred_region
        _
      $region40: #{encoder_forward.9} parent=11 // pred_fallthru
        _
      // Predicated region
      $region41: #{encoder_forward.9} parent=11 // pred_check
        %p469 = pneg %p218
      $region42: #{encoder_forward.9} parent=11 // pred_check_branch
        %471 = sbr.rel (%p469) target = $region44
      $region43: #{encoder_forward.9} parent=11 // pred_region
        _
      $region44: #{encoder_forward.9} parent=11 // pred_fallthru
        _
      // Predicated region
      $region45: #{encoder_forward.9} parent=11 // pred_check
        %p472 = pneg %p239
      $region46: #{encoder_forward.9} parent=11 // pred_check_branch
        %474 = sbr.rel (%p472) target = $region48
      $region47: #{encoder_forward.9} parent=11 // pred_region
        _
      $region48: #{encoder_forward.9} parent=11 // pred_fallthru
        _
      // Predicated region
      $region49: #{encoder_forward.9} parent=11 // pred_check
        %p475 = pneg %p260
      $region50: #{encoder_forward.9} parent=11 // pred_check_branch
        %477 = sbr.rel (%p475) target = $region52
      $region51: #{encoder_forward.9} parent=11 // pred_region
        _
      $region52: #{encoder_forward.9} parent=11 // pred_fallthru
        _
      // Predicated region
      $region53: #{encoder_forward.9} parent=11 // pred_check
        %p478 = pneg %p281
      $region54: #{encoder_forward.9} parent=11 // pred_check_branch
        %480 = sbr.rel (%p478) target = $region56
      $region55: #{encoder_forward.9} parent=11 // pred_region
        _
      $region56: #{encoder_forward.9} parent=11 // pred_fallthru
        _
      // Predicated region
      $region57: #{encoder_forward.9} parent=11 // pred_check
        %p481 = pneg %p302
      $region58: #{encoder_forward.9} parent=11 // pred_check_branch
        %483 = sbr.rel (%p481) target = $region60
      $region59: #{encoder_forward.9} parent=11 // pred_region
        _
      $region60: #{encoder_forward.9} parent=11 // pred_fallthru
        _
      // Predicated region
      $region61: #{encoder_forward.9} parent=11 // pred_check
        %p484 = pneg %p323
      $region62: #{encoder_forward.9} parent=11 // pred_check_branch
        %486 = sbr.rel (%p484) target = $region64
      $region63: #{encoder_forward.9} parent=11 // pred_region
        _
      $region64: #{encoder_forward.9} parent=11 // pred_fallthru
        _
      // Predicated region
      $region65: #{encoder_forward.9} parent=11 // pred_check
        %p487 = pneg %p344
      $region66: #{encoder_forward.9} parent=11 // pred_check_branch
        %489 = sbr.rel (%p487) target = $region68
      $region67: #{encoder_forward.9} parent=11 // pred_region
        _
      $region68: #{encoder_forward.9} parent=11 // pred_fallthru
        _
      // Predicated region
      $region69: #{encoder_forward.9} parent=11 // pred_check
        %p490 = pneg %p365
      $region70: #{encoder_forward.9} parent=11 // pred_check_branch
        %492 = sbr.rel (%p490) target = $region72
      $region71: #{encoder_forward.9} parent=11 // pred_region
        _
      $region72: #{encoder_forward.9} parent=11 // pred_fallthru
        _
      // Predicated region
      $region73: #{encoder_forward.9} parent=11 // pred_check
        %p493 = pneg %p386
      $region74: #{encoder_forward.9} parent=11 // pred_check_branch
        %495 = sbr.rel (%p493) target = $region76
      $region75: #{encoder_forward.9} parent=11 // pred_region
        _
      $region76: #{encoder_forward.9} parent=11 // pred_fallthru
        _
      // Predicated region
      $region77: #{encoder_forward.9} parent=11 // pred_check
        %p496 = pneg %p407
      $region78: #{encoder_forward.9} parent=11 // pred_check_branch
        %498 = sbr.rel (%p496) target = $region80
      $region79: #{encoder_forward.9} parent=11 // pred_region
        _
      $region80: #{encoder_forward.9} parent=11 // pred_fallthru
        _
    $region12: #{encoder_forward.9} parent=5 // pred_fallthru
      _
    %p499 = scmp.lt.s32.totalorder %s24, 2
    // Predicated region
    $region81: #{encoder_forward.9} parent=5 // pred_check
      %p500 = pneg %p499
    $region82: #{encoder_forward.9} parent=5 // pred_check_branch
      %502 = sbr.rel (%p500) target = $region84
    $region83: #{encoder_forward.9} parent=5 // pred_region
      // Predicated region
      $region85: #{encoder_forward.9} parent=83 // pred_check
        %p503 = pneg %p44
      $region86: #{encoder_forward.9} parent=83 // pred_check_branch
        %505 = sbr.rel (%p503) target = $region88
      $region87: #{encoder_forward.9} parent=83 // pred_region
        %p506 = scmp.lt.s32.totalorder %s24, 1
        %s507 = scalar_select %p506, %s24, 1
        %s508 = smul.addr %s507, 2
        %s509 = smul.addr %s508, 8
        %s510 = scalar_lea.vmem %s0, %s509
      $region88: #{encoder_forward.9} parent=83 // pred_fallthru
        _
    $region84: #{encoder_forward.9} parent=5 // pred_fallthru
      _
    %p511 = scmp.le.s32.totalorder 1, %s24
    %p512 = scmp.lt.s32.totalorder %s24, 3
    %p513 = pnand %p511, %p512
    %p514 = pneg %p513
    // Predicated region
    $region89: #{encoder_forward.9} parent=5 // pred_check
      _
    $region90: #{encoder_forward.9} parent=5 // pred_check_branch
      %516 = sbr.rel (%p513) target = $region92
    $region91: #{encoder_forward.9} parent=5 // pred_region
      %s517 = ssub.s32 %s24, 1
      %p518 = scmp.lt.s32.totalorder %s29, 1
      %s519 = scalar_select %p518, %s29, 1
      %s520 = smul.addr %s519, 2
      %s521 = smul.addr %s520, 8
      %s522 = scalar_lea.vmem %s0, %s521
      %p523 = pneg %p50
      %p524 = pneg %p47
      %p525 = pneg %p71
      %p526 = pneg %p68
      %p527 = pneg %p92
      %p528 = pneg %p89
      %p529 = pneg %p113
      %p530 = pneg %p110
      %p531 = pneg %p134
      %p532 = pneg %p131
      %p533 = pneg %p155
      %p534 = pneg %p152
      %p535 = pneg %p176
      %p536 = pneg %p173
      %p537 = pneg %p197
      %p538 = pneg %p194
      %p539 = pneg %p218
      %p540 = pneg %p215
      %p541 = pneg %p239
      %p542 = pneg %p236
      %p543 = pneg %p260
      %p544 = pneg %p257
      %p545 = pneg %p281
      %p546 = pneg %p278
      %p547 = pneg %p302
      %p548 = pneg %p299
      %p549 = pneg %p323
      %p550 = pneg %p320
      %p551 = pneg %p344
      %p552 = pneg %p341
      %p553 = pneg %p365
      %p554 = pneg %p362
      %p555 = pneg %p386
      %p556 = pneg %p383
      %p557 = pneg %p407
      %p558 = pneg %p404
      %p559 = pneg %p433
      %p560 = pneg %p430
      %p561 = scmp.lt.s32.totalorder %s29, 1
      %s562 = scalar_select %p561, %s29, 1
      %s563 = smul.addr %s562, 2
      %s564 = smul.addr %s563, 8
      %s565 = scalar_lea.vmem %s18, %s564
      %p566 = scmp.lt.s32.totalorder %s29, 1
      %s567 = scalar_select %p566, %s29, 1
      %s568 = smul.addr %s567, 2
      %s569 = smul.addr %s568, 8
      %s570 = scalar_lea.vmem %s0, %s569
      %p571 = scmp.lt.s32.totalorder %s29, 1
      %s572 = scalar_select %p571, %s29, 1
      %s573 = smul.addr %s572, 2
      %s574 = smul.addr %s573, 8
      %s575 = scalar_lea.vmem %s18, %s574
      %v577 = vld [vmem:[%s570] sm:$0xff]
      %v578 = vld [vmem:[%s570 + $0x8] sm:$0xff]
      %v579 = vld [vmem:[%s1] sm:$0xff]
      %v580 = vld [vmem:[%s1 + $0x8] sm:$0xff]
      %v581 = vadd.f32 %v577, %v579
      %v582 = vadd.f32 %v578, %v580
      %v583 = vpack.c.bf16 %v582, %v581
      %v584 = vld [vmem:[%s2] sm:$0xf]
      %v585 = vld [vmem:[%s2 + $0x4] sm:$0xf]
      %v586 = vld [vmem:[%s2 + $0x8] sm:$0xf]
      %v587 = vld [vmem:[%s2 + $0xc] sm:$0xf]
      %v588 = vld [vmem:[%s3] sm:$0x1]
      %v590 = vlaneseq
      %v591 = vshrl.u32 %v590, 7
      %v592 = vsub.s32 0, %v591
      %v593 = vrot.slane %v588, %v592
      %v599 = vunpack.c.l.b16 %v584
      %v600 = vunpack.c.l.b16 %v585
      %v601 = vunpack.c.l.b16 %v586
      %v602 = vunpack.c.l.b16 %v587
      %v603 = vpack.c.b16 %v600, %v599
      %v604 = vpack.c.b16 %v602, %v601
      %vm607 = vcmask 261120
      %v609 = vsel %vm607, %v583, 0
      %611 = vmatprep.subr.bf16.mxu0 0
      %612 = vmatpush1.bf16.msra.mxu0 %v603
      %613 = vmatprep.subr.bf16.mxu0 0
      %614 = vmatpush1.bf16.msra.mxu0 %v604
      %615 = vmatprep.subr.bf16.mxu0 0
      %616 = vmatpush1.bf16.msra.mxu0 0
      %617 = vmatprep.subr.bf16.mxu0 0
      %618 = vmatpush1.bf16.msra.mxu0 0
      %619 = vmatprep.subr.bf16.mxu0 0
      %620 = vmatpush1.bf16.msra.mxu0 0
      %621 = vmatprep.subr.bf16.mxu0 0
      %622 = vmatpush1.bf16.msra.mxu0 0
      %623 = vmatprep.subr.bf16.mxu0 0
      %624 = vmatpush1.bf16.msra.mxu0 0
      %625 = vmatprep.subr.bf16.mxu0 0
      %626 = vmatpush1.bf16.msra.mxu0 0
      %627 = vmatprep.subr.bf16.mxu0 0
      %628 = vmatpush1.bf16.msra.mxu0 0
      %629 = vmatprep.subr.bf16.mxu0 0
      %630 = vmatpush1.bf16.msra.mxu0 0
      %631 = vmatprep.subr.bf16.mxu0 0
      %632 = vmatpush1.bf16.msra.mxu0 0
      %633 = vmatprep.subr.bf16.mxu0 0
      %634 = vmatpush1.bf16.msra.mxu0 0
      %635 = vmatprep.subr.bf16.mxu0 0
      %636 = vmatpush1.bf16.msra.mxu0 0
      %637 = vmatprep.subr.bf16.mxu0 0
      %638 = vmatpush1.bf16.msra.mxu0 0
      %639 = vmatprep.subr.bf16.mxu0 0
      %640 = vmatpush1.bf16.msra.mxu0 0
      %641 = vmatprep.subr.bf16.mxu0 0
      %642 = vmatpush1.bf16.msra.mxu0 0
      %643 = vmatprep.mubr.bf16.mxu0 0
      %644 = vmatmul.mubr.bf16.gmra.mrb[0].mxu0 %v609
      %v645 = vpop.f32.mrb[0].mxu0
      %v646 = vadd.f32 %v593, %v645
      %v647 = vpop.f32.mrb[0].mxu0
      %v648 = vpop.f32.mrb[0].mxu0
      %v649 = vadd.f32 %v593, %v648
      %v650 = vpop.f32.mrb[0].mxu0
      %651 = vdwg.mxu0
      %v652 = vpack.c.bf16 %v649, %v646
      %v653 = vld [vmem:[%s4] sm:$0xf]
      %v654 = vld [vmem:[%s4 + $0x4] sm:$0xf]
      %v655 = vld [vmem:[%s4 + $0x8] sm:$0xf]
      %v656 = vld [vmem:[%s4 + $0xc] sm:$0xf]
      %v657 = vld [vmem:[%s5] sm:$0x1]
      %v659 = vlaneseq
      %v660 = vshrl.u32 %v659, 7
      %v661 = vsub.s32 0, %v660
      %v662 = vrot.slane %v657, %v661
      %v668 = vunpack.c.l.b16 %v653
      %v669 = vunpack.c.l.b16 %v654
      %v670 = vunpack.c.l.b16 %v655
      %v671 = vunpack.c.l.b16 %v656
      %v672 = vpack.c.b16 %v669, %v668
      %v673 = vpack.c.b16 %v671, %v670
      %676 = vmatprep.subr.bf16.mxu0 0
      %677 = vmatpush1.bf16.msra.mxu0 %v672
      %678 = vmatprep.subr.bf16.mxu0 0
      %679 = vmatpush1.bf16.msra.mxu0 %v673
      %680 = vmatprep.subr.bf16.mxu0 0
      %681 = vmatpush1.bf16.msra.mxu0 0
      %682 = vmatprep.subr.bf16.mxu0 0
      %683 = vmatpush1.bf16.msra.mxu0 0
      %684 = vmatprep.subr.bf16.mxu0 0
      %685 = vmatpush1.bf16.msra.mxu0 0
      %686 = vmatprep.subr.bf16.mxu0 0
      %687 = vmatpush1.bf16.msra.mxu0 0
      %688 = vmatprep.subr.bf16.mxu0 0
      %689 = vmatpush1.bf16.msra.mxu0 0
      %690 = vmatprep.subr.bf16.mxu0 0
      %691 = vmatpush1.bf16.msra.mxu0 0
      %692 = vmatprep.subr.bf16.mxu0 0
      %693 = vmatpush1.bf16.msra.mxu0 0
      %694 = vmatprep.subr.bf16.mxu0 0
      %695 = vmatpush1.bf16.msra.mxu0 0
      %696 = vmatprep.subr.bf16.mxu0 0
      %697 = vmatpush1.bf16.msra.mxu0 0
      %698 = vmatprep.subr.bf16.mxu0 0
      %699 = vmatpush1.bf16.msra.mxu0 0
      %700 = vmatprep.subr.bf16.mxu0 0
      %701 = vmatpush1.bf16.msra.mxu0 0
      %702 = vmatprep.subr.bf16.mxu0 0
      %703 = vmatpush1.bf16.msra.mxu0 0
      %704 = vmatprep.subr.bf16.mxu0 0
      %705 = vmatpush1.bf16.msra.mxu0 0
      %706 = vmatprep.subr.bf16.mxu0 0
      %707 = vmatpush1.bf16.msra.mxu0 0
      %708 = vmatprep.mubr.bf16.mxu0 0
      %709 = vmatmul.mubr.bf16.gmra.mrb[0].mxu0 %v609
      %v710 = vpop.f32.mrb[0].mxu0
      %v711 = vadd.f32 %v662, %v710
      %v712 = vpop.f32.mrb[0].mxu0
      %v713 = vpop.f32.mrb[0].mxu0
      %v714 = vadd.f32 %v662, %v713
      %v715 = vpop.f32.mrb[0].mxu0
      %716 = vdwg.mxu0
      %v717 = vpack.c.bf16 %v714, %v711
      %v718 = vld [vmem:[%s6] sm:$0xf]
      %v719 = vld [vmem:[%s6 + $0x4] sm:$0xf]
      %v720 = vld [vmem:[%s6 + $0x8] sm:$0xf]
      %v721 = vld [vmem:[%s6 + $0xc] sm:$0xf]
      %v722 = vld [vmem:[%s7] sm:$0x1]
      %v724 = vlaneseq
      %v725 = vshrl.u32 %v724, 7
      %v726 = vsub.s32 0, %v725
      %v727 = vrot.slane %v722, %v726
      %v733 = vunpack.c.l.b16 %v718
      %v734 = vunpack.c.l.b16 %v719
      %v735 = vunpack.c.l.b16 %v720
      %v736 = vunpack.c.l.b16 %v721
      %v737 = vpack.c.b16 %v734, %v733
      %v738 = vpack.c.b16 %v736, %v735
      %741 = vmatprep.subr.bf16.mxu0 0
      %742 = vmatpush1.bf16.msra.mxu0 %v737
      %743 = vmatprep.subr.bf16.mxu0 0
      %744 = vmatpush1.bf16.msra.mxu0 %v738
      %745 = vmatprep.subr.bf16.mxu0 0
      %746 = vmatpush1.bf16.msra.mxu0 0
      %747 = vmatprep.subr.bf16.mxu0 0
      %748 = vmatpush1.bf16.msra.mxu0 0
      %749 = vmatprep.subr.bf16.mxu0 0
      %750 = vmatpush1.bf16.msra.mxu0 0
      %751 = vmatprep.subr.bf16.mxu0 0
      %752 = vmatpush1.bf16.msra.mxu0 0
      %753 = vmatprep.subr.bf16.mxu0 0
      %754 = vmatpush1.bf16.msra.mxu0 0
      %755 = vmatprep.subr.bf16.mxu0 0
      %756 = vmatpush1.bf16.msra.mxu0 0
      %757 = vmatprep.subr.bf16.mxu0 0
      %758 = vmatpush1.bf16.msra.mxu0 0
      %759 = vmatprep.subr.bf16.mxu0 0
      %760 = vmatpush1.bf16.msra.mxu0 0
      %761 = vmatprep.subr.bf16.mxu0 0
      %762 = vmatpush1.bf16.msra.mxu0 0
      %763 = vmatprep.subr.bf16.mxu0 0
      %764 = vmatpush1.bf16.msra.mxu0 0
      %765 = vmatprep.subr.bf16.mxu0 0
      %766 = vmatpush1.bf16.msra.mxu0 0
      %767 = vmatprep.subr.bf16.mxu0 0
      %768 = vmatpush1.bf16.msra.mxu0 0
      %769 = vmatprep.subr.bf16.mxu0 0
      %770 = vmatpush1.bf16.msra.mxu0 0
      %771 = vmatprep.subr.bf16.mxu0 0
      %772 = vmatpush1.bf16.msra.mxu0 0
      %773 = vmatprep.mubr.bf16.mxu0 0
      %774 = vmatmul.mubr.bf16.gmra.mrb[0].mxu0 %v609
      %v775 = vpop.f32.mrb[0].mxu0
      %v776 = vadd.f32 %v727, %v775
      %v777 = vpop.f32.mrb[0].mxu0
      %v778 = vpop.f32.mrb[0].mxu0
      %v779 = vadd.f32 %v727, %v778
      %v780 = vpop.f32.mrb[0].mxu0
      %781 = vdwg.mxu0
      %v782 = vpack.c.bf16 %v779, %v776
      %vm783 = vcmask 64512
      %v785 = vsel %vm783, %v652, 0
      %v788 = vsel %vm783, %v717, 0
      %790 = vmatprep.subr.bf16.mxu0 0
      %791 = vmatpush1.bf16.xpose.msra.mxu0 %v788
      %792 = vmatprep.subr.bf16.mxu0 0
      %793 = vmatpush1.bf16.xpose.msra.mxu0 0
      %794 = vmatprep.subr.bf16.mxu0 0
      %795 = vmatpush1.bf16.xpose.msra.mxu0 0
      %796 = vmatprep.subr.bf16.mxu0 0
      %797 = vmatpush1.bf16.xpose.msra.mxu0 0
      %798 = vmatprep.subr.bf16.mxu0 0
      %799 = vmatpush1.bf16.xpose.msra.mxu0 0
      %800 = vmatprep.subr.bf16.mxu0 0
      %801 = vmatpush1.bf16.xpose.msra.mxu0 0
      %802 = vmatprep.subr.bf16.mxu0 0
      %803 = vmatpush1.bf16.xpose.msra.mxu0 0
      %804 = vmatprep.subr.bf16.mxu0 0
      %805 = vmatpush1.bf16.xpose.msra.mxu0 0
      %806 = vmatprep.subr.bf16.mxu0 0
      %807 = vmatpush1.bf16.xpose.msra.mxu0 0
      %808 = vmatprep.subr.bf16.mxu0 0
      %809 = vmatpush1.bf16.xpose.msra.mxu0 0
      %810 = vmatprep.subr.bf16.mxu0 0
      %811 = vmatpush1.bf16.xpose.msra.mxu0 0
      %812 = vmatprep.subr.bf16.mxu0 0
      %813 = vmatpush1.bf16.xpose.msra.mxu0 0
      %814 = vmatprep.subr.bf16.mxu0 0
      %815 = vmatpush1.bf16.xpose.msra.mxu0 0
      %816 = vmatprep.subr.bf16.mxu0 0
      %817 = vmatpush1.bf16.xpose.msra.mxu0 0
      %818 = vmatprep.subr.bf16.mxu0 0
      %819 = vmatpush1.bf16.xpose.msra.mxu0 0
      %820 = vmatprep.subr.bf16.mxu0 0
      %821 = vmatpush1.bf16.xpose.msra.mxu0 0
      %822 = vmatprep.mubr.bf16.mxu0 0
      %823 = vmatmul.mubr.bf16.gmra.mrb[0].mxu0 %v785
      %v824 = vpop.f32.mrb[0].mxu0
      %v825 = vadd.f32 0.0, %v824
      %v826 = vpop.f32.mrb[0].mxu0
      %v827 = vpop.f32.mrb[0].mxu0
      %v828 = vadd.f32 0.0, %v827
      %v829 = vpop.f32.mrb[0].mxu0
      %830 = vdwg.mxu0
      %vm831 = vcmask 130048
      %v832 = vsel %vm831, %v825, -inf
      %833 = vmax.xlane.f32.xlu0 %v832
      %v834 = vpop.xlane.xlu0 %833
      %v835 = vsel %vm831, %v828, -inf
      %836 = vmax.xlane.f32.xlu0 %v835
      %v837 = vpop.xlane.xlu0 %836
      %v838 = vsub.f32 %v825, %v834
      %v839 = vsub.f32 %v828, %v837
      %v840 = vmul.f32 %v838, 1.442695
      %v841 = vpow.pop %v840
      %v842 = vmul.f32 %v839, 1.442695
      %v843 = vpow.pop %v842
      %v844 = vsel %vm831, %v841, 0.0
      %845 = vadd.xlane.f32.xlu0 %v844
      %v846 = vpop.xlane.xlu0 %845
      %v847 = vsel %vm831, %v843, 0.0
      %848 = vadd.xlane.f32.xlu0 %v847
      %v849 = vpop.xlane.xlu0 %848
      %v850 = vrcp.pop %v846
      %v851 = vrcp.pop %v849
      %v852 = vmul.f32 %v841, %v850
      %v853 = vmul.f32 %v843, %v851
      %v854 = vpack.c.bf16 %v853, %v852
      %v856 = vsel %vm831, %v854, 0
      %858 = vmatprep.subr.bf16.mxu0 0
      %859 = vmatpush1.bf16.msra.mxu0 %v782
      %860 = vmatprep.subr.bf16.mxu0 0
      %861 = vmatpush1.bf16.msra.mxu0 0
      %862 = vmatprep.subr.bf16.mxu0 0
      %863 = vmatpush1.bf16.msra.mxu0 0
      %864 = vmatprep.subr.bf16.mxu0 0
      %865 = vmatpush1.bf16.msra.mxu0 0
      %866 = vmatprep.subr.bf16.mxu0 0
      %867 = vmatpush1.bf16.msra.mxu0 0
      %868 = vmatprep.subr.bf16.mxu0 0
      %869 = vmatpush1.bf16.msra.mxu0 0
      %870 = vmatprep.subr.bf16.mxu0 0
      %871 = vmatpush1.bf16.msra.mxu0 0
      %872 = vmatprep.subr.bf16.mxu0 0
      %873 = vmatpush1.bf16.msra.mxu0 0
      %874 = vmatprep.subr.bf16.mxu0 0
      %875 = vmatpush1.bf16.msra.mxu0 0
      %876 = vmatprep.subr.bf16.mxu0 0
      %877 = vmatpush1.bf16.msra.mxu0 0
      %878 = vmatprep.subr.bf16.mxu0 0
      %879 = vmatpush1.bf16.msra.mxu0 0
      %880 = vmatprep.subr.bf16.mxu0 0
      %881 = vmatpush1.bf16.msra.mxu0 0
      %882 = vmatprep.subr.bf16.mxu0 0
      %883 = vmatpush1.bf16.msra.mxu0 0
      %884 = vmatprep.subr.bf16.mxu0 0
      %885 = vmatpush1.bf16.msra.mxu0 0
      %886 = vmatprep.subr.bf16.mxu0 0
      %887 = vmatpush1.bf16.msra.mxu0 0
      %888 = vmatprep.subr.bf16.mxu0 0
      %889 = vmatpush1.bf16.msra.mxu0 0
      %890 = vmatprep.mubr.bf16.mxu0 0
      %891 = vmatmul.mubr.bf16.gmra.mrb[0].mxu0 %v856
      %v892 = vpop.f32.mrb[0].mxu0
      %v893 = vadd.f32 0.0, %v892
      %v894 = vpop.f32.mrb[0].mxu0
      %v895 = vpop.f32.mrb[0].mxu0
      %v896 = vadd.f32 0.0, %v895
      %v897 = vpop.f32.mrb[0].mxu0
      %898 = vdwg.mxu0
      %v899 = vpack.c.bf16 %v896, %v893
      %v900 = vld [vmem:[%s8] sm:$0xf]
      %902 = vrot.lane.b32.xlu0 %v652, 120
      %v903 = vpop.permute.xlu0 %902
      %905 = vrot.lane.b32.xlu0 %v717, 120
      %v906 = vpop.permute.xlu0 %905
      %v908 = vsel %vm783, %v903, 0
      %v911 = vsel %vm783, %v906, 0
      %913 = vmatprep.subr.bf16.mxu0 0
      %914 = vmatpush1.bf16.xpose.msra.mxu0 %v911
      %915 = vmatprep.subr.bf16.mxu0 0
      %916 = vmatpush1.bf16.xpose.msra.mxu0 0
      %917 = vmatprep.subr.bf16.mxu0 0
      %918 = vmatpush1.bf16.xpose.msra.mxu0 0
      %919 = vmatprep.subr.bf16.mxu0 0
      %920 = vmatpush1.bf16.xpose.msra.mxu0 0
      %921 = vmatprep.subr.bf16.mxu0 0
      %922 = vmatpush1.bf16.xpose.msra.mxu0 0
      %923 = vmatprep.subr.bf16.mxu0 0
      %924 = vmatpush1.bf16.xpose.msra.mxu0 0
      %925 = vmatprep.subr.bf16.mxu0 0
      %926 = vmatpush1.bf16.xpose.msra.mxu0 0
      %927 = vmatprep.subr.bf16.mxu0 0
      %928 = vmatpush1.bf16.xpose.msra.mxu0 0
      %929 = vmatprep.subr.bf16.mxu0 0
      %930 = vmatpush1.bf16.xpose.msra.mxu0 0
      %931 = vmatprep.subr.bf16.mxu0 0
      %932 = vmatpush1.bf16.xpose.msra.mxu0 0
      %933 = vmatprep.subr.bf16.mxu0 0
      %934 = vmatpush1.bf16.xpose.msra.mxu0 0
      %935 = vmatprep.subr.bf16.mxu0 0
      %936 = vmatpush1.bf16.xpose.msra.mxu0 0
      %937 = vmatprep.subr.bf16.mxu0 0
      %938 = vmatpush1.bf16.xpose.msra.mxu0 0
      %939 = vmatprep.subr.bf16.mxu0 0
      %940 = vmatpush1.bf16.xpose.msra.mxu0 0
      %941 = vmatprep.subr.bf16.mxu0 0
      %942 = vmatpush1.bf16.xpose.msra.mxu0 0
      %943 = vmatprep.subr.bf16.mxu0 0
      %944 = vmatpush1.bf16.xpose.msra.mxu0 0
      %945 = vmatprep.mubr.bf16.mxu0 0
      %946 = vmatmul.mubr.bf16.gmra.mrb[0].mxu0 %v908
      %v947 = vpop.f32.mrb[0].mxu0
      %v948 = vadd.f32 0.0, %v947
      %v949 = vpop.f32.mrb[0].mxu0
      %v950 = vpop.f32.mrb[0].mxu0
      %v951 = vadd.f32 0.0, %v950
      %v952 = vpop.f32.mrb[0].mxu0
      %953 = vdwg.mxu0
      %v954 = vsel %vm831, %v948, -inf
      %955 = vmax.xlane.f32.xlu0 %v954
      %v956 = vpop.xlane.xlu0 %955
      %v957 = vsel %vm831, %v951, -inf
      %958 = vmax.xlane.f32.xlu0 %v957
      %v959 = vpop.xlane.xlu0 %958
      %v960 = vsub.f32 %v948, %v956
      %v961 = vsub.f32 %v951, %v959
      %v962 = vmul.f32 %v960, 1.442695
      %v963 = vpow.pop %v962
      %v964 = vmul.f32 %v961, 1.442695
      %v965 = vpow.pop %v964
      %v966 = vsel %vm831, %v963, 0.0
      %967 = vadd.xlane.f32.xlu0 %v966
      %v968 = vpop.xlane.xlu0 %967
      %v969 = vsel %vm831, %v965, 0.0
      %970 = vadd.xlane.f32.xlu0 %v969
      %v971 = vpop.xlane.xlu0 %970
      %v972 = vrcp.pop %v968
      %v973 = vrcp.pop %v971
      %v974 = vmul.f32 %v963, %v972
      %v975 = vmul.f32 %v965, %v973
      %v976 = vpack.c.bf16 %v975, %v974
      %978 = vrot.lane.b32.xlu0 %v782, 120
      %v979 = vpop.permute.xlu0 %978
      %v982 = vsel %vm831, %v976, 0
      %984 = vmatprep.subr.bf16.mxu0 0
      %985 = vmatpush1.bf16.msra.mxu0 %v979
      %986 = vmatprep.subr.bf16.mxu0 0
      %987 = vmatpush1.bf16.msra.mxu0 0
      %988 = vmatprep.subr.bf16.mxu0 0
      %989 = vmatpush1.bf16.msra.mxu0 0
      %990 = vmatprep.subr.bf16.mxu0 0
      %991 = vmatpush1.bf16.msra.mxu0 0
      %992 = vmatprep.subr.bf16.mxu0 0
      %993 = vmatpush1.bf16.msra.mxu0 0
      %994 = vmatprep.subr.bf16.mxu0 0
      %995 = vmatpush1.bf16.msra.mxu0 0
      %996 = vmatprep.subr.bf16.mxu0 0
      %997 = vmatpush1.bf16.msra.mxu0 0
      %998 = vmatprep.subr.bf16.mxu0 0
      %999 = vmatpush1.bf16.msra.mxu0 0
      %1000 = vmatprep.subr.bf16.mxu0 0
      %1001 = vmatpush1.bf16.msra.mxu0 0
      %1002 = vmatprep.subr.bf16.mxu0 0
      %1003 = vmatpush1.bf16.msra.mxu0 0
      %1004 = vmatprep.subr.bf16.mxu0 0
      %1005 = vmatpush1.bf16.msra.mxu0 0
      %1006 = vmatprep.subr.bf16.mxu0 0
      %1007 = vmatpush1.bf16.msra.mxu0 0
      %1008 = vmatprep.subr.bf16.mxu0 0
      %1009 = vmatpush1.bf16.msra.mxu0 0
      %1010 = vmatprep.subr.bf16.mxu0 0
      %1011 = vmatpush1.bf16.msra.mxu0 0
      %1012 = vmatprep.subr.bf16.mxu0 0
      %1013 = vmatpush1.bf16.msra.mxu0 0
      %1014 = vmatprep.subr.bf16.mxu0 0
      %1015 = vmatpush1.bf16.msra.mxu0 0
      %1016 = vmatprep.mubr.bf16.mxu0 0
      %1017 = vmatmul.mubr.bf16.gmra.mrb[0].mxu0 %v982
      %v1018 = vpop.f32.mrb[0].mxu0
      %v1019 = vadd.f32 0.0, %v1018
      %v1020 = vpop.f32.mrb[0].mxu0
      %v1021 = vpop.f32.mrb[0].mxu0
      %v1022 = vadd.f32 0.0, %v1021
      %v1023 = vpop.f32.mrb[0].mxu0
      %1024 = vdwg.mxu0
      %v1025 = vpack.c.bf16 %v1022, %v1019
      %s1026 = scalar_lea.vmem %s8, 4
      %v1027 = vld [vmem:[%s1026] sm:$0xf]
      %v1029 = vsel %vm783, %v1025, 0
      %vm1031 = vcmask 1043456
      %v1033 = vsel %vm1031, %v1027, 0
      %1035 = vmatprep.subr.bf16.mxu0 0
      %1036 = vmatpush1.bf16.msra.mxu0 %v1033
      %1037 = vmatprep.subr.bf16.mxu0 0
      %1038 = vmatpush1.bf16.msra.mxu0 0
      %1039 = vmatprep.subr.bf16.mxu0 0
      %1040 = vmatpush1.bf16.msra.mxu0 0
      %1041 = vmatprep.subr.bf16.mxu0 0
      %1042 = vmatpush1.bf16.msra.mxu0 0
      %1043 = vmatprep.subr.bf16.mxu0 0
      %1044 = vmatpush1.bf16.msra.mxu0 0
      %1045 = vmatprep.subr.bf16.mxu0 0
      %1046 = vmatpush1.bf16.msra.mxu0 0
      %1047 = vmatprep.subr.bf16.mxu0 0
      %1048 = vmatpush1.bf16.msra.mxu0 0
      %1049 = vmatprep.subr.bf16.mxu0 0
      %1050 = vmatpush1.bf16.msra.mxu0 0
      %1051 = vmatprep.subr.bf16.mxu0 0
      %1052 = vmatpush1.bf16.msra.mxu0 0
      %1053 = vmatprep.subr.bf16.mxu0 0
      %1054 = vmatpush1.bf16.msra.mxu0 0
      %1055 = vmatprep.subr.bf16.mxu0 0
      %1056 = vmatpush1.bf16.msra.mxu0 0
      %1057 = vmatprep.subr.bf16.mxu0 0
      %1058 = vmatpush1.bf16.msra.mxu0 0
      %1059 = vmatprep.subr.bf16.mxu0 0
      %1060 = vmatpush1.bf16.msra.mxu0 0
      %1061 = vmatprep.subr.bf16.mxu0 0
      %1062 = vmatpush1.bf16.msra.mxu0 0
      %1063 = vmatprep.subr.bf16.mxu0 0
      %1064 = vmatpush1.bf16.msra.mxu0 0
      %1065 = vmatprep.subr.bf16.mxu0 0
      %1066 = vmatpush1.bf16.msra.mxu0 0
      %1067 = vmatprep.mubr.bf16.mxu0 0
      %1068 = vmatmul.mubr.bf16.gmra.mrb[0].mxu0 %v1029
      %v1069 = vpop.f32.mrb[0].mxu0
      %v1070 = vadd.f32 0.0, %v1069
      %v1071 = vpop.f32.mrb[0].mxu0
      %v1072 = vpop.f32.mrb[0].mxu0
      %v1073 = vadd.f32 0.0, %v1072
      %v1074 = vpop.f32.mrb[0].mxu0
      %1075 = vdwg.mxu0
      %v1077 = vsel %vm783, %v899, 0
      %v1080 = vsel %vm1031, %v900, 0
      %1082 = vmatprep.subr.bf16.mxu0 0
      %1083 = vmatpush1.bf16.msra.mxu0 %v1080
      %1084 = vmatprep.subr.bf16.mxu0 0
      %1085 = vmatpush1.bf16.msra.mxu0 0
      %1086 = vmatprep.subr.bf16.mxu0 0
      %1087 = vmatpush1.bf16.msra.mxu0 0
      %1088 = vmatprep.subr.bf16.mxu0 0
      %1089 = vmatpush1.bf16.msra.mxu0 0
      %1090 = vmatprep.subr.bf16.mxu0 0
      %1091 = vmatpush1.bf16.msra.mxu0 0
      %1092 = vmatprep.subr.bf16.mxu0 0
      %1093 = vmatpush1.bf16.msra.mxu0 0
      %1094 = vmatprep.subr.bf16.mxu0 0
      %1095 = vmatpush1.bf16.msra.mxu0 0
      %1096 = vmatprep.subr.bf16.mxu0 0
      %1097 = vmatpush1.bf16.msra.mxu0 0
      %1098 = vmatprep.subr.bf16.mxu0 0
      %1099 = vmatpush1.bf16.msra.mxu0 0
      %1100 = vmatprep.subr.bf16.mxu0 0
      %1101 = vmatpush1.bf16.msra.mxu0 0
      %1102 = vmatprep.subr.bf16.mxu0 0
      %1103 = vmatpush1.bf16.msra.mxu0 0
      %1104 = vmatprep.subr.bf16.mxu0 0
      %1105 = vmatpush1.bf16.msra.mxu0 0
      %1106 = vmatprep.subr.bf16.mxu0 0
      %1107 = vmatpush1.bf16.msra.mxu0 0
      %1108 = vmatprep.subr.bf16.mxu0 0
      %1109 = vmatpush1.bf16.msra.mxu0 0
      %1110 = vmatprep.subr.bf16.mxu0 0
      %1111 = vmatpush1.bf16.msra.mxu0 0
      %1112 = vmatprep.subr.bf16.mxu0 0
      %1113 = vmatpush1.bf16.msra.mxu0 0
      %1114 = vmatprep.mubr.bf16.mxu0 0
      %1115 = vmatmul.mubr.bf16.gmra.mrb[0].mxu0 %v1077
      %v1116 = vpop.f32.mrb[0].mxu0
      %v1117 = vadd.f32 %v1070, %v1116
      %v1118 = vpop.f32.mrb[0].mxu0
      %v1119 = vpop.f32.mrb[0].mxu0
      %v1120 = vadd.f32 %v1073, %v1119
      %v1121 = vpop.f32.mrb[0].mxu0
      %1122 = vdwg.mxu0
      %1123 = vrot.lane.b32.xlu0 %v652, 112
      %v1124 = vpop.permute.xlu0 %1123
      %1125 = vrot.lane.b32.xlu0 %v717, 112
      %v1126 = vpop.permute.xlu0 %1125
      %v1128 = vsel %vm783, %v1124, 0
      %v1131 = vsel %vm783, %v1126, 0
      %1133 = vmatprep.subr.bf16.mxu0 0
      %1134 = vmatpush1.bf16.xpose.msra.mxu0 %v1131
      %1135 = vmatprep.subr.bf16.mxu0 0
      %1136 = vmatpush1.bf16.xpose.msra.mxu0 0
      %1137 = vmatprep.subr.bf16.mxu0 0
      %1138 = vmatpush1.bf16.xpose.msra.mxu0 0
      %1139 = vmatprep.subr.bf16.mxu0 0
      %1140 = vmatpush1.bf16.xpose.msra.mxu0 0
      %1141 = vmatprep.subr.bf16.mxu0 0
      %1142 = vmatpush1.bf16.xpose.msra.mxu0 0
      %1143 = vmatprep.subr.bf16.mxu0 0
      %1144 = vmatpush1.bf16.xpose.msra.mxu0 0
      %1145 = vmatprep.subr.bf16.mxu0 0
      %1146 = vmatpush1.bf16.xpose.msra.mxu0 0
      %1147 = vmatprep.subr.bf16.mxu0 0
      %1148 = vmatpush1.bf16.xpose.msra.mxu0 0
      %1149 = vmatprep.subr.bf16.mxu0 0
      %1150 = vmatpush1.bf16.xpose.msra.mxu0 0
      %1151 = vmatprep.subr.bf16.mxu0 0
      %1152 = vmatpush1.bf16.xpose.msra.mxu0 0
      %1153 = vmatprep.subr.bf16.mxu0 0
      %1154 = vmatpush1.bf16.xpose.msra.mxu0 0
      %1155 = vmatprep.subr.bf16.mxu0 0
      %1156 = vmatpush1.bf16.xpose.msra.mxu0 0
      %1157 = vmatprep.subr.bf16.mxu0 0
      %1158 = vmatpush1.bf16.xpose.msra.mxu0 0
      %1159 = vmatprep.subr.bf16.mxu0 0
      %1160 = vmatpush1.bf16.xpose.msra.mxu0 0
      %1161 = vmatprep.subr.bf16.mxu0 0
      %1162 = vmatpush1.bf16.xpose.msra.mxu0 0
      %1163 = vmatprep.subr.bf16.mxu0 0
      %1164 = vmatpush1.bf16.xpose.msra.mxu0 0
      %1165 = vmatprep.mubr.bf16.mxu0 0
      %1166 = vmatmul.mubr.bf16.gmra.mrb[0].mxu0 %v1128
      %v1167 = vpop.f32.mrb[0].mxu0
      %v1168 = vadd.f32 0.0, %v1167
      %v1169 = vpop.f32.mrb[0].mxu0
      %v1170 = vpop.f32.mrb[0].mxu0
      %v1171 = vadd.f32 0.0, %v1170
      %v1172 = vpop.f32.mrb[0].mxu0
      %1173 = vdwg.mxu0
      %v1174 = vsel %vm831, %v1168, -inf
      %1175 = vmax.xlane.f32.xlu0 %v1174
      %v1176 = vpop.xlane.xlu0 %1175
      %v1177 = vsel %vm831, %v1171, -inf
      %1178 = vmax.xlane.f32.xlu0 %v1177
      %v1179 = vpop.xlane.xlu0 %1178
      %v1180 = vsub.f32 %v1168, %v1176
      %v1181 = vsub.f32 %v1171, %v1179
      %v1182 = vmul.f32 %v1180, 1.442695
      %v1183 = vpow.pop %v1182
      %v1184 = vmul.f32 %v1181, 1.442695
      %v1185 = vpow.pop %v1184
      %v1186 = vsel %vm831, %v1183, 0.0
      %1187 = vadd.xlane.f32.xlu0 %v1186
      %v1188 = vpop.xlane.xlu0 %1187
      %v1189 = vsel %vm831, %v1185, 0.0
      %1190 = vadd.xlane.f32.xlu0 %v1189
      %v1191 = vpop.xlane.xlu0 %1190
      %v1192 = vrcp.pop %v1188
      %v1193 = vrcp.pop %v1191
      %v1194 = vmul.f32 %v1183, %v1192
      %v1195 = vmul.f32 %v1185, %v1193
      %v1196 = vpack.c.bf16 %v1195, %v1194
      %1197 = vrot.lane.b32.xlu0 %v782, 112
      %v1198 = vpop.permute.xlu0 %1197
      %v1201 = vsel %vm831, %v1196, 0
      %1203 = vmatprep.subr.bf16.mxu0 0
      %1204 = vmatpush1.bf16.msra.mxu0 %v1198
      %1205 = vmatprep.subr.bf16.mxu0 0
      %1206 = vmatpush1.bf16.msra.mxu0 0
      %1207 = vmatprep.subr.bf16.mxu0 0
      %1208 = vmatpush1.bf16.msra.mxu0 0
      %1209 = vmatprep.subr.bf16.mxu0 0
      %1210 = vmatpush1.bf16.msra.mxu0 0
      %1211 = vmatprep.subr.bf16.mxu0 0
      %1212 = vmatpush1.bf16.msra.mxu0 0
      %1213 = vmatprep.subr.bf16.mxu0 0
      %1214 = vmatpush1.bf16.msra.mxu0 0
      %1215 = vmatprep.subr.bf16.mxu0 0
      %1216 = vmatpush1.bf16.msra.mxu0 0
      %1217 = vmatprep.subr.bf16.mxu0 0
      %1218 = vmatpush1.bf16.msra.mxu0 0
      %1219 = vmatprep.subr.bf16.mxu0 0
      %1220 = vmatpush1.bf16.msra.mxu0 0
      %1221 = vmatprep.subr.bf16.mxu0 0
      %1222 = vmatpush1.bf16.msra.mxu0 0
      %1223 = vmatprep.subr.bf16.mxu0 0
      %1224 = vmatpush1.bf16.msra.mxu0 0
      %1225 = vmatprep.subr.bf16.mxu0 0
      %1226 = vmatpush1.bf16.msra.mxu0 0
      %1227 = vmatprep.subr.bf16.mxu0 0
      %1228 = vmatpush1.bf16.msra.mxu0 0
      %1229 = vmatprep.subr.bf16.mxu0 0
      %1230 = vmatpush1.bf16.msra.mxu0 0
      %1231 = vmatprep.subr.bf16.mxu0 0
      %1232 = vmatpush1.bf16.msra.mxu0 0
      %1233 = vmatprep.subr.bf16.mxu0 0
      %1234 = vmatpush1.bf16.msra.mxu0 0
      %1235 = vmatprep.mubr.bf16.mxu0 0
      %1236 = vmatmul.mubr.bf16.gmra.mrb[0].mxu0 %v1201
      %v1237 = vpop.f32.mrb[0].mxu0
      %v1238 = vadd.f32 0.0, %v1237
      %v1239 = vpop.f32.mrb[0].mxu0
      %v1240 = vpop.f32.mrb[0].mxu0
      %v1241 = vadd.f32 0.0, %v1240
      %v1242 = vpop.f32.mrb[0].mxu0
      %1243 = vdwg.mxu0
      %v1244 = vpack.c.bf16 %v1241, %v1238
      %s1245 = scalar_lea.vmem %s8, 8
      %v1246 = vld [vmem:[%s1245] sm:$0xf]
      %v1248 = vsel %vm783, %v1244, 0
      %v1251 = vsel %vm1031, %v1246, 0
      %1253 = vmatprep.subr.bf16.mxu0 0
      %1254 = vmatpush1.bf16.msra.mxu0 %v1251
      %1255 = vmatprep.subr.bf16.mxu0 0
      %1256 = vmatpush1.bf16.msra.mxu0 0
      %1257 = vmatprep.subr.bf16.mxu0 0
      %1258 = vmatpush1.bf16.msra.mxu0 0
      %1259 = vmatprep.subr.bf16.mxu0 0
      %1260 = vmatpush1.bf16.msra.mxu0 0
      %1261 = vmatprep.subr.bf16.mxu0 0
      %1262 = vmatpush1.bf16.msra.mxu0 0
      %1263 = vmatprep.subr.bf16.mxu0 0
      %1264 = vmatpush1.bf16.msra.mxu0 0
      %1265 = vmatprep.subr.bf16.mxu0 0
      %1266 = vmatpush1.bf16.msra.mxu0 0
      %1267 = vmatprep.subr.bf16.mxu0 0
      %1268 = vmatpush1.bf16.msra.mxu0 0
      %1269 = vmatprep.subr.bf16.mxu0 0
      %1270 = vmatpush1.bf16.msra.mxu0 0
      %1271 = vmatprep.subr.bf16.mxu0 0
      %1272 = vmatpush1.bf16.msra.mxu0 0
      %1273 = vmatprep.subr.bf16.mxu0 0
      %1274 = vmatpush1.bf16.msra.mxu0 0
      %1275 = vmatprep.subr.bf16.mxu0 0
      %1276 = vmatpush1.bf16.msra.mxu0 0
      %1277 = vmatprep.subr.bf16.mxu0 0
      %1278 = vmatpush1.bf16.msra.mxu0 0
      %1279 = vmatprep.subr.bf16.mxu0 0
      %1280 = vmatpush1.bf16.msra.mxu0 0
      %1281 = vmatprep.subr.bf16.mxu0 0
      %1282 = vmatpush1.bf16.msra.mxu0 0
      %1283 = vmatprep.subr.bf16.mxu0 0
      %1284 = vmatpush1.bf16.msra.mxu0 0
      %1285 = vmatprep.mubr.bf16.mxu0 0
      %1286 = vmatmul.mubr.bf16.gmra.mrb[0].mxu0 %v1248
      %v1287 = vpop.f32.mrb[0].mxu0
      %v1288 = vadd.f32 0.0, %v1287
      %v1289 = vpop.f32.mrb[0].mxu0
      %v1290 = vpop.f32.mrb[0].mxu0
      %v1291 = vadd.f32 0.0, %v1290
      %v1292 = vpop.f32.mrb[0].mxu0
      %1293 = vdwg.mxu0
      %v1294 = vadd.f32 %v1117, %v1288
      %v1295 = vadd.f32 %v1120, %v1291
      %1296 = vrot.lane.b32.xlu0 %v652, 104
      %v1297 = vpop.permute.xlu0 %1296
      %1298 = vrot.lane.b32.xlu0 %v717, 104
      %v1299 = vpop.permute.xlu0 %1298
      %v1301 = vsel %vm783, %v1297, 0
      %v1304 = vsel %vm783, %v1299, 0
      %1306 = vmatprep.subr.bf16.mxu0 0
      %1307 = vmatpush1.bf16.xpose.msra.mxu0 %v1304
      %1308 = vmatprep.subr.bf16.mxu0 0
      %1309 = vmatpush1.bf16.xpose.msra.mxu0 0
      %1310 = vmatprep.subr.bf16.mxu0 0
      %1311 = vmatpush1.bf16.xpose.msra.mxu0 0
      %1312 = vmatprep.subr.bf16.mxu0 0
      %1313 = vmatpush1.bf16.xpose.msra.mxu0 0
      %1314 = vmatprep.subr.bf16.mxu0 0
      %1315 = vmatpush1.bf16.xpose.msra.mxu0 0
      %1316 = vmatprep.subr.bf16.mxu0 0
      %1317 = vmatpush1.bf16.xpose.msra.mxu0 0
      %1318 = vmatprep.subr.bf16.mxu0 0
      %1319 = vmatpush1.bf16.xpose.msra.mxu0 0
      %1320 = vmatprep.subr.bf16.mxu0 0
      %1321 = vmatpush1.bf16.xpose.msra.mxu0 0
      %1322 = vmatprep.subr.bf16.mxu0 0
      %1323 = vmatpush1.bf16.xpose.msra.mxu0 0
      %1324 = vmatprep.subr.bf16.mxu0 0
      %1325 = vmatpush1.bf16.xpose.msra.mxu0 0
      %1326 = vmatprep.subr.bf16.mxu0 0
      %1327 = vmatpush1.bf16.xpose.msra.mxu0 0
      %1328 = vmatprep.subr.bf16.mxu0 0
      %1329 = vmatpush1.bf16.xpose.msra.mxu0 0
      %1330 = vmatprep.subr.bf16.mxu0 0
      %1331 = vmatpush1.bf16.xpose.msra.mxu0 0
      %1332 = vmatprep.subr.bf16.mxu0 0
      %1333 = vmatpush1.bf16.xpose.msra.mxu0 0
      %1334 = vmatprep.subr.bf16.mxu0 0
      %1335 = vmatpush1.bf16.xpose.msra.mxu0 0
      %1336 = vmatprep.subr.bf16.mxu0 0
      %1337 = vmatpush1.bf16.xpose.msra.mxu0 0
      %1338 = vmatprep.mubr.bf16.mxu0 0
      %1339 = vmatmul.mubr.bf16.gmra.mrb[0].mxu0 %v1301
      %v1340 = vpop.f32.mrb[0].mxu0
      %v1341 = vadd.f32 0.0, %v1340
      %v1342 = vpop.f32.mrb[0].mxu0
      %v1343 = vpop.f32.mrb[0].mxu0
      %v1344 = vadd.f32 0.0, %v1343
      %v1345 = vpop.f32.mrb[0].mxu0
      %1346 = vdwg.mxu0
      %v1347 = vsel %vm831, %v1341, -inf
      %1348 = vmax.xlane.f32.xlu0 %v1347
      %v1349 = vpop.xlane.xlu0 %1348
      %v1350 = vsel %vm831, %v1344, -inf
      %1351 = vmax.xlane.f32.xlu0 %v1350
      %v1352 = vpop.xlane.xlu0 %1351
      %v1353 = vsub.f32 %v1341, %v1349
      %v1354 = vsub.f32 %v1344, %v1352
      %v1355 = vmul.f32 %v1353, 1.442695
      %v1356 = vpow.pop %v1355
      %v1357 = vmul.f32 %v1354, 1.442695
      %v1358 = vpow.pop %v1357
      %v1359 = vsel %vm831, %v1356, 0.0
      %1360 = vadd.xlane.f32.xlu0 %v1359
      %v1361 = vpop.xlane.xlu0 %1360
      %v1362 = vsel %vm831, %v1358, 0.0
      %1363 = vadd.xlane.f32.xlu0 %v1362
      %v1364 = vpop.xlane.xlu0 %1363
      %v1365 = vrcp.pop %v1361
      %v1366 = vrcp.pop %v1364
      %v1367 = vmul.f32 %v1356, %v1365
      %v1368 = vmul.f32 %v1358, %v1366
      %v1369 = vpack.c.bf16 %v1368, %v1367
      %1370 = vrot.lane.b32.xlu0 %v782, 104
      %v1371 = vpop.permute.xlu0 %1370
      %v1374 = vsel %vm831, %v1369, 0
      %1376 = vmatprep.subr.bf16.mxu0 0
      %1377 = vmatpush1.bf16.msra.mxu0 %v1371
      %1378 = vmatprep.subr.bf16.mxu0 0
      %1379 = vmatpush1.bf16.msra.mxu0 0
      %1380 = vmatprep.subr.bf16.mxu0 0
      %1381 = vmatpush1.bf16.msra.mxu0 0
      %1382 = vmatprep.subr.bf16.mxu0 0
      %1383 = vmatpush1.bf16.msra.mxu0 0
      %1384 = vmatprep.subr.bf16.mxu0 0
      %1385 = vmatpush1.bf16.msra.mxu0 0
      %1386 = vmatprep.subr.bf16.mxu0 0
      %1387 = vmatpush1.bf16.msra.mxu0 0
      %1388 = vmatprep.subr.bf16.mxu0 0
      %1389 = vmatpush1.bf16.msra.mxu0 0
      %1390 = vmatprep.subr.bf16.mxu0 0
      %1391 = vmatpush1.bf16.msra.mxu0 0
      %1392 = vmatprep.subr.bf16.mxu0 0
      %1393 = vmatpush1.bf16.msra.mxu0 0
      %1394 = vmatprep.subr.bf16.mxu0 0
      %1395 = vmatpush1.bf16.msra.mxu0 0
      %1396 = vmatprep.subr.bf16.mxu0 0
      %1397 = vmatpush1.bf16.msra.mxu0 0
      %1398 = vmatprep.subr.bf16.mxu0 0
      %1399 = vmatpush1.bf16.msra.mxu0 0
      %1400 = vmatprep.subr.bf16.mxu0 0
      %1401 = vmatpush1.bf16.msra.mxu0 0
      %1402 = vmatprep.subr.bf16.mxu0 0
      %1403 = vmatpush1.bf16.msra.mxu0 0
      %1404 = vmatprep.subr.bf16.mxu0 0
      %1405 = vmatpush1.bf16.msra.mxu0 0
      %1406 = vmatprep.subr.bf16.mxu0 0
      %1407 = vmatpush1.bf16.msra.mxu0 0
      %1408 = vmatprep.mubr.bf16.mxu0 0
      %1409 = vmatmul.mubr.bf16.gmra.mrb[0].mxu0 %v1374
      %v1410 = vpop.f32.mrb[0].mxu0
      %v1411 = vadd.f32 0.0, %v1410
      %v1412 = vpop.f32.mrb[0].mxu0
      %v1413 = vpop.f32.mrb[0].mxu0
      %v1414 = vadd.f32 0.0, %v1413
      %v1415 = vpop.f32.mrb[0].mxu0
      %1416 = vdwg.mxu0
      %v1417 = vpack.c.bf16 %v1414, %v1411
      %s1418 = scalar_lea.vmem %s8, 12
      %v1419 = vld [vmem:[%s1418] sm:$0xf]
      %v1421 = vsel %vm783, %v1417, 0
      %v1424 = vsel %vm1031, %v1419, 0
      %1426 = vmatprep.subr.bf16.mxu0 0
      %1427 = vmatpush1.bf16.msra.mxu0 %v1424
      %1428 = vmatprep.subr.bf16.mxu0 0
      %1429 = vmatpush1.bf16.msra.mxu0 0
      %1430 = vmatprep.subr.bf16.mxu0 0
      %1431 = vmatpush1.bf16.msra.mxu0 0
      %1432 = vmatprep.subr.bf16.mxu0 0
      %1433 = vmatpush1.bf16.msra.mxu0 0
      %1434 = vmatprep.subr.bf16.mxu0 0
      %1435 = vmatpush1.bf16.msra.mxu0 0
      %1436 = vmatprep.subr.bf16.mxu0 0
      %1437 = vmatpush1.bf16.msra.mxu0 0
      %1438 = vmatprep.subr.bf16.mxu0 0
      %1439 = vmatpush1.bf16.msra.mxu0 0
      %1440 = vmatprep.subr.bf16.mxu0 0
      %1441 = vmatpush1.bf16.msra.mxu0 0
      %1442 = vmatprep.subr.bf16.mxu0 0
      %1443 = vmatpush1.bf16.msra.mxu0 0
      %1444 = vmatprep.subr.bf16.mxu0 0
      %1445 = vmatpush1.bf16.msra.mxu0 0
      %1446 = vmatprep.subr.bf16.mxu0 0
      %1447 = vmatpush1.bf16.msra.mxu0 0
      %1448 = vmatprep.subr.bf16.mxu0 0
      %1449 = vmatpush1.bf16.msra.mxu0 0
      %1450 = vmatprep.subr.bf16.mxu0 0
      %1451 = vmatpush1.bf16.msra.mxu0 0
      %1452 = vmatprep.subr.bf16.mxu0 0
      %1453 = vmatpush1.bf16.msra.mxu0 0
      %1454 = vmatprep.subr.bf16.mxu0 0
      %1455 = vmatpush1.bf16.msra.mxu0 0
      %1456 = vmatprep.subr.bf16.mxu0 0
      %1457 = vmatpush1.bf16.msra.mxu0 0
      %1458 = vmatprep.mubr.bf16.mxu0 0
      %1459 = vmatmul.mubr.bf16.gmra.mrb[0].mxu0 %v1421
      %v1460 = vpop.f32.mrb[0].mxu0
      %v1461 = vadd.f32 0.0, %v1460
      %v1462 = vpop.f32.mrb[0].mxu0
      %v1463 = vpop.f32.mrb[0].mxu0
      %v1464 = vadd.f32 0.0, %v1463
      %v1465 = vpop.f32.mrb[0].mxu0
      %1466 = vdwg.mxu0
      %v1467 = vadd.f32 %v1294, %v1461
      %v1468 = vadd.f32 %v1295, %v1464
      %v1469 = vld [vmem:[%s9] sm:$0x1]
      %v1471 = vlaneseq
      %v1472 = vshrl.u32 %v1471, 7
      %v1473 = vsub.s32 0, %v1472
      %v1474 = vrot.slane %v1469, %v1473
      %v1476 = vadd.f32 %v1467, %v1474
      %v1477 = vadd.f32 %v1468, %v1474
      %v1478 = vadd.f32 %v581, %v1476
      %v1479 = vadd.f32 %v582, %v1477
      %v1480 = vld [vmem:[%s14] sm:$0x1]
      %v1481 = vld [vmem:[%s15] sm:$0x1]
      %v1482 = vsel %vm607, %v1478, 0.0
      %1483 = vadd.xlane.f32.xlu0 %v1482
      %v1484 = vpop.xlane.xlu0 %1483
      %v1485 = vsel %vm607, %v1479, 0.0
      %1486 = vadd.xlane.f32.xlu0 %v1485
      %v1487 = vpop.xlane.xlu0 %1486
      %v1488 = vrcp.pop 32.0
      %v1489 = vmul.f32 %v1484, %v1488
      %v1490 = vmul.f32 %v1487, %v1488
      %v1491 = vsub.f32 %v1478, %v1489
      %v1492 = vsub.f32 %v1479, %v1490
      %v1493 = vmul.f32 %v1491, %v1491
      %v1494 = vmul.f32 %v1492, %v1492
      %v1495 = vsel %vm607, %v1493, 0.0
      %1496 = vadd.xlane.f32.xlu0 %v1495
      %v1497 = vpop.xlane.xlu0 %1496
      %v1498 = vsel %vm607, %v1494, 0.0
      %1499 = vadd.xlane.f32.xlu0 %v1498
      %v1500 = vpop.xlane.xlu0 %1499
      %v1501 = vmul.f32 %v1497, %v1488
      %v1502 = vmul.f32 %v1500, %v1488
      %v1503 = vadd.f32 %v1501, 1e-05
      %v1504 = vadd.f32 %v1502, 1e-05
      %v1505 = vrsqrt.pop %v1503
      %v1506 = vrsqrt.pop %v1504
      %v1507 = vmul.f32 %v1491, %v1505
      %v1508 = vmul.f32 %v1492, %v1506
      %v1510 = vlaneseq
      %v1511 = vshrl.u32 %v1510, 7
      %v1512 = vsub.s32 0, %v1511
      %v1513 = vrot.slane %v1480, %v1512
      %v1515 = vmul.f32 %v1507, %v1513
      %v1516 = vmul.f32 %v1508, %v1513
      %v1518 = vlaneseq
      %v1519 = vshrl.u32 %v1518, 7
      %v1520 = vsub.s32 0, %v1519
      %v1521 = vrot.slane %v1481, %v1520
      %v1523 = vadd.f32 %v1515, %v1521
      %v1524 = vadd.f32 %v1516, %v1521
      %v1525 = vpack.c.bf16 %v1524, %v1523
      %v1526 = vld [vmem:[%s10] sm:$0xf]
      %v1527 = vld [vmem:[%s10 + $0x4] sm:$0xf]
      %v1528 = vld [vmem:[%s10 + $0x8] sm:$0xf]
      %v1529 = vld [vmem:[%s10 + $0xc] sm:$0xf]
      %v1530 = vld [vmem:[%s11] sm:$0x1]
      %v1532 = vlaneseq
      %v1533 = vshrl.u32 %v1532, 7
      %v1534 = vsub.s32 0, %v1533
      %v1535 = vrot.slane %v1530, %v1534
      %v1541 = vunpack.c.l.b16 %v1526
      %v1542 = vunpack.c.l.b16 %v1527
      %v1543 = vunpack.c.l.b16 %v1528
      %v1544 = vunpack.c.l.b16 %v1529
      %v1545 = vpack.c.b16 %v1542, %v1541
      %v1546 = vpack.c.b16 %v1544, %v1543
      %v1550 = vsel %vm607, %v1525, 0
      %1552 = vmatprep.subr.bf16.mxu0 0
      %1553 = vmatpush1.bf16.msra.mxu0 %v1545
      %1554 = vmatprep.subr.bf16.mxu0 0
      %1555 = vmatpush1.bf16.msra.mxu0 %v1546
      %1556 = vmatprep.subr.bf16.mxu0 0
      %1557 = vmatpush1.bf16.msra.mxu0 0
      %1558 = vmatprep.subr.bf16.mxu0 0
      %1559 = vmatpush1.bf16.msra.mxu0 0
      %1560 = vmatprep.subr.bf16.mxu0 0
      %1561 = vmatpush1.bf16.msra.mxu0 0
      %1562 = vmatprep.subr.bf16.mxu0 0
      %1563 = vmatpush1.bf16.msra.mxu0 0
      %1564 = vmatprep.subr.bf16.mxu0 0
      %1565 = vmatpush1.bf16.msra.mxu0 0
      %1566 = vmatprep.subr.bf16.mxu0 0
      %1567 = vmatpush1.bf16.msra.mxu0 0
      %1568 = vmatprep.subr.bf16.mxu0 0
      %1569 = vmatpush1.bf16.msra.mxu0 0
      %1570 = vmatprep.subr.bf16.mxu0 0
      %1571 = vmatpush1.bf16.msra.mxu0 0
      %1572 = vmatprep.subr.bf16.mxu0 0
      %1573 = vmatpush1.bf16.msra.mxu0 0
      %1574 = vmatprep.subr.bf16.mxu0 0
      %1575 = vmatpush1.bf16.msra.mxu0 0
      %1576 = vmatprep.subr.bf16.mxu0 0
      %1577 = vmatpush1.bf16.msra.mxu0 0
      %1578 = vmatprep.subr.bf16.mxu0 0
      %1579 = vmatpush1.bf16.msra.mxu0 0
      %1580 = vmatprep.subr.bf16.mxu0 0
      %1581 = vmatpush1.bf16.msra.mxu0 0
      %1582 = vmatprep.subr.bf16.mxu0 0
      %1583 = vmatpush1.bf16.msra.mxu0 0
      %1584 = vmatprep.mubr.bf16.mxu0 0
      %1585 = vmatmul.mubr.bf16.gmra.mrb[0].mxu0 %v1550
      %v1586 = vpop.f32.mrb[0].mxu0
      %v1587 = vadd.f32 %v1535, %v1586
      %v1588 = vpop.f32.mrb[0].mxu0
      %v1589 = vpop.f32.mrb[0].mxu0
      %v1590 = vadd.f32 %v1535, %v1589
      %v1591 = vpop.f32.mrb[0].mxu0
      %1592 = vdwg.mxu0
      %v1593 = vmax.f32 %v1587, 0.0
      %v1594 = vmax.f32 %v1590, 0.0
      %v1595 = vpack.c.bf16 %v1594, %v1593
      %v1596 = vld [vmem:[%s12] sm:$0xf]
      %v1597 = vld [vmem:[%s12 + $0x4] sm:$0xf]
      %v1598 = vld [vmem:[%s12 + $0x8] sm:$0xf]
      %v1599 = vld [vmem:[%s12 + $0xc] sm:$0xf]
      %v1600 = vld [vmem:[%s12 + $0x10] sm:$0xf]
      %v1601 = vld [vmem:[%s12 + $0x14] sm:$0xf]
      %v1602 = vld [vmem:[%s12 + $0x18] sm:$0xf]
      %v1603 = vld [vmem:[%s12 + $0x1c] sm:$0xf]
      %v1604 = vld [vmem:[%s12 + $0x20] sm:$0xf]
      %v1605 = vld [vmem:[%s12 + $0x24] sm:$0xf]
      %v1606 = vld [vmem:[%s12 + $0x28] sm:$0xf]
      %v1607 = vld [vmem:[%s12 + $0x2c] sm:$0xf]
      %v1608 = vld [vmem:[%s12 + $0x30] sm:$0xf]
      %v1609 = vld [vmem:[%s12 + $0x34] sm:$0xf]
      %v1610 = vld [vmem:[%s12 + $0x38] sm:$0xf]
      %v1611 = vld [vmem:[%s12 + $0x3c] sm:$0xf]
      %v1612 = vld [vmem:[%s13] sm:$0x1]
      %v1614 = vlaneseq
      %v1615 = vshrl.u32 %v1614, 7
      %v1616 = vsub.s32 0, %v1615
      %v1617 = vrot.slane %v1612, %v1616
      %v1635 = vunpack.c.l.b16 %v1596
      %v1636 = vunpack.c.l.b16 %v1597
      %v1637 = vunpack.c.l.b16 %v1598
      %v1638 = vunpack.c.l.b16 %v1599
      %v1639 = vunpack.c.l.b16 %v1600
      %v1640 = vunpack.c.l.b16 %v1601
      %v1641 = vunpack.c.l.b16 %v1602
      %v1642 = vunpack.c.l.b16 %v1603
      %v1643 = vunpack.c.l.b16 %v1604
      %v1644 = vunpack.c.l.b16 %v1605
      %v1645 = vunpack.c.l.b16 %v1606
      %v1646 = vunpack.c.l.b16 %v1607
      %v1647 = vunpack.c.l.b16 %v1608
      %v1648 = vunpack.c.l.b16 %v1609
      %v1649 = vunpack.c.l.b16 %v1610
      %v1650 = vunpack.c.l.b16 %v1611
      %v1651 = vpack.c.b16 %v1636, %v1635
      %v1652 = vpack.c.b16 %v1638, %v1637
      %v1653 = vpack.c.b16 %v1640, %v1639
      %v1654 = vpack.c.b16 %v1642, %v1641
      %v1655 = vpack.c.b16 %v1644, %v1643
      %v1656 = vpack.c.b16 %v1646, %v1645
      %v1657 = vpack.c.b16 %v1648, %v1647
      %v1658 = vpack.c.b16 %v1650, %v1649
      %1667 = vmatprep.subr.bf16.mxu0 0
      %1668 = vmatpush1.bf16.msra.mxu0 %v1651
      %1669 = vmatprep.subr.bf16.mxu0 0
      %1670 = vmatpush1.bf16.msra.mxu0 %v1652
      %1671 = vmatprep.subr.bf16.mxu0 0
      %1672 = vmatpush1.bf16.msra.mxu0 %v1653
      %1673 = vmatprep.subr.bf16.mxu0 0
      %1674 = vmatpush1.bf16.msra.mxu0 %v1654
      %1675 = vmatprep.subr.bf16.mxu0 0
      %1676 = vmatpush1.bf16.msra.mxu0 %v1655
      %1677 = vmatprep.subr.bf16.mxu0 0
      %1678 = vmatpush1.bf16.msra.mxu0 %v1656
      %1679 = vmatprep.subr.bf16.mxu0 0
      %1680 = vmatpush1.bf16.msra.mxu0 %v1657
      %1681 = vmatprep.subr.bf16.mxu0 0
      %1682 = vmatpush1.bf16.msra.mxu0 %v1658
      %1683 = vmatprep.subr.bf16.mxu0 0
      %1684 = vmatpush1.bf16.msra.mxu0 0
      %1685 = vmatprep.subr.bf16.mxu0 0
      %1686 = vmatpush1.bf16.msra.mxu0 0
      %1687 = vmatprep.subr.bf16.mxu0 0
      %1688 = vmatpush1.bf16.msra.mxu0 0
      %1689 = vmatprep.subr.bf16.mxu0 0
      %1690 = vmatpush1.bf16.msra.mxu0 0
      %1691 = vmatprep.subr.bf16.mxu0 0
      %1692 = vmatpush1.bf16.msra.mxu0 0
      %1693 = vmatprep.subr.bf16.mxu0 0
      %1694 = vmatpush1.bf16.msra.mxu0 0
      %1695 = vmatprep.subr.bf16.mxu0 0
      %1696 = vmatpush1.bf16.msra.mxu0 0
      %1697 = vmatprep.subr.bf16.mxu0 0
      %1698 = vmatpush1.bf16.msra.mxu0 0
      %1699 = vmatprep.mubr.bf16.mxu0 0
      %1700 = vmatmul.mubr.bf16.gmra.mrb[0].mxu0 %v1595
      %v1701 = vpop.f32.mrb[0].mxu0
      %v1702 = vadd.f32 %v1617, %v1701
      %v1703 = vpop.f32.mrb[0].mxu0
      %v1704 = vpop.f32.mrb[0].mxu0
      %v1705 = vadd.f32 %v1617, %v1704
      %v1706 = vpop.f32.mrb[0].mxu0
      %1707 = vdwg.mxu0
      %v1708 = vadd.f32 %v1523, %v1702
      %v1709 = vadd.f32 %v1524, %v1705
      %v1710 = vld [vmem:[%s16] sm:$0x1]
      %v1711 = vld [vmem:[%s17] sm:$0x1]
      %v1712 = vsel %vm607, %v1708, 0.0
      %1713 = vadd.xlane.f32.xlu0 %v1712
      %v1714 = vpop.xlane.xlu0 %1713
      %v1715 = vsel %vm607, %v1709, 0.0
      %1716 = vadd.xlane.f32.xlu0 %v1715
      %v1717 = vpop.xlane.xlu0 %1716
      %v1718 = vmul.f32 %v1714, %v1488
      %v1719 = vmul.f32 %v1717, %v1488
      %v1720 = vsub.f32 %v1708, %v1718
      %v1721 = vsub.f32 %v1709, %v1719
      %v1722 = vmul.f32 %v1720, %v1720
      %v1723 = vmul.f32 %v1721, %v1721
      %v1724 = vsel %vm607, %v1722, 0.0
      %1725 = vadd.xlane.f32.xlu0 %v1724
      %v1726 = vpop.xlane.xlu0 %1725
      %v1727 = vsel %vm607, %v1723, 0.0
      %1728 = vadd.xlane.f32.xlu0 %v1727
      %v1729 = vpop.xlane.xlu0 %1728
      %v1730 = vmul.f32 %v1726, %v1488
      %v1731 = vmul.f32 %v1729, %v1488
      %v1732 = vadd.f32 %v1730, 1e-05
      %v1733 = vadd.f32 %v1731, 1e-05
      %v1734 = vrsqrt.pop %v1732
      %v1735 = vrsqrt.pop %v1733
      %v1736 = vmul.f32 %v1720, %v1734
      %v1737 = vmul.f32 %v1721, %v1735
      %v1739 = vlaneseq
      %v1740 = vshrl.u32 %v1739, 7
      %v1741 = vsub.s32 0, %v1740
      %v1742 = vrot.slane %v1710, %v1741
      %v1744 = vmul.f32 %v1736, %v1742
      %v1745 = vmul.f32 %v1737, %v1742
      %v1747 = vlaneseq
      %v1748 = vshrl.u32 %v1747, 7
      %v1749 = vsub.s32 0, %v1748
      %v1750 = vrot.slane %v1711, %v1749
      %v1752 = vadd.f32 %v1744, %v1750
      %v1753 = vadd.f32 %v1745, %v1750
      %1754 = vst.msk [vmem:[%s575] sm:$0xff] %vm607, %v1752
      %1755 = vst.msk [vmem:[%s575 + $0x8] sm:$0xff] %vm607, %v1753
      %p1756 = scmp.lt.s32.totalorder %s29, 1
      %s1757 = scalar_select %p1756, %s29, 1
      %s1758 = smul.addr %s1757, 2
      %s1759 = smul.addr %s1758, 8
      %s1760 = scalar_lea.vmem %s18, %s1759
      // Predicated region
      $region93: #{encoder_forward.9} parent=91 // pred_check
        %p1761 = pneg %p430
      $region94: #{encoder_forward.9} parent=91 // pred_check_branch
        %1763 = sbr.rel (%p1761) target = $region96
      $region95: #{encoder_forward.9} parent=91 // pred_region
        _
      $region96: #{encoder_forward.9} parent=91 // pred_fallthru
        _
    $region92: #{encoder_forward.9} parent=5 // pred_fallthru
      _
    %p1764 = scmp.le.s32.totalorder 2, %s24
    // Predicated region
    $region97: #{encoder_forward.9} parent=5 // pred_check
      %p1765 = pneg %p1764
    $region98: #{encoder_forward.9} parent=5 // pred_check_branch
      %1767 = sbr.rel (%p1765) target = $region100
    $region99: #{encoder_forward.9} parent=5 // pred_region
      %s1768 = ssub.s32 %s24, 2
      // Predicated region
      $region101: #{encoder_forward.9} parent=99 // pred_check
        %p1769 = pneg %p436
      $region102: #{encoder_forward.9} parent=99 // pred_check_branch
        %1771 = sbr.rel (%p1769) target = $region104
      $region103: #{encoder_forward.9} parent=99 // pred_region
        %p1772 = scmp.lt.s32.totalorder %s30, 1
        %s1773 = scalar_select %p1772, %s30, 1
        %s1774 = smul.addr %s1773, 2
        %s1775 = smul.addr %s1774, 8
        %s1776 = scalar_lea.vmem %s18, %s1775
      $region104: #{encoder_forward.9} parent=99 // pred_fallthru
        _
    $region100: #{encoder_forward.9} parent=5 // pred_fallthru
      _
  $region6: #{encoder_forward.9} parent=0 // loop_footer
    %s28 = sadd.s32 1, %s24
  $region7: #{encoder_forward.9} parent=0 // loop_footer_branch
    %23 = sbr.rel target = $region3
  $region8: #{encoder_forward.9} parent=0 // loop_exit
    _

// kernel: encoder_forward.11
$region0: #{encoder_forward.11}
  #allocation0 [shape = 'u32[]', space=smem, size = 0x4, offset = 0x4, fixed_abs, tag = 'smem constant byte address 0x4 - core index']
  #allocation1 [shape = 'u32[144,128]{1,0:T(1,128)}', space=vmem, size = 0x12000, scoped, tag = 'internal scratch']
  %s0 = inlined_call_operand.vmem [shape: f32[2,16,32], index: 0, kind: input, shape index: {}]
  %s1 = inlined_call_operand.vmem [shape: bf16[32,32], index: 1, kind: input, shape index: {}]
  %s2 = inlined_call_operand.vmem [shape: f32[1,32], index: 2, kind: input, shape index: {}]
  %s3 = inlined_call_operand.vmem [shape: bf16[32,32], index: 3, kind: input, shape index: {}]
  %s4 = inlined_call_operand.vmem [shape: f32[1,32], index: 4, kind: input, shape index: {}]
  %s5 = inlined_call_operand.vmem [shape: bf16[32,32], index: 5, kind: input, shape index: {}]
  %s6 = inlined_call_operand.vmem [shape: f32[1,32], index: 6, kind: input, shape index: {}]
  %s7 = inlined_call_operand.vmem [shape: bf16[4,8,32], index: 7, kind: input, shape index: {}]
  %s8 = inlined_call_operand.vmem [shape: f32[1,32], index: 8, kind: input, shape index: {}]
  %s9 = inlined_call_operand.vmem [shape: bf16[32,128], index: 9, kind: input, shape index: {}]
  %s10 = inlined_call_operand.vmem [shape: f32[1,128], index: 10, kind: input, shape index: {}]
  %s11 = inlined_call_operand.vmem [shape: bf16[128,32], index: 11, kind: input, shape index: {}]
  %s12 = inlined_call_operand.vmem [shape: f32[1,32], index: 12, kind: input, shape index: {}]
  %s13 = inlined_call_operand.vmem [shape: f32[1,32], index: 13, kind: input, shape index: {}]
  %s14 = inlined_call_operand.vmem [shape: f32[1,32], index: 14, kind: input, shape index: {}]
  %s15 = inlined_call_operand.vmem [shape: f32[1,32], index: 15, kind: input, shape index: {}]
  %s16 = inlined_call_operand.vmem [shape: f32[1,32], index: 16, kind: input, shape index: {}]
  %s17 = inlined_call_operand.hbm [shape: f32[2,16,32], index: 17, kind: output, shape index: {}]
  %s18 = sld [smem:[#allocation0]]
  $region101: #{encoder_forward.11} parent=0
    _
  %s20 = ssub.s32 1, %s18
  %s21 = scalar_select 0, %s20, %s18
  $region1: #{encoder_forward.11} parent=0
    #allocation2 [shape = 'u8[16384]{0}', space=vmem, size = 0x4000, scoped, tag = 'output window, operand 0']
    #allocation3 [shape = 's32[2]{0}', space=sflag, size = 0x8, scoped, tag = 'scoped memory for encoder_forward.11']
    %22 = vsyncpa [#allocation3], 0
    %s23 = scalar_lea.sflag [#allocation3], 1
    %24 = vsyncpa %s23, 0
    loop: start=0, step=1, limit=4
    $region2: #{encoder_forward.11} parent=1 // loop_pre_header
      _
    $region3: #{encoder_forward.11} parent=1 // loop_header
      %s26 = sphi 0, %s30
      %p27 = scmp.ge.s32.totalorder %s26, 4
      %s36 = sphi 0, %s38
      %s39 = sphi 0, %s36
      %s40 = sphi 0, %s39
      %s56 = sphi 0, %s40
      %s60 = sphi 0, %s60
      %s62 = sphi 0, %s60
      %s63 = sphi 0, %s62
      %s77 = sphi 0, %s63
      %s81 = sphi 0, %s81
      %s83 = sphi 0, %s81
      %s84 = sphi 0, %s83
      %s98 = sphi 0, %s84
      %s102 = sphi 0, %s102
      %s104 = sphi 0, %s102
      %s105 = sphi 0, %s104
      %s119 = sphi 0, %s105
      %s123 = sphi 0, %s123
      %s125 = sphi 0, %s123
      %s126 = sphi 0, %s125
      %s140 = sphi 0, %s126
      %s144 = sphi 0, %s144
      %s146 = sphi 0, %s144
      %s147 = sphi 0, %s146
      %s161 = sphi 0, %s147
      %s165 = sphi 0, %s165
      %s167 = sphi 0, %s165
      %s168 = sphi 0, %s167
      %s182 = sphi 0, %s168
      %s186 = sphi 0, %s186
      %s188 = sphi 0, %s186
      %s189 = sphi 0, %s188
      %s203 = sphi 0, %s189
      %s207 = sphi 0, %s207
      %s209 = sphi 0, %s207
      %s210 = sphi 0, %s209
      %s224 = sphi 0, %s210
      %s228 = sphi 0, %s228
      %s230 = sphi 0, %s228
      %s231 = sphi 0, %s230
      %s245 = sphi 0, %s231
      %s249 = sphi 0, %s249
      %s251 = sphi 0, %s249
      %s252 = sphi 0, %s251
      %s266 = sphi 0, %s252
      %s270 = sphi 0, %s270
      %s272 = sphi 0, %s270
      %s273 = sphi 0, %s272
      %s287 = sphi 0, %s273
      %s291 = sphi 0, %s291
      %s293 = sphi 0, %s291
      %s294 = sphi 0, %s293
      %s308 = sphi 0, %s294
      %s312 = sphi 0, %s312
      %s314 = sphi 0, %s312
      %s315 = sphi 0, %s314
      %s329 = sphi 0, %s315
      %s333 = sphi 0, %s333
      %s335 = sphi 0, %s333
      %s336 = sphi 0, %s335
      %s350 = sphi 0, %s336
      %s354 = sphi 0, %s354
      %s356 = sphi 0, %s354
      %s357 = sphi 0, %s356
      %s371 = sphi 0, %s357
      %s375 = sphi 0, %s375
      %s377 = sphi 0, %s375
      %s378 = sphi 0, %s377
      %s392 = sphi 0, %s378
      %s398 = sphi 0, %s400
      %s401 = sphi 0, %s398
      %s402 = sphi 0, %s401
      %s418 = sphi 0, %s402
    $region4: #{encoder_forward.11} parent=1 // loop_header_branch
      %29 = sbr.rel (%p27) target = $region8
    $region5: #{encoder_forward.11} parent=1 // loop_body
      %s31 = ssub.s32 %s26, 1
      %s32 = ssub.s32 %s26, 2
      %s33 = sadd.s32 %s26, 1
      %s34 = ssub.s32 %s26, %s33
      %p35 = scmp.eq.s32.totalorder %s34, 0
      %s37 = sadd.s32 %s36, 1
      %s38 = scalar_select %p35, %s36, %s37
      %p41 = pneg %p35
      %p42 = scmp.eq.s32.totalorder %s26, 1
      %p43 = por %p41, %p42
      %p44 = scmp.ne.s32.totalorder %s36, %s39
      %p45 = scmp.eq.s32.totalorder %s26, 0
      %p46 = por %p44, %p45
      %p47 = scmp.ne.s32.totalorder %s36, %s39
      %p48 = scmp.eq.s32.totalorder %s31, 1
      %p49 = por %p47, %p48
      %p50 = scmp.ne.s32.totalorder %s39, %s40
      %p51 = scmp.eq.s32.totalorder %s31, 0
      %p52 = por %p50, %p51
      %p53 = scmp.ne.s32.totalorder %s39, %s40
      %p54 = scmp.eq.s32.totalorder %s32, 1
      %p55 = por %p53, %p54
      %p57 = scmp.ne.s32.totalorder %s40, %s56
      %p58 = scmp.eq.s32.totalorder %s32, 0
      %p59 = por %p57, %p58
      %s61 = sadd.s32 %s60, 1
      %p64 = scmp.eq.s32.totalorder %s26, 1
      %p65 = scmp.ne.s32.totalorder %s60, %s62
      %p66 = scmp.eq.s32.totalorder %s26, 0
      %p67 = por %p65, %p66
      %p68 = scmp.ne.s32.totalorder %s60, %s62
      %p69 = scmp.eq.s32.totalorder %s31, 1
      %p70 = por %p68, %p69
      %p71 = scmp.ne.s32.totalorder %s62, %s63
      %p72 = scmp.eq.s32.totalorder %s31, 0
      %p73 = por %p71, %p72
      %p74 = scmp.ne.s32.totalorder %s62, %s63
      %p75 = scmp.eq.s32.totalorder %s32, 1
      %p76 = por %p74, %p75
      %p78 = scmp.ne.s32.totalorder %s63, %s77
      %p79 = scmp.eq.s32.totalorder %s32, 0
      %p80 = por %p78, %p79
      %s82 = sadd.s32 %s81, 1
      %p85 = scmp.eq.s32.totalorder %s26, 1
      %p86 = scmp.ne.s32.totalorder %s81, %s83
      %p87 = scmp.eq.s32.totalorder %s26, 0
      %p88 = por %p86, %p87
      %p89 = scmp.ne.s32.totalorder %s81, %s83
      %p90 = scmp.eq.s32.totalorder %s31, 1
      %p91 = por %p89, %p90
      %p92 = scmp.ne.s32.totalorder %s83, %s84
      %p93 = scmp.eq.s32.totalorder %s31, 0
      %p94 = por %p92, %p93
      %p95 = scmp.ne.s32.totalorder %s83, %s84
      %p96 = scmp.eq.s32.totalorder %s32, 1
      %p97 = por %p95, %p96
      %p99 = scmp.ne.s32.totalorder %s84, %s98
      %p100 = scmp.eq.s32.totalorder %s32, 0
      %p101 = por %p99, %p100
      %s103 = sadd.s32 %s102, 1
      %p106 = scmp.eq.s32.totalorder %s26, 1
      %p107 = scmp.ne.s32.totalorder %s102, %s104
      %p108 = scmp.eq.s32.totalorder %s26, 0
      %p109 = por %p107, %p108
      %p110 = scmp.ne.s32.totalorder %s102, %s104
      %p111 = scmp.eq.s32.totalorder %s31, 1
      %p112 = por %p110, %p111
      %p113 = scmp.ne.s32.totalorder %s104, %s105
      %p114 = scmp.eq.s32.totalorder %s31, 0
      %p115 = por %p113, %p114
      %p116 = scmp.ne.s32.totalorder %s104, %s105
      %p117 = scmp.eq.s32.totalorder %s32, 1
      %p118 = por %p116, %p117
      %p120 = scmp.ne.s32.totalorder %s105, %s119
      %p121 = scmp.eq.s32.totalorder %s32, 0
      %p122 = por %p120, %p121
      %s124 = sadd.s32 %s123, 1
      %p127 = scmp.eq.s32.totalorder %s26, 1
      %p128 = scmp.ne.s32.totalorder %s123, %s125
      %p129 = scmp.eq.s32.totalorder %s26, 0
      %p130 = por %p128, %p129
      %p131 = scmp.ne.s32.totalorder %s123, %s125
      %p132 = scmp.eq.s32.totalorder %s31, 1
      %p133 = por %p131, %p132
      %p134 = scmp.ne.s32.totalorder %s125, %s126
      %p135 = scmp.eq.s32.totalorder %s31, 0
      %p136 = por %p134, %p135
      %p137 = scmp.ne.s32.totalorder %s125, %s126
      %p138 = scmp.eq.s32.totalorder %s32, 1
      %p139 = por %p137, %p138
      %p141 = scmp.ne.s32.totalorder %s126, %s140
      %p142 = scmp.eq.s32.totalorder %s32, 0
      %p143 = por %p141, %p142
      %s145 = sadd.s32 %s144, 1
      %p148 = scmp.eq.s32.totalorder %s26, 1
      %p149 = scmp.ne.s32.totalorder %s144, %s146
      %p150 = scmp.eq.s32.totalorder %s26, 0
      %p151 = por %p149, %p150
      %p152 = scmp.ne.s32.totalorder %s144, %s146
      %p153 = scmp.eq.s32.totalorder %s31, 1
      %p154 = por %p152, %p153
      %p155 = scmp.ne.s32.totalorder %s146, %s147
      %p156 = scmp.eq.s32.totalorder %s31, 0
      %p157 = por %p155, %p156
      %p158 = scmp.ne.s32.totalorder %s146, %s147
      %p159 = scmp.eq.s32.totalorder %s32, 1
      %p160 = por %p158, %p159
      %p162 = scmp.ne.s32.totalorder %s147, %s161
      %p163 = scmp.eq.s32.totalorder %s32, 0
      %p164 = por %p162, %p163
      %s166 = sadd.s32 %s165, 1
      %p169 = scmp.eq.s32.totalorder %s26, 1
      %p170 = scmp.ne.s32.totalorder %s165, %s167
      %p171 = scmp.eq.s32.totalorder %s26, 0
      %p172 = por %p170, %p171
      %p173 = scmp.ne.s32.totalorder %s165, %s167
      %p174 = scmp.eq.s32.totalorder %s31, 1
      %p175 = por %p173, %p174
      %p176 = scmp.ne.s32.totalorder %s167, %s168
      %p177 = scmp.eq.s32.totalorder %s31, 0
      %p178 = por %p176, %p177
      %p179 = scmp.ne.s32.totalorder %s167, %s168
      %p180 = scmp.eq.s32.totalorder %s32, 1
      %p181 = por %p179, %p180
      %p183 = scmp.ne.s32.totalorder %s168, %s182
      %p184 = scmp.eq.s32.totalorder %s32, 0
      %p185 = por %p183, %p184
      %s187 = sadd.s32 %s186, 1
      %p190 = scmp.eq.s32.totalorder %s26, 1
      %p191 = scmp.ne.s32.totalorder %s186, %s188
      %p192 = scmp.eq.s32.totalorder %s26, 0
      %p193 = por %p191, %p192
      %p194 = scmp.ne.s32.totalorder %s186, %s188
      %p195 = scmp.eq.s32.totalorder %s31, 1
      %p196 = por %p194, %p195
      %p197 = scmp.ne.s32.totalorder %s188, %s189
      %p198 = scmp.eq.s32.totalorder %s31, 0
      %p199 = por %p197, %p198
      %p200 = scmp.ne.s32.totalorder %s188, %s189
      %p201 = scmp.eq.s32.totalorder %s32, 1
      %p202 = por %p200, %p201
      %p204 = scmp.ne.s32.totalorder %s189, %s203
      %p205 = scmp.eq.s32.totalorder %s32, 0
      %p206 = por %p204, %p205
      %s208 = sadd.s32 %s207, 1
      %p211 = scmp.eq.s32.totalorder %s26, 1
      %p212 = scmp.ne.s32.totalorder %s207, %s209
      %p213 = scmp.eq.s32.totalorder %s26, 0
      %p214 = por %p212, %p213
      %p215 = scmp.ne.s32.totalorder %s207, %s209
      %p216 = scmp.eq.s32.totalorder %s31, 1
      %p217 = por %p215, %p216
      %p218 = scmp.ne.s32.totalorder %s209, %s210
      %p219 = scmp.eq.s32.totalorder %s31, 0
      %p220 = por %p218, %p219
      %p221 = scmp.ne.s32.totalorder %s209, %s210
      %p222 = scmp.eq.s32.totalorder %s32, 1
      %p223 = por %p221, %p222
      %p225 = scmp.ne.s32.totalorder %s210, %s224
      %p226 = scmp.eq.s32.totalorder %s32, 0
      %p227 = por %p225, %p226
      %s229 = sadd.s32 %s228, 1
      %p232 = scmp.eq.s32.totalorder %s26, 1
      %p233 = scmp.ne.s32.totalorder %s228, %s230
      %p234 = scmp.eq.s32.totalorder %s26, 0
      %p235 = por %p233, %p234
      %p236 = scmp.ne.s32.totalorder %s228, %s230
      %p237 = scmp.eq.s32.totalorder %s31, 1
      %p238 = por %p236, %p237
      %p239 = scmp.ne.s32.totalorder %s230, %s231
      %p240 = scmp.eq.s32.totalorder %s31, 0
      %p241 = por %p239, %p240
      %p242 = scmp.ne.s32.totalorder %s230, %s231
      %p243 = scmp.eq.s32.totalorder %s32, 1
      %p244 = por %p242, %p243
      %p246 = scmp.ne.s32.totalorder %s231, %s245
      %p247 = scmp.eq.s32.totalorder %s32, 0
      %p248 = por %p246, %p247
      %s250 = sadd.s32 %s249, 1
      %p253 = scmp.eq.s32.totalorder %s26, 1
      %p254 = scmp.ne.s32.totalorder %s249, %s251
      %p255 = scmp.eq.s32.totalorder %s26, 0
      %p256 = por %p254, %p255
      %p257 = scmp.ne.s32.totalorder %s249, %s251
      %p258 = scmp.eq.s32.totalorder %s31, 1
      %p259 = por %p257, %p258
      %p260 = scmp.ne.s32.totalorder %s251, %s252
      %p261 = scmp.eq.s32.totalorder %s31, 0
      %p262 = por %p260, %p261
      %p263 = scmp.ne.s32.totalorder %s251, %s252
      %p264 = scmp.eq.s32.totalorder %s32, 1
      %p265 = por %p263, %p264
      %p267 = scmp.ne.s32.totalorder %s252, %s266
      %p268 = scmp.eq.s32.totalorder %s32, 0
      %p269 = por %p267, %p268
      %s271 = sadd.s32 %s270, 1
      %p274 = scmp.eq.s32.totalorder %s26, 1
      %p275 = scmp.ne.s32.totalorder %s270, %s272
      %p276 = scmp.eq.s32.totalorder %s26, 0
      %p277 = por %p275, %p276
      %p278 = scmp.ne.s32.totalorder %s270, %s272
      %p279 = scmp.eq.s32.totalorder %s31, 1
      %p280 = por %p278, %p279
      %p281 = scmp.ne.s32.totalorder %s272, %s273
      %p282 = scmp.eq.s32.totalorder %s31, 0
      %p283 = por %p281, %p282
      %p284 = scmp.ne.s32.totalorder %s272, %s273
      %p285 = scmp.eq.s32.totalorder %s32, 1
      %p286 = por %p284, %p285
      %p288 = scmp.ne.s32.totalorder %s273, %s287
      %p289 = scmp.eq.s32.totalorder %s32, 0
      %p290 = por %p288, %p289
      %s292 = sadd.s32 %s291, 1
      %p295 = scmp.eq.s32.totalorder %s26, 1
      %p296 = scmp.ne.s32.totalorder %s291, %s293
      %p297 = scmp.eq.s32.totalorder %s26, 0
      %p298 = por %p296, %p297
      %p299 = scmp.ne.s32.totalorder %s291, %s293
      %p300 = scmp.eq.s32.totalorder %s31, 1
      %p301 = por %p299, %p300
      %p302 = scmp.ne.s32.totalorder %s293, %s294
      %p303 = scmp.eq.s32.totalorder %s31, 0
      %p304 = por %p302, %p303
      %p305 = scmp.ne.s32.totalorder %s293, %s294
      %p306 = scmp.eq.s32.totalorder %s32, 1
      %p307 = por %p305, %p306
      %p309 = scmp.ne.s32.totalorder %s294, %s308
      %p310 = scmp.eq.s32.totalorder %s32, 0
      %p311 = por %p309, %p310
      %s313 = sadd.s32 %s312, 1
      %p316 = scmp.eq.s32.totalorder %s26, 1
      %p317 = scmp.ne.s32.totalorder %s312, %s314
      %p318 = scmp.eq.s32.totalorder %s26, 0
      %p319 = por %p317, %p318
      %p320 = scmp.ne.s32.totalorder %s312, %s314
      %p321 = scmp.eq.s32.totalorder %s31, 1
      %p322 = por %p320, %p321
      %p323 = scmp.ne.s32.totalorder %s314, %s315
      %p324 = scmp.eq.s32.totalorder %s31, 0
      %p325 = por %p323, %p324
      %p326 = scmp.ne.s32.totalorder %s314, %s315
      %p327 = scmp.eq.s32.totalorder %s32, 1
      %p328 = por %p326, %p327
      %p330 = scmp.ne.s32.totalorder %s315, %s329
      %p331 = scmp.eq.s32.totalorder %s32, 0
      %p332 = por %p330, %p331
      %s334 = sadd.s32 %s333, 1
      %p337 = scmp.eq.s32.totalorder %s26, 1
      %p338 = scmp.ne.s32.totalorder %s333, %s335
      %p339 = scmp.eq.s32.totalorder %s26, 0
      %p340 = por %p338, %p339
      %p341 = scmp.ne.s32.totalorder %s333, %s335
      %p342 = scmp.eq.s32.totalorder %s31, 1
      %p343 = por %p341, %p342
      %p344 = scmp.ne.s32.totalorder %s335, %s336
      %p345 = scmp.eq.s32.totalorder %s31, 0
      %p346 = por %p344, %p345
      %p347 = scmp.ne.s32.totalorder %s335, %s336
      %p348 = scmp.eq.s32.totalorder %s32, 1
      %p349 = por %p347, %p348
      %p351 = scmp.ne.s32.totalorder %s336, %s350
      %p352 = scmp.eq.s32.totalorder %s32, 0
      %p353 = por %p351, %p352
      %s355 = sadd.s32 %s354, 1
      %p358 = scmp.eq.s32.totalorder %s26, 1
      %p359 = scmp.ne.s32.totalorder %s354, %s356
      %p360 = scmp.eq.s32.totalorder %s26, 0
      %p361 = por %p359, %p360
      %p362 = scmp.ne.s32.totalorder %s354, %s356
      %p363 = scmp.eq.s32.totalorder %s31, 1
      %p364 = por %p362, %p363
      %p365 = scmp.ne.s32.totalorder %s356, %s357
      %p366 = scmp.eq.s32.totalorder %s31, 0
      %p367 = por %p365, %p366
      %p368 = scmp.ne.s32.totalorder %s356, %s357
      %p369 = scmp.eq.s32.totalorder %s32, 1
      %p370 = por %p368, %p369
      %p372 = scmp.ne.s32.totalorder %s357, %s371
      %p373 = scmp.eq.s32.totalorder %s32, 0
      %p374 = por %p372, %p373
      %s376 = sadd.s32 %s375, 1
      %p379 = scmp.eq.s32.totalorder %s26, 1
      %p380 = scmp.ne.s32.totalorder %s375, %s377
      %p381 = scmp.eq.s32.totalorder %s26, 0
      %p382 = por %p380, %p381
      %p383 = scmp.ne.s32.totalorder %s375, %s377
      %p384 = scmp.eq.s32.totalorder %s31, 1
      %p385 = por %p383, %p384
      %p386 = scmp.ne.s32.totalorder %s377, %s378
      %p387 = scmp.eq.s32.totalorder %s31, 0
      %p388 = por %p386, %p387
      %p389 = scmp.ne.s32.totalorder %s377, %s378
      %p390 = scmp.eq.s32.totalorder %s32, 1
      %p391 = por %p389, %p390
      %p393 = scmp.ne.s32.totalorder %s378, %s392
      %p394 = scmp.eq.s32.totalorder %s32, 0
      %p395 = por %p393, %p394
      %s396 = ssub.s32 %s26, %s33
      %p397 = scmp.eq.s32.totalorder %s396, 0
      %s399 = sadd.s32 %s398, 1
      %s400 = scalar_select %p397, %s398, %s399
      %p403 = pneg %p397
      %p404 = scmp.eq.s32.totalorder %s26, 1
      %p405 = por %p403, %p404
      %p406 = scmp.ne.s32.totalorder %s398, %s401
      %p407 = scmp.eq.s32.totalorder %s26, 0
      %p408 = por %p406, %p407
      %p409 = scmp.ne.s32.totalorder %s398, %s401
      %p410 = scmp.eq.s32.totalorder %s31, 1
      %p411 = por %p409, %p410
      %p412 = scmp.ne.s32.totalorder %s401, %s402
      %p413 = scmp.eq.s32.totalorder %s31, 0
      %p414 = por %p412, %p413
      %p415 = scmp.ne.s32.totalorder %s401, %s402
      %p416 = scmp.eq.s32.totalorder %s32, 1
      %p417 = por %p415, %p416
      %p419 = scmp.ne.s32.totalorder %s402, %s418
      %p420 = scmp.eq.s32.totalorder %s32, 0
      %p421 = por %p419, %p420
      %p422 = scmp.le.s32.totalorder 1, %s26
      %p423 = scmp.lt.s32.totalorder %s26, 3
      %p424 = pnand %p422, %p423
      %p425 = pneg %p424
      // Predicated region
      $region9: #{encoder_forward.11} parent=5 // pred_check
        _
      $region10: #{encoder_forward.11} parent=5 // pred_check_branch
        %427 = sbr.rel (%p424) target = $region12
      $region11: #{encoder_forward.11} parent=5 // pred_region
        %s428 = ssub.s32 %s26, 1
        // Predicated region
        $region13: #{encoder_forward.11} parent=11 // pred_check
          %p429 = pneg %p73
        $region14: #{encoder_forward.11} parent=11 // pred_check_branch
          %431 = sbr.rel (%p429) target = $region16
        $region15: #{encoder_forward.11} parent=11 // pred_region
          _
        $region16: #{encoder_forward.11} parent=11 // pred_fallthru
          _
        // Predicated region
        $region17: #{encoder_forward.11} parent=11 // pred_check
          %p432 = pneg %p94
        $region18: #{encoder_forward.11} parent=11 // pred_check_branch
          %434 = sbr.rel (%p432) target = $region20
        $region19: #{encoder_forward.11} parent=11 // pred_region
          _
        $region20: #{encoder_forward.11} parent=11 // pred_fallthru
          _
        // Predicated region
        $region21: #{encoder_forward.11} parent=11 // pred_check
          %p435 = pneg %p115
        $region22: #{encoder_forward.11} parent=11 // pred_check_branch
          %437 = sbr.rel (%p435) target = $region24
        $region23: #{encoder_forward.11} parent=11 // pred_region
          _
        $region24: #{encoder_forward.11} parent=11 // pred_fallthru
          _
        // Predicated region
        $region25: #{encoder_forward.11} parent=11 // pred_check
          %p438 = pneg %p136
        $region26: #{encoder_forward.11} parent=11 // pred_check_branch
          %440 = sbr.rel (%p438) target = $region28
        $region27: #{encoder_forward.11} parent=11 // pred_region
          _
        $region28: #{encoder_forward.11} parent=11 // pred_fallthru
          _
        // Predicated region
        $region29: #{encoder_forward.11} parent=11 // pred_check
          %p441 = pneg %p157
        $region30: #{encoder_forward.11} parent=11 // pred_check_branch
          %443 = sbr.rel (%p441) target = $region32
        $region31: #{encoder_forward.11} parent=11 // pred_region
          _
        $region32: #{encoder_forward.11} parent=11 // pred_fallthru
          _
        // Predicated region
        $region33: #{encoder_forward.11} parent=11 // pred_check
          %p444 = pneg %p178
        $region34: #{encoder_forward.11} parent=11 // pred_check_branch
          %446 = sbr.rel (%p444) target = $region36
        $region35: #{encoder_forward.11} parent=11 // pred_region
          _
        $region36: #{encoder_forward.11} parent=11 // pred_fallthru
          _
        // Predicated region
        $region37: #{encoder_forward.11} parent=11 // pred_check
          %p447 = pneg %p199
        $region38: #{encoder_forward.11} parent=11 // pred_check_branch
          %449 = sbr.rel (%p447) target = $region40
        $region39: #{encoder_forward.11} parent=11 // pred_region
          _
        $region40: #{encoder_forward.11} parent=11 // pred_fallthru
          _
        // Predicated region
        $region41: #{encoder_forward.11} parent=11 // pred_check
          %p450 = pneg %p220
        $region42: #{encoder_forward.11} parent=11 // pred_check_branch
          %452 = sbr.rel (%p450) target = $region44
        $region43: #{encoder_forward.11} parent=11 // pred_region
          _
        $region44: #{encoder_forward.11} parent=11 // pred_fallthru
          _
        // Predicated region
        $region45: #{encoder_forward.11} parent=11 // pred_check
          %p453 = pneg %p241
        $region46: #{encoder_forward.11} parent=11 // pred_check_branch
          %455 = sbr.rel (%p453) target = $region48
        $region47: #{encoder_forward.11} parent=11 // pred_region
          _
        $region48: #{encoder_forward.11} parent=11 // pred_fallthru
          _
        // Predicated region
        $region49: #{encoder_forward.11} parent=11 // pred_check
          %p456 = pneg %p262
        $region50: #{encoder_forward.11} parent=11 // pred_check_branch
          %458 = sbr.rel (%p456) target = $region52
        $region51: #{encoder_forward.11} parent=11 // pred_region
          _
        $region52: #{encoder_forward.11} parent=11 // pred_fallthru
          _
        // Predicated region
        $region53: #{encoder_forward.11} parent=11 // pred_check
          %p459 = pneg %p283
        $region54: #{encoder_forward.11} parent=11 // pred_check_branch
          %461 = sbr.rel (%p459) target = $region56
        $region55: #{encoder_forward.11} parent=11 // pred_region
          _
        $region56: #{encoder_forward.11} parent=11 // pred_fallthru
          _
        // Predicated region
        $region57: #{encoder_forward.11} parent=11 // pred_check
          %p462 = pneg %p304
        $region58: #{encoder_forward.11} parent=11 // pred_check_branch
          %464 = sbr.rel (%p462) target = $region60
        $region59: #{encoder_forward.11} parent=11 // pred_region
          _
        $region60: #{encoder_forward.11} parent=11 // pred_fallthru
          _
        // Predicated region
        $region61: #{encoder_forward.11} parent=11 // pred_check
          %p465 = pneg %p325
        $region62: #{encoder_forward.11} parent=11 // pred_check_branch
          %467 = sbr.rel (%p465) target = $region64
        $region63: #{encoder_forward.11} parent=11 // pred_region
          _
        $region64: #{encoder_forward.11} parent=11 // pred_fallthru
          _
        // Predicated region
        $region65: #{encoder_forward.11} parent=11 // pred_check
          %p468 = pneg %p346
        $region66: #{encoder_forward.11} parent=11 // pred_check_branch
          %470 = sbr.rel (%p468) target = $region68
        $region67: #{encoder_forward.11} parent=11 // pred_region
          _
        $region68: #{encoder_forward.11} parent=11 // pred_fallthru
          _
        // Predicated region
        $region69: #{encoder_forward.11} parent=11 // pred_check
          %p471 = pneg %p367
        $region70: #{encoder_forward.11} parent=11 // pred_check_branch
          %473 = sbr.rel (%p471) target = $region72
        $region71: #{encoder_forward.11} parent=11 // pred_region
          _
        $region72: #{encoder_forward.11} parent=11 // pred_fallthru
          _
        // Predicated region
        $region73: #{encoder_forward.11} parent=11 // pred_check
          %p474 = pneg %p388
        $region74: #{encoder_forward.11} parent=11 // pred_check_branch
          %476 = sbr.rel (%p474) target = $region76
        $region75: #{encoder_forward.11} parent=11 // pred_region
          _
        $region76: #{encoder_forward.11} parent=11 // pred_fallthru
          _
      $region12: #{encoder_forward.11} parent=5 // pred_fallthru
        _
      %p477 = scmp.lt.s32.totalorder %s26, 2
      // Predicated region
      $region77: #{encoder_forward.11} parent=5 // pred_check
        %p478 = pneg %p477
      $region78: #{encoder_forward.11} parent=5 // pred_check_branch
        %480 = sbr.rel (%p478) target = $region80
      $region79: #{encoder_forward.11} parent=5 // pred_region
        // Predicated region
        $region81: #{encoder_forward.11} parent=79 // pred_check
          %p481 = pneg %p46
        $region82: #{encoder_forward.11} parent=79 // pred_check_branch
          %483 = sbr.rel (%p481) target = $region84
        $region83: #{encoder_forward.11} parent=79 // pred_region
          %p484 = scmp.lt.s32.totalorder %s26, 1
          %s485 = scalar_select %p484, %s26, 1
          %s486 = smul.addr %s485, 2
          %s487 = smul.addr %s486, 8
          %s488 = scalar_lea.vmem %s0, %s487
        $region84: #{encoder_forward.11} parent=79 // pred_fallthru
          _
      $region80: #{encoder_forward.11} parent=5 // pred_fallthru
        _
      %p489 = scmp.le.s32.totalorder 1, %s26
      %p490 = scmp.lt.s32.totalorder %s26, 3
      %p491 = pnand %p489, %p490
      %p492 = pneg %p491
      // Predicated region
      $region85: #{encoder_forward.11} parent=5 // pred_check
        _
      $region86: #{encoder_forward.11} parent=5 // pred_check_branch
        %494 = sbr.rel (%p491) target = $region88
      $region87: #{encoder_forward.11} parent=5 // pred_region
        %s495 = ssub.s32 %s26, 1
        %p496 = scmp.lt.s32.totalorder %s31, 1
        %s497 = scalar_select %p496, %s31, 1
        %s498 = smul.addr %s497, 2
        %s499 = smul.addr %s498, 8
        %s500 = scalar_lea.vmem %s0, %s499
        %p501 = pneg %p52
        %p502 = pneg %p49
        %p503 = pneg %p73
        %p504 = pneg %p70
        %p505 = pneg %p94
        %p506 = pneg %p91
        %p507 = pneg %p115
        %p508 = pneg %p112
        %p509 = pneg %p136
        %p510 = pneg %p133
        %p511 = pneg %p157
        %p512 = pneg %p154
        %p513 = pneg %p178
        %p514 = pneg %p175
        %p515 = pneg %p199
        %p516 = pneg %p196
        %p517 = pneg %p220
        %p518 = pneg %p217
        %p519 = pneg %p241
        %p520 = pneg %p238
        %p521 = pneg %p262
        %p522 = pneg %p259
        %p523 = pneg %p283
        %p524 = pneg %p280
        %p525 = pneg %p304
        %p526 = pneg %p301
        %p527 = pneg %p325
        %p528 = pneg %p322
        %p529 = pneg %p346
        %p530 = pneg %p343
        %p531 = pneg %p367
        %p532 = pneg %p364
        %p533 = pneg %p388
        %p534 = pneg %p385
        %p535 = pneg %p414
        %p536 = pneg %p411
        %s537 = sand.u32 %s401, 1
        %s538 = scalar_lea.sflag [#allocation3], %s537
        %s539 = sand.u32 %s401, 1
        %s540 = smul.addr %s539, 16
        %s541 = scalar_lea.vmem [#allocation2], %s540
        %p542 = scmp.lt.s32.totalorder %s31, 1
        %s543 = scalar_select %p542, %s31, 1
        %s544 = smul.addr %s543, 2
        %s545 = smul.addr %s544, 8
        %s546 = scalar_lea.vmem %s0, %s545
        %v548 = vld [vmem:[%s546] sm:$0xff]
        %v549 = vld [vmem:[%s546 + $0x8] sm:$0xff]
        %v550 = vpack.c.bf16 %v549, %v548
        %v551 = vld [vmem:[%s1] sm:$0xf]
        %v552 = vld [vmem:[%s1 + $0x4] sm:$0xf]
        %v553 = vld [vmem:[%s1 + $0x8] sm:$0xf]
        %v554 = vld [vmem:[%s1 + $0xc] sm:$0xf]
        %v555 = vld [vmem:[%s2] sm:$0x1]
        %v557 = vlaneseq
        %v558 = vshrl.u32 %v557, 7
        %v559 = vsub.s32 0, %v558
        %v560 = vrot.slane %v555, %v559
        %v566 = vunpack.c.l.b16 %v551
        %v567 = vunpack.c.l.b16 %v552
        %v568 = vunpack.c.l.b16 %v553
        %v569 = vunpack.c.l.b16 %v554
        %v570 = vpack.c.b16 %v567, %v566
        %v571 = vpack.c.b16 %v569, %v568
        %vm574 = vcmask 261120
        %v576 = vsel %vm574, %v550, 0
        %578 = vmatprep.subr.bf16.mxu0 0
        %579 = vmatpush1.bf16.msra.mxu0 %v570
        %580 = vmatprep.subr.bf16.mxu0 0
        %581 = vmatpush1.bf16.msra.mxu0 %v571
        %582 = vmatprep.subr.bf16.mxu0 0
        %583 = vmatpush1.bf16.msra.mxu0 0
        %584 = vmatprep.subr.bf16.mxu0 0
        %585 = vmatpush1.bf16.msra.mxu0 0
        %586 = vmatprep.subr.bf16.mxu0 0
        %587 = vmatpush1.bf16.msra.mxu0 0
        %588 = vmatprep.subr.bf16.mxu0 0
        %589 = vmatpush1.bf16.msra.mxu0 0
        %590 = vmatprep.subr.bf16.mxu0 0
        %591 = vmatpush1.bf16.msra.mxu0 0
        %592 = vmatprep.subr.bf16.mxu0 0
        %593 = vmatpush1.bf16.msra.mxu0 0
        %594 = vmatprep.subr.bf16.mxu0 0
        %595 = vmatpush1.bf16.msra.mxu0 0
        %596 = vmatprep.subr.bf16.mxu0 0
        %597 = vmatpush1.bf16.msra.mxu0 0
        %598 = vmatprep.subr.bf16.mxu0 0
        %599 = vmatpush1.bf16.msra.mxu0 0
        %600 = vmatprep.subr.bf16.mxu0 0
        %601 = vmatpush1.bf16.msra.mxu0 0
        %602 = vmatprep.subr.bf16.mxu0 0
        %603 = vmatpush1.bf16.msra.mxu0 0
        %604 = vmatprep.subr.bf16.mxu0 0
        %605 = vmatpush1.bf16.msra.mxu0 0
        %606 = vmatprep.subr.bf16.mxu0 0
        %607 = vmatpush1.bf16.msra.mxu0 0
        %608 = vmatprep.subr.bf16.mxu0 0
        %609 = vmatpush1.bf16.msra.mxu0 0
        %610 = vmatprep.mubr.bf16.mxu0 0
        %611 = vmatmul.mubr.bf16.gmra.mrb[0].mxu0 %v576
        %v612 = vpop.f32.mrb[0].mxu0
        %v613 = vadd.f32 %v560, %v612
        %v614 = vpop.f32.mrb[0].mxu0
        %v615 = vpop.f32.mrb[0].mxu0
        %v616 = vadd.f32 %v560, %v615
        %v617 = vpop.f32.mrb[0].mxu0
        %618 = vdwg.mxu0
        %v619 = vpack.c.bf16 %v616, %v613
        %v620 = vld [vmem:[%s3] sm:$0xf]
        %v621 = vld [vmem:[%s3 + $0x4] sm:$0xf]
        %v622 = vld [vmem:[%s3 + $0x8] sm:$0xf]
        %v623 = vld [vmem:[%s3 + $0xc] sm:$0xf]
        %v624 = vld [vmem:[%s4] sm:$0x1]
        %v626 = vlaneseq
        %v627 = vshrl.u32 %v626, 7
        %v628 = vsub.s32 0, %v627
        %v629 = vrot.slane %v624, %v628
        %v635 = vunpack.c.l.b16 %v620
        %v636 = vunpack.c.l.b16 %v621
        %v637 = vunpack.c.l.b16 %v622
        %v638 = vunpack.c.l.b16 %v623
        %v639 = vpack.c.b16 %v636, %v635
        %v640 = vpack.c.b16 %v638, %v637
        %643 = vmatprep.subr.bf16.mxu0 0
        %644 = vmatpush1.bf16.msra.mxu0 %v639
        %645 = vmatprep.subr.bf16.mxu0 0
        %646 = vmatpush1.bf16.msra.mxu0 %v640
        %647 = vmatprep.subr.bf16.mxu0 0
        %648 = vmatpush1.bf16.msra.mxu0 0
        %649 = vmatprep.subr.bf16.mxu0 0
        %650 = vmatpush1.bf16.msra.mxu0 0
        %651 = vmatprep.subr.bf16.mxu0 0
        %652 = vmatpush1.bf16.msra.mxu0 0
        %653 = vmatprep.subr.bf16.mxu0 0
        %654 = vmatpush1.bf16.msra.mxu0 0
        %655 = vmatprep.subr.bf16.mxu0 0
        %656 = vmatpush1.bf16.msra.mxu0 0
        %657 = vmatprep.subr.bf16.mxu0 0
        %658 = vmatpush1.bf16.msra.mxu0 0
        %659 = vmatprep.subr.bf16.mxu0 0
        %660 = vmatpush1.bf16.msra.mxu0 0
        %661 = vmatprep.subr.bf16.mxu0 0
        %662 = vmatpush1.bf16.msra.mxu0 0
        %663 = vmatprep.subr.bf16.mxu0 0
        %664 = vmatpush1.bf16.msra.mxu0 0
        %665 = vmatprep.subr.bf16.mxu0 0
        %666 = vmatpush1.bf16.msra.mxu0 0
        %667 = vmatprep.subr.bf16.mxu0 0
        %668 = vmatpush1.bf16.msra.mxu0 0
        %669 = vmatprep.subr.bf16.mxu0 0
        %670 = vmatpush1.bf16.msra.mxu0 0
        %671 = vmatprep.subr.bf16.mxu0 0
        %672 = vmatpush1.bf16.msra.mxu0 0
        %673 = vmatprep.subr.bf16.mxu0 0
        %674 = vmatpush1.bf16.msra.mxu0 0
        %675 = vmatprep.mubr.bf16.mxu0 0
        %676 = vmatmul.mubr.bf16.gmra.mrb[0].mxu0 %v576
        %v677 = vpop.f32.mrb[0].mxu0
        %v678 = vadd.f32 %v629, %v677
        %v679 = vpop.f32.mrb[0].mxu0
        %v680 = vpop.f32.mrb[0].mxu0
        %v681 = vadd.f32 %v629, %v680
        %v682 = vpop.f32.mrb[0].mxu0
        %683 = vdwg.mxu0
        %v684 = vpack.c.bf16 %v681, %v678
        %v685 = vld [vmem:[%s5] sm:$0xf]
        %v686 = vld [vmem:[%s5 + $0x4] sm:$0xf]
        %v687 = vld [vmem:[%s5 + $0x8] sm:$0xf]
        %v688 = vld [vmem:[%s5 + $0xc] sm:$0xf]
        %v689 = vld [vmem:[%s6] sm:$0x1]
        %v691 = vlaneseq
        %v692 = vshrl.u32 %v691, 7
        %v693 = vsub.s32 0, %v692
        %v694 = vrot.slane %v689, %v693
        %v700 = vunpack.c.l.b16 %v685
        %v701 = vunpack.c.l.b16 %v686
        %v702 = vunpack.c.l.b16 %v687
        %v703 = vunpack.c.l.b16 %v688
        %v704 = vpack.c.b16 %v701, %v700
        %v705 = vpack.c.b16 %v703, %v702
        %708 = vmatprep.subr.bf16.mxu0 0
        %709 = vmatpush1.bf16.msra.mxu0 %v704
        %710 = vmatprep.subr.bf16.mxu0 0
        %711 = vmatpush1.bf16.msra.mxu0 %v705
        %712 = vmatprep.subr.bf16.mxu0 0
        %713 = vmatpush1.bf16.msra.mxu0 0
        %714 = vmatprep.subr.bf16.mxu0 0
        %715 = vmatpush1.bf16.msra.mxu0 0
        %716 = vmatprep.subr.bf16.mxu0 0
        %717 = vmatpush1.bf16.msra.mxu0 0
        %718 = vmatprep.subr.bf16.mxu0 0
        %719 = vmatpush1.bf16.msra.mxu0 0
        %720 = vmatprep.subr.bf16.mxu0 0
        %721 = vmatpush1.bf16.msra.mxu0 0
        %722 = vmatprep.subr.bf16.mxu0 0
        %723 = vmatpush1.bf16.msra.mxu0 0
        %724 = vmatprep.subr.bf16.mxu0 0
        %725 = vmatpush1.bf16.msra.mxu0 0
        %726 = vmatprep.subr.bf16.mxu0 0
        %727 = vmatpush1.bf16.msra.mxu0 0
        %728 = vmatprep.subr.bf16.mxu0 0
        %729 = vmatpush1.bf16.msra.mxu0 0
        %730 = vmatprep.subr.bf16.mxu0 0
        %731 = vmatpush1.bf16.msra.mxu0 0
        %732 = vmatprep.subr.bf16.mxu0 0
        %733 = vmatpush1.bf16.msra.mxu0 0
        %734 = vmatprep.subr.bf16.mxu0 0
        %735 = vmatpush1.bf16.msra.mxu0 0
        %736 = vmatprep.subr.bf16.mxu0 0
        %737 = vmatpush1.bf16.msra.mxu0 0
        %738 = vmatprep.subr.bf16.mxu0 0
        %739 = vmatpush1.bf16.msra.mxu0 0
        %740 = vmatprep.mubr.bf16.mxu0 0
        %741 = vmatmul.mubr.bf16.gmra.mrb[0].mxu0 %v576
        %v742 = vpop.f32.mrb[0].mxu0
        %v743 = vadd.f32 %v694, %v742
        %v744 = vpop.f32.mrb[0].mxu0
        %v745 = vpop.f32.mrb[0].mxu0
        %v746 = vadd.f32 %v694, %v745
        %v747 = vpop.f32.mrb[0].mxu0
        %748 = vdwg.mxu0
        %v749 = vpack.c.bf16 %v746, %v743
        %vm750 = vcmask 64512
        %v752 = vsel %vm750, %v619, 0
        %v755 = vsel %vm750, %v684, 0
        %757 = vmatprep.subr.bf16.mxu0 0
        %758 = vmatpush1.bf16.xpose.msra.mxu0 %v755
        %759 = vmatprep.subr.bf16.mxu0 0
        %760 = vmatpush1.bf16.xpose.msra.mxu0 0
        %761 = vmatprep.subr.bf16.mxu0 0
        %762 = vmatpush1.bf16.xpose.msra.mxu0 0
        %763 = vmatprep.subr.bf16.mxu0 0
        %764 = vmatpush1.bf16.xpose.msra.mxu0 0
        %765 = vmatprep.subr.bf16.mxu0 0
        %766 = vmatpush1.bf16.xpose.msra.mxu0 0
        %767 = vmatprep.subr.bf16.mxu0 0
        %768 = vmatpush1.bf16.xpose.msra.mxu0 0
        %769 = vmatprep.subr.bf16.mxu0 0
        %770 = vmatpush1.bf16.xpose.msra.mxu0 0
        %771 = vmatprep.subr.bf16.mxu0 0
        %772 = vmatpush1.bf16.xpose.msra.mxu0 0
        %773 = vmatprep.subr.bf16.mxu0 0
        %774 = vmatpush1.bf16.xpose.msra.mxu0 0
        %775 = vmatprep.subr.bf16.mxu0 0
        %776 = vmatpush1.bf16.xpose.msra.mxu0 0
        %777 = vmatprep.subr.bf16.mxu0 0
        %778 = vmatpush1.bf16.xpose.msra.mxu0 0
        %779 = vmatprep.subr.bf16.mxu0 0
        %780 = vmatpush1.bf16.xpose.msra.mxu0 0
        %781 = vmatprep.subr.bf16.mxu0 0
        %782 = vmatpush1.bf16.xpose.msra.mxu0 0
        %783 = vmatprep.subr.bf16.mxu0 0
        %784 = vmatpush1.bf16.xpose.msra.mxu0 0
        %785 = vmatprep.subr.bf16.mxu0 0
        %786 = vmatpush1.bf16.xpose.msra.mxu0 0
        %787 = vmatprep.subr.bf16.mxu0 0
        %788 = vmatpush1.bf16.xpose.msra.mxu0 0
        %789 = vmatprep.mubr.bf16.mxu0 0
        %790 = vmatmul.mubr.bf16.gmra.mrb[0].mxu0 %v752
        %v791 = vpop.f32.mrb[0].mxu0
        %v792 = vadd.f32 0.0, %v791
        %v793 = vpop.f32.mrb[0].mxu0
        %v794 = vpop.f32.mrb[0].mxu0
        %v795 = vadd.f32 0.0, %v794
        %v796 = vpop.f32.mrb[0].mxu0
        %797 = vdwg.mxu0
        %vm798 = vcmask 130048
        %v799 = vsel %vm798, %v792, -inf
        %800 = vmax.xlane.f32.xlu0 %v799
        %v801 = vpop.xlane.xlu0 %800
        %v802 = vsel %vm798, %v795, -inf
        %803 = vmax.xlane.f32.xlu0 %v802
        %v804 = vpop.xlane.xlu0 %803
        %v805 = vsub.f32 %v792, %v801
        %v806 = vsub.f32 %v795, %v804
        %v807 = vmul.f32 %v805, 1.442695
        %v808 = vpow.pop %v807
        %v809 = vmul.f32 %v806, 1.442695
        %v810 = vpow.pop %v809
        %v811 = vsel %vm798, %v808, 0.0
        %812 = vadd.xlane.f32.xlu0 %v811
        %v813 = vpop.xlane.xlu0 %812
        %v814 = vsel %vm798, %v810, 0.0
        %815 = vadd.xlane.f32.xlu0 %v814
        %v816 = vpop.xlane.xlu0 %815
        %v817 = vrcp.pop %v813
        %v818 = vrcp.pop %v816
        %v819 = vmul.f32 %v808, %v817
        %v820 = vmul.f32 %v810, %v818
        %v821 = vpack.c.bf16 %v820, %v819
        %v823 = vsel %vm798, %v821, 0
        %825 = vmatprep.subr.bf16.mxu0 0
        %826 = vmatpush1.bf16.msra.mxu0 %v749
        %827 = vmatprep.subr.bf16.mxu0 0
        %828 = vmatpush1.bf16.msra.mxu0 0
        %829 = vmatprep.subr.bf16.mxu0 0
        %830 = vmatpush1.bf16.msra.mxu0 0
        %831 = vmatprep.subr.bf16.mxu0 0
        %832 = vmatpush1.bf16.msra.mxu0 0
        %833 = vmatprep.subr.bf16.mxu0 0
        %834 = vmatpush1.bf16.msra.mxu0 0
        %835 = vmatprep.subr.bf16.mxu0 0
        %836 = vmatpush1.bf16.msra.mxu0 0
        %837 = vmatprep.subr.bf16.mxu0 0
        %838 = vmatpush1.bf16.msra.mxu0 0
        %839 = vmatprep.subr.bf16.mxu0 0
        %840 = vmatpush1.bf16.msra.mxu0 0
        %841 = vmatprep.subr.bf16.mxu0 0
        %842 = vmatpush1.bf16.msra.mxu0 0
        %843 = vmatprep.subr.bf16.mxu0 0
        %844 = vmatpush1.bf16.msra.mxu0 0
        %845 = vmatprep.subr.bf16.mxu0 0
        %846 = vmatpush1.bf16.msra.mxu0 0
        %847 = vmatprep.subr.bf16.mxu0 0
        %848 = vmatpush1.bf16.msra.mxu0 0
        %849 = vmatprep.subr.bf16.mxu0 0
        %850 = vmatpush1.bf16.msra.mxu0 0
        %851 = vmatprep.subr.bf16.mxu0 0
        %852 = vmatpush1.bf16.msra.mxu0 0
        %853 = vmatprep.subr.bf16.mxu0 0
        %854 = vmatpush1.bf16.msra.mxu0 0
        %855 = vmatprep.subr.bf16.mxu0 0
        %856 = vmatpush1.bf16.msra.mxu0 0
        %857 = vmatprep.mubr.bf16.mxu0 0
        %858 = vmatmul.mubr.bf16.gmra.mrb[0].mxu0 %v823
        %v859 = vpop.f32.mrb[0].mxu0
        %v860 = vadd.f32 0.0, %v859
        %v861 = vpop.f32.mrb[0].mxu0
        %v862 = vpop.f32.mrb[0].mxu0
        %v863 = vadd.f32 0.0, %v862
        %v864 = vpop.f32.mrb[0].mxu0
        %865 = vdwg.mxu0
        %v866 = vpack.c.bf16 %v863, %v860
        %v867 = vld [vmem:[%s7] sm:$0xf]
        %869 = vrot.lane.b32.xlu0 %v619, 120
        %v870 = vpop.permute.xlu0 %869
        %872 = vrot.lane.b32.xlu0 %v684, 120
        %v873 = vpop.permute.xlu0 %872
        %v875 = vsel %vm750, %v870, 0
        %v878 = vsel %vm750, %v873, 0
        %880 = vmatprep.subr.bf16.mxu0 0
        %881 = vmatpush1.bf16.xpose.msra.mxu0 %v878
        %882 = vmatprep.subr.bf16.mxu0 0
        %883 = vmatpush1.bf16.xpose.msra.mxu0 0
        %884 = vmatprep.subr.bf16.mxu0 0
        %885 = vmatpush1.bf16.xpose.msra.mxu0 0
        %886 = vmatprep.subr.bf16.mxu0 0
        %887 = vmatpush1.bf16.xpose.msra.mxu0 0
        %888 = vmatprep.subr.bf16.mxu0 0
        %889 = vmatpush1.bf16.xpose.msra.mxu0 0
        %890 = vmatprep.subr.bf16.mxu0 0
        %891 = vmatpush1.bf16.xpose.msra.mxu0 0
        %892 = vmatprep.subr.bf16.mxu0 0
        %893 = vmatpush1.bf16.xpose.msra.mxu0 0
        %894 = vmatprep.subr.bf16.mxu0 0
        %895 = vmatpush1.bf16.xpose.msra.mxu0 0
        %896 = vmatprep.subr.bf16.mxu0 0
        %897 = vmatpush1.bf16.xpose.msra.mxu0 0
        %898 = vmatprep.subr.bf16.mxu0 0
        %899 = vmatpush1.bf16.xpose.msra.mxu0 0
        %900 = vmatprep.subr.bf16.mxu0 0
        %901 = vmatpush1.bf16.xpose.msra.mxu0 0
        %902 = vmatprep.subr.bf16.mxu0 0
        %903 = vmatpush1.bf16.xpose.msra.mxu0 0
        %904 = vmatprep.subr.bf16.mxu0 0
        %905 = vmatpush1.bf16.xpose.msra.mxu0 0
        %906 = vmatprep.subr.bf16.mxu0 0
        %907 = vmatpush1.bf16.xpose.msra.mxu0 0
        %908 = vmatprep.subr.bf16.mxu0 0
        %909 = vmatpush1.bf16.xpose.msra.mxu0 0
        %910 = vmatprep.subr.bf16.mxu0 0
        %911 = vmatpush1.bf16.xpose.msra.mxu0 0
        %912 = vmatprep.mubr.bf16.mxu0 0
        %913 = vmatmul.mubr.bf16.gmra.mrb[0].mxu0 %v875
        %v914 = vpop.f32.mrb[0].mxu0
        %v915 = vadd.f32 0.0, %v914
        %v916 = vpop.f32.mrb[0].mxu0
        %v917 = vpop.f32.mrb[0].mxu0
        %v918 = vadd.f32 0.0, %v917
        %v919 = vpop.f32.mrb[0].mxu0
        %920 = vdwg.mxu0
        %v921 = vsel %vm798, %v915, -inf
        %922 = vmax.xlane.f32.xlu0 %v921
        %v923 = vpop.xlane.xlu0 %922
        %v924 = vsel %vm798, %v918, -inf
        %925 = vmax.xlane.f32.xlu0 %v924
        %v926 = vpop.xlane.xlu0 %925
        %v927 = vsub.f32 %v915, %v923
        %v928 = vsub.f32 %v918, %v926
        %v929 = vmul.f32 %v927, 1.442695
        %v930 = vpow.pop %v929
        %v931 = vmul.f32 %v928, 1.442695
        %v932 = vpow.pop %v931
        %v933 = vsel %vm798, %v930, 0.0
        %934 = vadd.xlane.f32.xlu0 %v933
        %v935 = vpop.xlane.xlu0 %934
        %v936 = vsel %vm798, %v932, 0.0
        %937 = vadd.xlane.f32.xlu0 %v936
        %v938 = vpop.xlane.xlu0 %937
        %v939 = vrcp.pop %v935
        %v940 = vrcp.pop %v938
        %v941 = vmul.f32 %v930, %v939
        %v942 = vmul.f32 %v932, %v940
        %v943 = vpack.c.bf16 %v942, %v941
        %945 = vrot.lane.b32.xlu0 %v749, 120
        %v946 = vpop.permute.xlu0 %945
        %v949 = vsel %vm798, %v943, 0
        %951 = vmatprep.subr.bf16.mxu0 0
        %952 = vmatpush1.bf16.msra.mxu0 %v946
        %953 = vmatprep.subr.bf16.mxu0 0
        %954 = vmatpush1.bf16.msra.mxu0 0
        %955 = vmatprep.subr.bf16.mxu0 0
        %956 = vmatpush1.bf16.msra.mxu0 0
        %957 = vmatprep.subr.bf16.mxu0 0
        %958 = vmatpush1.bf16.msra.mxu0 0
        %959 = vmatprep.subr.bf16.mxu0 0
        %960 = vmatpush1.bf16.msra.mxu0 0
        %961 = vmatprep.subr.bf16.mxu0 0
        %962 = vmatpush1.bf16.msra.mxu0 0
        %963 = vmatprep.subr.bf16.mxu0 0
        %964 = vmatpush1.bf16.msra.mxu0 0
        %965 = vmatprep.subr.bf16.mxu0 0
        %966 = vmatpush1.bf16.msra.mxu0 0
        %967 = vmatprep.subr.bf16.mxu0 0
        %968 = vmatpush1.bf16.msra.mxu0 0
        %969 = vmatprep.subr.bf16.mxu0 0
        %970 = vmatpush1.bf16.msra.mxu0 0
        %971 = vmatprep.subr.bf16.mxu0 0
        %972 = vmatpush1.bf16.msra.mxu0 0
        %973 = vmatprep.subr.bf16.mxu0 0
        %974 = vmatpush1.bf16.msra.mxu0 0
        %975 = vmatprep.subr.bf16.mxu0 0
        %976 = vmatpush1.bf16.msra.mxu0 0
        %977 = vmatprep.subr.bf16.mxu0 0
        %978 = vmatpush1.bf16.msra.mxu0 0
        %979 = vmatprep.subr.bf16.mxu0 0
        %980 = vmatpush1.bf16.msra.mxu0 0
        %981 = vmatprep.subr.bf16.mxu0 0
        %982 = vmatpush1.bf16.msra.mxu0 0
        %983 = vmatprep.mubr.bf16.mxu0 0
        %984 = vmatmul.mubr.bf16.gmra.mrb[0].mxu0 %v949
        %v985 = vpop.f32.mrb[0].mxu0
        %v986 = vadd.f32 0.0, %v985
        %v987 = vpop.f32.mrb[0].mxu0
        %v988 = vpop.f32.mrb[0].mxu0
        %v989 = vadd.f32 0.0, %v988
        %v990 = vpop.f32.mrb[0].mxu0
        %991 = vdwg.mxu0
        %v992 = vpack.c.bf16 %v989, %v986
        %s993 = scalar_lea.vmem %s7, 4
        %v994 = vld [vmem:[%s993] sm:$0xf]
        %v996 = vsel %vm750, %v992, 0
        %vm998 = vcmask 1043456
        %v1000 = vsel %vm998, %v994, 0
        %1002 = vmatprep.subr.bf16.mxu0 0
        %1003 = vmatpush1.bf16.msra.mxu0 %v1000
        %1004 = vmatprep.subr.bf16.mxu0 0
        %1005 = vmatpush1.bf16.msra.mxu0 0
        %1006 = vmatprep.subr.bf16.mxu0 0
        %1007 = vmatpush1.bf16.msra.mxu0 0
        %1008 = vmatprep.subr.bf16.mxu0 0
        %1009 = vmatpush1.bf16.msra.mxu0 0
        %1010 = vmatprep.subr.bf16.mxu0 0
        %1011 = vmatpush1.bf16.msra.mxu0 0
        %1012 = vmatprep.subr.bf16.mxu0 0
        %1013 = vmatpush1.bf16.msra.mxu0 0
        %1014 = vmatprep.subr.bf16.mxu0 0
        %1015 = vmatpush1.bf16.msra.mxu0 0
        %1016 = vmatprep.subr.bf16.mxu0 0
        %1017 = vmatpush1.bf16.msra.mxu0 0
        %1018 = vmatprep.subr.bf16.mxu0 0
        %1019 = vmatpush1.bf16.msra.mxu0 0
        %1020 = vmatprep.subr.bf16.mxu0 0
        %1021 = vmatpush1.bf16.msra.mxu0 0
        %1022 = vmatprep.subr.bf16.mxu0 0
        %1023 = vmatpush1.bf16.msra.mxu0 0
        %1024 = vmatprep.subr.bf16.mxu0 0
        %1025 = vmatpush1.bf16.msra.mxu0 0
        %1026 = vmatprep.subr.bf16.mxu0 0
        %1027 = vmatpush1.bf16.msra.mxu0 0
        %1028 = vmatprep.subr.bf16.mxu0 0
        %1029 = vmatpush1.bf16.msra.mxu0 0
        %1030 = vmatprep.subr.bf16.mxu0 0
        %1031 = vmatpush1.bf16.msra.mxu0 0
        %1032 = vmatprep.subr.bf16.mxu0 0
        %1033 = vmatpush1.bf16.msra.mxu0 0
        %1034 = vmatprep.mubr.bf16.mxu0 0
        %1035 = vmatmul.mubr.bf16.gmra.mrb[0].mxu0 %v996
        %v1036 = vpop.f32.mrb[0].mxu0
        %v1037 = vadd.f32 0.0, %v1036
        %v1038 = vpop.f32.mrb[0].mxu0
        %v1039 = vpop.f32.mrb[0].mxu0
        %v1040 = vadd.f32 0.0, %v1039
        %v1041 = vpop.f32.mrb[0].mxu0
        %1042 = vdwg.mxu0
        %v1044 = vsel %vm750, %v866, 0
        %v1047 = vsel %vm998, %v867, 0
        %1049 = vmatprep.subr.bf16.mxu0 0
        %1050 = vmatpush1.bf16.msra.mxu0 %v1047
        %1051 = vmatprep.subr.bf16.mxu0 0
        %1052 = vmatpush1.bf16.msra.mxu0 0
        %1053 = vmatprep.subr.bf16.mxu0 0
        %1054 = vmatpush1.bf16.msra.mxu0 0
        %1055 = vmatprep.subr.bf16.mxu0 0
        %1056 = vmatpush1.bf16.msra.mxu0 0
        %1057 = vmatprep.subr.bf16.mxu0 0
        %1058 = vmatpush1.bf16.msra.mxu0 0
        %1059 = vmatprep.subr.bf16.mxu0 0
        %1060 = vmatpush1.bf16.msra.mxu0 0
        %1061 = vmatprep.subr.bf16.mxu0 0
        %1062 = vmatpush1.bf16.msra.mxu0 0
        %1063 = vmatprep.subr.bf16.mxu0 0
        %1064 = vmatpush1.bf16.msra.mxu0 0
        %1065 = vmatprep.subr.bf16.mxu0 0
        %1066 = vmatpush1.bf16.msra.mxu0 0
        %1067 = vmatprep.subr.bf16.mxu0 0
        %1068 = vmatpush1.bf16.msra.mxu0 0
        %1069 = vmatprep.subr.bf16.mxu0 0
        %1070 = vmatpush1.bf16.msra.mxu0 0
        %1071 = vmatprep.subr.bf16.mxu0 0
        %1072 = vmatpush1.bf16.msra.mxu0 0
        %1073 = vmatprep.subr.bf16.mxu0 0
        %1074 = vmatpush1.bf16.msra.mxu0 0
        %1075 = vmatprep.subr.bf16.mxu0 0
        %1076 = vmatpush1.bf16.msra.mxu0 0
        %1077 = vmatprep.subr.bf16.mxu0 0
        %1078 = vmatpush1.bf16.msra.mxu0 0
        %1079 = vmatprep.subr.bf16.mxu0 0
        %1080 = vmatpush1.bf16.msra.mxu0 0
        %1081 = vmatprep.mubr.bf16.mxu0 0
        %1082 = vmatmul.mubr.bf16.gmra.mrb[0].mxu0 %v1044
        %v1083 = vpop.f32.mrb[0].mxu0
        %v1084 = vadd.f32 %v1037, %v1083
        %v1085 = vpop.f32.mrb[0].mxu0
        %v1086 = vpop.f32.mrb[0].mxu0
        %v1087 = vadd.f32 %v1040, %v1086
        %v1088 = vpop.f32.mrb[0].mxu0
        %1089 = vdwg.mxu0
        %1090 = vrot.lane.b32.xlu0 %v619, 112
        %v1091 = vpop.permute.xlu0 %1090
        %1092 = vrot.lane.b32.xlu0 %v684, 112
        %v1093 = vpop.permute.xlu0 %1092
        %v1095 = vsel %vm750, %v1091, 0
        %v1098 = vsel %vm750, %v1093, 0
        %1100 = vmatprep.subr.bf16.mxu0 0
        %1101 = vmatpush1.bf16.xpose.msra.mxu0 %v1098
        %1102 = vmatprep.subr.bf16.mxu0 0
        %1103 = vmatpush1.bf16.xpose.msra.mxu0 0
        %1104 = vmatprep.subr.bf16.mxu0 0
        %1105 = vmatpush1.bf16.xpose.msra.mxu0 0
        %1106 = vmatprep.subr.bf16.mxu0 0
        %1107 = vmatpush1.bf16.xpose.msra.mxu0 0
        %1108 = vmatprep.subr.bf16.mxu0 0
        %1109 = vmatpush1.bf16.xpose.msra.mxu0 0
        %1110 = vmatprep.subr.bf16.mxu0 0
        %1111 = vmatpush1.bf16.xpose.msra.mxu0 0
        %1112 = vmatprep.subr.bf16.mxu0 0
        %1113 = vmatpush1.bf16.xpose.msra.mxu0 0
        %1114 = vmatprep.subr.bf16.mxu0 0
        %1115 = vmatpush1.bf16.xpose.msra.mxu0 0
        %1116 = vmatprep.subr.bf16.mxu0 0
        %1117 = vmatpush1.bf16.xpose.msra.mxu0 0
        %1118 = vmatprep.subr.bf16.mxu0 0
        %1119 = vmatpush1.bf16.xpose.msra.mxu0 0
        %1120 = vmatprep.subr.bf16.mxu0 0
        %1121 = vmatpush1.bf16.xpose.msra.mxu0 0
        %1122 = vmatprep.subr.bf16.mxu0 0
        %1123 = vmatpush1.bf16.xpose.msra.mxu0 0
        %1124 = vmatprep.subr.bf16.mxu0 0
        %1125 = vmatpush1.bf16.xpose.msra.mxu0 0
        %1126 = vmatprep.subr.bf16.mxu0 0
        %1127 = vmatpush1.bf16.xpose.msra.mxu0 0
        %1128 = vmatprep.subr.bf16.mxu0 0
        %1129 = vmatpush1.bf16.xpose.msra.mxu0 0
        %1130 = vmatprep.subr.bf16.mxu0 0
        %1131 = vmatpush1.bf16.xpose.msra.mxu0 0
        %1132 = vmatprep.mubr.bf16.mxu0 0
        %1133 = vmatmul.mubr.bf16.gmra.mrb[0].mxu0 %v1095
        %v1134 = vpop.f32.mrb[0].mxu0
        %v1135 = vadd.f32 0.0, %v1134
        %v1136 = vpop.f32.mrb[0].mxu0
        %v1137 = vpop.f32.mrb[0].mxu0
        %v1138 = vadd.f32 0.0, %v1137
        %v1139 = vpop.f32.mrb[0].mxu0
        %1140 = vdwg.mxu0
        %v1141 = vsel %vm798, %v1135, -inf
        %1142 = vmax.xlane.f32.xlu0 %v1141
        %v1143 = vpop.xlane.xlu0 %1142
        %v1144 = vsel %vm798, %v1138, -inf
        %1145 = vmax.xlane.f32.xlu0 %v1144
        %v1146 = vpop.xlane.xlu0 %1145
        %v1147 = vsub.f32 %v1135, %v1143
        %v1148 = vsub.f32 %v1138, %v1146
        %v1149 = vmul.f32 %v1147, 1.442695
        %v1150 = vpow.pop %v1149
        %v1151 = vmul.f32 %v1148, 1.442695
        %v1152 = vpow.pop %v1151
        %v1153 = vsel %vm798, %v1150, 0.0
        %1154 = vadd.xlane.f32.xlu0 %v1153
        %v1155 = vpop.xlane.xlu0 %1154
        %v1156 = vsel %vm798, %v1152, 0.0
        %1157 = vadd.xlane.f32.xlu0 %v1156
        %v1158 = vpop.xlane.xlu0 %1157
        %v1159 = vrcp.pop %v1155
        %v1160 = vrcp.pop %v1158
        %v1161 = vmul.f32 %v1150, %v1159
        %v1162 = vmul.f32 %v1152, %v1160
        %v1163 = vpack.c.bf16 %v1162, %v1161
        %1164 = vrot.lane.b32.xlu0 %v749, 112
        %v1165 = vpop.permute.xlu0 %1164
        %v1168 = vsel %vm798, %v1163, 0
        %1170 = vmatprep.subr.bf16.mxu0 0
        %1171 = vmatpush1.bf16.msra.mxu0 %v1165
        %1172 = vmatprep.subr.bf16.mxu0 0
        %1173 = vmatpush1.bf16.msra.mxu0 0
        %1174 = vmatprep.subr.bf16.mxu0 0
        %1175 = vmatpush1.bf16.msra.mxu0 0
        %1176 = vmatprep.subr.bf16.mxu0 0
        %1177 = vmatpush1.bf16.msra.mxu0 0
        %1178 = vmatprep.subr.bf16.mxu0 0
        %1179 = vmatpush1.bf16.msra.mxu0 0
        %1180 = vmatprep.subr.bf16.mxu0 0
        %1181 = vmatpush1.bf16.msra.mxu0 0
        %1182 = vmatprep.subr.bf16.mxu0 0
        %1183 = vmatpush1.bf16.msra.mxu0 0
        %1184 = vmatprep.subr.bf16.mxu0 0
        %1185 = vmatpush1.bf16.msra.mxu0 0
        %1186 = vmatprep.subr.bf16.mxu0 0
        %1187 = vmatpush1.bf16.msra.mxu0 0
        %1188 = vmatprep.subr.bf16.mxu0 0
        %1189 = vmatpush1.bf16.msra.mxu0 0
        %1190 = vmatprep.subr.bf16.mxu0 0
        %1191 = vmatpush1.bf16.msra.mxu0 0
        %1192 = vmatprep.subr.bf16.mxu0 0
        %1193 = vmatpush1.bf16.msra.mxu0 0
        %1194 = vmatprep.subr.bf16.mxu0 0
        %1195 = vmatpush1.bf16.msra.mxu0 0
        %1196 = vmatprep.subr.bf16.mxu0 0
        %1197 = vmatpush1.bf16.msra.mxu0 0
        %1198 = vmatprep.subr.bf16.mxu0 0
        %1199 = vmatpush1.bf16.msra.mxu0 0
        %1200 = vmatprep.subr.bf16.mxu0 0
        %1201 = vmatpush1.bf16.msra.mxu0 0
        %1202 = vmatprep.mubr.bf16.mxu0 0
        %1203 = vmatmul.mubr.bf16.gmra.mrb[0].mxu0 %v1168
        %v1204 = vpop.f32.mrb[0].mxu0
        %v1205 = vadd.f32 0.0, %v1204
        %v1206 = vpop.f32.mrb[0].mxu0
        %v1207 = vpop.f32.mrb[0].mxu0
        %v1208 = vadd.f32 0.0, %v1207
        %v1209 = vpop.f32.mrb[0].mxu0
        %1210 = vdwg.mxu0
        %v1211 = vpack.c.bf16 %v1208, %v1205
        %s1212 = scalar_lea.vmem %s7, 8
        %v1213 = vld [vmem:[%s1212] sm:$0xf]
        %v1215 = vsel %vm750, %v1211, 0
        %v1218 = vsel %vm998, %v1213, 0
        %1220 = vmatprep.subr.bf16.mxu0 0
        %1221 = vmatpush1.bf16.msra.mxu0 %v1218
        %1222 = vmatprep.subr.bf16.mxu0 0
        %1223 = vmatpush1.bf16.msra.mxu0 0
        %1224 = vmatprep.subr.bf16.mxu0 0
        %1225 = vmatpush1.bf16.msra.mxu0 0
        %1226 = vmatprep.subr.bf16.mxu0 0
        %1227 = vmatpush1.bf16.msra.mxu0 0
        %1228 = vmatprep.subr.bf16.mxu0 0
        %1229 = vmatpush1.bf16.msra.mxu0 0
        %1230 = vmatprep.subr.bf16.mxu0 0
        %1231 = vmatpush1.bf16.msra.mxu0 0
        %1232 = vmatprep.subr.bf16.mxu0 0
        %1233 = vmatpush1.bf16.msra.mxu0 0
        %1234 = vmatprep.subr.bf16.mxu0 0
        %1235 = vmatpush1.bf16.msra.mxu0 0
        %1236 = vmatprep.subr.bf16.mxu0 0
        %1237 = vmatpush1.bf16.msra.mxu0 0
        %1238 = vmatprep.subr.bf16.mxu0 0
        %1239 = vmatpush1.bf16.msra.mxu0 0
        %1240 = vmatprep.subr.bf16.mxu0 0
        %1241 = vmatpush1.bf16.msra.mxu0 0
        %1242 = vmatprep.subr.bf16.mxu0 0
        %1243 = vmatpush1.bf16.msra.mxu0 0
        %1244 = vmatprep.subr.bf16.mxu0 0
        %1245 = vmatpush1.bf16.msra.mxu0 0
        %1246 = vmatprep.subr.bf16.mxu0 0
        %1247 = vmatpush1.bf16.msra.mxu0 0
        %1248 = vmatprep.subr.bf16.mxu0 0
        %1249 = vmatpush1.bf16.msra.mxu0 0
        %1250 = vmatprep.subr.bf16.mxu0 0
        %1251 = vmatpush1.bf16.msra.mxu0 0
        %1252 = vmatprep.mubr.bf16.mxu0 0
        %1253 = vmatmul.mubr.bf16.gmra.mrb[0].mxu0 %v1215
        %v1254 = vpop.f32.mrb[0].mxu0
        %v1255 = vadd.f32 0.0, %v1254
        %v1256 = vpop.f32.mrb[0].mxu0
        %v1257 = vpop.f32.mrb[0].mxu0
        %v1258 = vadd.f32 0.0, %v1257
        %v1259 = vpop.f32.mrb[0].mxu0
        %1260 = vdwg.mxu0
        %v1261 = vadd.f32 %v1084, %v1255
        %v1262 = vadd.f32 %v1087, %v1258
        %1263 = vrot.lane.b32.xlu0 %v619, 104
        %v1264 = vpop.permute.xlu0 %1263
        %1265 = vrot.lane.b32.xlu0 %v684, 104
        %v1266 = vpop.permute.xlu0 %1265
        %v1268 = vsel %vm750, %v1264, 0
        %v1271 = vsel %vm750, %v1266, 0
        %1273 = vmatprep.subr.bf16.mxu0 0
        %1274 = vmatpush1.bf16.xpose.msra.mxu0 %v1271
        %1275 = vmatprep.subr.bf16.mxu0 0
        %1276 = vmatpush1.bf16.xpose.msra.mxu0 0
        %1277 = vmatprep.subr.bf16.mxu0 0
        %1278 = vmatpush1.bf16.xpose.msra.mxu0 0
        %1279 = vmatprep.subr.bf16.mxu0 0
        %1280 = vmatpush1.bf16.xpose.msra.mxu0 0
        %1281 = vmatprep.subr.bf16.mxu0 0
        %1282 = vmatpush1.bf16.xpose.msra.mxu0 0
        %1283 = vmatprep.subr.bf16.mxu0 0
        %1284 = vmatpush1.bf16.xpose.msra.mxu0 0
        %1285 = vmatprep.subr.bf16.mxu0 0
        %1286 = vmatpush1.bf16.xpose.msra.mxu0 0
        %1287 = vmatprep.subr.bf16.mxu0 0
        %1288 = vmatpush1.bf16.xpose.msra.mxu0 0
        %1289 = vmatprep.subr.bf16.mxu0 0
        %1290 = vmatpush1.bf16.xpose.msra.mxu0 0
        %1291 = vmatprep.subr.bf16.mxu0 0
        %1292 = vmatpush1.bf16.xpose.msra.mxu0 0
        %1293 = vmatprep.subr.bf16.mxu0 0
        %1294 = vmatpush1.bf16.xpose.msra.mxu0 0
        %1295 = vmatprep.subr.bf16.mxu0 0
        %1296 = vmatpush1.bf16.xpose.msra.mxu0 0
        %1297 = vmatprep.subr.bf16.mxu0 0
        %1298 = vmatpush1.bf16.xpose.msra.mxu0 0
        %1299 = vmatprep.subr.bf16.mxu0 0
        %1300 = vmatpush1.bf16.xpose.msra.mxu0 0
        %1301 = vmatprep.subr.bf16.mxu0 0
        %1302 = vmatpush1.bf16.xpose.msra.mxu0 0
        %1303 = vmatprep.subr.bf16.mxu0 0
        %1304 = vmatpush1.bf16.xpose.msra.mxu0 0
        %1305 = vmatprep.mubr.bf16.mxu0 0
        %1306 = vmatmul.mubr.bf16.gmra.mrb[0].mxu0 %v1268
        %v1307 = vpop.f32.mrb[0].mxu0
        %v1308 = vadd.f32 0.0, %v1307
        %v1309 = vpop.f32.mrb[0].mxu0
        %v1310 = vpop.f32.mrb[0].mxu0
        %v1311 = vadd.f32 0.0, %v1310
        %v1312 = vpop.f32.mrb[0].mxu0
        %1313 = vdwg.mxu0
        %v1314 = vsel %vm798, %v1308, -inf
        %1315 = vmax.xlane.f32.xlu0 %v1314
        %v1316 = vpop.xlane.xlu0 %1315
        %v1317 = vsel %vm798, %v1311, -inf
        %1318 = vmax.xlane.f32.xlu0 %v1317
        %v1319 = vpop.xlane.xlu0 %1318
        %v1320 = vsub.f32 %v1308, %v1316
        %v1321 = vsub.f32 %v1311, %v1319
        %v1322 = vmul.f32 %v1320, 1.442695
        %v1323 = vpow.pop %v1322
        %v1324 = vmul.f32 %v1321, 1.442695
        %v1325 = vpow.pop %v1324
        %v1326 = vsel %vm798, %v1323, 0.0
        %1327 = vadd.xlane.f32.xlu0 %v1326
        %v1328 = vpop.xlane.xlu0 %1327
        %v1329 = vsel %vm798, %v1325, 0.0
        %1330 = vadd.xlane.f32.xlu0 %v1329
        %v1331 = vpop.xlane.xlu0 %1330
        %v1332 = vrcp.pop %v1328
        %v1333 = vrcp.pop %v1331
        %v1334 = vmul.f32 %v1323, %v1332
        %v1335 = vmul.f32 %v1325, %v1333
        %v1336 = vpack.c.bf16 %v1335, %v1334
        %1337 = vrot.lane.b32.xlu0 %v749, 104
        %v1338 = vpop.permute.xlu0 %1337
        %v1341 = vsel %vm798, %v1336, 0
        %1343 = vmatprep.subr.bf16.mxu0 0
        %1344 = vmatpush1.bf16.msra.mxu0 %v1338
        %1345 = vmatprep.subr.bf16.mxu0 0
        %1346 = vmatpush1.bf16.msra.mxu0 0
        %1347 = vmatprep.subr.bf16.mxu0 0
        %1348 = vmatpush1.bf16.msra.mxu0 0
        %1349 = vmatprep.subr.bf16.mxu0 0
        %1350 = vmatpush1.bf16.msra.mxu0 0
        %1351 = vmatprep.subr.bf16.mxu0 0
        %1352 = vmatpush1.bf16.msra.mxu0 0
        %1353 = vmatprep.subr.bf16.mxu0 0
        %1354 = vmatpush1.bf16.msra.mxu0 0
        %1355 = vmatprep.subr.bf16.mxu0 0
        %1356 = vmatpush1.bf16.msra.mxu0 0
        %1357 = vmatprep.subr.bf16.mxu0 0
        %1358 = vmatpush1.bf16.msra.mxu0 0
        %1359 = vmatprep.subr.bf16.mxu0 0
        %1360 = vmatpush1.bf16.msra.mxu0 0
        %1361 = vmatprep.subr.bf16.mxu0 0
        %1362 = vmatpush1.bf16.msra.mxu0 0
        %1363 = vmatprep.subr.bf16.mxu0 0
        %1364 = vmatpush1.bf16.msra.mxu0 0
        %1365 = vmatprep.subr.bf16.mxu0 0
        %1366 = vmatpush1.bf16.msra.mxu0 0
        %1367 = vmatprep.subr.bf16.mxu0 0
        %1368 = vmatpush1.bf16.msra.mxu0 0
        %1369 = vmatprep.subr.bf16.mxu0 0
        %1370 = vmatpush1.bf16.msra.mxu0 0
        %1371 = vmatprep.subr.bf16.mxu0 0
        %1372 = vmatpush1.bf16.msra.mxu0 0
        %1373 = vmatprep.subr.bf16.mxu0 0
        %1374 = vmatpush1.bf16.msra.mxu0 0
        %1375 = vmatprep.mubr.bf16.mxu0 0
        %1376 = vmatmul.mubr.bf16.gmra.mrb[0].mxu0 %v1341
        %v1377 = vpop.f32.mrb[0].mxu0
        %v1378 = vadd.f32 0.0, %v1377
        %v1379 = vpop.f32.mrb[0].mxu0
        %v1380 = vpop.f32.mrb[0].mxu0
        %v1381 = vadd.f32 0.0, %v1380
        %v1382 = vpop.f32.mrb[0].mxu0
        %1383 = vdwg.mxu0
        %v1384 = vpack.c.bf16 %v1381, %v1378
        %s1385 = scalar_lea.vmem %s7, 12
        %v1386 = vld [vmem:[%s1385] sm:$0xf]
        %v1388 = vsel %vm750, %v1384, 0
        %v1391 = vsel %vm998, %v1386, 0
        %1393 = vmatprep.subr.bf16.mxu0 0
        %1394 = vmatpush1.bf16.msra.mxu0 %v1391
        %1395 = vmatprep.subr.bf16.mxu0 0
        %1396 = vmatpush1.bf16.msra.mxu0 0
        %1397 = vmatprep.subr.bf16.mxu0 0
        %1398 = vmatpush1.bf16.msra.mxu0 0
        %1399 = vmatprep.subr.bf16.mxu0 0
        %1400 = vmatpush1.bf16.msra.mxu0 0
        %1401 = vmatprep.subr.bf16.mxu0 0
        %1402 = vmatpush1.bf16.msra.mxu0 0
        %1403 = vmatprep.subr.bf16.mxu0 0
        %1404 = vmatpush1.bf16.msra.mxu0 0
        %1405 = vmatprep.subr.bf16.mxu0 0
        %1406 = vmatpush1.bf16.msra.mxu0 0
        %1407 = vmatprep.subr.bf16.mxu0 0
        %1408 = vmatpush1.bf16.msra.mxu0 0
        %1409 = vmatprep.subr.bf16.mxu0 0
        %1410 = vmatpush1.bf16.msra.mxu0 0
        %1411 = vmatprep.subr.bf16.mxu0 0
        %1412 = vmatpush1.bf16.msra.mxu0 0
        %1413 = vmatprep.subr.bf16.mxu0 0
        %1414 = vmatpush1.bf16.msra.mxu0 0
        %1415 = vmatprep.subr.bf16.mxu0 0
        %1416 = vmatpush1.bf16.msra.mxu0 0
        %1417 = vmatprep.subr.bf16.mxu0 0
        %1418 = vmatpush1.bf16.msra.mxu0 0
        %1419 = vmatprep.subr.bf16.mxu0 0
        %1420 = vmatpush1.bf16.msra.mxu0 0
        %1421 = vmatprep.subr.bf16.mxu0 0
        %1422 = vmatpush1.bf16.msra.mxu0 0
        %1423 = vmatprep.subr.bf16.mxu0 0
        %1424 = vmatpush1.bf16.msra.mxu0 0
        %1425 = vmatprep.mubr.bf16.mxu0 0
        %1426 = vmatmul.mubr.bf16.gmra.mrb[0].mxu0 %v1388
        %v1427 = vpop.f32.mrb[0].mxu0
        %v1428 = vadd.f32 0.0, %v1427
        %v1429 = vpop.f32.mrb[0].mxu0
        %v1430 = vpop.f32.mrb[0].mxu0
        %v1431 = vadd.f32 0.0, %v1430
        %v1432 = vpop.f32.mrb[0].mxu0
        %1433 = vdwg.mxu0
        %v1434 = vadd.f32 %v1261, %v1428
        %v1435 = vadd.f32 %v1262, %v1431
        %v1436 = vld [vmem:[%s8] sm:$0x1]
        %v1438 = vlaneseq
        %v1439 = vshrl.u32 %v1438, 7
        %v1440 = vsub.s32 0, %v1439
        %v1441 = vrot.slane %v1436, %v1440
        %v1443 = vadd.f32 %v1434, %v1441
        %v1444 = vadd.f32 %v1435, %v1441
        %v1445 = vadd.f32 %v548, %v1443
        %v1446 = vadd.f32 %v549, %v1444
        %v1447 = vld [vmem:[%s13] sm:$0x1]
        %v1448 = vld [vmem:[%s14] sm:$0x1]
        %v1449 = vsel %vm574, %v1445, 0.0
        %1450 = vadd.xlane.f32.xlu0 %v1449
        %v1451 = vpop.xlane.xlu0 %1450
        %v1452 = vsel %vm574, %v1446, 0.0
        %1453 = vadd.xlane.f32.xlu0 %v1452
        %v1454 = vpop.xlane.xlu0 %1453
        %v1455 = vrcp.pop 32.0
        %v1456 = vmul.f32 %v1451, %v1455
        %v1457 = vmul.f32 %v1454, %v1455
        %v1458 = vsub.f32 %v1445, %v1456
        %v1459 = vsub.f32 %v1446, %v1457
        %v1460 = vmul.f32 %v1458, %v1458
        %v1461 = vmul.f32 %v1459, %v1459
        %v1462 = vsel %vm574, %v1460, 0.0
        %1463 = vadd.xlane.f32.xlu0 %v1462
        %v1464 = vpop.xlane.xlu0 %1463
        %v1465 = vsel %vm574, %v1461, 0.0
        %1466 = vadd.xlane.f32.xlu0 %v1465
        %v1467 = vpop.xlane.xlu0 %1466
        %v1468 = vmul.f32 %v1464, %v1455
        %v1469 = vmul.f32 %v1467, %v1455
        %v1470 = vadd.f32 %v1468, 1e-05
        %v1471 = vadd.f32 %v1469, 1e-05
        %v1472 = vrsqrt.pop %v1470
        %v1473 = vrsqrt.pop %v1471
        %v1474 = vmul.f32 %v1458, %v1472
        %v1475 = vmul.f32 %v1459, %v1473
        %v1477 = vlaneseq
        %v1478 = vshrl.u32 %v1477, 7
        %v1479 = vsub.s32 0, %v1478
        %v1480 = vrot.slane %v1447, %v1479
        %v1482 = vmul.f32 %v1474, %v1480
        %v1483 = vmul.f32 %v1475, %v1480
        %v1485 = vlaneseq
        %v1486 = vshrl.u32 %v1485, 7
        %v1487 = vsub.s32 0, %v1486
        %v1488 = vrot.slane %v1448, %v1487
        %v1490 = vadd.f32 %v1482, %v1488
        %v1491 = vadd.f32 %v1483, %v1488
        %v1492 = vpack.c.bf16 %v1491, %v1490
        %v1493 = vld [vmem:[%s9] sm:$0xf]
        %v1494 = vld [vmem:[%s9 + $0x4] sm:$0xf]
        %v1495 = vld [vmem:[%s9 + $0x8] sm:$0xf]
        %v1496 = vld [vmem:[%s9 + $0xc] sm:$0xf]
        %v1497 = vld [vmem:[%s10] sm:$0x1]
        %v1499 = vlaneseq
        %v1500 = vshrl.u32 %v1499, 7
        %v1501 = vsub.s32 0, %v1500
        %v1502 = vrot.slane %v1497, %v1501
        %v1508 = vunpack.c.l.b16 %v1493
        %v1509 = vunpack.c.l.b16 %v1494
        %v1510 = vunpack.c.l.b16 %v1495
        %v1511 = vunpack.c.l.b16 %v1496
        %v1512 = vpack.c.b16 %v1509, %v1508
        %v1513 = vpack.c.b16 %v1511, %v1510
        %v1517 = vsel %vm574, %v1492, 0
        %1519 = vmatprep.subr.bf16.mxu0 0
        %1520 = vmatpush1.bf16.msra.mxu0 %v1512
        %1521 = vmatprep.subr.bf16.mxu0 0
        %1522 = vmatpush1.bf16.msra.mxu0 %v1513
        %1523 = vmatprep.subr.bf16.mxu0 0
        %1524 = vmatpush1.bf16.msra.mxu0 0
        %1525 = vmatprep.subr.bf16.mxu0 0
        %1526 = vmatpush1.bf16.msra.mxu0 0
        %1527 = vmatprep.subr.bf16.mxu0 0
        %1528 = vmatpush1.bf16.msra.mxu0 0
        %1529 = vmatprep.subr.bf16.mxu0 0
        %1530 = vmatpush1.bf16.msra.mxu0 0
        %1531 = vmatprep.subr.bf16.mxu0 0
        %1532 = vmatpush1.bf16.msra.mxu0 0
        %1533 = vmatprep.subr.bf16.mxu0 0
        %1534 = vmatpush1.bf16.msra.mxu0 0
        %1535 = vmatprep.subr.bf16.mxu0 0
        %1536 = vmatpush1.bf16.msra.mxu0 0
        %1537 = vmatprep.subr.bf16.mxu0 0
        %1538 = vmatpush1.bf16.msra.mxu0 0
        %1539 = vmatprep.subr.bf16.mxu0 0
        %1540 = vmatpush1.bf16.msra.mxu0 0
        %1541 = vmatprep.subr.bf16.mxu0 0
        %1542 = vmatpush1.bf16.msra.mxu0 0
        %1543 = vmatprep.subr.bf16.mxu0 0
        %1544 = vmatpush1.bf16.msra.mxu0 0
        %1545 = vmatprep.subr.bf16.mxu0 0
        %1546 = vmatpush1.bf16.msra.mxu0 0
        %1547 = vmatprep.subr.bf16.mxu0 0
        %1548 = vmatpush1.bf16.msra.mxu0 0
        %1549 = vmatprep.subr.bf16.mxu0 0
        %1550 = vmatpush1.bf16.msra.mxu0 0
        %1551 = vmatprep.mubr.bf16.mxu0 0
        %1552 = vmatmul.mubr.bf16.gmra.mrb[0].mxu0 %v1517
        %v1553 = vpop.f32.mrb[0].mxu0
        %v1554 = vadd.f32 %v1502, %v1553
        %v1555 = vpop.f32.mrb[0].mxu0
        %v1556 = vpop.f32.mrb[0].mxu0
        %v1557 = vadd.f32 %v1502, %v1556
        %v1558 = vpop.f32.mrb[0].mxu0
        %1559 = vdwg.mxu0
        %v1560 = vmax.f32 %v1554, 0.0
        %v1561 = vmax.f32 %v1557, 0.0
        %v1562 = vpack.c.bf16 %v1561, %v1560
        %v1563 = vld [vmem:[%s11] sm:$0xf]
        %v1564 = vld [vmem:[%s11 + $0x4] sm:$0xf]
        %v1565 = vld [vmem:[%s11 + $0x8] sm:$0xf]
        %v1566 = vld [vmem:[%s11 + $0xc] sm:$0xf]
        %v1567 = vld [vmem:[%s11 + $0x10] sm:$0xf]
        %v1568 = vld [vmem:[%s11 + $0x14] sm:$0xf]
        %v1569 = vld [vmem:[%s11 + $0x18] sm:$0xf]
        %v1570 = vld [vmem:[%s11 + $0x1c] sm:$0xf]
        %v1571 = vld [vmem:[%s11 + $0x20] sm:$0xf]
        %v1572 = vld [vmem:[%s11 + $0x24] sm:$0xf]
        %v1573 = vld [vmem:[%s11 + $0x28] sm:$0xf]
        %v1574 = vld [vmem:[%s11 + $0x2c] sm:$0xf]
        %v1575 = vld [vmem:[%s11 + $0x30] sm:$0xf]
        %v1576 = vld [vmem:[%s11 + $0x34] sm:$0xf]
        %v1577 = vld [vmem:[%s11 + $0x38] sm:$0xf]
        %v1578 = vld [vmem:[%s11 + $0x3c] sm:$0xf]
        %v1579 = vld [vmem:[%s12] sm:$0x1]
        %v1581 = vlaneseq
        %v1582 = vshrl.u32 %v1581, 7
        %v1583 = vsub.s32 0, %v1582
        %v1584 = vrot.slane %v1579, %v1583
        %v1602 = vunpack.c.l.b16 %v1563
        %v1603 = vunpack.c.l.b16 %v1564
        %v1604 = vunpack.c.l.b16 %v1565
        %v1605 = vunpack.c.l.b16 %v1566
        %v1606 = vunpack.c.l.b16 %v1567
        %v1607 = vunpack.c.l.b16 %v1568
        %v1608 = vunpack.c.l.b16 %v1569
        %v1609 = vunpack.c.l.b16 %v1570
        %v1610 = vunpack.c.l.b16 %v1571
        %v1611 = vunpack.c.l.b16 %v1572
        %v1612 = vunpack.c.l.b16 %v1573
        %v1613 = vunpack.c.l.b16 %v1574
        %v1614 = vunpack.c.l.b16 %v1575
        %v1615 = vunpack.c.l.b16 %v1576
        %v1616 = vunpack.c.l.b16 %v1577
        %v1617 = vunpack.c.l.b16 %v1578
        %v1618 = vpack.c.b16 %v1603, %v1602
        %v1619 = vpack.c.b16 %v1605, %v1604
        %v1620 = vpack.c.b16 %v1607, %v1606
        %v1621 = vpack.c.b16 %v1609, %v1608
        %v1622 = vpack.c.b16 %v1611, %v1610
        %v1623 = vpack.c.b16 %v1613, %v1612
        %v1624 = vpack.c.b16 %v1615, %v1614
        %v1625 = vpack.c.b16 %v1617, %v1616
        %1634 = vmatprep.subr.bf16.mxu0 0
        %1635 = vmatpush1.bf16.msra.mxu0 %v1618
        %1636 = vmatprep.subr.bf16.mxu0 0
        %1637 = vmatpush1.bf16.msra.mxu0 %v1619
        %1638 = vmatprep.subr.bf16.mxu0 0
        %1639 = vmatpush1.bf16.msra.mxu0 %v1620
        %1640 = vmatprep.subr.bf16.mxu0 0
        %1641 = vmatpush1.bf16.msra.mxu0 %v1621
        %1642 = vmatprep.subr.bf16.mxu0 0
        %1643 = vmatpush1.bf16.msra.mxu0 %v1622
        %1644 = vmatprep.subr.bf16.mxu0 0
        %1645 = vmatpush1.bf16.msra.mxu0 %v1623
        %1646 = vmatprep.subr.bf16.mxu0 0
        %1647 = vmatpush1.bf16.msra.mxu0 %v1624
        %1648 = vmatprep.subr.bf16.mxu0 0
        %1649 = vmatpush1.bf16.msra.mxu0 %v1625
        %1650 = vmatprep.subr.bf16.mxu0 0
        %1651 = vmatpush1.bf16.msra.mxu0 0
        %1652 = vmatprep.subr.bf16.mxu0 0
        %1653 = vmatpush1.bf16.msra.mxu0 0
        %1654 = vmatprep.subr.bf16.mxu0 0
        %1655 = vmatpush1.bf16.msra.mxu0 0
        %1656 = vmatprep.subr.bf16.mxu0 0
        %1657 = vmatpush1.bf16.msra.mxu0 0
        %1658 = vmatprep.subr.bf16.mxu0 0
        %1659 = vmatpush1.bf16.msra.mxu0 0
        %1660 = vmatprep.subr.bf16.mxu0 0
        %1661 = vmatpush1.bf16.msra.mxu0 0
        %1662 = vmatprep.subr.bf16.mxu0 0
        %1663 = vmatpush1.bf16.msra.mxu0 0
        %1664 = vmatprep.subr.bf16.mxu0 0
        %1665 = vmatpush1.bf16.msra.mxu0 0
        %1666 = vmatprep.mubr.bf16.mxu0 0
        %1667 = vmatmul.mubr.bf16.gmra.mrb[0].mxu0 %v1562
        %v1668 = vpop.f32.mrb[0].mxu0
        %v1669 = vadd.f32 %v1584, %v1668
        %v1670 = vpop.f32.mrb[0].mxu0
        %v1671 = vpop.f32.mrb[0].mxu0
        %v1672 = vadd.f32 %v1584, %v1671
        %v1673 = vpop.f32.mrb[0].mxu0
        %1674 = vdwg.mxu0
        %v1675 = vadd.f32 %v1490, %v1669
        %v1676 = vadd.f32 %v1491, %v1672
        %v1677 = vld [vmem:[%s15] sm:$0x1]
        %v1678 = vld [vmem:[%s16] sm:$0x1]
        %v1679 = vsel %vm574, %v1675, 0.0
        %1680 = vadd.xlane.f32.xlu0 %v1679
        %v1681 = vpop.xlane.xlu0 %1680
        %v1682 = vsel %vm574, %v1676, 0.0
        %1683 = vadd.xlane.f32.xlu0 %v1682
        %v1684 = vpop.xlane.xlu0 %1683
        %v1685 = vmul.f32 %v1681, %v1455
        %v1686 = vmul.f32 %v1684, %v1455
        %v1687 = vsub.f32 %v1675, %v1685
        %v1688 = vsub.f32 %v1676, %v1686
        %v1689 = vmul.f32 %v1687, %v1687
        %v1690 = vmul.f32 %v1688, %v1688
        %v1691 = vsel %vm574, %v1689, 0.0
        %1692 = vadd.xlane.f32.xlu0 %v1691
        %v1693 = vpop.xlane.xlu0 %1692
        %v1694 = vsel %vm574, %v1690, 0.0
        %1695 = vadd.xlane.f32.xlu0 %v1694
        %v1696 = vpop.xlane.xlu0 %1695
        %v1697 = vmul.f32 %v1693, %v1455
        %v1698 = vmul.f32 %v1696, %v1455
        %v1699 = vadd.f32 %v1697, 1e-05
        %v1700 = vadd.f32 %v1698, 1e-05
        %v1701 = vrsqrt.pop %v1699
        %v1702 = vrsqrt.pop %v1700
        %v1703 = vmul.f32 %v1687, %v1701
        %v1704 = vmul.f32 %v1688, %v1702
        %v1706 = vlaneseq
        %v1707 = vshrl.u32 %v1706, 7
        %v1708 = vsub.s32 0, %v1707
        %v1709 = vrot.slane %v1677, %v1708
        %v1711 = vmul.f32 %v1703, %v1709
        %v1712 = vmul.f32 %v1704, %v1709
        %v1714 = vlaneseq
        %v1715 = vshrl.u32 %v1714, 7
        %v1716 = vsub.s32 0, %v1715
        %v1717 = vrot.slane %v1678, %v1716
        %v1719 = vadd.f32 %v1711, %v1717
        %v1720 = vadd.f32 %v1712, %v1717
        %1721 = vst.msk [vmem:[%s541] sm:$0xff] %vm574, %v1719
        %1722 = vst.msk [vmem:[%s541 + $0x8] sm:$0xff] %vm574, %v1720
        %s1723 = sand.u32 %s401, 1
        %s1724 = scalar_lea.sflag [#allocation3], %s1723
        %s1725 = sand.u32 %s401, 1
        %s1726 = smul.addr %s1725, 16
        %s1727 = scalar_lea.vmem [#allocation2], %s1726
        // Predicated region
        $region89: #{encoder_forward.11} parent=87 // pred_check
          %p1728 = pneg %p411
        $region90: #{encoder_forward.11} parent=87 // pred_check_branch
          %1730 = sbr.rel (%p1728) target = $region92
        $region91: #{encoder_forward.11} parent=87 // pred_region
          %s1732 = ssub.s32 256, 256
          %1733 = vsyncadd %s1724, %s1732
          %s1734 = smul.addr %s31, 2
          %s1735 = smul.addr %s1734, 128
          %s1736 = scalar_lea.hbm %s17, %s1735
          %s1737 = sshll.u32 %s1727, 4
          %s1738 = int_to_ptr.vmem [resolvable:$true] %s1737
          %1743 = dma.vmem_to_hbm [thread:$0]  %s1738, 256, %s1736, %s1724, 128, 128, 8
        $region92: #{encoder_forward.11} parent=87 // pred_fallthru
          _
      $region88: #{encoder_forward.11} parent=5 // pred_fallthru
        _
      %p1744 = scmp.le.s32.totalorder 2, %s26
      // Predicated region
      $region93: #{encoder_forward.11} parent=5 // pred_check
        %p1745 = pneg %p1744
      $region94: #{encoder_forward.11} parent=5 // pred_check_branch
        %1747 = sbr.rel (%p1745) target = $region96
      $region95: #{encoder_forward.11} parent=5 // pred_region
        %s1748 = ssub.s32 %s26, 2
        // Predicated region
        $region97: #{encoder_forward.11} parent=95 // pred_check
          %p1749 = pneg %p417
        $region98: #{encoder_forward.11} parent=95 // pred_check_branch
          %1751 = sbr.rel (%p1749) target = $region100
        $region99: #{encoder_forward.11} parent=95 // pred_region
          %s1752 = sand.u32 %s402, 1
          %s1753 = scalar_lea.sflag [#allocation3], %s1752
          %s1754 = sand.u32 %s402, 1
          %s1755 = smul.addr %s1754, 16
          %s1756 = scalar_lea.vmem [#allocation2], %s1755
          %1757 = dma.done %s1753, 256
        $region100: #{encoder_forward.11} parent=95 // pred_fallthru
          _
      $region96: #{encoder_forward.11} parent=5 // pred_fallthru
        _
    $region6: #{encoder_forward.11} parent=1 // loop_footer
      %s30 = sadd.s32 1, %s26
    $region7: #{encoder_forward.11} parent=1 // loop_footer_branch
      %25 = sbr.rel target = $region3
    $region8: #{encoder_forward.11} parent=1 // loop_exit
      _
    %1758 = vsyncpa [#allocation3], 1
    %s1759 = scalar_lea.sflag [#allocation3], 1
    %1760 = vsyncpa %s1759, 1

</llo_original>
